<compile_context>
chip_gen: v6e
topology: v6e:2x2x1
jax: 0.10.0
libtpu: 0.0.40
codegen_flags: <defaults>
</compile_context>

<pallas_src>
import functools

import numpy as np
import jax
import jax.numpy as jnp
from jax.experimental import pallas as pl
from jax.experimental.pallas import tpu as pltpu

_EPS_GN = 1e-5
_EPS_BN = 1e-5


# ---------------------------------------------------------------------------
# Host-side constant builders (static shapes -> numpy / tiny jnp ops).
# ---------------------------------------------------------------------------
def _stride2_sel(l_in, k=5, pad=2, stride=2):
    """Per-tap 0/1 selection matrices folding the stride-2 + zero-pad of a Conv1d."""
    l_out = (l_in + 2 * pad - k) // stride + 1
    sel = np.zeros((k, l_in, l_out), np.float32)
    for j in range(k):
        for t in range(l_out):
            m = stride * t + j - pad
            if 0 <= m < l_in:
                sel[j, m, t] = 1.0
    return sel, l_out


def _pool_mask(l_in, l_out):
    """F.adaptive_avg_pool1d(L -> l_out) as an (l_in, l_out) averaging matrix."""
    m = np.zeros((l_in, l_out), np.float32)
    for i in range(l_out):
        s = (i * l_in) // l_out
        e = -((-(i + 1) * l_in) // l_out)
        m[s:e, i] = 1.0 / (e - s)
    return m


def _dwt_matrix(h0, h1, l_in):
    """DWT1DForward(J=1, mode='zero') as one (l_in, 2*out) matrix: [low | high]."""
    k = int(h0.shape[0])
    out = (l_in + k - 1) // 2
    p = 2 * (out - 1) - l_in + k
    p_left = p // 2                     # extra odd-p right zero is implicit
    i = np.arange(l_in)[:, None]
    n = np.arange(out)[None, :]
    tap = i - 2 * n + p_left
    valid = jnp.asarray((tap >= 0) & (tap < k))
    tap_c = np.clip(tap, 0, k - 1)
    d_lo = jnp.where(valid, h0[tap_c], 0.0)
    d_hi = jnp.where(valid, h1[tap_c], 0.0)
    return jnp.concatenate([d_lo, d_hi], axis=1).astype(jnp.float32), out


def fold_bn(w, b, gamma, beta, eps=_EPS_BN):
    # TODO(synk): eval-mode BN folded assuming running_mean=0, running_var=1.
    scale = gamma / jnp.sqrt(1.0 + eps)
    return w * scale[:, None, None], b * scale + beta


class _Slab:
    """Pack many small 2-D constants into one slab; slice with static offsets."""

    def __init__(self):
        self._segs = []

    def add(self, name, arr):
        a = jnp.asarray(arr, jnp.float32)
        assert a.ndim == 2
        self._segs.append((name, a))

    def build(self):
        width = max(int(a.shape[1]) for _, a in self._segs)
        offsets, rows, r = {}, [], 0
        for name, a in self._segs:
            nr, nc = int(a.shape[0]), int(a.shape[1])
            pad_r = (-nr) % 8                    # keep row offsets 8-aligned
            rows.append(jnp.pad(a, ((0, pad_r), (0, width - nc))))
            offsets[name] = (r, nr, nc)
            r += nr + pad_r
        return jnp.concatenate(rows, axis=0), offsets


# ---------------------------------------------------------------------------
# Fused kernel builder.
# ---------------------------------------------------------------------------
def _build_kernel(cfg, woff, voff, TB):
    L1 = cfg["pre"]["l1"]
    L2 = cfg["pre"]["l2"]
    C1 = cfg["pre"]["c1"]

    def kernel(x_ref, sel1_ref, sel2_ref, poolm_ref, wmat_ref, wvec_ref, out_ref):
        def dot(a, b):
            return jnp.dot(a, b, preferred_element_type=jnp.float32)

        def W(name):                              # static slice of the weight slab
            r0, nr, nc = woff[name]
            return wmat_ref[r0:r0 + nr, 0:nc]

        def V(name):                              # static slice of the vector slab
            r0, nr, _ = voff[name]
            return wvec_ref[r0:r0 + nr, :]

        def avg_col(n):
            # (n, 1) averaging vector: length reductions run on the MXU.
            return jnp.full((n, 1), 1.0 / n, dtype=jnp.float32)

        def dwt(x_val, idx):
            o = cfg["dwt"][idx]["lout"]
            res = dot(x_val, W(f"dwt{idx}"))                   # one matmul: (c, 2*o)
            return jnp.concatenate([res[:, 0:o], res[:, o:2 * o]], axis=0)

        def group_norm_relu(y, cout, lout, gam, bet):
            cg = cout // 2                                     # GroupNorm(2, cout)
            a = avg_col(lout)
            ch_m = dot(y, a)                                   # per-channel mean
            ch_m2 = dot(y * y, a)                              # per-channel E[x^2]
            parts = []
            for g in range(2):
                c0, c1 = g * cg, (g + 1) * cg
                m = jnp.mean(ch_m[c0:c1, :], axis=0, keepdims=True)
                m2 = jnp.mean(ch_m2[c0:c1, :], axis=0, keepdims=True)
                inv = jax.lax.rsqrt(m2 - m * m + _EPS_GN)
                parts.append((y[c0:c1, :] - m) * inv * gam[c0:c1, :] + bet[c0:c1, :])
            return jnp.maximum(jnp.concatenate(parts, axis=0), 0.0)

        def sconv(x_val, idx):                                 # conv(k=3,p=0)+GN+ReLU
            s = cfg["sconv"][idx]
            cout, lin = s["cout"], s["lin"]
            lout = lin - 2
            x3 = jnp.concatenate([x_val[:, 0:lout],
                                  x_val[:, 1:1 + lout],
                                  x_val[:, 2:2 + lout]], axis=0)   # (3*cin, lout)
            y = dot(W(f"sc{idx}_w"), x3) + V(f"sc{idx}_b")         # one matmul
            return group_norm_relu(y, cout, lout, V(f"sc{idx}_g"), V(f"sc{idx}_be"))

        def cse(x_val, idx):                                   # A_cSE block
            c, l = cfg["cse"][idx]["c"], cfg["cse"][idx]["l"]
            zc = jnp.zeros((c, 1), jnp.float32)
            xp = jnp.concatenate([zc, x_val, zc], axis=1)      # pad=1 boundary
            x3 = jnp.concatenate([xp[:, 0:l], xp[:, 1:1 + l], xp[:, 2:2 + l]],
                                 axis=0)                       # (3*c, l)
            h = jnp.maximum(dot(W(f"cse{idx}_w0"), x3) + V(f"cse{idx}_b0"), 0.0)
            p = dot(h, avg_col(l))                             # AvgPool1d(full length)
            z = jnp.maximum(dot(W(f"cse{idx}_w1"), p) + V(f"cse{idx}_b1"), 0.0)
            gate = jax.nn.sigmoid(dot(W(f"cse{idx}_w2"), z) + V(f"cse{idx}_b2"))
            return x_val * (gate + 1.0)                        # in_x * s + in_x

        def sample_forward(xv):                                # xv: (1, L)
            # pre_conv stage 1: Conv1d(1->16, k=5, s=2, p=2) + BN + ReLU.
            t1 = dot(xv, sel1_ref[...])                        # (1, 5*L1) one matmul
            w1 = W("pre1")                                     # (16, 5)
            a1 = V("pre1_b")
            for j in range(5):                                 # Cin==1: VPU combine
                a1 = a1 + w1[:, j:j + 1] * t1[:, j * L1:(j + 1) * L1]
            a1 = jnp.maximum(a1, 0.0)                          # (16, L1)
            # pre_conv stage 2: Conv1d(16->32, k=5, s=2, p=2) + BN + ReLU.
            t2 = dot(a1, sel2_ref[...])                        # (16, 5*L2) one matmul
            w2 = W("pre2")                                     # (32, 5*16)
            a2 = V("pre2_b")
            for j in range(5):
                a2 = a2 + dot(w2[:, j * C1:(j + 1) * C1],
                              t2[:, j * L2:(j + 1) * L2])
            a2 = jnp.maximum(a2, 0.0)                          # (32, L2)
            # F.adaptive_avg_pool1d(input_dim).
            cur = dot(a2, poolm_ref[...])                      # (32, input_dim)
            # DWT0 + SConv1.
            cur = sconv(dwt(cur, 0), 0)
            # Five (DWT -> Dropout[id in eval] -> A_cSE -> SConv) stages.
            for i in range(1, 6):
                d = dwt(cur, i)
                cur = sconv(cse(d, i - 1), i)
            # AdaptiveAvgPool1d(1) + Linear(numf*32, 6).
            lout = cfg["sconv"][5]["lin"] - 2
            pool = dot(cur, avg_col(lout))                     # (numf*32, 1)
            return dot(W("fc"), pool) + V("fc_b")              # (6, 1)

        xb = x_ref[0]                                          # (TB, L)
        logits = [sample_forward(xb[s:s + 1, :]) for s in range(TB)]
        out_ref[0] = jnp.concatenate(logits, axis=1)           # one (6, TB) store

    return kernel


# ---------------------------------------------------------------------------
# Forward pass (jit'ed; builds constants + calls the single fused kernel).
# ---------------------------------------------------------------------------
@functools.partial(jax.jit, static_argnames=("input_dim",))
def mwa_cnn_forward(x, P, input_dim=64):
    B, L, c_in = x.shape
    assert c_in == 1
    assert input_dim == 64, "pre_conv emits 32 channels; DWT0 concat -> 64 == input_dim"

    numf = int(P["sconv1"]["w"].shape[0])
    k_dwt = int(P["h0"].shape[0])
    C1 = 16

    # --- batch tiling: TB samples per grid step, >= 2 grid steps when B >= 2
    #     (v7x has 2 TensorCores; v5e/v6e just amortize per-step overhead).
    TB = 1 if B <= 1 else max(1, min(8, B // 2))
    num_steps = -(-B // TB)
    B_pad = num_steps * TB

    x_2d = x[:, :, 0].astype(jnp.float32)          # permute(0,2,1): (B,1,L) -> (B,L)
    if B_pad > B:
        x_2d = jnp.pad(x_2d, ((0, B_pad - B), (0, 0)))
    x_steps = x_2d.reshape(num_steps, TB, L)

    # --- stride-2 / zero-pad selection matrices + adaptive-pool matrix.
    sel1, L1 = _stride2_sel(L)
    sel2, L2 = _stride2_sel(L1)
    sel1_cat = jnp.asarray(np.concatenate([sel1[j] for j in range(5)], axis=1))
    sel2_cat = jnp.asarray(np.concatenate([sel2[j] for j in range(5)], axis=1))
    poolm = jnp.asarray(_pool_mask(L2, input_dim))

    # --- static stage geometry.
    def dwt_out(l):
        return (l + k_dwt - 1) // 2

    dwt_cfg, sconv_cfg, cse_cfg = [], [], []
    ch, ln = 32, input_dim
    o0 = dwt_out(ln)
    dwt_cfg.append(dict(cin=ch, lin=ln, lout=o0))
    sconv_cfg.append(dict(cin=2 * ch, cout=numf, lin=o0))
    ch, ln = numf, o0 - 2
    for _ in range(5):
        o = dwt_out(ln)
        dwt_cfg.append(dict(cin=ch, lin=ln, lout=o))
        ch, ln = 2 * ch, o
        cse_cfg.append(dict(c=ch, l=ln))
        sconv_cfg.append(dict(cin=ch, cout=ch, lin=ln))
        ln -= 2
    cfg = dict(dwt=dwt_cfg, sconv=sconv_cfg, cse=cse_cfg,
               pre=dict(l1=L1, l2=L2, c1=C1))

    # --- weight slab (all 2-D weights) and vector slab (biases / affines).
    wm, wv = _Slab(), _Slab()

    def stack_taps(w):                            # (cout, cin, k) -> (cout, k*cin)
        return jnp.concatenate([w[:, :, j] for j in range(w.shape[2])], axis=1)

    w1f, b1f = fold_bn(P["pre_w1"], P["pre_b1"], P["pre_g1"], P["pre_be1"])
    w2f, b2f = fold_bn(P["pre_w2"], P["pre_b2"], P["pre_g2"], P["pre_be2"])
    wm.add("pre1", w1f[:, 0, :])                  # (16, 5)
    wv.add("pre1_b", b1f[:, None])
    wm.add("pre2", stack_taps(w2f))               # (32, 5*16)
    wv.add("pre2_b", b2f[:, None])

    for si, d in enumerate(dwt_cfg):              # one analysis matrix per stage
        dmat, o = _dwt_matrix(P["h0"], P["h1"], d["lin"])
        assert o == d["lout"]
        wm.add(f"dwt{si}", dmat)                  # (lin, 2*out)

    for si in range(6):                           # SConv_1D: conv(k=3,p=0)+GN+ReLU
        sp = P[f"sconv{si + 1}"]
        wm.add(f"sc{si}_w", stack_taps(sp["w"]))  # (cout, 3*cin)
        wv.add(f"sc{si}_b", sp["b"][:, None])
        wv.add(f"sc{si}_g", sp["gn_g"][:, None])
        wv.add(f"sc{si}_be", sp["gn_b"][:, None])

    for ci in range(5):                           # A_cSE (BN folded)
        cp = P[f"cse{ci + 1}"]
        cw0, cb0 = fold_bn(cp["w0"], cp["b0"], cp["g0"], cp["be0"])
        cw1, cb1 = fold_bn(cp["w1"], cp["b1"], cp["g1"], cp["be1"])
        cw2, cb2 = fold_bn(cp["w2"], cp["b2"], cp["g2"], cp["be2"])
        wm.add(f"cse{ci}_w0", stack_taps(cw0))    # (c, 3*c)
        wv.add(f"cse{ci}_b0", cb0[:, None])
        wm.add(f"cse{ci}_w1", cw1[:, :, 0])       # (c/2, c)
        wv.add(f"cse{ci}_b1", cb1[:, None])
        wm.add(f"cse{ci}_w2", cw2[:, :, 0])       # (c, c/2)
        wv.add(f"cse{ci}_b2", cb2[:, None])

    wm.add("fc", P["fc_w"])                       # (6, numf*32)
    wv.add("fc_b", P["fc_b"][:, None])

    wmat, woff = wm.build()
    wvec, voff = wv.build()

    kernel = _build_kernel(cfg, woff, voff, TB)

    def _const_spec(a):
        return pl.BlockSpec(a.shape, lambda i: (0,) * a.ndim)

    out = pl.pallas_call(
        kernel,
        out_shape=jax.ShapeDtypeStruct((num_steps, 6, TB), jnp.float32),
        grid=(num_steps,),
        in_specs=[
            pl.BlockSpec((1, TB, L), lambda i: (i, 0, 0)),
            _const_spec(sel1_cat),
            _const_spec(sel2_cat),
            _const_spec(poolm),
            _const_spec(wmat),
            _const_spec(wvec),
        ],
        out_specs=pl.BlockSpec((1, 6, TB), lambda i: (i, 0, 0)),
        compiler_params=pltpu.CompilerParams(
            dimension_semantics=("parallel",)),   # v7x: grid steps across both TCs
    )(x_steps, sel1_cat, sel2_cat, poolm, wmat, wvec)

    out = jnp.transpose(out, (0, 2, 1)).reshape(B_pad, 6)
    return out[:B]


# ---------------------------------------------------------------------------
# Deterministic parameter initialization (shapes from MWA_CNN.__init__).
# ---------------------------------------------------------------------------
def init_params(key, input_dim=64, numf=4):
    keys = iter(jax.random.split(key, 256))

    def nk():
        return next(keys)

    def conv(cout, cin, k):
        w = 0.1 * jax.random.normal(nk(), (cout, cin, k), jnp.float32)
        b = 0.05 * jax.random.normal(nk(), (cout,), jnp.float32)
        return w, b

    def affine(c):
        g = 1.0 + 0.1 * jax.random.normal(nk(), (c,), jnp.float32)
        be = 0.05 * jax.random.normal(nk(), (c,), jnp.float32)
        return g, be

    P = {}
    P["pre_w1"], P["pre_b1"] = conv(16, 1, 5)
    P["pre_g1"], P["pre_be1"] = affine(16)
    P["pre_w2"], P["pre_b2"] = conv(32, 16, 5)
    P["pre_g2"], P["pre_be2"] = affine(32)

    # Synthetic deterministic 32-tap QMF pair standing in for db16 (see TODO).
    h0 = jax.random.normal(nk(), (32,), jnp.float32)
    h0 = h0 / jnp.linalg.norm(h0)
    n = jnp.arange(32)
    h1 = ((-1.0) ** n) * h0[::-1]
    P["h0"], P["h1"] = h0, h1

    def sconv_p(cin, cout):
        w, b = conv(cout, cin, 3)
        g, be = affine(cout)
        return dict(w=w, b=b, gn_g=g, gn_b=be)

    P["sconv1"] = sconv_p(input_dim, numf)
    P["sconv2"] = sconv_p(numf * 2, numf * 2)
    P["sconv3"] = sconv_p(numf * 4, numf * 4)
    P["sconv4"] = sconv_p(numf * 8, numf * 8)
    P["sconv5"] = sconv_p(numf * 16, numf * 16)
    P["sconv6"] = sconv_p(numf * 32, numf * 32)

    def cse_p(c):
        w0, b0 = conv(c, c, 3)
        g0, be0 = affine(c)
        w1, b1 = conv(c // 2, c, 1)
        g1, be1 = affine(c // 2)
        w2, b2 = conv(c, c // 2, 1)
        g2, be2 = affine(c)
        return dict(w0=w0, b0=b0, g0=g0, be0=be0,
                    w1=w1, b1=b1, g1=g1, be1=be1,
                    w2=w2, b2=b2, g2=g2, be2=be2)

    P["cse1"] = cse_p(numf * 2)
    P["cse2"] = cse_p(numf * 4)
    P["cse3"] = cse_p(numf * 8)
    P["cse4"] = cse_p(numf * 16)
    P["cse5"] = cse_p(numf * 32)

    P["fc_w"] = 0.1 * jax.random.normal(nk(), (6, numf * 32), jnp.float32)
    P["fc_b"] = 0.05 * jax.random.normal(nk(), (6,), jnp.float32)
    return P


if __name__ == "__main__":
    key = jax.random.PRNGKey(0)
    pkey, xkey = jax.random.split(key)

    INPUT_DIM, NUMF = 64, 4          # module defaults (required for shape consistency)
    B, L = 2, 256                    # small example: (batch, seq, 1)

    params = init_params(pkey, INPUT_DIM, NUMF)
    x = jax.random.normal(xkey, (B, L, 1), jnp.float32)

    out = mwa_cnn_forward(x, params, input_dim=INPUT_DIM)
    out = jax.block_until_ready(out)
    assert out.shape == (B, 6), out.shape
    assert bool(jnp.all(jnp.isfinite(out)))
    print("KERNEL_OK")
</pallas_src>

<mosaic_0001>
module attributes {stable_mosaic.version = 11 : i64} {
  func.func @kernel(%arg0: i32, %arg1: memref<1x1x256xf32, #tpu.memory_space<vmem>>, %arg2: memref<256x640xf32, #tpu.memory_space<vmem>>, %arg3: memref<128x320xf32, #tpu.memory_space<vmem>>, %arg4: memref<64x64xf32, #tpu.memory_space<vmem>>, %arg5: memref<1184x384xf32, #tpu.memory_space<vmem>>, %arg6: memref<1448x1xf32, #tpu.memory_space<vmem>>, %arg7: memref<1x6x1xf32, #tpu.memory_space<vmem>>) attributes {dimension_semantics = [#tpu.dimension_semantics<parallel>], iteration_bounds = array<i64: 2>, scalar_prefetch = 0 : i64, scratch_operands = 0 : i64, tpu.core_type = #tpu.core_type<tc>, window_params = [{transform_indices = @transform_0, window_bounds = array<i64: 1, 1, 256>}, {pipeline_mode = #tpu.pipeline_mode<synchronous>, transform_indices = @transform_1, window_bounds = array<i64: 256, 640>}, {pipeline_mode = #tpu.pipeline_mode<synchronous>, transform_indices = @transform_2, window_bounds = array<i64: 128, 320>}, {pipeline_mode = #tpu.pipeline_mode<synchronous>, transform_indices = @transform_3, window_bounds = array<i64: 64, 64>}, {pipeline_mode = #tpu.pipeline_mode<synchronous>, transform_indices = @transform_4, window_bounds = array<i64: 1184, 384>}, {pipeline_mode = #tpu.pipeline_mode<synchronous>, transform_indices = @transform_5, window_bounds = array<i64: 1448, 1>}, {transform_indices = @transform_6, window_bounds = array<i64: 1, 6, 1>}]} {
    %c0 = arith.constant 0 : index
    %c0_0 = arith.constant 0 : index
    %c0_1 = arith.constant 0 : index
    %0 = vector.load %arg1[%c0, %c0_0, %c0_1] : memref<1x1x256xf32, #tpu.memory_space<vmem>>, vector<1x1x256xf32>
    %1 = vector.shape_cast %0 : vector<1x1x256xf32> to vector<1x256xf32>
    %c0_2 = arith.constant 0 : index
    %c0_3 = arith.constant 0 : index
    %2 = vector.load %arg2[%c0_2, %c0_3] : memref<256x640xf32, #tpu.memory_space<vmem>>, vector<256x640xf32>
    %cst = arith.constant dense<0.000000e+00> : vector<1x640xf32>
    %3 = tpu.matmul %1, %2, %cst {dimension_numbers = #tpu.dot_dimension_numbers<[1], [0], [0], [1], [0, 0, 1, 1], [], []>} : vector<1x256xf32>, vector<256x640xf32>, vector<1x640xf32> -> vector<1x640xf32>
    %c0_4 = arith.constant 0 : index
    %c0_5 = arith.constant 0 : index
    %4 = vector.load %arg5[%c0_4, %c0_5] : memref<1184x384xf32, #tpu.memory_space<vmem>>, vector<16x5xf32>
    %c0_6 = arith.constant 0 : index
    %c0_7 = arith.constant 0 : index
    %5 = vector.load %arg6[%c0_6, %c0_7] : memref<1448x1xf32, #tpu.memory_space<vmem>>, vector<16x1xf32>
    %6 = vector.extract_strided_slice %4 {offsets = [0, 0], sizes = [16, 1], strides = [1, 1]} : vector<16x5xf32> to vector<16x1xf32>
    %7 = vector.extract_strided_slice %3 {offsets = [0, 0], sizes = [1, 128], strides = [1, 1]} : vector<1x640xf32> to vector<1x128xf32>
    %8 = vector.broadcast %6 : vector<16x1xf32> to vector<16x128xf32>
    %9 = vector.broadcast %7 : vector<1x128xf32> to vector<16x128xf32>
    %10 = arith.mulf %8, %9 : vector<16x128xf32>
    %11 = vector.broadcast %5 : vector<16x1xf32> to vector<16x128xf32>
    %12 = arith.addf %11, %10 : vector<16x128xf32>
    %13 = vector.extract_strided_slice %4 {offsets = [0, 1], sizes = [16, 1], strides = [1, 1]} : vector<16x5xf32> to vector<16x1xf32>
    %14 = vector.extract_strided_slice %3 {offsets = [0, 128], sizes = [1, 128], strides = [1, 1]} : vector<1x640xf32> to vector<1x128xf32>
    %15 = vector.broadcast %13 : vector<16x1xf32> to vector<16x128xf32>
    %16 = vector.broadcast %14 : vector<1x128xf32> to vector<16x128xf32>
    %17 = arith.mulf %15, %16 : vector<16x128xf32>
    %18 = arith.addf %12, %17 : vector<16x128xf32>
    %19 = vector.extract_strided_slice %4 {offsets = [0, 2], sizes = [16, 1], strides = [1, 1]} : vector<16x5xf32> to vector<16x1xf32>
    %20 = vector.extract_strided_slice %3 {offsets = [0, 256], sizes = [1, 128], strides = [1, 1]} : vector<1x640xf32> to vector<1x128xf32>
    %21 = vector.broadcast %19 : vector<16x1xf32> to vector<16x128xf32>
    %22 = vector.broadcast %20 : vector<1x128xf32> to vector<16x128xf32>
    %23 = arith.mulf %21, %22 : vector<16x128xf32>
    %24 = arith.addf %18, %23 : vector<16x128xf32>
    %25 = vector.extract_strided_slice %4 {offsets = [0, 3], sizes = [16, 1], strides = [1, 1]} : vector<16x5xf32> to vector<16x1xf32>
    %26 = vector.extract_strided_slice %3 {offsets = [0, 384], sizes = [1, 128], strides = [1, 1]} : vector<1x640xf32> to vector<1x128xf32>
    %27 = vector.broadcast %25 : vector<16x1xf32> to vector<16x128xf32>
    %28 = vector.broadcast %26 : vector<1x128xf32> to vector<16x128xf32>
    %29 = arith.mulf %27, %28 : vector<16x128xf32>
    %30 = arith.addf %24, %29 : vector<16x128xf32>
    %31 = vector.extract_strided_slice %4 {offsets = [0, 4], sizes = [16, 1], strides = [1, 1]} : vector<16x5xf32> to vector<16x1xf32>
    %32 = vector.extract_strided_slice %3 {offsets = [0, 512], sizes = [1, 128], strides = [1, 1]} : vector<1x640xf32> to vector<1x128xf32>
    %33 = vector.broadcast %31 : vector<16x1xf32> to vector<16x128xf32>
    %34 = vector.broadcast %32 : vector<1x128xf32> to vector<16x128xf32>
    %35 = arith.mulf %33, %34 : vector<16x128xf32>
    %36 = arith.addf %30, %35 : vector<16x128xf32>
    %cst_8 = arith.constant 0.000000e+00 : f32
    %37 = vector.broadcast %cst_8 : f32 to vector<16x128xf32>
    %38 = arith.maximumf %36, %37 : vector<16x128xf32>
    %c0_9 = arith.constant 0 : index
    %c0_10 = arith.constant 0 : index
    %39 = vector.load %arg3[%c0_9, %c0_10] : memref<128x320xf32, #tpu.memory_space<vmem>>, vector<128x320xf32>
    %cst_11 = arith.constant dense<0.000000e+00> : vector<16x320xf32>
    %40 = tpu.matmul %38, %39, %cst_11 {dimension_numbers = #tpu.dot_dimension_numbers<[1], [0], [0], [1], [0, 0, 1, 1], [], []>} : vector<16x128xf32>, vector<128x320xf32>, vector<16x320xf32> -> vector<16x320xf32>
    %c16 = arith.constant 16 : index
    %c0_12 = arith.constant 0 : index
    %41 = vector.load %arg5[%c16, %c0_12] : memref<1184x384xf32, #tpu.memory_space<vmem>>, vector<32x80xf32>
    %c16_13 = arith.constant 16 : index
    %c0_14 = arith.constant 0 : index
    %42 = vector.load %arg6[%c16_13, %c0_14] : memref<1448x1xf32, #tpu.memory_space<vmem>>, vector<32x1xf32>
    %43 = vector.extract_strided_slice %41 {offsets = [0, 0], sizes = [32, 16], strides = [1, 1]} : vector<32x80xf32> to vector<32x16xf32>
    %44 = vector.extract_strided_slice %40 {offsets = [0, 0], sizes = [16, 64], strides = [1, 1]} : vector<16x320xf32> to vector<16x64xf32>
    %cst_15 = arith.constant dense<0.000000e+00> : vector<32x64xf32>
    %45 = tpu.matmul %43, %44, %cst_15 {dimension_numbers = #tpu.dot_dimension_numbers<[1], [0], [0], [1], [0, 0, 1, 1], [], []>} : vector<32x16xf32>, vector<16x64xf32>, vector<32x64xf32> -> vector<32x64xf32>
    %46 = vector.broadcast %42 : vector<32x1xf32> to vector<32x64xf32>
    %47 = arith.addf %46, %45 : vector<32x64xf32>
    %48 = vector.extract_strided_slice %41 {offsets = [0, 16], sizes = [32, 16], strides = [1, 1]} : vector<32x80xf32> to vector<32x16xf32>
    %49 = vector.extract_strided_slice %40 {offsets = [0, 64], sizes = [16, 64], strides = [1, 1]} : vector<16x320xf32> to vector<16x64xf32>
    %cst_16 = arith.constant dense<0.000000e+00> : vector<32x64xf32>
    %50 = tpu.matmul %48, %49, %cst_16 {dimension_numbers = #tpu.dot_dimension_numbers<[1], [0], [0], [1], [0, 0, 1, 1], [], []>} : vector<32x16xf32>, vector<16x64xf32>, vector<32x64xf32> -> vector<32x64xf32>
    %51 = arith.addf %47, %50 : vector<32x64xf32>
    %52 = vector.extract_strided_slice %41 {offsets = [0, 32], sizes = [32, 16], strides = [1, 1]} : vector<32x80xf32> to vector<32x16xf32>
    %53 = vector.extract_strided_slice %40 {offsets = [0, 128], sizes = [16, 64], strides = [1, 1]} : vector<16x320xf32> to vector<16x64xf32>
    %cst_17 = arith.constant dense<0.000000e+00> : vector<32x64xf32>
    %54 = tpu.matmul %52, %53, %cst_17 {dimension_numbers = #tpu.dot_dimension_numbers<[1], [0], [0], [1], [0, 0, 1, 1], [], []>} : vector<32x16xf32>, vector<16x64xf32>, vector<32x64xf32> -> vector<32x64xf32>
    %55 = arith.addf %51, %54 : vector<32x64xf32>
    %56 = vector.extract_strided_slice %41 {offsets = [0, 48], sizes = [32, 16], strides = [1, 1]} : vector<32x80xf32> to vector<32x16xf32>
    %57 = vector.extract_strided_slice %40 {offsets = [0, 192], sizes = [16, 64], strides = [1, 1]} : vector<16x320xf32> to vector<16x64xf32>
    %cst_18 = arith.constant dense<0.000000e+00> : vector<32x64xf32>
    %58 = tpu.matmul %56, %57, %cst_18 {dimension_numbers = #tpu.dot_dimension_numbers<[1], [0], [0], [1], [0, 0, 1, 1], [], []>} : vector<32x16xf32>, vector<16x64xf32>, vector<32x64xf32> -> vector<32x64xf32>
    %59 = arith.addf %55, %58 : vector<32x64xf32>
    %60 = vector.extract_strided_slice %41 {offsets = [0, 64], sizes = [32, 16], strides = [1, 1]} : vector<32x80xf32> to vector<32x16xf32>
    %61 = vector.extract_strided_slice %40 {offsets = [0, 256], sizes = [16, 64], strides = [1, 1]} : vector<16x320xf32> to vector<16x64xf32>
    %cst_19 = arith.constant dense<0.000000e+00> : vector<32x64xf32>
    %62 = tpu.matmul %60, %61, %cst_19 {dimension_numbers = #tpu.dot_dimension_numbers<[1], [0], [0], [1], [0, 0, 1, 1], [], []>} : vector<32x16xf32>, vector<16x64xf32>, vector<32x64xf32> -> vector<32x64xf32>
    %63 = arith.addf %59, %62 : vector<32x64xf32>
    %cst_20 = arith.constant 0.000000e+00 : f32
    %64 = vector.broadcast %cst_20 : f32 to vector<32x64xf32>
    %65 = arith.maximumf %63, %64 : vector<32x64xf32>
    %c0_21 = arith.constant 0 : index
    %c0_22 = arith.constant 0 : index
    %66 = vector.load %arg4[%c0_21, %c0_22] : memref<64x64xf32, #tpu.memory_space<vmem>>, vector<64x64xf32>
    %cst_23 = arith.constant dense<0.000000e+00> : vector<32x64xf32>
    %67 = tpu.matmul %65, %66, %cst_23 {dimension_numbers = #tpu.dot_dimension_numbers<[1], [0], [0], [1], [0, 0, 1, 1], [], []>} : vector<32x64xf32>, vector<64x64xf32>, vector<32x64xf32> -> vector<32x64xf32>
    %c48 = arith.constant 48 : index
    %c0_24 = arith.constant 0 : index
    %68 = vector.load %arg5[%c48, %c0_24] : memref<1184x384xf32, #tpu.memory_space<vmem>>, vector<64x94xf32>
    %cst_25 = arith.constant dense<0.000000e+00> : vector<32x94xf32>
    %69 = tpu.matmul %67, %68, %cst_25 {dimension_numbers = #tpu.dot_dimension_numbers<[1], [0], [0], [1], [0, 0, 1, 1], [], []>} : vector<32x64xf32>, vector<64x94xf32>, vector<32x94xf32> -> vector<32x94xf32>
    %70 = vector.extract_strided_slice %69 {offsets = [0, 0], sizes = [32, 47], strides = [1, 1]} : vector<32x94xf32> to vector<32x47xf32>
    %71 = vector.extract_strided_slice %69 {offsets = [0, 47], sizes = [32, 47], strides = [1, 1]} : vector<32x94xf32> to vector<32x47xf32>
    %72 = tpu.concatenate %70, %71 in 0 : vector<32x47xf32>, vector<32x47xf32> -> vector<64x47xf32>
    %73 = vector.extract_strided_slice %72 {offsets = [0, 0], sizes = [64, 45], strides = [1, 1]} : vector<64x47xf32> to vector<64x45xf32>
    %74 = vector.extract_strided_slice %72 {offsets = [0, 1], sizes = [64, 45], strides = [1, 1]} : vector<64x47xf32> to vector<64x45xf32>
    %75 = vector.extract_strided_slice %72 {offsets = [0, 2], sizes = [64, 45], strides = [1, 1]} : vector<64x47xf32> to vector<64x45xf32>
    %76 = tpu.concatenate %73, %74, %75 in 0 : vector<64x45xf32>, vector<64x45xf32>, vector<64x45xf32> -> vector<192x45xf32>
    %c296 = arith.constant 296 : index
    %c0_26 = arith.constant 0 : index
    %77 = vector.load %arg5[%c296, %c0_26] : memref<1184x384xf32, #tpu.memory_space<vmem>>, vector<4x192xf32>
    %cst_27 = arith.constant dense<0.000000e+00> : vector<4x45xf32>
    %78 = tpu.matmul %77, %76, %cst_27 {dimension_numbers = #tpu.dot_dimension_numbers<[1], [0], [0], [1], [0, 0, 1, 1], [], []>} : vector<4x192xf32>, vector<192x45xf32>, vector<4x45xf32> -> vector<4x45xf32>
    %c48_28 = arith.constant 48 : index
    %c0_29 = arith.constant 0 : index
    %79 = vector.load %arg6[%c48_28, %c0_29] : memref<1448x1xf32, #tpu.memory_space<vmem>>, vector<4x1xf32>
    %80 = vector.broadcast %79 : vector<4x1xf32> to vector<4x45xf32>
    %81 = arith.addf %78, %80 : vector<4x45xf32>
    %c56 = arith.constant 56 : index
    %c0_30 = arith.constant 0 : index
    %82 = vector.load %arg6[%c56, %c0_30] : memref<1448x1xf32, #tpu.memory_space<vmem>>, vector<4x1xf32>
    %c64 = arith.constant 64 : index
    %c0_31 = arith.constant 0 : index
    %83 = vector.load %arg6[%c64, %c0_31] : memref<1448x1xf32, #tpu.memory_space<vmem>>, vector<4x1xf32>
    %cst_32 = arith.constant 0.0222222228 : f32
    %84 = vector.broadcast %cst_32 : f32 to vector<45x1xf32>
    %cst_33 = arith.constant dense<0.000000e+00> : vector<4x1xf32>
    %85 = tpu.matmul %81, %84, %cst_33 {dimension_numbers = #tpu.dot_dimension_numbers<[1], [0], [0], [1], [0, 0, 1, 1], [], []>} : vector<4x45xf32>, vector<45x1xf32>, vector<4x1xf32> -> vector<4x1xf32>
    %86 = arith.mulf %81, %81 : vector<4x45xf32>
    %cst_34 = arith.constant dense<0.000000e+00> : vector<4x1xf32>
    %87 = tpu.matmul %86, %84, %cst_34 {dimension_numbers = #tpu.dot_dimension_numbers<[1], [0], [0], [1], [0, 0, 1, 1], [], []>} : vector<4x45xf32>, vector<45x1xf32>, vector<4x1xf32> -> vector<4x1xf32>
    %88 = vector.extract_strided_slice %85 {offsets = [0, 0], sizes = [2, 1], strides = [1, 1]} : vector<4x1xf32> to vector<2x1xf32>
    %cst_35 = arith.constant dense<0.000000e+00> : vector<1xf32>
    %89 = vector.multi_reduction <add>, %88, %cst_35 [0] : vector<2x1xf32> to vector<1xf32>
    %90 = vector.shape_cast %89 : vector<1xf32> to vector<1x1xf32>
    %cst_36 = arith.constant 2.000000e+00 : f32
    %91 = vector.broadcast %cst_36 : f32 to vector<1x1xf32>
    %92 = arith.divf %90, %91 : vector<1x1xf32>
    %93 = vector.extract_strided_slice %87 {offsets = [0, 0], sizes = [2, 1], strides = [1, 1]} : vector<4x1xf32> to vector<2x1xf32>
    %cst_37 = arith.constant dense<0.000000e+00> : vector<1xf32>
    %94 = vector.multi_reduction <add>, %93, %cst_37 [0] : vector<2x1xf32> to vector<1xf32>
    %95 = vector.shape_cast %94 : vector<1xf32> to vector<1x1xf32>
    %cst_38 = arith.constant 2.000000e+00 : f32
    %96 = vector.broadcast %cst_38 : f32 to vector<1x1xf32>
    %97 = arith.divf %95, %96 : vector<1x1xf32>
    %98 = arith.mulf %92, %92 : vector<1x1xf32>
    %99 = arith.subf %97, %98 : vector<1x1xf32>
    %cst_39 = arith.constant 9.99999974E-6 : f32
    %100 = vector.broadcast %cst_39 : f32 to vector<1x1xf32>
    %101 = arith.addf %99, %100 : vector<1x1xf32>
    %102 = math.rsqrt %101 : vector<1x1xf32>
    %103 = vector.extract_strided_slice %81 {offsets = [0, 0], sizes = [2, 45], strides = [1, 1]} : vector<4x45xf32> to vector<2x45xf32>
    %104 = vector.broadcast %92 : vector<1x1xf32> to vector<2x45xf32>
    %105 = arith.subf %103, %104 : vector<2x45xf32>
    %106 = vector.broadcast %102 : vector<1x1xf32> to vector<2x45xf32>
    %107 = arith.mulf %105, %106 : vector<2x45xf32>
    %108 = vector.extract_strided_slice %82 {offsets = [0, 0], sizes = [2, 1], strides = [1, 1]} : vector<4x1xf32> to vector<2x1xf32>
    %109 = vector.broadcast %108 : vector<2x1xf32> to vector<2x45xf32>
    %110 = arith.mulf %107, %109 : vector<2x45xf32>
    %111 = vector.extract_strided_slice %83 {offsets = [0, 0], sizes = [2, 1], strides = [1, 1]} : vector<4x1xf32> to vector<2x1xf32>
    %112 = vector.broadcast %111 : vector<2x1xf32> to vector<2x45xf32>
    %113 = arith.addf %110, %112 : vector<2x45xf32>
    %114 = vector.extract_strided_slice %85 {offsets = [2, 0], sizes = [2, 1], strides = [1, 1]} : vector<4x1xf32> to vector<2x1xf32>
    %cst_40 = arith.constant dense<0.000000e+00> : vector<1xf32>
    %115 = vector.multi_reduction <add>, %114, %cst_40 [0] : vector<2x1xf32> to vector<1xf32>
    %116 = vector.shape_cast %115 : vector<1xf32> to vector<1x1xf32>
    %cst_41 = arith.constant 2.000000e+00 : f32
    %117 = vector.broadcast %cst_41 : f32 to vector<1x1xf32>
    %118 = arith.divf %116, %117 : vector<1x1xf32>
    %119 = vector.extract_strided_slice %87 {offsets = [2, 0], sizes = [2, 1], strides = [1, 1]} : vector<4x1xf32> to vector<2x1xf32>
    %cst_42 = arith.constant dense<0.000000e+00> : vector<1xf32>
    %120 = vector.multi_reduction <add>, %119, %cst_42 [0] : vector<2x1xf32> to vector<1xf32>
    %121 = vector.shape_cast %120 : vector<1xf32> to vector<1x1xf32>
    %cst_43 = arith.constant 2.000000e+00 : f32
    %122 = vector.broadcast %cst_43 : f32 to vector<1x1xf32>
    %123 = arith.divf %121, %122 : vector<1x1xf32>
    %124 = arith.mulf %118, %118 : vector<1x1xf32>
    %125 = arith.subf %123, %124 : vector<1x1xf32>
    %cst_44 = arith.constant 9.99999974E-6 : f32
    %126 = vector.broadcast %cst_44 : f32 to vector<1x1xf32>
    %127 = arith.addf %125, %126 : vector<1x1xf32>
    %128 = math.rsqrt %127 : vector<1x1xf32>
    %129 = vector.extract_strided_slice %81 {offsets = [2, 0], sizes = [2, 45], strides = [1, 1]} : vector<4x45xf32> to vector<2x45xf32>
    %130 = vector.broadcast %118 : vector<1x1xf32> to vector<2x45xf32>
    %131 = arith.subf %129, %130 : vector<2x45xf32>
    %132 = vector.broadcast %128 : vector<1x1xf32> to vector<2x45xf32>
    %133 = arith.mulf %131, %132 : vector<2x45xf32>
    %134 = vector.extract_strided_slice %82 {offsets = [2, 0], sizes = [2, 1], strides = [1, 1]} : vector<4x1xf32> to vector<2x1xf32>
    %135 = vector.broadcast %134 : vector<2x1xf32> to vector<2x45xf32>
    %136 = arith.mulf %133, %135 : vector<2x45xf32>
    %137 = vector.extract_strided_slice %83 {offsets = [2, 0], sizes = [2, 1], strides = [1, 1]} : vector<4x1xf32> to vector<2x1xf32>
    %138 = vector.broadcast %137 : vector<2x1xf32> to vector<2x45xf32>
    %139 = arith.addf %136, %138 : vector<2x45xf32>
    %140 = tpu.concatenate %113, %139 in 0 : vector<2x45xf32>, vector<2x45xf32> -> vector<4x45xf32>
    %cst_45 = arith.constant 0.000000e+00 : f32
    %141 = vector.broadcast %cst_45 : f32 to vector<4x45xf32>
    %142 = arith.maximumf %140, %141 : vector<4x45xf32>
    %c112 = arith.constant 112 : index
    %c0_46 = arith.constant 0 : index
    %143 = vector.load %arg5[%c112, %c0_46] : memref<1184x384xf32, #tpu.memory_space<vmem>>, vector<45x76xf32>
    %cst_47 = arith.constant dense<0.000000e+00> : vector<4x76xf32>
    %144 = tpu.matmul %142, %143, %cst_47 {dimension_numbers = #tpu.dot_dimension_numbers<[1], [0], [0], [1], [0, 0, 1, 1], [], []>} : vector<4x45xf32>, vector<45x76xf32>, vector<4x76xf32> -> vector<4x76xf32>
    %145 = vector.extract_strided_slice %144 {offsets = [0, 0], sizes = [4, 38], strides = [1, 1]} : vector<4x76xf32> to vector<4x38xf32>
    %146 = vector.extract_strided_slice %144 {offsets = [0, 38], sizes = [4, 38], strides = [1, 1]} : vector<4x76xf32> to vector<4x38xf32>
    %147 = tpu.concatenate %145, %146 in 0 : vector<4x38xf32>, vector<4x38xf32> -> vector<8x38xf32>
    %cst_48 = arith.constant 0.000000e+00 : f32
    %148 = vector.broadcast %cst_48 : f32 to vector<8x1xf32>
    %149 = tpu.concatenate %148, %147, %148 in 1 : vector<8x1xf32>, vector<8x38xf32>, vector<8x1xf32> -> vector<8x40xf32>
    %150 = vector.extract_strided_slice %149 {offsets = [0, 0], sizes = [8, 38], strides = [1, 1]} : vector<8x40xf32> to vector<8x38xf32>
    %151 = vector.extract_strided_slice %149 {offsets = [0, 1], sizes = [8, 38], strides = [1, 1]} : vector<8x40xf32> to vector<8x38xf32>
    %152 = vector.extract_strided_slice %149 {offsets = [0, 2], sizes = [8, 38], strides = [1, 1]} : vector<8x40xf32> to vector<8x38xf32>
    %153 = tpu.concatenate %150, %151, %152 in 0 : vector<8x38xf32>, vector<8x38xf32>, vector<8x38xf32> -> vector<24x38xf32>
    %c552 = arith.constant 552 : index
    %c0_49 = arith.constant 0 : index
    %154 = vector.load %arg5[%c552, %c0_49] : memref<1184x384xf32, #tpu.memory_space<vmem>>, vector<8x24xf32>
    %cst_50 = arith.constant dense<0.000000e+00> : vector<8x38xf32>
    %155 = tpu.matmul %154, %153, %cst_50 {dimension_numbers = #tpu.dot_dimension_numbers<[1], [0], [0], [1], [0, 0, 1, 1], [], []>} : vector<8x24xf32>, vector<24x38xf32>, vector<8x38xf32> -> vector<8x38xf32>
    %c816 = arith.constant 816 : index
    %c0_51 = arith.constant 0 : index
    %156 = vector.load %arg6[%c816, %c0_51] : memref<1448x1xf32, #tpu.memory_space<vmem>>, vector<8x1xf32>
    %157 = vector.broadcast %156 : vector<8x1xf32> to vector<8x38xf32>
    %158 = arith.addf %155, %157 : vector<8x38xf32>
    %cst_52 = arith.constant 0.000000e+00 : f32
    %159 = vector.broadcast %cst_52 : f32 to vector<8x38xf32>
    %160 = arith.maximumf %158, %159 : vector<8x38xf32>
    %cst_53 = arith.constant 0.0263157897 : f32
    %161 = vector.broadcast %cst_53 : f32 to vector<38x1xf32>
    %cst_54 = arith.constant dense<0.000000e+00> : vector<8x1xf32>
    %162 = tpu.matmul %160, %161, %cst_54 {dimension_numbers = #tpu.dot_dimension_numbers<[1], [0], [0], [1], [0, 0, 1, 1], [], []>} : vector<8x38xf32>, vector<38x1xf32>, vector<8x1xf32> -> vector<8x1xf32>
    %c560 = arith.constant 560 : index
    %c0_55 = arith.constant 0 : index
    %163 = vector.load %arg5[%c560, %c0_55] : memref<1184x384xf32, #tpu.memory_space<vmem>>, vector<4x8xf32>
    %cst_56 = arith.constant dense<0.000000e+00> : vector<4x1xf32>
    %164 = tpu.matmul %163, %162, %cst_56 {dimension_numbers = #tpu.dot_dimension_numbers<[1], [0], [0], [1], [0, 0, 1, 1], [], []>} : vector<4x8xf32>, vector<8x1xf32>, vector<4x1xf32> -> vector<4x1xf32>
    %c824 = arith.constant 824 : index
    %c0_57 = arith.constant 0 : index
    %165 = vector.load %arg6[%c824, %c0_57] : memref<1448x1xf32, #tpu.memory_space<vmem>>, vector<4x1xf32>
    %166 = arith.addf %164, %165 : vector<4x1xf32>
    %cst_58 = arith.constant 0.000000e+00 : f32
    %167 = vector.broadcast %cst_58 : f32 to vector<4x1xf32>
    %168 = arith.maximumf %166, %167 : vector<4x1xf32>
    %c568 = arith.constant 568 : index
    %c0_59 = arith.constant 0 : index
    %169 = vector.load %arg5[%c568, %c0_59] : memref<1184x384xf32, #tpu.memory_space<vmem>>, vector<8x4xf32>
    %cst_60 = arith.constant dense<0.000000e+00> : vector<8x1xf32>
    %170 = tpu.matmul %169, %168, %cst_60 {dimension_numbers = #tpu.dot_dimension_numbers<[1], [0], [0], [1], [0, 0, 1, 1], [], []>} : vector<8x4xf32>, vector<4x1xf32>, vector<8x1xf32> -> vector<8x1xf32>
    %c832 = arith.constant 832 : index
    %c0_61 = arith.constant 0 : index
    %171 = vector.load %arg6[%c832, %c0_61] : memref<1448x1xf32, #tpu.memory_space<vmem>>, vector<8x1xf32>
    %172 = arith.addf %170, %171 : vector<8x1xf32>
    %173 = arith.negf %172 : vector<8x1xf32>
    %174 = math.exp %173 : vector<8x1xf32>
    %cst_62 = arith.constant 1.000000e+00 : f32
    %175 = vector.broadcast %cst_62 : f32 to vector<8x1xf32>
    %176 = arith.addf %175, %174 : vector<8x1xf32>
    %177 = arith.divf %175, %176 : vector<8x1xf32>
    %cst_63 = arith.constant 1.000000e+00 : f32
    %178 = vector.broadcast %cst_63 : f32 to vector<8x1xf32>
    %179 = arith.addf %177, %178 : vector<8x1xf32>
    %180 = vector.broadcast %179 : vector<8x1xf32> to vector<8x38xf32>
    %181 = arith.mulf %147, %180 : vector<8x38xf32>
    %182 = vector.extract_strided_slice %181 {offsets = [0, 0], sizes = [8, 36], strides = [1, 1]} : vector<8x38xf32> to vector<8x36xf32>
    %183 = vector.extract_strided_slice %181 {offsets = [0, 1], sizes = [8, 36], strides = [1, 1]} : vector<8x38xf32> to vector<8x36xf32>
    %184 = vector.extract_strided_slice %181 {offsets = [0, 2], sizes = [8, 36], strides = [1, 1]} : vector<8x38xf32> to vector<8x36xf32>
    %185 = tpu.concatenate %182, %183, %184 in 0 : vector<8x36xf32>, vector<8x36xf32>, vector<8x36xf32> -> vector<24x36xf32>
    %c304 = arith.constant 304 : index
    %c0_64 = arith.constant 0 : index
    %186 = vector.load %arg5[%c304, %c0_64] : memref<1184x384xf32, #tpu.memory_space<vmem>>, vector<8x24xf32>
    %cst_65 = arith.constant dense<0.000000e+00> : vector<8x36xf32>
    %187 = tpu.matmul %186, %185, %cst_65 {dimension_numbers = #tpu.dot_dimension_numbers<[1], [0], [0], [1], [0, 0, 1, 1], [], []>} : vector<8x24xf32>, vector<24x36xf32>, vector<8x36xf32> -> vector<8x36xf32>
    %c72 = arith.constant 72 : index
    %c0_66 = arith.constant 0 : index
    %188 = vector.load %arg6[%c72, %c0_66] : memref<1448x1xf32, #tpu.memory_space<vmem>>, vector<8x1xf32>
    %189 = vector.broadcast %188 : vector<8x1xf32> to vector<8x36xf32>
    %190 = arith.addf %187, %189 : vector<8x36xf32>
    %c80 = arith.constant 80 : index
    %c0_67 = arith.constant 0 : index
    %191 = vector.load %arg6[%c80, %c0_67] : memref<1448x1xf32, #tpu.memory_space<vmem>>, vector<8x1xf32>
    %c88 = arith.constant 88 : index
    %c0_68 = arith.constant 0 : index
    %192 = vector.load %arg6[%c88, %c0_68] : memref<1448x1xf32, #tpu.memory_space<vmem>>, vector<8x1xf32>
    %cst_69 = arith.constant 0.027777778 : f32
    %193 = vector.broadcast %cst_69 : f32 to vector<36x1xf32>
    %cst_70 = arith.constant dense<0.000000e+00> : vector<8x1xf32>
    %194 = tpu.matmul %190, %193, %cst_70 {dimension_numbers = #tpu.dot_dimension_numbers<[1], [0], [0], [1], [0, 0, 1, 1], [], []>} : vector<8x36xf32>, vector<36x1xf32>, vector<8x1xf32> -> vector<8x1xf32>
    %195 = arith.mulf %190, %190 : vector<8x36xf32>
    %cst_71 = arith.constant dense<0.000000e+00> : vector<8x1xf32>
    %196 = tpu.matmul %195, %193, %cst_71 {dimension_numbers = #tpu.dot_dimension_numbers<[1], [0], [0], [1], [0, 0, 1, 1], [], []>} : vector<8x36xf32>, vector<36x1xf32>, vector<8x1xf32> -> vector<8x1xf32>
    %197 = vector.extract_strided_slice %194 {offsets = [0, 0], sizes = [4, 1], strides = [1, 1]} : vector<8x1xf32> to vector<4x1xf32>
    %cst_72 = arith.constant dense<0.000000e+00> : vector<1xf32>
    %198 = vector.multi_reduction <add>, %197, %cst_72 [0] : vector<4x1xf32> to vector<1xf32>
    %199 = vector.shape_cast %198 : vector<1xf32> to vector<1x1xf32>
    %cst_73 = arith.constant 4.000000e+00 : f32
    %200 = vector.broadcast %cst_73 : f32 to vector<1x1xf32>
    %201 = arith.divf %199, %200 : vector<1x1xf32>
    %202 = vector.extract_strided_slice %196 {offsets = [0, 0], sizes = [4, 1], strides = [1, 1]} : vector<8x1xf32> to vector<4x1xf32>
    %cst_74 = arith.constant dense<0.000000e+00> : vector<1xf32>
    %203 = vector.multi_reduction <add>, %202, %cst_74 [0] : vector<4x1xf32> to vector<1xf32>
    %204 = vector.shape_cast %203 : vector<1xf32> to vector<1x1xf32>
    %cst_75 = arith.constant 4.000000e+00 : f32
    %205 = vector.broadcast %cst_75 : f32 to vector<1x1xf32>
    %206 = arith.divf %204, %205 : vector<1x1xf32>
    %207 = arith.mulf %201, %201 : vector<1x1xf32>
    %208 = arith.subf %206, %207 : vector<1x1xf32>
    %cst_76 = arith.constant 9.99999974E-6 : f32
    %209 = vector.broadcast %cst_76 : f32 to vector<1x1xf32>
    %210 = arith.addf %208, %209 : vector<1x1xf32>
    %211 = math.rsqrt %210 : vector<1x1xf32>
    %212 = vector.extract_strided_slice %190 {offsets = [0, 0], sizes = [4, 36], strides = [1, 1]} : vector<8x36xf32> to vector<4x36xf32>
    %213 = vector.broadcast %201 : vector<1x1xf32> to vector<4x36xf32>
    %214 = arith.subf %212, %213 : vector<4x36xf32>
    %215 = vector.broadcast %211 : vector<1x1xf32> to vector<4x36xf32>
    %216 = arith.mulf %214, %215 : vector<4x36xf32>
    %217 = vector.extract_strided_slice %191 {offsets = [0, 0], sizes = [4, 1], strides = [1, 1]} : vector<8x1xf32> to vector<4x1xf32>
    %218 = vector.broadcast %217 : vector<4x1xf32> to vector<4x36xf32>
    %219 = arith.mulf %216, %218 : vector<4x36xf32>
    %220 = vector.extract_strided_slice %192 {offsets = [0, 0], sizes = [4, 1], strides = [1, 1]} : vector<8x1xf32> to vector<4x1xf32>
    %221 = vector.broadcast %220 : vector<4x1xf32> to vector<4x36xf32>
    %222 = arith.addf %219, %221 : vector<4x36xf32>
    %223 = vector.extract_strided_slice %194 {offsets = [4, 0], sizes = [4, 1], strides = [1, 1]} : vector<8x1xf32> to vector<4x1xf32>
    %cst_77 = arith.constant dense<0.000000e+00> : vector<1xf32>
    %224 = vector.multi_reduction <add>, %223, %cst_77 [0] : vector<4x1xf32> to vector<1xf32>
    %225 = vector.shape_cast %224 : vector<1xf32> to vector<1x1xf32>
    %cst_78 = arith.constant 4.000000e+00 : f32
    %226 = vector.broadcast %cst_78 : f32 to vector<1x1xf32>
    %227 = arith.divf %225, %226 : vector<1x1xf32>
    %228 = vector.extract_strided_slice %196 {offsets = [4, 0], sizes = [4, 1], strides = [1, 1]} : vector<8x1xf32> to vector<4x1xf32>
    %cst_79 = arith.constant dense<0.000000e+00> : vector<1xf32>
    %229 = vector.multi_reduction <add>, %228, %cst_79 [0] : vector<4x1xf32> to vector<1xf32>
    %230 = vector.shape_cast %229 : vector<1xf32> to vector<1x1xf32>
    %cst_80 = arith.constant 4.000000e+00 : f32
    %231 = vector.broadcast %cst_80 : f32 to vector<1x1xf32>
    %232 = arith.divf %230, %231 : vector<1x1xf32>
    %233 = arith.mulf %227, %227 : vector<1x1xf32>
    %234 = arith.subf %232, %233 : vector<1x1xf32>
    %cst_81 = arith.constant 9.99999974E-6 : f32
    %235 = vector.broadcast %cst_81 : f32 to vector<1x1xf32>
    %236 = arith.addf %234, %235 : vector<1x1xf32>
    %237 = math.rsqrt %236 : vector<1x1xf32>
    %238 = vector.extract_strided_slice %190 {offsets = [4, 0], sizes = [4, 36], strides = [1, 1]} : vector<8x36xf32> to vector<4x36xf32>
    %239 = vector.broadcast %227 : vector<1x1xf32> to vector<4x36xf32>
    %240 = arith.subf %238, %239 : vector<4x36xf32>
    %241 = vector.broadcast %237 : vector<1x1xf32> to vector<4x36xf32>
    %242 = arith.mulf %240, %241 : vector<4x36xf32>
    %243 = vector.extract_strided_slice %191 {offsets = [4, 0], sizes = [4, 1], strides = [1, 1]} : vector<8x1xf32> to vector<4x1xf32>
    %244 = vector.broadcast %243 : vector<4x1xf32> to vector<4x36xf32>
    %245 = arith.mulf %242, %244 : vector<4x36xf32>
    %246 = vector.extract_strided_slice %192 {offsets = [4, 0], sizes = [4, 1], strides = [1, 1]} : vector<8x1xf32> to vector<4x1xf32>
    %247 = vector.broadcast %246 : vector<4x1xf32> to vector<4x36xf32>
    %248 = arith.addf %245, %247 : vector<4x36xf32>
    %249 = tpu.concatenate %222, %248 in 0 : vector<4x36xf32>, vector<4x36xf32> -> vector<8x36xf32>
    %cst_82 = arith.constant 0.000000e+00 : f32
    %250 = vector.broadcast %cst_82 : f32 to vector<8x36xf32>
    %251 = arith.maximumf %249, %250 : vector<8x36xf32>
    %c160 = arith.constant 160 : index
    %c0_83 = arith.constant 0 : index
    %252 = vector.load %arg5[%c160, %c0_83] : memref<1184x384xf32, #tpu.memory_space<vmem>>, vector<36x66xf32>
    %cst_84 = arith.constant dense<0.000000e+00> : vector<8x66xf32>
    %253 = tpu.matmul %251, %252, %cst_84 {dimension_numbers = #tpu.dot_dimension_numbers<[1], [0], [0], [1], [0, 0, 1, 1], [], []>} : vector<8x36xf32>, vector<36x66xf32>, vector<8x66xf32> -> vector<8x66xf32>
    %254 = vector.extract_strided_slice %253 {offsets = [0, 0], sizes = [8, 33], strides = [1, 1]} : vector<8x66xf32> to vector<8x33xf32>
    %255 = vector.extract_strided_slice %253 {offsets = [0, 33], sizes = [8, 33], strides = [1, 1]} : vector<8x66xf32> to vector<8x33xf32>
    %256 = tpu.concatenate %254, %255 in 0 : vector<8x33xf32>, vector<8x33xf32> -> vector<16x33xf32>
    %cst_85 = arith.constant 0.000000e+00 : f32
    %257 = vector.broadcast %cst_85 : f32 to vector<16x1xf32>
    %258 = tpu.concatenate %257, %256, %257 in 1 : vector<16x1xf32>, vector<16x33xf32>, vector<16x1xf32> -> vector<16x35xf32>
    %259 = vector.extract_strided_slice %258 {offsets = [0, 0], sizes = [16, 33], strides = [1, 1]} : vector<16x35xf32> to vector<16x33xf32>
    %260 = vector.extract_strided_slice %258 {offsets = [0, 1], sizes = [16, 33], strides = [1, 1]} : vector<16x35xf32> to vector<16x33xf32>
    %261 = vector.extract_strided_slice %258 {offsets = [0, 2], sizes = [16, 33], strides = [1, 1]} : vector<16x35xf32> to vector<16x33xf32>
    %262 = tpu.concatenate %259, %260, %261 in 0 : vector<16x33xf32>, vector<16x33xf32>, vector<16x33xf32> -> vector<48x33xf32>
    %c576 = arith.constant 576 : index
    %c0_86 = arith.constant 0 : index
    %263 = vector.load %arg5[%c576, %c0_86] : memref<1184x384xf32, #tpu.memory_space<vmem>>, vector<16x48xf32>
    %cst_87 = arith.constant dense<0.000000e+00> : vector<16x33xf32>
    %264 = tpu.matmul %263, %262, %cst_87 {dimension_numbers = #tpu.dot_dimension_numbers<[1], [0], [0], [1], [0, 0, 1, 1], [], []>} : vector<16x48xf32>, vector<48x33xf32>, vector<16x33xf32> -> vector<16x33xf32>
    %c840 = arith.constant 840 : index
    %c0_88 = arith.constant 0 : index
    %265 = vector.load %arg6[%c840, %c0_88] : memref<1448x1xf32, #tpu.memory_space<vmem>>, vector<16x1xf32>
    %266 = vector.broadcast %265 : vector<16x1xf32> to vector<16x33xf32>
    %267 = arith.addf %264, %266 : vector<16x33xf32>
    %cst_89 = arith.constant 0.000000e+00 : f32
    %268 = vector.broadcast %cst_89 : f32 to vector<16x33xf32>
    %269 = arith.maximumf %267, %268 : vector<16x33xf32>
    %cst_90 = arith.constant 0.0303030312 : f32
    %270 = vector.broadcast %cst_90 : f32 to vector<33x1xf32>
    %cst_91 = arith.constant dense<0.000000e+00> : vector<16x1xf32>
    %271 = tpu.matmul %269, %270, %cst_91 {dimension_numbers = #tpu.dot_dimension_numbers<[1], [0], [0], [1], [0, 0, 1, 1], [], []>} : vector<16x33xf32>, vector<33x1xf32>, vector<16x1xf32> -> vector<16x1xf32>
    %c592 = arith.constant 592 : index
    %c0_92 = arith.constant 0 : index
    %272 = vector.load %arg5[%c592, %c0_92] : memref<1184x384xf32, #tpu.memory_space<vmem>>, vector<8x16xf32>
    %cst_93 = arith.constant dense<0.000000e+00> : vector<8x1xf32>
    %273 = tpu.matmul %272, %271, %cst_93 {dimension_numbers = #tpu.dot_dimension_numbers<[1], [0], [0], [1], [0, 0, 1, 1], [], []>} : vector<8x16xf32>, vector<16x1xf32>, vector<8x1xf32> -> vector<8x1xf32>
    %c856 = arith.constant 856 : index
    %c0_94 = arith.constant 0 : index
    %274 = vector.load %arg6[%c856, %c0_94] : memref<1448x1xf32, #tpu.memory_space<vmem>>, vector<8x1xf32>
    %275 = arith.addf %273, %274 : vector<8x1xf32>
    %cst_95 = arith.constant 0.000000e+00 : f32
    %276 = vector.broadcast %cst_95 : f32 to vector<8x1xf32>
    %277 = arith.maximumf %275, %276 : vector<8x1xf32>
    %c600 = arith.constant 600 : index
    %c0_96 = arith.constant 0 : index
    %278 = vector.load %arg5[%c600, %c0_96] : memref<1184x384xf32, #tpu.memory_space<vmem>>, vector<16x8xf32>
    %cst_97 = arith.constant dense<0.000000e+00> : vector<16x1xf32>
    %279 = tpu.matmul %278, %277, %cst_97 {dimension_numbers = #tpu.dot_dimension_numbers<[1], [0], [0], [1], [0, 0, 1, 1], [], []>} : vector<16x8xf32>, vector<8x1xf32>, vector<16x1xf32> -> vector<16x1xf32>
    %c864 = arith.constant 864 : index
    %c0_98 = arith.constant 0 : index
    %280 = vector.load %arg6[%c864, %c0_98] : memref<1448x1xf32, #tpu.memory_space<vmem>>, vector<16x1xf32>
    %281 = arith.addf %279, %280 : vector<16x1xf32>
    %282 = arith.negf %281 : vector<16x1xf32>
    %283 = math.exp %282 : vector<16x1xf32>
    %cst_99 = arith.constant 1.000000e+00 : f32
    %284 = vector.broadcast %cst_99 : f32 to vector<16x1xf32>
    %285 = arith.addf %284, %283 : vector<16x1xf32>
    %286 = arith.divf %284, %285 : vector<16x1xf32>
    %cst_100 = arith.constant 1.000000e+00 : f32
    %287 = vector.broadcast %cst_100 : f32 to vector<16x1xf32>
    %288 = arith.addf %286, %287 : vector<16x1xf32>
    %289 = vector.broadcast %288 : vector<16x1xf32> to vector<16x33xf32>
    %290 = arith.mulf %256, %289 : vector<16x33xf32>
    %291 = vector.extract_strided_slice %290 {offsets = [0, 0], sizes = [16, 31], strides = [1, 1]} : vector<16x33xf32> to vector<16x31xf32>
    %292 = vector.extract_strided_slice %290 {offsets = [0, 1], sizes = [16, 31], strides = [1, 1]} : vector<16x33xf32> to vector<16x31xf32>
    %293 = vector.extract_strided_slice %290 {offsets = [0, 2], sizes = [16, 31], strides = [1, 1]} : vector<16x33xf32> to vector<16x31xf32>
    %294 = tpu.concatenate %291, %292, %293 in 0 : vector<16x31xf32>, vector<16x31xf32>, vector<16x31xf32> -> vector<48x31xf32>
    %c312 = arith.constant 312 : index
    %c0_101 = arith.constant 0 : index
    %295 = vector.load %arg5[%c312, %c0_101] : memref<1184x384xf32, #tpu.memory_space<vmem>>, vector<16x48xf32>
    %cst_102 = arith.constant dense<0.000000e+00> : vector<16x31xf32>
    %296 = tpu.matmul %295, %294, %cst_102 {dimension_numbers = #tpu.dot_dimension_numbers<[1], [0], [0], [1], [0, 0, 1, 1], [], []>} : vector<16x48xf32>, vector<48x31xf32>, vector<16x31xf32> -> vector<16x31xf32>
    %c96 = arith.constant 96 : index
    %c0_103 = arith.constant 0 : index
    %297 = vector.load %arg6[%c96, %c0_103] : memref<1448x1xf32, #tpu.memory_space<vmem>>, vector<16x1xf32>
    %298 = vector.broadcast %297 : vector<16x1xf32> to vector<16x31xf32>
    %299 = arith.addf %296, %298 : vector<16x31xf32>
    %c112_104 = arith.constant 112 : index
    %c0_105 = arith.constant 0 : index
    %300 = vector.load %arg6[%c112_104, %c0_105] : memref<1448x1xf32, #tpu.memory_space<vmem>>, vector<16x1xf32>
    %c128 = arith.constant 128 : index
    %c0_106 = arith.constant 0 : index
    %301 = vector.load %arg6[%c128, %c0_106] : memref<1448x1xf32, #tpu.memory_space<vmem>>, vector<16x1xf32>
    %cst_107 = arith.constant 0.0322580636 : f32
    %302 = vector.broadcast %cst_107 : f32 to vector<31x1xf32>
    %cst_108 = arith.constant dense<0.000000e+00> : vector<16x1xf32>
    %303 = tpu.matmul %299, %302, %cst_108 {dimension_numbers = #tpu.dot_dimension_numbers<[1], [0], [0], [1], [0, 0, 1, 1], [], []>} : vector<16x31xf32>, vector<31x1xf32>, vector<16x1xf32> -> vector<16x1xf32>
    %304 = arith.mulf %299, %299 : vector<16x31xf32>
    %cst_109 = arith.constant dense<0.000000e+00> : vector<16x1xf32>
    %305 = tpu.matmul %304, %302, %cst_109 {dimension_numbers = #tpu.dot_dimension_numbers<[1], [0], [0], [1], [0, 0, 1, 1], [], []>} : vector<16x31xf32>, vector<31x1xf32>, vector<16x1xf32> -> vector<16x1xf32>
    %306 = vector.extract_strided_slice %303 {offsets = [0, 0], sizes = [8, 1], strides = [1, 1]} : vector<16x1xf32> to vector<8x1xf32>
    %cst_110 = arith.constant dense<0.000000e+00> : vector<1xf32>
    %307 = vector.multi_reduction <add>, %306, %cst_110 [0] : vector<8x1xf32> to vector<1xf32>
    %308 = vector.shape_cast %307 : vector<1xf32> to vector<1x1xf32>
    %cst_111 = arith.constant 8.000000e+00 : f32
    %309 = vector.broadcast %cst_111 : f32 to vector<1x1xf32>
    %310 = arith.divf %308, %309 : vector<1x1xf32>
    %311 = vector.extract_strided_slice %305 {offsets = [0, 0], sizes = [8, 1], strides = [1, 1]} : vector<16x1xf32> to vector<8x1xf32>
    %cst_112 = arith.constant dense<0.000000e+00> : vector<1xf32>
    %312 = vector.multi_reduction <add>, %311, %cst_112 [0] : vector<8x1xf32> to vector<1xf32>
    %313 = vector.shape_cast %312 : vector<1xf32> to vector<1x1xf32>
    %cst_113 = arith.constant 8.000000e+00 : f32
    %314 = vector.broadcast %cst_113 : f32 to vector<1x1xf32>
    %315 = arith.divf %313, %314 : vector<1x1xf32>
    %316 = arith.mulf %310, %310 : vector<1x1xf32>
    %317 = arith.subf %315, %316 : vector<1x1xf32>
    %cst_114 = arith.constant 9.99999974E-6 : f32
    %318 = vector.broadcast %cst_114 : f32 to vector<1x1xf32>
    %319 = arith.addf %317, %318 : vector<1x1xf32>
    %320 = math.rsqrt %319 : vector<1x1xf32>
    %321 = vector.extract_strided_slice %299 {offsets = [0, 0], sizes = [8, 31], strides = [1, 1]} : vector<16x31xf32> to vector<8x31xf32>
    %322 = vector.broadcast %310 : vector<1x1xf32> to vector<8x31xf32>
    %323 = arith.subf %321, %322 : vector<8x31xf32>
    %324 = vector.broadcast %320 : vector<1x1xf32> to vector<8x31xf32>
    %325 = arith.mulf %323, %324 : vector<8x31xf32>
    %326 = vector.extract_strided_slice %300 {offsets = [0, 0], sizes = [8, 1], strides = [1, 1]} : vector<16x1xf32> to vector<8x1xf32>
    %327 = vector.broadcast %326 : vector<8x1xf32> to vector<8x31xf32>
    %328 = arith.mulf %325, %327 : vector<8x31xf32>
    %329 = vector.extract_strided_slice %301 {offsets = [0, 0], sizes = [8, 1], strides = [1, 1]} : vector<16x1xf32> to vector<8x1xf32>
    %330 = vector.broadcast %329 : vector<8x1xf32> to vector<8x31xf32>
    %331 = arith.addf %328, %330 : vector<8x31xf32>
    %332 = vector.extract_strided_slice %303 {offsets = [8, 0], sizes = [8, 1], strides = [1, 1]} : vector<16x1xf32> to vector<8x1xf32>
    %cst_115 = arith.constant dense<0.000000e+00> : vector<1xf32>
    %333 = vector.multi_reduction <add>, %332, %cst_115 [0] : vector<8x1xf32> to vector<1xf32>
    %334 = vector.shape_cast %333 : vector<1xf32> to vector<1x1xf32>
    %cst_116 = arith.constant 8.000000e+00 : f32
    %335 = vector.broadcast %cst_116 : f32 to vector<1x1xf32>
    %336 = arith.divf %334, %335 : vector<1x1xf32>
    %337 = vector.extract_strided_slice %305 {offsets = [8, 0], sizes = [8, 1], strides = [1, 1]} : vector<16x1xf32> to vector<8x1xf32>
    %cst_117 = arith.constant dense<0.000000e+00> : vector<1xf32>
    %338 = vector.multi_reduction <add>, %337, %cst_117 [0] : vector<8x1xf32> to vector<1xf32>
    %339 = vector.shape_cast %338 : vector<1xf32> to vector<1x1xf32>
    %cst_118 = arith.constant 8.000000e+00 : f32
    %340 = vector.broadcast %cst_118 : f32 to vector<1x1xf32>
    %341 = arith.divf %339, %340 : vector<1x1xf32>
    %342 = arith.mulf %336, %336 : vector<1x1xf32>
    %343 = arith.subf %341, %342 : vector<1x1xf32>
    %cst_119 = arith.constant 9.99999974E-6 : f32
    %344 = vector.broadcast %cst_119 : f32 to vector<1x1xf32>
    %345 = arith.addf %343, %344 : vector<1x1xf32>
    %346 = math.rsqrt %345 : vector<1x1xf32>
    %347 = vector.extract_strided_slice %299 {offsets = [8, 0], sizes = [8, 31], strides = [1, 1]} : vector<16x31xf32> to vector<8x31xf32>
    %348 = vector.broadcast %336 : vector<1x1xf32> to vector<8x31xf32>
    %349 = arith.subf %347, %348 : vector<8x31xf32>
    %350 = vector.broadcast %346 : vector<1x1xf32> to vector<8x31xf32>
    %351 = arith.mulf %349, %350 : vector<8x31xf32>
    %352 = vector.extract_strided_slice %300 {offsets = [8, 0], sizes = [8, 1], strides = [1, 1]} : vector<16x1xf32> to vector<8x1xf32>
    %353 = vector.broadcast %352 : vector<8x1xf32> to vector<8x31xf32>
    %354 = arith.mulf %351, %353 : vector<8x31xf32>
    %355 = vector.extract_strided_slice %301 {offsets = [8, 0], sizes = [8, 1], strides = [1, 1]} : vector<16x1xf32> to vector<8x1xf32>
    %356 = vector.broadcast %355 : vector<8x1xf32> to vector<8x31xf32>
    %357 = arith.addf %354, %356 : vector<8x31xf32>
    %358 = tpu.concatenate %331, %357 in 0 : vector<8x31xf32>, vector<8x31xf32> -> vector<16x31xf32>
    %cst_120 = arith.constant 0.000000e+00 : f32
    %359 = vector.broadcast %cst_120 : f32 to vector<16x31xf32>
    %360 = arith.maximumf %358, %359 : vector<16x31xf32>
    %c200 = arith.constant 200 : index
    %c0_121 = arith.constant 0 : index
    %361 = vector.load %arg5[%c200, %c0_121] : memref<1184x384xf32, #tpu.memory_space<vmem>>, vector<31x62xf32>
    %cst_122 = arith.constant dense<0.000000e+00> : vector<16x62xf32>
    %362 = tpu.matmul %360, %361, %cst_122 {dimension_numbers = #tpu.dot_dimension_numbers<[1], [0], [0], [1], [0, 0, 1, 1], [], []>} : vector<16x31xf32>, vector<31x62xf32>, vector<16x62xf32> -> vector<16x62xf32>
    %363 = vector.extract_strided_slice %362 {offsets = [0, 0], sizes = [16, 31], strides = [1, 1]} : vector<16x62xf32> to vector<16x31xf32>
    %364 = vector.extract_strided_slice %362 {offsets = [0, 31], sizes = [16, 31], strides = [1, 1]} : vector<16x62xf32> to vector<16x31xf32>
    %365 = tpu.concatenate %363, %364 in 0 : vector<16x31xf32>, vector<16x31xf32> -> vector<32x31xf32>
    %cst_123 = arith.constant 0.000000e+00 : f32
    %366 = vector.broadcast %cst_123 : f32 to vector<32x1xf32>
    %367 = tpu.concatenate %366, %365, %366 in 1 : vector<32x1xf32>, vector<32x31xf32>, vector<32x1xf32> -> vector<32x33xf32>
    %368 = vector.extract_strided_slice %367 {offsets = [0, 0], sizes = [32, 31], strides = [1, 1]} : vector<32x33xf32> to vector<32x31xf32>
    %369 = vector.extract_strided_slice %367 {offsets = [0, 1], sizes = [32, 31], strides = [1, 1]} : vector<32x33xf32> to vector<32x31xf32>
    %370 = vector.extract_strided_slice %367 {offsets = [0, 2], sizes = [32, 31], strides = [1, 1]} : vector<32x33xf32> to vector<32x31xf32>
    %371 = tpu.concatenate %368, %369, %370 in 0 : vector<32x31xf32>, vector<32x31xf32>, vector<32x31xf32> -> vector<96x31xf32>
    %c616 = arith.constant 616 : index
    %c0_124 = arith.constant 0 : index
    %372 = vector.load %arg5[%c616, %c0_124] : memref<1184x384xf32, #tpu.memory_space<vmem>>, vector<32x96xf32>
    %cst_125 = arith.constant dense<0.000000e+00> : vector<32x31xf32>
    %373 = tpu.matmul %372, %371, %cst_125 {dimension_numbers = #tpu.dot_dimension_numbers<[1], [0], [0], [1], [0, 0, 1, 1], [], []>} : vector<32x96xf32>, vector<96x31xf32>, vector<32x31xf32> -> vector<32x31xf32>
    %c880 = arith.constant 880 : index
    %c0_126 = arith.constant 0 : index
    %374 = vector.load %arg6[%c880, %c0_126] : memref<1448x1xf32, #tpu.memory_space<vmem>>, vector<32x1xf32>
    %375 = vector.broadcast %374 : vector<32x1xf32> to vector<32x31xf32>
    %376 = arith.addf %373, %375 : vector<32x31xf32>
    %cst_127 = arith.constant 0.000000e+00 : f32
    %377 = vector.broadcast %cst_127 : f32 to vector<32x31xf32>
    %378 = arith.maximumf %376, %377 : vector<32x31xf32>
    %cst_128 = arith.constant 0.0322580636 : f32
    %379 = vector.broadcast %cst_128 : f32 to vector<31x1xf32>
    %cst_129 = arith.constant dense<0.000000e+00> : vector<32x1xf32>
    %380 = tpu.matmul %378, %379, %cst_129 {dimension_numbers = #tpu.dot_dimension_numbers<[1], [0], [0], [1], [0, 0, 1, 1], [], []>} : vector<32x31xf32>, vector<31x1xf32>, vector<32x1xf32> -> vector<32x1xf32>
    %c648 = arith.constant 648 : index
    %c0_130 = arith.constant 0 : index
    %381 = vector.load %arg5[%c648, %c0_130] : memref<1184x384xf32, #tpu.memory_space<vmem>>, vector<16x32xf32>
    %cst_131 = arith.constant dense<0.000000e+00> : vector<16x1xf32>
    %382 = tpu.matmul %381, %380, %cst_131 {dimension_numbers = #tpu.dot_dimension_numbers<[1], [0], [0], [1], [0, 0, 1, 1], [], []>} : vector<16x32xf32>, vector<32x1xf32>, vector<16x1xf32> -> vector<16x1xf32>
    %c912 = arith.constant 912 : index
    %c0_132 = arith.constant 0 : index
    %383 = vector.load %arg6[%c912, %c0_132] : memref<1448x1xf32, #tpu.memory_space<vmem>>, vector<16x1xf32>
    %384 = arith.addf %382, %383 : vector<16x1xf32>
    %cst_133 = arith.constant 0.000000e+00 : f32
    %385 = vector.broadcast %cst_133 : f32 to vector<16x1xf32>
    %386 = arith.maximumf %384, %385 : vector<16x1xf32>
    %c664 = arith.constant 664 : index
    %c0_134 = arith.constant 0 : index
    %387 = vector.load %arg5[%c664, %c0_134] : memref<1184x384xf32, #tpu.memory_space<vmem>>, vector<32x16xf32>
    %cst_135 = arith.constant dense<0.000000e+00> : vector<32x1xf32>
    %388 = tpu.matmul %387, %386, %cst_135 {dimension_numbers = #tpu.dot_dimension_numbers<[1], [0], [0], [1], [0, 0, 1, 1], [], []>} : vector<32x16xf32>, vector<16x1xf32>, vector<32x1xf32> -> vector<32x1xf32>
    %c928 = arith.constant 928 : index
    %c0_136 = arith.constant 0 : index
    %389 = vector.load %arg6[%c928, %c0_136] : memref<1448x1xf32, #tpu.memory_space<vmem>>, vector<32x1xf32>
    %390 = arith.addf %388, %389 : vector<32x1xf32>
    %391 = arith.negf %390 : vector<32x1xf32>
    %392 = math.exp %391 : vector<32x1xf32>
    %cst_137 = arith.constant 1.000000e+00 : f32
    %393 = vector.broadcast %cst_137 : f32 to vector<32x1xf32>
    %394 = arith.addf %393, %392 : vector<32x1xf32>
    %395 = arith.divf %393, %394 : vector<32x1xf32>
    %cst_138 = arith.constant 1.000000e+00 : f32
    %396 = vector.broadcast %cst_138 : f32 to vector<32x1xf32>
    %397 = arith.addf %395, %396 : vector<32x1xf32>
    %398 = vector.broadcast %397 : vector<32x1xf32> to vector<32x31xf32>
    %399 = arith.mulf %365, %398 : vector<32x31xf32>
    %400 = vector.extract_strided_slice %399 {offsets = [0, 0], sizes = [32, 29], strides = [1, 1]} : vector<32x31xf32> to vector<32x29xf32>
    %401 = vector.extract_strided_slice %399 {offsets = [0, 1], sizes = [32, 29], strides = [1, 1]} : vector<32x31xf32> to vector<32x29xf32>
    %402 = vector.extract_strided_slice %399 {offsets = [0, 2], sizes = [32, 29], strides = [1, 1]} : vector<32x31xf32> to vector<32x29xf32>
    %403 = tpu.concatenate %400, %401, %402 in 0 : vector<32x29xf32>, vector<32x29xf32>, vector<32x29xf32> -> vector<96x29xf32>
    %c328 = arith.constant 328 : index
    %c0_139 = arith.constant 0 : index
    %404 = vector.load %arg5[%c328, %c0_139] : memref<1184x384xf32, #tpu.memory_space<vmem>>, vector<32x96xf32>
    %cst_140 = arith.constant dense<0.000000e+00> : vector<32x29xf32>
    %405 = tpu.matmul %404, %403, %cst_140 {dimension_numbers = #tpu.dot_dimension_numbers<[1], [0], [0], [1], [0, 0, 1, 1], [], []>} : vector<32x96xf32>, vector<96x29xf32>, vector<32x29xf32> -> vector<32x29xf32>
    %c144 = arith.constant 144 : index
    %c0_141 = arith.constant 0 : index
    %406 = vector.load %arg6[%c144, %c0_141] : memref<1448x1xf32, #tpu.memory_space<vmem>>, vector<32x1xf32>
    %407 = vector.broadcast %406 : vector<32x1xf32> to vector<32x29xf32>
    %408 = arith.addf %405, %407 : vector<32x29xf32>
    %c176 = arith.constant 176 : index
    %c0_142 = arith.constant 0 : index
    %409 = vector.load %arg6[%c176, %c0_142] : memref<1448x1xf32, #tpu.memory_space<vmem>>, vector<32x1xf32>
    %c208 = arith.constant 208 : index
    %c0_143 = arith.constant 0 : index
    %410 = vector.load %arg6[%c208, %c0_143] : memref<1448x1xf32, #tpu.memory_space<vmem>>, vector<32x1xf32>
    %cst_144 = arith.constant 0.0344827585 : f32
    %411 = vector.broadcast %cst_144 : f32 to vector<29x1xf32>
    %cst_145 = arith.constant dense<0.000000e+00> : vector<32x1xf32>
    %412 = tpu.matmul %408, %411, %cst_145 {dimension_numbers = #tpu.dot_dimension_numbers<[1], [0], [0], [1], [0, 0, 1, 1], [], []>} : vector<32x29xf32>, vector<29x1xf32>, vector<32x1xf32> -> vector<32x1xf32>
    %413 = arith.mulf %408, %408 : vector<32x29xf32>
    %cst_146 = arith.constant dense<0.000000e+00> : vector<32x1xf32>
    %414 = tpu.matmul %413, %411, %cst_146 {dimension_numbers = #tpu.dot_dimension_numbers<[1], [0], [0], [1], [0, 0, 1, 1], [], []>} : vector<32x29xf32>, vector<29x1xf32>, vector<32x1xf32> -> vector<32x1xf32>
    %415 = vector.extract_strided_slice %412 {offsets = [0, 0], sizes = [16, 1], strides = [1, 1]} : vector<32x1xf32> to vector<16x1xf32>
    %cst_147 = arith.constant dense<0.000000e+00> : vector<1xf32>
    %416 = vector.multi_reduction <add>, %415, %cst_147 [0] : vector<16x1xf32> to vector<1xf32>
    %417 = vector.shape_cast %416 : vector<1xf32> to vector<1x1xf32>
    %cst_148 = arith.constant 1.600000e+01 : f32
    %418 = vector.broadcast %cst_148 : f32 to vector<1x1xf32>
    %419 = arith.divf %417, %418 : vector<1x1xf32>
    %420 = vector.extract_strided_slice %414 {offsets = [0, 0], sizes = [16, 1], strides = [1, 1]} : vector<32x1xf32> to vector<16x1xf32>
    %cst_149 = arith.constant dense<0.000000e+00> : vector<1xf32>
    %421 = vector.multi_reduction <add>, %420, %cst_149 [0] : vector<16x1xf32> to vector<1xf32>
    %422 = vector.shape_cast %421 : vector<1xf32> to vector<1x1xf32>
    %cst_150 = arith.constant 1.600000e+01 : f32
    %423 = vector.broadcast %cst_150 : f32 to vector<1x1xf32>
    %424 = arith.divf %422, %423 : vector<1x1xf32>
    %425 = arith.mulf %419, %419 : vector<1x1xf32>
    %426 = arith.subf %424, %425 : vector<1x1xf32>
    %cst_151 = arith.constant 9.99999974E-6 : f32
    %427 = vector.broadcast %cst_151 : f32 to vector<1x1xf32>
    %428 = arith.addf %426, %427 : vector<1x1xf32>
    %429 = math.rsqrt %428 : vector<1x1xf32>
    %430 = vector.extract_strided_slice %408 {offsets = [0, 0], sizes = [16, 29], strides = [1, 1]} : vector<32x29xf32> to vector<16x29xf32>
    %431 = vector.broadcast %419 : vector<1x1xf32> to vector<16x29xf32>
    %432 = arith.subf %430, %431 : vector<16x29xf32>
    %433 = vector.broadcast %429 : vector<1x1xf32> to vector<16x29xf32>
    %434 = arith.mulf %432, %433 : vector<16x29xf32>
    %435 = vector.extract_strided_slice %409 {offsets = [0, 0], sizes = [16, 1], strides = [1, 1]} : vector<32x1xf32> to vector<16x1xf32>
    %436 = vector.broadcast %435 : vector<16x1xf32> to vector<16x29xf32>
    %437 = arith.mulf %434, %436 : vector<16x29xf32>
    %438 = vector.extract_strided_slice %410 {offsets = [0, 0], sizes = [16, 1], strides = [1, 1]} : vector<32x1xf32> to vector<16x1xf32>
    %439 = vector.broadcast %438 : vector<16x1xf32> to vector<16x29xf32>
    %440 = arith.addf %437, %439 : vector<16x29xf32>
    %441 = vector.extract_strided_slice %412 {offsets = [16, 0], sizes = [16, 1], strides = [1, 1]} : vector<32x1xf32> to vector<16x1xf32>
    %cst_152 = arith.constant dense<0.000000e+00> : vector<1xf32>
    %442 = vector.multi_reduction <add>, %441, %cst_152 [0] : vector<16x1xf32> to vector<1xf32>
    %443 = vector.shape_cast %442 : vector<1xf32> to vector<1x1xf32>
    %cst_153 = arith.constant 1.600000e+01 : f32
    %444 = vector.broadcast %cst_153 : f32 to vector<1x1xf32>
    %445 = arith.divf %443, %444 : vector<1x1xf32>
    %446 = vector.extract_strided_slice %414 {offsets = [16, 0], sizes = [16, 1], strides = [1, 1]} : vector<32x1xf32> to vector<16x1xf32>
    %cst_154 = arith.constant dense<0.000000e+00> : vector<1xf32>
    %447 = vector.multi_reduction <add>, %446, %cst_154 [0] : vector<16x1xf32> to vector<1xf32>
    %448 = vector.shape_cast %447 : vector<1xf32> to vector<1x1xf32>
    %cst_155 = arith.constant 1.600000e+01 : f32
    %449 = vector.broadcast %cst_155 : f32 to vector<1x1xf32>
    %450 = arith.divf %448, %449 : vector<1x1xf32>
    %451 = arith.mulf %445, %445 : vector<1x1xf32>
    %452 = arith.subf %450, %451 : vector<1x1xf32>
    %cst_156 = arith.constant 9.99999974E-6 : f32
    %453 = vector.broadcast %cst_156 : f32 to vector<1x1xf32>
    %454 = arith.addf %452, %453 : vector<1x1xf32>
    %455 = math.rsqrt %454 : vector<1x1xf32>
    %456 = vector.extract_strided_slice %408 {offsets = [16, 0], sizes = [16, 29], strides = [1, 1]} : vector<32x29xf32> to vector<16x29xf32>
    %457 = vector.broadcast %445 : vector<1x1xf32> to vector<16x29xf32>
    %458 = arith.subf %456, %457 : vector<16x29xf32>
    %459 = vector.broadcast %455 : vector<1x1xf32> to vector<16x29xf32>
    %460 = arith.mulf %458, %459 : vector<16x29xf32>
    %461 = vector.extract_strided_slice %409 {offsets = [16, 0], sizes = [16, 1], strides = [1, 1]} : vector<32x1xf32> to vector<16x1xf32>
    %462 = vector.broadcast %461 : vector<16x1xf32> to vector<16x29xf32>
    %463 = arith.mulf %460, %462 : vector<16x29xf32>
    %464 = vector.extract_strided_slice %410 {offsets = [16, 0], sizes = [16, 1], strides = [1, 1]} : vector<32x1xf32> to vector<16x1xf32>
    %465 = vector.broadcast %464 : vector<16x1xf32> to vector<16x29xf32>
    %466 = arith.addf %463, %465 : vector<16x29xf32>
    %467 = tpu.concatenate %440, %466 in 0 : vector<16x29xf32>, vector<16x29xf32> -> vector<32x29xf32>
    %cst_157 = arith.constant 0.000000e+00 : f32
    %468 = vector.broadcast %cst_157 : f32 to vector<32x29xf32>
    %469 = arith.maximumf %467, %468 : vector<32x29xf32>
    %c232 = arith.constant 232 : index
    %c0_158 = arith.constant 0 : index
    %470 = vector.load %arg5[%c232, %c0_158] : memref<1184x384xf32, #tpu.memory_space<vmem>>, vector<29x60xf32>
    %cst_159 = arith.constant dense<0.000000e+00> : vector<32x60xf32>
    %471 = tpu.matmul %469, %470, %cst_159 {dimension_numbers = #tpu.dot_dimension_numbers<[1], [0], [0], [1], [0, 0, 1, 1], [], []>} : vector<32x29xf32>, vector<29x60xf32>, vector<32x60xf32> -> vector<32x60xf32>
    %472 = vector.extract_strided_slice %471 {offsets = [0, 0], sizes = [32, 30], strides = [1, 1]} : vector<32x60xf32> to vector<32x30xf32>
    %473 = vector.extract_strided_slice %471 {offsets = [0, 30], sizes = [32, 30], strides = [1, 1]} : vector<32x60xf32> to vector<32x30xf32>
    %474 = tpu.concatenate %472, %473 in 0 : vector<32x30xf32>, vector<32x30xf32> -> vector<64x30xf32>
    %cst_160 = arith.constant 0.000000e+00 : f32
    %475 = vector.broadcast %cst_160 : f32 to vector<64x1xf32>
    %476 = tpu.concatenate %475, %474, %475 in 1 : vector<64x1xf32>, vector<64x30xf32>, vector<64x1xf32> -> vector<64x32xf32>
    %477 = vector.extract_strided_slice %476 {offsets = [0, 0], sizes = [64, 30], strides = [1, 1]} : vector<64x32xf32> to vector<64x30xf32>
    %478 = vector.extract_strided_slice %476 {offsets = [0, 1], sizes = [64, 30], strides = [1, 1]} : vector<64x32xf32> to vector<64x30xf32>
    %479 = vector.extract_strided_slice %476 {offsets = [0, 2], sizes = [64, 30], strides = [1, 1]} : vector<64x32xf32> to vector<64x30xf32>
    %480 = tpu.concatenate %477, %478, %479 in 0 : vector<64x30xf32>, vector<64x30xf32>, vector<64x30xf32> -> vector<192x30xf32>
    %c696 = arith.constant 696 : index
    %c0_161 = arith.constant 0 : index
    %481 = vector.load %arg5[%c696, %c0_161] : memref<1184x384xf32, #tpu.memory_space<vmem>>, vector<64x192xf32>
    %cst_162 = arith.constant dense<0.000000e+00> : vector<64x30xf32>
    %482 = tpu.matmul %481, %480, %cst_162 {dimension_numbers = #tpu.dot_dimension_numbers<[1], [0], [0], [1], [0, 0, 1, 1], [], []>} : vector<64x192xf32>, vector<192x30xf32>, vector<64x30xf32> -> vector<64x30xf32>
    %c960 = arith.constant 960 : index
    %c0_163 = arith.constant 0 : index
    %483 = vector.load %arg6[%c960, %c0_163] : memref<1448x1xf32, #tpu.memory_space<vmem>>, vector<64x1xf32>
    %484 = vector.broadcast %483 : vector<64x1xf32> to vector<64x30xf32>
    %485 = arith.addf %482, %484 : vector<64x30xf32>
    %cst_164 = arith.constant 0.000000e+00 : f32
    %486 = vector.broadcast %cst_164 : f32 to vector<64x30xf32>
    %487 = arith.maximumf %485, %486 : vector<64x30xf32>
    %cst_165 = arith.constant 0.0333333351 : f32
    %488 = vector.broadcast %cst_165 : f32 to vector<30x1xf32>
    %cst_166 = arith.constant dense<0.000000e+00> : vector<64x1xf32>
    %489 = tpu.matmul %487, %488, %cst_166 {dimension_numbers = #tpu.dot_dimension_numbers<[1], [0], [0], [1], [0, 0, 1, 1], [], []>} : vector<64x30xf32>, vector<30x1xf32>, vector<64x1xf32> -> vector<64x1xf32>
    %c760 = arith.constant 760 : index
    %c0_167 = arith.constant 0 : index
    %490 = vector.load %arg5[%c760, %c0_167] : memref<1184x384xf32, #tpu.memory_space<vmem>>, vector<32x64xf32>
    %cst_168 = arith.constant dense<0.000000e+00> : vector<32x1xf32>
    %491 = tpu.matmul %490, %489, %cst_168 {dimension_numbers = #tpu.dot_dimension_numbers<[1], [0], [0], [1], [0, 0, 1, 1], [], []>} : vector<32x64xf32>, vector<64x1xf32>, vector<32x1xf32> -> vector<32x1xf32>
    %c1024 = arith.constant 1024 : index
    %c0_169 = arith.constant 0 : index
    %492 = vector.load %arg6[%c1024, %c0_169] : memref<1448x1xf32, #tpu.memory_space<vmem>>, vector<32x1xf32>
    %493 = arith.addf %491, %492 : vector<32x1xf32>
    %cst_170 = arith.constant 0.000000e+00 : f32
    %494 = vector.broadcast %cst_170 : f32 to vector<32x1xf32>
    %495 = arith.maximumf %493, %494 : vector<32x1xf32>
    %c792 = arith.constant 792 : index
    %c0_171 = arith.constant 0 : index
    %496 = vector.load %arg5[%c792, %c0_171] : memref<1184x384xf32, #tpu.memory_space<vmem>>, vector<64x32xf32>
    %cst_172 = arith.constant dense<0.000000e+00> : vector<64x1xf32>
    %497 = tpu.matmul %496, %495, %cst_172 {dimension_numbers = #tpu.dot_dimension_numbers<[1], [0], [0], [1], [0, 0, 1, 1], [], []>} : vector<64x32xf32>, vector<32x1xf32>, vector<64x1xf32> -> vector<64x1xf32>
    %c1056 = arith.constant 1056 : index
    %c0_173 = arith.constant 0 : index
    %498 = vector.load %arg6[%c1056, %c0_173] : memref<1448x1xf32, #tpu.memory_space<vmem>>, vector<64x1xf32>
    %499 = arith.addf %497, %498 : vector<64x1xf32>
    %500 = arith.negf %499 : vector<64x1xf32>
    %501 = math.exp %500 : vector<64x1xf32>
    %cst_174 = arith.constant 1.000000e+00 : f32
    %502 = vector.broadcast %cst_174 : f32 to vector<64x1xf32>
    %503 = arith.addf %502, %501 : vector<64x1xf32>
    %504 = arith.divf %502, %503 : vector<64x1xf32>
    %cst_175 = arith.constant 1.000000e+00 : f32
    %505 = vector.broadcast %cst_175 : f32 to vector<64x1xf32>
    %506 = arith.addf %504, %505 : vector<64x1xf32>
    %507 = vector.broadcast %506 : vector<64x1xf32> to vector<64x30xf32>
    %508 = arith.mulf %474, %507 : vector<64x30xf32>
    %509 = vector.extract_strided_slice %508 {offsets = [0, 0], sizes = [64, 28], strides = [1, 1]} : vector<64x30xf32> to vector<64x28xf32>
    %510 = vector.extract_strided_slice %508 {offsets = [0, 1], sizes = [64, 28], strides = [1, 1]} : vector<64x30xf32> to vector<64x28xf32>
    %511 = vector.extract_strided_slice %508 {offsets = [0, 2], sizes = [64, 28], strides = [1, 1]} : vector<64x30xf32> to vector<64x28xf32>
    %512 = tpu.concatenate %509, %510, %511 in 0 : vector<64x28xf32>, vector<64x28xf32>, vector<64x28xf32> -> vector<192x28xf32>
    %c360 = arith.constant 360 : index
    %c0_176 = arith.constant 0 : index
    %513 = vector.load %arg5[%c360, %c0_176] : memref<1184x384xf32, #tpu.memory_space<vmem>>, vector<64x192xf32>
    %cst_177 = arith.constant dense<0.000000e+00> : vector<64x28xf32>
    %514 = tpu.matmul %513, %512, %cst_177 {dimension_numbers = #tpu.dot_dimension_numbers<[1], [0], [0], [1], [0, 0, 1, 1], [], []>} : vector<64x192xf32>, vector<192x28xf32>, vector<64x28xf32> -> vector<64x28xf32>
    %c240 = arith.constant 240 : index
    %c0_178 = arith.constant 0 : index
    %515 = vector.load %arg6[%c240, %c0_178] : memref<1448x1xf32, #tpu.memory_space<vmem>>, vector<64x1xf32>
    %516 = vector.broadcast %515 : vector<64x1xf32> to vector<64x28xf32>
    %517 = arith.addf %514, %516 : vector<64x28xf32>
    %c304_179 = arith.constant 304 : index
    %c0_180 = arith.constant 0 : index
    %518 = vector.load %arg6[%c304_179, %c0_180] : memref<1448x1xf32, #tpu.memory_space<vmem>>, vector<64x1xf32>
    %c368 = arith.constant 368 : index
    %c0_181 = arith.constant 0 : index
    %519 = vector.load %arg6[%c368, %c0_181] : memref<1448x1xf32, #tpu.memory_space<vmem>>, vector<64x1xf32>
    %cst_182 = arith.constant 0.0357142873 : f32
    %520 = vector.broadcast %cst_182 : f32 to vector<28x1xf32>
    %cst_183 = arith.constant dense<0.000000e+00> : vector<64x1xf32>
    %521 = tpu.matmul %517, %520, %cst_183 {dimension_numbers = #tpu.dot_dimension_numbers<[1], [0], [0], [1], [0, 0, 1, 1], [], []>} : vector<64x28xf32>, vector<28x1xf32>, vector<64x1xf32> -> vector<64x1xf32>
    %522 = arith.mulf %517, %517 : vector<64x28xf32>
    %cst_184 = arith.constant dense<0.000000e+00> : vector<64x1xf32>
    %523 = tpu.matmul %522, %520, %cst_184 {dimension_numbers = #tpu.dot_dimension_numbers<[1], [0], [0], [1], [0, 0, 1, 1], [], []>} : vector<64x28xf32>, vector<28x1xf32>, vector<64x1xf32> -> vector<64x1xf32>
    %524 = vector.extract_strided_slice %521 {offsets = [0, 0], sizes = [32, 1], strides = [1, 1]} : vector<64x1xf32> to vector<32x1xf32>
    %cst_185 = arith.constant dense<0.000000e+00> : vector<1xf32>
    %525 = vector.multi_reduction <add>, %524, %cst_185 [0] : vector<32x1xf32> to vector<1xf32>
    %526 = vector.shape_cast %525 : vector<1xf32> to vector<1x1xf32>
    %cst_186 = arith.constant 3.200000e+01 : f32
    %527 = vector.broadcast %cst_186 : f32 to vector<1x1xf32>
    %528 = arith.divf %526, %527 : vector<1x1xf32>
    %529 = vector.extract_strided_slice %523 {offsets = [0, 0], sizes = [32, 1], strides = [1, 1]} : vector<64x1xf32> to vector<32x1xf32>
    %cst_187 = arith.constant dense<0.000000e+00> : vector<1xf32>
    %530 = vector.multi_reduction <add>, %529, %cst_187 [0] : vector<32x1xf32> to vector<1xf32>
    %531 = vector.shape_cast %530 : vector<1xf32> to vector<1x1xf32>
    %cst_188 = arith.constant 3.200000e+01 : f32
    %532 = vector.broadcast %cst_188 : f32 to vector<1x1xf32>
    %533 = arith.divf %531, %532 : vector<1x1xf32>
    %534 = arith.mulf %528, %528 : vector<1x1xf32>
    %535 = arith.subf %533, %534 : vector<1x1xf32>
    %cst_189 = arith.constant 9.99999974E-6 : f32
    %536 = vector.broadcast %cst_189 : f32 to vector<1x1xf32>
    %537 = arith.addf %535, %536 : vector<1x1xf32>
    %538 = math.rsqrt %537 : vector<1x1xf32>
    %539 = vector.extract_strided_slice %517 {offsets = [0, 0], sizes = [32, 28], strides = [1, 1]} : vector<64x28xf32> to vector<32x28xf32>
    %540 = vector.broadcast %528 : vector<1x1xf32> to vector<32x28xf32>
    %541 = arith.subf %539, %540 : vector<32x28xf32>
    %542 = vector.broadcast %538 : vector<1x1xf32> to vector<32x28xf32>
    %543 = arith.mulf %541, %542 : vector<32x28xf32>
    %544 = vector.extract_strided_slice %518 {offsets = [0, 0], sizes = [32, 1], strides = [1, 1]} : vector<64x1xf32> to vector<32x1xf32>
    %545 = vector.broadcast %544 : vector<32x1xf32> to vector<32x28xf32>
    %546 = arith.mulf %543, %545 : vector<32x28xf32>
    %547 = vector.extract_strided_slice %519 {offsets = [0, 0], sizes = [32, 1], strides = [1, 1]} : vector<64x1xf32> to vector<32x1xf32>
    %548 = vector.broadcast %547 : vector<32x1xf32> to vector<32x28xf32>
    %549 = arith.addf %546, %548 : vector<32x28xf32>
    %550 = vector.extract_strided_slice %521 {offsets = [32, 0], sizes = [32, 1], strides = [1, 1]} : vector<64x1xf32> to vector<32x1xf32>
    %cst_190 = arith.constant dense<0.000000e+00> : vector<1xf32>
    %551 = vector.multi_reduction <add>, %550, %cst_190 [0] : vector<32x1xf32> to vector<1xf32>
    %552 = vector.shape_cast %551 : vector<1xf32> to vector<1x1xf32>
    %cst_191 = arith.constant 3.200000e+01 : f32
    %553 = vector.broadcast %cst_191 : f32 to vector<1x1xf32>
    %554 = arith.divf %552, %553 : vector<1x1xf32>
    %555 = vector.extract_strided_slice %523 {offsets = [32, 0], sizes = [32, 1], strides = [1, 1]} : vector<64x1xf32> to vector<32x1xf32>
    %cst_192 = arith.constant dense<0.000000e+00> : vector<1xf32>
    %556 = vector.multi_reduction <add>, %555, %cst_192 [0] : vector<32x1xf32> to vector<1xf32>
    %557 = vector.shape_cast %556 : vector<1xf32> to vector<1x1xf32>
    %cst_193 = arith.constant 3.200000e+01 : f32
    %558 = vector.broadcast %cst_193 : f32 to vector<1x1xf32>
    %559 = arith.divf %557, %558 : vector<1x1xf32>
    %560 = arith.mulf %554, %554 : vector<1x1xf32>
    %561 = arith.subf %559, %560 : vector<1x1xf32>
    %cst_194 = arith.constant 9.99999974E-6 : f32
    %562 = vector.broadcast %cst_194 : f32 to vector<1x1xf32>
    %563 = arith.addf %561, %562 : vector<1x1xf32>
    %564 = math.rsqrt %563 : vector<1x1xf32>
    %565 = vector.extract_strided_slice %517 {offsets = [32, 0], sizes = [32, 28], strides = [1, 1]} : vector<64x28xf32> to vector<32x28xf32>
    %566 = vector.broadcast %554 : vector<1x1xf32> to vector<32x28xf32>
    %567 = arith.subf %565, %566 : vector<32x28xf32>
    %568 = vector.broadcast %564 : vector<1x1xf32> to vector<32x28xf32>
    %569 = arith.mulf %567, %568 : vector<32x28xf32>
    %570 = vector.extract_strided_slice %518 {offsets = [32, 0], sizes = [32, 1], strides = [1, 1]} : vector<64x1xf32> to vector<32x1xf32>
    %571 = vector.broadcast %570 : vector<32x1xf32> to vector<32x28xf32>
    %572 = arith.mulf %569, %571 : vector<32x28xf32>
    %573 = vector.extract_strided_slice %519 {offsets = [32, 0], sizes = [32, 1], strides = [1, 1]} : vector<64x1xf32> to vector<32x1xf32>
    %574 = vector.broadcast %573 : vector<32x1xf32> to vector<32x28xf32>
    %575 = arith.addf %572, %574 : vector<32x28xf32>
    %576 = tpu.concatenate %549, %575 in 0 : vector<32x28xf32>, vector<32x28xf32> -> vector<64x28xf32>
    %cst_195 = arith.constant 0.000000e+00 : f32
    %577 = vector.broadcast %cst_195 : f32 to vector<64x28xf32>
    %578 = arith.maximumf %576, %577 : vector<64x28xf32>
    %c264 = arith.constant 264 : index
    %c0_196 = arith.constant 0 : index
    %579 = vector.load %arg5[%c264, %c0_196] : memref<1184x384xf32, #tpu.memory_space<vmem>>, vector<28x58xf32>
    %cst_197 = arith.constant dense<0.000000e+00> : vector<64x58xf32>
    %580 = tpu.matmul %578, %579, %cst_197 {dimension_numbers = #tpu.dot_dimension_numbers<[1], [0], [0], [1], [0, 0, 1, 1], [], []>} : vector<64x28xf32>, vector<28x58xf32>, vector<64x58xf32> -> vector<64x58xf32>
    %581 = vector.extract_strided_slice %580 {offsets = [0, 0], sizes = [64, 29], strides = [1, 1]} : vector<64x58xf32> to vector<64x29xf32>
    %582 = vector.extract_strided_slice %580 {offsets = [0, 29], sizes = [64, 29], strides = [1, 1]} : vector<64x58xf32> to vector<64x29xf32>
    %583 = tpu.concatenate %581, %582 in 0 : vector<64x29xf32>, vector<64x29xf32> -> vector<128x29xf32>
    %cst_198 = arith.constant 0.000000e+00 : f32
    %584 = vector.broadcast %cst_198 : f32 to vector<128x1xf32>
    %585 = tpu.concatenate %584, %583, %584 in 1 : vector<128x1xf32>, vector<128x29xf32>, vector<128x1xf32> -> vector<128x31xf32>
    %586 = vector.extract_strided_slice %585 {offsets = [0, 0], sizes = [128, 29], strides = [1, 1]} : vector<128x31xf32> to vector<128x29xf32>
    %587 = vector.extract_strided_slice %585 {offsets = [0, 1], sizes = [128, 29], strides = [1, 1]} : vector<128x31xf32> to vector<128x29xf32>
    %588 = vector.extract_strided_slice %585 {offsets = [0, 2], sizes = [128, 29], strides = [1, 1]} : vector<128x31xf32> to vector<128x29xf32>
    %589 = tpu.concatenate %586, %587, %588 in 0 : vector<128x29xf32>, vector<128x29xf32>, vector<128x29xf32> -> vector<384x29xf32>
    %c856_199 = arith.constant 856 : index
    %c0_200 = arith.constant 0 : index
    %590 = vector.load %arg5[%c856_199, %c0_200] : memref<1184x384xf32, #tpu.memory_space<vmem>>, vector<128x384xf32>
    %cst_201 = arith.constant dense<0.000000e+00> : vector<128x29xf32>
    %591 = tpu.matmul %590, %589, %cst_201 {dimension_numbers = #tpu.dot_dimension_numbers<[1], [0], [0], [1], [0, 0, 1, 1], [], []>} : vector<128x384xf32>, vector<384x29xf32>, vector<128x29xf32> -> vector<128x29xf32>
    %c1120 = arith.constant 1120 : index
    %c0_202 = arith.constant 0 : index
    %592 = vector.load %arg6[%c1120, %c0_202] : memref<1448x1xf32, #tpu.memory_space<vmem>>, vector<128x1xf32>
    %593 = vector.broadcast %592 : vector<128x1xf32> to vector<128x29xf32>
    %594 = arith.addf %591, %593 : vector<128x29xf32>
    %cst_203 = arith.constant 0.000000e+00 : f32
    %595 = vector.broadcast %cst_203 : f32 to vector<128x29xf32>
    %596 = arith.maximumf %594, %595 : vector<128x29xf32>
    %cst_204 = arith.constant 0.0344827585 : f32
    %597 = vector.broadcast %cst_204 : f32 to vector<29x1xf32>
    %cst_205 = arith.constant dense<0.000000e+00> : vector<128x1xf32>
    %598 = tpu.matmul %596, %597, %cst_205 {dimension_numbers = #tpu.dot_dimension_numbers<[1], [0], [0], [1], [0, 0, 1, 1], [], []>} : vector<128x29xf32>, vector<29x1xf32>, vector<128x1xf32> -> vector<128x1xf32>
    %c984 = arith.constant 984 : index
    %c0_206 = arith.constant 0 : index
    %599 = vector.load %arg5[%c984, %c0_206] : memref<1184x384xf32, #tpu.memory_space<vmem>>, vector<64x128xf32>
    %cst_207 = arith.constant dense<0.000000e+00> : vector<64x1xf32>
    %600 = tpu.matmul %599, %598, %cst_207 {dimension_numbers = #tpu.dot_dimension_numbers<[1], [0], [0], [1], [0, 0, 1, 1], [], []>} : vector<64x128xf32>, vector<128x1xf32>, vector<64x1xf32> -> vector<64x1xf32>
    %c1248 = arith.constant 1248 : index
    %c0_208 = arith.constant 0 : index
    %601 = vector.load %arg6[%c1248, %c0_208] : memref<1448x1xf32, #tpu.memory_space<vmem>>, vector<64x1xf32>
    %602 = arith.addf %600, %601 : vector<64x1xf32>
    %cst_209 = arith.constant 0.000000e+00 : f32
    %603 = vector.broadcast %cst_209 : f32 to vector<64x1xf32>
    %604 = arith.maximumf %602, %603 : vector<64x1xf32>
    %c1048 = arith.constant 1048 : index
    %c0_210 = arith.constant 0 : index
    %605 = vector.load %arg5[%c1048, %c0_210] : memref<1184x384xf32, #tpu.memory_space<vmem>>, vector<128x64xf32>
    %cst_211 = arith.constant dense<0.000000e+00> : vector<128x1xf32>
    %606 = tpu.matmul %605, %604, %cst_211 {dimension_numbers = #tpu.dot_dimension_numbers<[1], [0], [0], [1], [0, 0, 1, 1], [], []>} : vector<128x64xf32>, vector<64x1xf32>, vector<128x1xf32> -> vector<128x1xf32>
    %c1312 = arith.constant 1312 : index
    %c0_212 = arith.constant 0 : index
    %607 = vector.load %arg6[%c1312, %c0_212] : memref<1448x1xf32, #tpu.memory_space<vmem>>, vector<128x1xf32>
    %608 = arith.addf %606, %607 : vector<128x1xf32>
    %609 = arith.negf %608 : vector<128x1xf32>
    %610 = math.exp %609 : vector<128x1xf32>
    %cst_213 = arith.constant 1.000000e+00 : f32
    %611 = vector.broadcast %cst_213 : f32 to vector<128x1xf32>
    %612 = arith.addf %611, %610 : vector<128x1xf32>
    %613 = arith.divf %611, %612 : vector<128x1xf32>
    %cst_214 = arith.constant 1.000000e+00 : f32
    %614 = vector.broadcast %cst_214 : f32 to vector<128x1xf32>
    %615 = arith.addf %613, %614 : vector<128x1xf32>
    %616 = vector.broadcast %615 : vector<128x1xf32> to vector<128x29xf32>
    %617 = arith.mulf %583, %616 : vector<128x29xf32>
    %618 = vector.extract_strided_slice %617 {offsets = [0, 0], sizes = [128, 27], strides = [1, 1]} : vector<128x29xf32> to vector<128x27xf32>
    %619 = vector.extract_strided_slice %617 {offsets = [0, 1], sizes = [128, 27], strides = [1, 1]} : vector<128x29xf32> to vector<128x27xf32>
    %620 = vector.extract_strided_slice %617 {offsets = [0, 2], sizes = [128, 27], strides = [1, 1]} : vector<128x29xf32> to vector<128x27xf32>
    %621 = tpu.concatenate %618, %619, %620 in 0 : vector<128x27xf32>, vector<128x27xf32>, vector<128x27xf32> -> vector<384x27xf32>
    %c424 = arith.constant 424 : index
    %c0_215 = arith.constant 0 : index
    %622 = vector.load %arg5[%c424, %c0_215] : memref<1184x384xf32, #tpu.memory_space<vmem>>, vector<128x384xf32>
    %cst_216 = arith.constant dense<0.000000e+00> : vector<128x27xf32>
    %623 = tpu.matmul %622, %621, %cst_216 {dimension_numbers = #tpu.dot_dimension_numbers<[1], [0], [0], [1], [0, 0, 1, 1], [], []>} : vector<128x384xf32>, vector<384x27xf32>, vector<128x27xf32> -> vector<128x27xf32>
    %c432 = arith.constant 432 : index
    %c0_217 = arith.constant 0 : index
    %624 = vector.load %arg6[%c432, %c0_217] : memref<1448x1xf32, #tpu.memory_space<vmem>>, vector<128x1xf32>
    %625 = vector.broadcast %624 : vector<128x1xf32> to vector<128x27xf32>
    %626 = arith.addf %623, %625 : vector<128x27xf32>
    %c560_218 = arith.constant 560 : index
    %c0_219 = arith.constant 0 : index
    %627 = vector.load %arg6[%c560_218, %c0_219] : memref<1448x1xf32, #tpu.memory_space<vmem>>, vector<128x1xf32>
    %c688 = arith.constant 688 : index
    %c0_220 = arith.constant 0 : index
    %628 = vector.load %arg6[%c688, %c0_220] : memref<1448x1xf32, #tpu.memory_space<vmem>>, vector<128x1xf32>
    %cst_221 = arith.constant 0.0370370373 : f32
    %629 = vector.broadcast %cst_221 : f32 to vector<27x1xf32>
    %cst_222 = arith.constant dense<0.000000e+00> : vector<128x1xf32>
    %630 = tpu.matmul %626, %629, %cst_222 {dimension_numbers = #tpu.dot_dimension_numbers<[1], [0], [0], [1], [0, 0, 1, 1], [], []>} : vector<128x27xf32>, vector<27x1xf32>, vector<128x1xf32> -> vector<128x1xf32>
    %631 = arith.mulf %626, %626 : vector<128x27xf32>
    %cst_223 = arith.constant dense<0.000000e+00> : vector<128x1xf32>
    %632 = tpu.matmul %631, %629, %cst_223 {dimension_numbers = #tpu.dot_dimension_numbers<[1], [0], [0], [1], [0, 0, 1, 1], [], []>} : vector<128x27xf32>, vector<27x1xf32>, vector<128x1xf32> -> vector<128x1xf32>
    %633 = vector.extract_strided_slice %630 {offsets = [0, 0], sizes = [64, 1], strides = [1, 1]} : vector<128x1xf32> to vector<64x1xf32>
    %cst_224 = arith.constant dense<0.000000e+00> : vector<1xf32>
    %634 = vector.multi_reduction <add>, %633, %cst_224 [0] : vector<64x1xf32> to vector<1xf32>
    %635 = vector.shape_cast %634 : vector<1xf32> to vector<1x1xf32>
    %cst_225 = arith.constant 6.400000e+01 : f32
    %636 = vector.broadcast %cst_225 : f32 to vector<1x1xf32>
    %637 = arith.divf %635, %636 : vector<1x1xf32>
    %638 = vector.extract_strided_slice %632 {offsets = [0, 0], sizes = [64, 1], strides = [1, 1]} : vector<128x1xf32> to vector<64x1xf32>
    %cst_226 = arith.constant dense<0.000000e+00> : vector<1xf32>
    %639 = vector.multi_reduction <add>, %638, %cst_226 [0] : vector<64x1xf32> to vector<1xf32>
    %640 = vector.shape_cast %639 : vector<1xf32> to vector<1x1xf32>
    %cst_227 = arith.constant 6.400000e+01 : f32
    %641 = vector.broadcast %cst_227 : f32 to vector<1x1xf32>
    %642 = arith.divf %640, %641 : vector<1x1xf32>
    %643 = arith.mulf %637, %637 : vector<1x1xf32>
    %644 = arith.subf %642, %643 : vector<1x1xf32>
    %cst_228 = arith.constant 9.99999974E-6 : f32
    %645 = vector.broadcast %cst_228 : f32 to vector<1x1xf32>
    %646 = arith.addf %644, %645 : vector<1x1xf32>
    %647 = math.rsqrt %646 : vector<1x1xf32>
    %648 = vector.extract_strided_slice %626 {offsets = [0, 0], sizes = [64, 27], strides = [1, 1]} : vector<128x27xf32> to vector<64x27xf32>
    %649 = vector.broadcast %637 : vector<1x1xf32> to vector<64x27xf32>
    %650 = arith.subf %648, %649 : vector<64x27xf32>
    %651 = vector.broadcast %647 : vector<1x1xf32> to vector<64x27xf32>
    %652 = arith.mulf %650, %651 : vector<64x27xf32>
    %653 = vector.extract_strided_slice %627 {offsets = [0, 0], sizes = [64, 1], strides = [1, 1]} : vector<128x1xf32> to vector<64x1xf32>
    %654 = vector.broadcast %653 : vector<64x1xf32> to vector<64x27xf32>
    %655 = arith.mulf %652, %654 : vector<64x27xf32>
    %656 = vector.extract_strided_slice %628 {offsets = [0, 0], sizes = [64, 1], strides = [1, 1]} : vector<128x1xf32> to vector<64x1xf32>
    %657 = vector.broadcast %656 : vector<64x1xf32> to vector<64x27xf32>
    %658 = arith.addf %655, %657 : vector<64x27xf32>
    %659 = vector.extract_strided_slice %630 {offsets = [64, 0], sizes = [64, 1], strides = [1, 1]} : vector<128x1xf32> to vector<64x1xf32>
    %cst_229 = arith.constant dense<0.000000e+00> : vector<1xf32>
    %660 = vector.multi_reduction <add>, %659, %cst_229 [0] : vector<64x1xf32> to vector<1xf32>
    %661 = vector.shape_cast %660 : vector<1xf32> to vector<1x1xf32>
    %cst_230 = arith.constant 6.400000e+01 : f32
    %662 = vector.broadcast %cst_230 : f32 to vector<1x1xf32>
    %663 = arith.divf %661, %662 : vector<1x1xf32>
    %664 = vector.extract_strided_slice %632 {offsets = [64, 0], sizes = [64, 1], strides = [1, 1]} : vector<128x1xf32> to vector<64x1xf32>
    %cst_231 = arith.constant dense<0.000000e+00> : vector<1xf32>
    %665 = vector.multi_reduction <add>, %664, %cst_231 [0] : vector<64x1xf32> to vector<1xf32>
    %666 = vector.shape_cast %665 : vector<1xf32> to vector<1x1xf32>
    %cst_232 = arith.constant 6.400000e+01 : f32
    %667 = vector.broadcast %cst_232 : f32 to vector<1x1xf32>
    %668 = arith.divf %666, %667 : vector<1x1xf32>
    %669 = arith.mulf %663, %663 : vector<1x1xf32>
    %670 = arith.subf %668, %669 : vector<1x1xf32>
    %cst_233 = arith.constant 9.99999974E-6 : f32
    %671 = vector.broadcast %cst_233 : f32 to vector<1x1xf32>
    %672 = arith.addf %670, %671 : vector<1x1xf32>
    %673 = math.rsqrt %672 : vector<1x1xf32>
    %674 = vector.extract_strided_slice %626 {offsets = [64, 0], sizes = [64, 27], strides = [1, 1]} : vector<128x27xf32> to vector<64x27xf32>
    %675 = vector.broadcast %663 : vector<1x1xf32> to vector<64x27xf32>
    %676 = arith.subf %674, %675 : vector<64x27xf32>
    %677 = vector.broadcast %673 : vector<1x1xf32> to vector<64x27xf32>
    %678 = arith.mulf %676, %677 : vector<64x27xf32>
    %679 = vector.extract_strided_slice %627 {offsets = [64, 0], sizes = [64, 1], strides = [1, 1]} : vector<128x1xf32> to vector<64x1xf32>
    %680 = vector.broadcast %679 : vector<64x1xf32> to vector<64x27xf32>
    %681 = arith.mulf %678, %680 : vector<64x27xf32>
    %682 = vector.extract_strided_slice %628 {offsets = [64, 0], sizes = [64, 1], strides = [1, 1]} : vector<128x1xf32> to vector<64x1xf32>
    %683 = vector.broadcast %682 : vector<64x1xf32> to vector<64x27xf32>
    %684 = arith.addf %681, %683 : vector<64x27xf32>
    %685 = tpu.concatenate %658, %684 in 0 : vector<64x27xf32>, vector<64x27xf32> -> vector<128x27xf32>
    %cst_234 = arith.constant 0.000000e+00 : f32
    %686 = vector.broadcast %cst_234 : f32 to vector<128x27xf32>
    %687 = arith.maximumf %685, %686 : vector<128x27xf32>
    %cst_235 = arith.constant 0.0370370373 : f32
    %688 = vector.broadcast %cst_235 : f32 to vector<27x1xf32>
    %cst_236 = arith.constant dense<0.000000e+00> : vector<128x1xf32>
    %689 = tpu.matmul %687, %688, %cst_236 {dimension_numbers = #tpu.dot_dimension_numbers<[1], [0], [0], [1], [0, 0, 1, 1], [], []>} : vector<128x27xf32>, vector<27x1xf32>, vector<128x1xf32> -> vector<128x1xf32>
    %c1176 = arith.constant 1176 : index
    %c0_237 = arith.constant 0 : index
    %690 = vector.load %arg5[%c1176, %c0_237] : memref<1184x384xf32, #tpu.memory_space<vmem>>, vector<6x128xf32>
    %cst_238 = arith.constant dense<0.000000e+00> : vector<6x1xf32>
    %691 = tpu.matmul %690, %689, %cst_238 {dimension_numbers = #tpu.dot_dimension_numbers<[1], [0], [0], [1], [0, 0, 1, 1], [], []>} : vector<6x128xf32>, vector<128x1xf32>, vector<6x1xf32> -> vector<6x1xf32>
    %c1440 = arith.constant 1440 : index
    %c0_239 = arith.constant 0 : index
    %692 = vector.load %arg6[%c1440, %c0_239] : memref<1448x1xf32, #tpu.memory_space<vmem>>, vector<6x1xf32>
    %693 = arith.addf %691, %692 : vector<6x1xf32>
    %c0_240 = arith.constant 0 : index
    %c0_241 = arith.constant 0 : index
    %c0_242 = arith.constant 0 : index
    %694 = vector.load %arg7[%c0_240, %c0_241, %c0_242] : memref<1x6x1xf32, #tpu.memory_space<vmem>>, vector<1x6x1xf32>
    %695 = vector.shape_cast %694 : vector<1x6x1xf32> to vector<6x1xf32>
    %696 = vector.shape_cast %693 : vector<6x1xf32> to vector<1x6x1xf32>
    tpu.vector_store %arg7[%c0_240, %c0_241, %c0_242], %696 {strides = array<i32>} : memref<1x6x1xf32, #tpu.memory_space<vmem>>, vector<1x6x1xf32>,
    return
  }
  func.func @transform_0(%arg0: i32) -> (i32, i32, i32) {
    %c0_i32 = arith.constant 0 : i32
    %c0_i32_0 = arith.constant 0 : i32
    %c0_i32_1 = arith.constant 0 : i32
    return %arg0, %c0_i32, %c0_i32_0 : i32, i32, i32
  }
  func.func @transform_1(%arg0: i32) -> (i32, i32) {
    %c0_i32 = arith.constant 0 : i32
    %c0_i32_0 = arith.constant 0 : i32
    %c0_i32_1 = arith.constant 0 : i32
    return %c0_i32, %c0_i32_0 : i32, i32
  }
  func.func @transform_2(%arg0: i32) -> (i32, i32) {
    %c0_i32 = arith.constant 0 : i32
    %c0_i32_0 = arith.constant 0 : i32
    %c0_i32_1 = arith.constant 0 : i32
    return %c0_i32, %c0_i32_0 : i32, i32
  }
  func.func @transform_3(%arg0: i32) -> (i32, i32) {
    %c0_i32 = arith.constant 0 : i32
    %c0_i32_0 = arith.constant 0 : i32
    %c0_i32_1 = arith.constant 0 : i32
    return %c0_i32, %c0_i32_0 : i32, i32
  }
  func.func @transform_4(%arg0: i32) -> (i32, i32) {
    %c0_i32 = arith.constant 0 : i32
    %c0_i32_0 = arith.constant 0 : i32
    %c0_i32_1 = arith.constant 0 : i32
    return %c0_i32, %c0_i32_0 : i32, i32
  }
  func.func @transform_5(%arg0: i32) -> (i32, i32) {
    %c0_i32 = arith.constant 0 : i32
    %c0_i32_0 = arith.constant 0 : i32
    %c0_i32_1 = arith.constant 0 : i32
    return %c0_i32, %c0_i32_0 : i32, i32
  }
  func.func @transform_6(%arg0: i32) -> (i32, i32, i32) {
    %c0_i32 = arith.constant 0 : i32
    %c0_i32_0 = arith.constant 0 : i32
    %c0_i32_1 = arith.constant 0 : i32
    return %arg0, %c0_i32, %c0_i32_0 : i32, i32, i32
  }
}

</mosaic_0001>

<llo_original>
// kernel: mwa_cnn_forward.1
$region0: #{mwa_cnn_forward.1}
  #allocation0 [shape = 'u32[]', space=smem, size = 0x4, offset = 0x4, fixed_abs, tag = 'smem constant byte address 0x4 - core index']
  #allocation1 [shape = 'u32[144,128]{1,0:T(1,128)}', space=vmem, size = 0x12000, scoped, tag = 'internal scratch']
  %s0 = inlined_call_operand.vmem [shape: f32[2,1,256], index: 0, kind: input, shape index: {}]
  %s1 = inlined_call_operand.vmem [shape: f32[256,640], index: 1, kind: input, shape index: {}]
  %s2 = inlined_call_operand.vmem [shape: f32[128,320], index: 2, kind: input, shape index: {}]
  %s3 = inlined_call_operand.vmem [shape: f32[64,64], index: 3, kind: input, shape index: {}]
  %s4 = inlined_call_operand.vmem [shape: f32[1184,384], index: 4, kind: input, shape index: {}]
  %s5 = inlined_call_operand.vmem [shape: f32[1448,1], index: 5, kind: input, shape index: {}]
  %s6 = inlined_call_operand.vmem [shape: f32[2,6,1], index: 6, kind: output, shape index: {}]
  %s7 = sld [smem:[#allocation0]]
  $region57: #{mwa_cnn_forward.1} parent=0
    _
  %s9 = ssub.s32 1, %s7
  %s10 = scalar_select 0, %s9, %s7
  loop: start=0, step=1, limit=4
  $region2: #{mwa_cnn_forward.1} parent=0 // loop_pre_header
    _
  $region3: #{mwa_cnn_forward.1} parent=0 // loop_header
    %s12 = sphi 0, %s16
    %p13 = scmp.ge.s32.totalorder %s12, 4
    %s22 = sphi 0, %s24
    %s25 = sphi 0, %s22
    %s26 = sphi 0, %s25
    %s42 = sphi 0, %s26
    %s46 = sphi 0, %s46
    %s48 = sphi 0, %s46
    %s49 = sphi 0, %s48
    %s63 = sphi 0, %s49
    %s67 = sphi 0, %s67
    %s69 = sphi 0, %s67
    %s70 = sphi 0, %s69
    %s84 = sphi 0, %s70
    %s88 = sphi 0, %s88
    %s90 = sphi 0, %s88
    %s91 = sphi 0, %s90
    %s105 = sphi 0, %s91
    %s109 = sphi 0, %s109
    %s111 = sphi 0, %s109
    %s112 = sphi 0, %s111
    %s126 = sphi 0, %s112
    %s130 = sphi 0, %s130
    %s132 = sphi 0, %s130
    %s133 = sphi 0, %s132
    %s147 = sphi 0, %s133
    %s153 = sphi 0, %s155
    %s156 = sphi 0, %s153
    %s157 = sphi 0, %s156
    %s173 = sphi 0, %s157
  $region4: #{mwa_cnn_forward.1} parent=0 // loop_header_branch
    %15 = sbr.rel (%p13) target = $region8
  $region5: #{mwa_cnn_forward.1} parent=0 // loop_body
    %s17 = ssub.s32 %s12, 1
    %s18 = ssub.s32 %s12, 2
    %s19 = sadd.s32 %s12, 1
    %s20 = ssub.s32 %s12, %s19
    %p21 = scmp.eq.s32.totalorder %s20, 0
    %s23 = sadd.s32 %s22, 1
    %s24 = scalar_select %p21, %s22, %s23
    %p27 = pneg %p21
    %p28 = scmp.eq.s32.totalorder %s12, 1
    %p29 = por %p27, %p28
    %p30 = scmp.ne.s32.totalorder %s22, %s25
    %p31 = scmp.eq.s32.totalorder %s12, 0
    %p32 = por %p30, %p31
    %p33 = scmp.ne.s32.totalorder %s22, %s25
    %p34 = scmp.eq.s32.totalorder %s17, 1
    %p35 = por %p33, %p34
    %p36 = scmp.ne.s32.totalorder %s25, %s26
    %p37 = scmp.eq.s32.totalorder %s17, 0
    %p38 = por %p36, %p37
    %p39 = scmp.ne.s32.totalorder %s25, %s26
    %p40 = scmp.eq.s32.totalorder %s18, 1
    %p41 = por %p39, %p40
    %p43 = scmp.ne.s32.totalorder %s26, %s42
    %p44 = scmp.eq.s32.totalorder %s18, 0
    %p45 = por %p43, %p44
    %s47 = sadd.s32 %s46, 1
    %p50 = scmp.eq.s32.totalorder %s12, 1
    %p51 = scmp.ne.s32.totalorder %s46, %s48
    %p52 = scmp.eq.s32.totalorder %s12, 0
    %p53 = por %p51, %p52
    %p54 = scmp.ne.s32.totalorder %s46, %s48
    %p55 = scmp.eq.s32.totalorder %s17, 1
    %p56 = por %p54, %p55
    %p57 = scmp.ne.s32.totalorder %s48, %s49
    %p58 = scmp.eq.s32.totalorder %s17, 0
    %p59 = por %p57, %p58
    %p60 = scmp.ne.s32.totalorder %s48, %s49
    %p61 = scmp.eq.s32.totalorder %s18, 1
    %p62 = por %p60, %p61
    %p64 = scmp.ne.s32.totalorder %s49, %s63
    %p65 = scmp.eq.s32.totalorder %s18, 0
    %p66 = por %p64, %p65
    %s68 = sadd.s32 %s67, 1
    %p71 = scmp.eq.s32.totalorder %s12, 1
    %p72 = scmp.ne.s32.totalorder %s67, %s69
    %p73 = scmp.eq.s32.totalorder %s12, 0
    %p74 = por %p72, %p73
    %p75 = scmp.ne.s32.totalorder %s67, %s69
    %p76 = scmp.eq.s32.totalorder %s17, 1
    %p77 = por %p75, %p76
    %p78 = scmp.ne.s32.totalorder %s69, %s70
    %p79 = scmp.eq.s32.totalorder %s17, 0
    %p80 = por %p78, %p79
    %p81 = scmp.ne.s32.totalorder %s69, %s70
    %p82 = scmp.eq.s32.totalorder %s18, 1
    %p83 = por %p81, %p82
    %p85 = scmp.ne.s32.totalorder %s70, %s84
    %p86 = scmp.eq.s32.totalorder %s18, 0
    %p87 = por %p85, %p86
    %s89 = sadd.s32 %s88, 1
    %p92 = scmp.eq.s32.totalorder %s12, 1
    %p93 = scmp.ne.s32.totalorder %s88, %s90
    %p94 = scmp.eq.s32.totalorder %s12, 0
    %p95 = por %p93, %p94
    %p96 = scmp.ne.s32.totalorder %s88, %s90
    %p97 = scmp.eq.s32.totalorder %s17, 1
    %p98 = por %p96, %p97
    %p99 = scmp.ne.s32.totalorder %s90, %s91
    %p100 = scmp.eq.s32.totalorder %s17, 0
    %p101 = por %p99, %p100
    %p102 = scmp.ne.s32.totalorder %s90, %s91
    %p103 = scmp.eq.s32.totalorder %s18, 1
    %p104 = por %p102, %p103
    %p106 = scmp.ne.s32.totalorder %s91, %s105
    %p107 = scmp.eq.s32.totalorder %s18, 0
    %p108 = por %p106, %p107
    %s110 = sadd.s32 %s109, 1
    %p113 = scmp.eq.s32.totalorder %s12, 1
    %p114 = scmp.ne.s32.totalorder %s109, %s111
    %p115 = scmp.eq.s32.totalorder %s12, 0
    %p116 = por %p114, %p115
    %p117 = scmp.ne.s32.totalorder %s109, %s111
    %p118 = scmp.eq.s32.totalorder %s17, 1
    %p119 = por %p117, %p118
    %p120 = scmp.ne.s32.totalorder %s111, %s112
    %p121 = scmp.eq.s32.totalorder %s17, 0
    %p122 = por %p120, %p121
    %p123 = scmp.ne.s32.totalorder %s111, %s112
    %p124 = scmp.eq.s32.totalorder %s18, 1
    %p125 = por %p123, %p124
    %p127 = scmp.ne.s32.totalorder %s112, %s126
    %p128 = scmp.eq.s32.totalorder %s18, 0
    %p129 = por %p127, %p128
    %s131 = sadd.s32 %s130, 1
    %p134 = scmp.eq.s32.totalorder %s12, 1
    %p135 = scmp.ne.s32.totalorder %s130, %s132
    %p136 = scmp.eq.s32.totalorder %s12, 0
    %p137 = por %p135, %p136
    %p138 = scmp.ne.s32.totalorder %s130, %s132
    %p139 = scmp.eq.s32.totalorder %s17, 1
    %p140 = por %p138, %p139
    %p141 = scmp.ne.s32.totalorder %s132, %s133
    %p142 = scmp.eq.s32.totalorder %s17, 0
    %p143 = por %p141, %p142
    %p144 = scmp.ne.s32.totalorder %s132, %s133
    %p145 = scmp.eq.s32.totalorder %s18, 1
    %p146 = por %p144, %p145
    %p148 = scmp.ne.s32.totalorder %s133, %s147
    %p149 = scmp.eq.s32.totalorder %s18, 0
    %p150 = por %p148, %p149
    %s151 = ssub.s32 %s12, %s19
    %p152 = scmp.eq.s32.totalorder %s151, 0
    %s154 = sadd.s32 %s153, 1
    %s155 = scalar_select %p152, %s153, %s154
    %p158 = pneg %p152
    %p159 = scmp.eq.s32.totalorder %s12, 1
    %p160 = por %p158, %p159
    %p161 = scmp.ne.s32.totalorder %s153, %s156
    %p162 = scmp.eq.s32.totalorder %s12, 0
    %p163 = por %p161, %p162
    %p164 = scmp.ne.s32.totalorder %s153, %s156
    %p165 = scmp.eq.s32.totalorder %s17, 1
    %p166 = por %p164, %p165
    %p167 = scmp.ne.s32.totalorder %s156, %s157
    %p168 = scmp.eq.s32.totalorder %s17, 0
    %p169 = por %p167, %p168
    %p170 = scmp.ne.s32.totalorder %s156, %s157
    %p171 = scmp.eq.s32.totalorder %s18, 1
    %p172 = por %p170, %p171
    %p174 = scmp.ne.s32.totalorder %s157, %s173
    %p175 = scmp.eq.s32.totalorder %s18, 0
    %p176 = por %p174, %p175
    %p177 = scmp.le.s32.totalorder 1, %s12
    %p178 = scmp.lt.s32.totalorder %s12, 3
    %p179 = pnand %p177, %p178
    %p180 = pneg %p179
    // Predicated region
    $region9: #{mwa_cnn_forward.1} parent=5 // pred_check
      _
    $region10: #{mwa_cnn_forward.1} parent=5 // pred_check_branch
      %182 = sbr.rel (%p179) target = $region12
    $region11: #{mwa_cnn_forward.1} parent=5 // pred_region
      %s183 = ssub.s32 %s12, 1
      // Predicated region
      $region13: #{mwa_cnn_forward.1} parent=11 // pred_check
        %p184 = pneg %p59
      $region14: #{mwa_cnn_forward.1} parent=11 // pred_check_branch
        %186 = sbr.rel (%p184) target = $region16
      $region15: #{mwa_cnn_forward.1} parent=11 // pred_region
        _
      $region16: #{mwa_cnn_forward.1} parent=11 // pred_fallthru
        _
      // Predicated region
      $region17: #{mwa_cnn_forward.1} parent=11 // pred_check
        %p187 = pneg %p80
      $region18: #{mwa_cnn_forward.1} parent=11 // pred_check_branch
        %189 = sbr.rel (%p187) target = $region20
      $region19: #{mwa_cnn_forward.1} parent=11 // pred_region
        _
      $region20: #{mwa_cnn_forward.1} parent=11 // pred_fallthru
        _
      // Predicated region
      $region21: #{mwa_cnn_forward.1} parent=11 // pred_check
        %p190 = pneg %p101
      $region22: #{mwa_cnn_forward.1} parent=11 // pred_check_branch
        %192 = sbr.rel (%p190) target = $region24
      $region23: #{mwa_cnn_forward.1} parent=11 // pred_region
        _
      $region24: #{mwa_cnn_forward.1} parent=11 // pred_fallthru
        _
      // Predicated region
      $region25: #{mwa_cnn_forward.1} parent=11 // pred_check
        %p193 = pneg %p122
      $region26: #{mwa_cnn_forward.1} parent=11 // pred_check_branch
        %195 = sbr.rel (%p193) target = $region28
      $region27: #{mwa_cnn_forward.1} parent=11 // pred_region
        _
      $region28: #{mwa_cnn_forward.1} parent=11 // pred_fallthru
        _
      // Predicated region
      $region29: #{mwa_cnn_forward.1} parent=11 // pred_check
        %p196 = pneg %p143
      $region30: #{mwa_cnn_forward.1} parent=11 // pred_check_branch
        %198 = sbr.rel (%p196) target = $region32
      $region31: #{mwa_cnn_forward.1} parent=11 // pred_region
        _
      $region32: #{mwa_cnn_forward.1} parent=11 // pred_fallthru
        _
    $region12: #{mwa_cnn_forward.1} parent=5 // pred_fallthru
      _
    %p199 = scmp.lt.s32.totalorder %s12, 2
    // Predicated region
    $region33: #{mwa_cnn_forward.1} parent=5 // pred_check
      %p200 = pneg %p199
    $region34: #{mwa_cnn_forward.1} parent=5 // pred_check_branch
      %202 = sbr.rel (%p200) target = $region36
    $region35: #{mwa_cnn_forward.1} parent=5 // pred_region
      // Predicated region
      $region37: #{mwa_cnn_forward.1} parent=35 // pred_check
        %p203 = pneg %p32
      $region38: #{mwa_cnn_forward.1} parent=35 // pred_check_branch
        %205 = sbr.rel (%p203) target = $region40
      $region39: #{mwa_cnn_forward.1} parent=35 // pred_region
        %p206 = scmp.lt.s32.totalorder %s12, 1
        %s207 = scalar_select %p206, %s12, 1
        %s208 = smul.addr %s207, 2
        %s209 = scalar_lea.vmem %s0, %s208
      $region40: #{mwa_cnn_forward.1} parent=35 // pred_fallthru
        _
    $region36: #{mwa_cnn_forward.1} parent=5 // pred_fallthru
      _
    %p210 = scmp.le.s32.totalorder 1, %s12
    %p211 = scmp.lt.s32.totalorder %s12, 3
    %p212 = pnand %p210, %p211
    %p213 = pneg %p212
    // Predicated region
    $region41: #{mwa_cnn_forward.1} parent=5 // pred_check
      _
    $region42: #{mwa_cnn_forward.1} parent=5 // pred_check_branch
      %215 = sbr.rel (%p212) target = $region44
    $region43: #{mwa_cnn_forward.1} parent=5 // pred_region
      %s216 = ssub.s32 %s12, 1
      %p217 = scmp.lt.s32.totalorder %s17, 1
      %s218 = scalar_select %p217, %s17, 1
      %s219 = smul.addr %s218, 2
      %s220 = scalar_lea.vmem %s0, %s219
      %p221 = pneg %p38
      %p222 = pneg %p35
      %p223 = pneg %p59
      %p224 = pneg %p56
      %p225 = pneg %p80
      %p226 = pneg %p77
      %p227 = pneg %p101
      %p228 = pneg %p98
      %p229 = pneg %p122
      %p230 = pneg %p119
      %p231 = pneg %p143
      %p232 = pneg %p140
      %p233 = pneg %p169
      %p234 = pneg %p166
      %p235 = scmp.lt.s32.totalorder %s17, 1
      %s236 = scalar_select %p235, %s17, 1
      %s237 = smul.addr %s236, 8
      %s238 = scalar_lea.vmem %s6, %s237
      %p239 = scmp.lt.s32.totalorder %s17, 1
      %s240 = scalar_select %p239, %s17, 1
      %s241 = smul.addr %s240, 2
      %s242 = scalar_lea.vmem %s0, %s241
      %p243 = scmp.lt.s32.totalorder %s17, 1
      %s244 = scalar_select %p243, %s17, 1
      %s245 = smul.addr %s244, 8
      %s246 = scalar_lea.vmem %s6, %s245
      %v247 = vld [vmem:[%s242] sm:$0x3]
      %v248 = vld [vmem:[%s1] sm:$0xff]
      %v249 = vld [vmem:[%s1 + $0x8] sm:$0xff]
      %v250 = vld [vmem:[%s1 + $0x10] sm:$0xff]
      %v251 = vld [vmem:[%s1 + $0x18] sm:$0xff]
      %v252 = vld [vmem:[%s1 + $0x20] sm:$0xff]
      %v253 = vld [vmem:[%s1 + $0x28] sm:$0xff]
      %v254 = vld [vmem:[%s1 + $0x30] sm:$0xff]
      %v255 = vld [vmem:[%s1 + $0x38] sm:$0xff]
      %v256 = vld [vmem:[%s1 + $0x40] sm:$0xff]
      %v257 = vld [vmem:[%s1 + $0x48] sm:$0xff]
      %v258 = vld [vmem:[%s1 + $0x50] sm:$0xff]
      %v259 = vld [vmem:[%s1 + $0x58] sm:$0xff]
      %v260 = vld [vmem:[%s1 + $0x60] sm:$0xff]
      %v261 = vld [vmem:[%s1 + $0x68] sm:$0xff]
      %v262 = vld [vmem:[%s1 + $0x70] sm:$0xff]
      %v263 = vld [vmem:[%s1 + $0x78] sm:$0xff]
      %v264 = vld [vmem:[%s1 + $0x80] sm:$0xff]
      %v265 = vld [vmem:[%s1 + $0x88] sm:$0xff]
      %v266 = vld [vmem:[%s1 + $0x90] sm:$0xff]
      %v267 = vld [vmem:[%s1 + $0x98] sm:$0xff]
      %v268 = vld [vmem:[%s1 + $0xa0] sm:$0xff]
      %v269 = vld [vmem:[%s1 + $0xa8] sm:$0xff]
      %v270 = vld [vmem:[%s1 + $0xb0] sm:$0xff]
      %v271 = vld [vmem:[%s1 + $0xb8] sm:$0xff]
      %v272 = vld [vmem:[%s1 + $0xc0] sm:$0xff]
      %v273 = vld [vmem:[%s1 + $0xc8] sm:$0xff]
      %v274 = vld [vmem:[%s1 + $0xd0] sm:$0xff]
      %v275 = vld [vmem:[%s1 + $0xd8] sm:$0xff]
      %v276 = vld [vmem:[%s1 + $0xe0] sm:$0xff]
      %v277 = vld [vmem:[%s1 + $0xe8] sm:$0xff]
      %v278 = vld [vmem:[%s1 + $0xf0] sm:$0xff]
      %v279 = vld [vmem:[%s1 + $0xf8] sm:$0xff]
      %v280 = vld [vmem:[%s1 + $0x100] sm:$0xff]
      %v281 = vld [vmem:[%s1 + $0x108] sm:$0xff]
      %v282 = vld [vmem:[%s1 + $0x110] sm:$0xff]
      %v283 = vld [vmem:[%s1 + $0x118] sm:$0xff]
      %v284 = vld [vmem:[%s1 + $0x120] sm:$0xff]
      %v285 = vld [vmem:[%s1 + $0x128] sm:$0xff]
      %v286 = vld [vmem:[%s1 + $0x130] sm:$0xff]
      %v287 = vld [vmem:[%s1 + $0x138] sm:$0xff]
      %v288 = vld [vmem:[%s1 + $0x140] sm:$0xff]
      %v289 = vld [vmem:[%s1 + $0x148] sm:$0xff]
      %v290 = vld [vmem:[%s1 + $0x150] sm:$0xff]
      %v291 = vld [vmem:[%s1 + $0x158] sm:$0xff]
      %v292 = vld [vmem:[%s1 + $0x160] sm:$0xff]
      %v293 = vld [vmem:[%s1 + $0x168] sm:$0xff]
      %v294 = vld [vmem:[%s1 + $0x170] sm:$0xff]
      %v295 = vld [vmem:[%s1 + $0x178] sm:$0xff]
      %v296 = vld [vmem:[%s1 + $0x180] sm:$0xff]
      %v297 = vld [vmem:[%s1 + $0x188] sm:$0xff]
      %v298 = vld [vmem:[%s1 + $0x190] sm:$0xff]
      %v299 = vld [vmem:[%s1 + $0x198] sm:$0xff]
      %v300 = vld [vmem:[%s1 + $0x1a0] sm:$0xff]
      %v301 = vld [vmem:[%s1 + $0x1a8] sm:$0xff]
      %v302 = vld [vmem:[%s1 + $0x1b0] sm:$0xff]
      %v303 = vld [vmem:[%s1 + $0x1b8] sm:$0xff]
      %v304 = vld [vmem:[%s1 + $0x1c0] sm:$0xff]
      %v305 = vld [vmem:[%s1 + $0x1c8] sm:$0xff]
      %v306 = vld [vmem:[%s1 + $0x1d0] sm:$0xff]
      %v307 = vld [vmem:[%s1 + $0x1d8] sm:$0xff]
      %v308 = vld [vmem:[%s1 + $0x1e0] sm:$0xff]
      %v309 = vld [vmem:[%s1 + $0x1e8] sm:$0xff]
      %v310 = vld [vmem:[%s1 + $0x1f0] sm:$0xff]
      %v311 = vld [vmem:[%s1 + $0x1f8] sm:$0xff]
      %v312 = vld [vmem:[%s1 + $0x200] sm:$0xff]
      %v313 = vld [vmem:[%s1 + $0x208] sm:$0xff]
      %v314 = vld [vmem:[%s1 + $0x210] sm:$0xff]
      %v315 = vld [vmem:[%s1 + $0x218] sm:$0xff]
      %v316 = vld [vmem:[%s1 + $0x220] sm:$0xff]
      %v317 = vld [vmem:[%s1 + $0x228] sm:$0xff]
      %v318 = vld [vmem:[%s1 + $0x230] sm:$0xff]
      %v319 = vld [vmem:[%s1 + $0x238] sm:$0xff]
      %v320 = vld [vmem:[%s1 + $0x240] sm:$0xff]
      %v321 = vld [vmem:[%s1 + $0x248] sm:$0xff]
      %v322 = vld [vmem:[%s1 + $0x250] sm:$0xff]
      %v323 = vld [vmem:[%s1 + $0x258] sm:$0xff]
      %v324 = vld [vmem:[%s1 + $0x260] sm:$0xff]
      %v325 = vld [vmem:[%s1 + $0x268] sm:$0xff]
      %v326 = vld [vmem:[%s1 + $0x270] sm:$0xff]
      %v327 = vld [vmem:[%s1 + $0x278] sm:$0xff]
      %v328 = vld [vmem:[%s1 + $0x280] sm:$0xff]
      %v329 = vld [vmem:[%s1 + $0x288] sm:$0xff]
      %v330 = vld [vmem:[%s1 + $0x290] sm:$0xff]
      %v331 = vld [vmem:[%s1 + $0x298] sm:$0xff]
      %v332 = vld [vmem:[%s1 + $0x2a0] sm:$0xff]
      %v333 = vld [vmem:[%s1 + $0x2a8] sm:$0xff]
      %v334 = vld [vmem:[%s1 + $0x2b0] sm:$0xff]
      %v335 = vld [vmem:[%s1 + $0x2b8] sm:$0xff]
      %v336 = vld [vmem:[%s1 + $0x2c0] sm:$0xff]
      %v337 = vld [vmem:[%s1 + $0x2c8] sm:$0xff]
      %v338 = vld [vmem:[%s1 + $0x2d0] sm:$0xff]
      %v339 = vld [vmem:[%s1 + $0x2d8] sm:$0xff]
      %v340 = vld [vmem:[%s1 + $0x2e0] sm:$0xff]
      %v341 = vld [vmem:[%s1 + $0x2e8] sm:$0xff]
      %v342 = vld [vmem:[%s1 + $0x2f0] sm:$0xff]
      %v343 = vld [vmem:[%s1 + $0x2f8] sm:$0xff]
      %v344 = vld [vmem:[%s1 + $0x300] sm:$0xff]
      %v345 = vld [vmem:[%s1 + $0x308] sm:$0xff]
      %v346 = vld [vmem:[%s1 + $0x310] sm:$0xff]
      %v347 = vld [vmem:[%s1 + $0x318] sm:$0xff]
      %v348 = vld [vmem:[%s1 + $0x320] sm:$0xff]
      %v349 = vld [vmem:[%s1 + $0x328] sm:$0xff]
      %v350 = vld [vmem:[%s1 + $0x330] sm:$0xff]
      %v351 = vld [vmem:[%s1 + $0x338] sm:$0xff]
      %v352 = vld [vmem:[%s1 + $0x340] sm:$0xff]
      %v353 = vld [vmem:[%s1 + $0x348] sm:$0xff]
      %v354 = vld [vmem:[%s1 + $0x350] sm:$0xff]
      %v355 = vld [vmem:[%s1 + $0x358] sm:$0xff]
      %v356 = vld [vmem:[%s1 + $0x360] sm:$0xff]
      %v357 = vld [vmem:[%s1 + $0x368] sm:$0xff]
      %v358 = vld [vmem:[%s1 + $0x370] sm:$0xff]
      %v359 = vld [vmem:[%s1 + $0x378] sm:$0xff]
      %v360 = vld [vmem:[%s1 + $0x380] sm:$0xff]
      %v361 = vld [vmem:[%s1 + $0x388] sm:$0xff]
      %v362 = vld [vmem:[%s1 + $0x390] sm:$0xff]
      %v363 = vld [vmem:[%s1 + $0x398] sm:$0xff]
      %v364 = vld [vmem:[%s1 + $0x3a0] sm:$0xff]
      %v365 = vld [vmem:[%s1 + $0x3a8] sm:$0xff]
      %v366 = vld [vmem:[%s1 + $0x3b0] sm:$0xff]
      %v367 = vld [vmem:[%s1 + $0x3b8] sm:$0xff]
      %v368 = vld [vmem:[%s1 + $0x3c0] sm:$0xff]
      %v369 = vld [vmem:[%s1 + $0x3c8] sm:$0xff]
      %v370 = vld [vmem:[%s1 + $0x3d0] sm:$0xff]
      %v371 = vld [vmem:[%s1 + $0x3d8] sm:$0xff]
      %v372 = vld [vmem:[%s1 + $0x3e0] sm:$0xff]
      %v373 = vld [vmem:[%s1 + $0x3e8] sm:$0xff]
      %v374 = vld [vmem:[%s1 + $0x3f0] sm:$0xff]
      %v375 = vld [vmem:[%s1 + $0x3f8] sm:$0xff]
      %v376 = vld [vmem:[%s1 + $0x400] sm:$0xff]
      %v377 = vld [vmem:[%s1 + $0x408] sm:$0xff]
      %v378 = vld [vmem:[%s1 + $0x410] sm:$0xff]
      %v379 = vld [vmem:[%s1 + $0x418] sm:$0xff]
      %v380 = vld [vmem:[%s1 + $0x420] sm:$0xff]
      %v381 = vld [vmem:[%s1 + $0x428] sm:$0xff]
      %v382 = vld [vmem:[%s1 + $0x430] sm:$0xff]
      %v383 = vld [vmem:[%s1 + $0x438] sm:$0xff]
      %v384 = vld [vmem:[%s1 + $0x440] sm:$0xff]
      %v385 = vld [vmem:[%s1 + $0x448] sm:$0xff]
      %v386 = vld [vmem:[%s1 + $0x450] sm:$0xff]
      %v387 = vld [vmem:[%s1 + $0x458] sm:$0xff]
      %v388 = vld [vmem:[%s1 + $0x460] sm:$0xff]
      %v389 = vld [vmem:[%s1 + $0x468] sm:$0xff]
      %v390 = vld [vmem:[%s1 + $0x470] sm:$0xff]
      %v391 = vld [vmem:[%s1 + $0x478] sm:$0xff]
      %v392 = vld [vmem:[%s1 + $0x480] sm:$0xff]
      %v393 = vld [vmem:[%s1 + $0x488] sm:$0xff]
      %v394 = vld [vmem:[%s1 + $0x490] sm:$0xff]
      %v395 = vld [vmem:[%s1 + $0x498] sm:$0xff]
      %v396 = vld [vmem:[%s1 + $0x4a0] sm:$0xff]
      %v397 = vld [vmem:[%s1 + $0x4a8] sm:$0xff]
      %v398 = vld [vmem:[%s1 + $0x4b0] sm:$0xff]
      %v399 = vld [vmem:[%s1 + $0x4b8] sm:$0xff]
      %v400 = vld [vmem:[%s1 + $0x4c0] sm:$0xff]
      %v401 = vld [vmem:[%s1 + $0x4c8] sm:$0xff]
      %v402 = vld [vmem:[%s1 + $0x4d0] sm:$0xff]
      %v403 = vld [vmem:[%s1 + $0x4d8] sm:$0xff]
      %v404 = vld [vmem:[%s1 + $0x4e0] sm:$0xff]
      %v405 = vld [vmem:[%s1 + $0x4e8] sm:$0xff]
      %v406 = vld [vmem:[%s1 + $0x4f0] sm:$0xff]
      %v407 = vld [vmem:[%s1 + $0x4f8] sm:$0xff]
      %v409 = vlaneseq
      %v410 = vshrl.u32 %v409, 7
      %v411 = vsub.s32 0, %v410
      %v412 = vrot.slane %v247, %v411
      %v413 = vlaneseq
      %v414 = vshrl.u32 %v413, 7
      %v415 = vsub.s32 1, %v414
      %v416 = vrot.slane %v247, %v415
      %419 = vmatprep.subr.mxu0 %v324
      %420 = vmatpush1.msra.mxu0 %v323
      %421 = vmatprep.subr.mxu0 %v319
      %422 = vmatpush1.msra.mxu0 %v318
      %423 = vmatprep.subr.mxu0 %v314
      %424 = vmatpush1.msra.mxu0 %v313
      %425 = vmatprep.subr.mxu0 %v309
      %426 = vmatpush1.msra.mxu0 %v308
      %427 = vmatprep.subr.mxu0 %v304
      %428 = vmatpush1.msra.mxu0 %v303
      %429 = vmatprep.subr.mxu0 %v299
      %430 = vmatpush1.msra.mxu0 %v298
      %431 = vmatprep.subr.mxu0 %v294
      %432 = vmatpush1.msra.mxu0 %v293
      %433 = vmatprep.subr.mxu0 %v289
      %434 = vmatpush1.msra.mxu0 %v288
      %435 = vmatprep.subr.mxu0 %v284
      %436 = vmatpush1.msra.mxu0 %v283
      %437 = vmatprep.subr.mxu0 %v279
      %438 = vmatpush1.msra.mxu0 %v278
      %439 = vmatprep.subr.mxu0 %v274
      %440 = vmatpush1.msra.mxu0 %v273
      %441 = vmatprep.subr.mxu0 %v269
      %442 = vmatpush1.msra.mxu0 %v268
      %443 = vmatprep.subr.mxu0 %v264
      %444 = vmatpush1.msra.mxu0 %v263
      %445 = vmatprep.subr.mxu0 %v259
      %446 = vmatpush1.msra.mxu0 %v258
      %447 = vmatprep.subr.mxu0 %v254
      %448 = vmatpush1.msra.mxu0 %v253
      %449 = vmatprep.subr.mxu0 %v249
      %450 = vmatpush1.msra.mxu0 %v248
      %451 = vmatprep.subr.mxu0 %v404
      %452 = vmatpush2.msra.mxu0 %v403
      %453 = vmatprep.subr.mxu0 %v399
      %454 = vmatpush2.msra.mxu0 %v398
      %455 = vmatprep.subr.mxu0 %v394
      %456 = vmatpush2.msra.mxu0 %v393
      %457 = vmatprep.subr.mxu0 %v389
      %458 = vmatpush2.msra.mxu0 %v388
      %459 = vmatprep.subr.mxu0 %v384
      %460 = vmatpush2.msra.mxu0 %v383
      %461 = vmatprep.subr.mxu0 %v379
      %462 = vmatpush2.msra.mxu0 %v378
      %463 = vmatprep.subr.mxu0 %v374
      %464 = vmatpush2.msra.mxu0 %v373
      %465 = vmatprep.subr.mxu0 %v369
      %466 = vmatpush2.msra.mxu0 %v368
      %467 = vmatprep.subr.mxu0 %v364
      %468 = vmatpush2.msra.mxu0 %v363
      %469 = vmatprep.subr.mxu0 %v359
      %470 = vmatpush2.msra.mxu0 %v358
      %471 = vmatprep.subr.mxu0 %v354
      %472 = vmatpush2.msra.mxu0 %v353
      %473 = vmatprep.subr.mxu0 %v349
      %474 = vmatpush2.msra.mxu0 %v348
      %475 = vmatprep.subr.mxu0 %v344
      %476 = vmatpush2.msra.mxu0 %v343
      %477 = vmatprep.subr.mxu0 %v339
      %478 = vmatpush2.msra.mxu0 %v338
      %479 = vmatprep.subr.mxu0 %v334
      %480 = vmatpush2.msra.mxu0 %v333
      %481 = vmatprep.subr.mxu0 %v329
      %482 = vmatpush2.msra.mxu0 %v328
      %483 = vmatprep.mubr.f32.mxu0 %v416
      %484 = vmatmul.mubr.f32.gmra.mxu0 %v412
      %v485 = vpop.f32.mrf.mxu0
      %v486 = vadd.f32 0.0, %v485
      %v487 = vpop.f32.mrf.mxu0
      %v488 = vadd.f32 0.0, %v487
      %489 = vdwg.mxu0
      %490 = vmatprep.subr.mxu0 %v326
      %491 = vmatpush1.msra.mxu0 %v325
      %492 = vmatprep.subr.mxu0 %v321
      %493 = vmatpush1.msra.mxu0 %v320
      %494 = vmatprep.subr.mxu0 %v316
      %495 = vmatpush1.msra.mxu0 %v315
      %496 = vmatprep.subr.mxu0 %v311
      %497 = vmatpush1.msra.mxu0 %v310
      %498 = vmatprep.subr.mxu0 %v306
      %499 = vmatpush1.msra.mxu0 %v305
      %500 = vmatprep.subr.mxu0 %v301
      %501 = vmatpush1.msra.mxu0 %v300
      %502 = vmatprep.subr.mxu0 %v296
      %503 = vmatpush1.msra.mxu0 %v295
      %504 = vmatprep.subr.mxu0 %v291
      %505 = vmatpush1.msra.mxu0 %v290
      %506 = vmatprep.subr.mxu0 %v286
      %507 = vmatpush1.msra.mxu0 %v285
      %508 = vmatprep.subr.mxu0 %v281
      %509 = vmatpush1.msra.mxu0 %v280
      %510 = vmatprep.subr.mxu0 %v276
      %511 = vmatpush1.msra.mxu0 %v275
      %512 = vmatprep.subr.mxu0 %v271
      %513 = vmatpush1.msra.mxu0 %v270
      %514 = vmatprep.subr.mxu0 %v266
      %515 = vmatpush1.msra.mxu0 %v265
      %516 = vmatprep.subr.mxu0 %v261
      %517 = vmatpush1.msra.mxu0 %v260
      %518 = vmatprep.subr.mxu0 %v256
      %519 = vmatpush1.msra.mxu0 %v255
      %520 = vmatprep.subr.mxu0 %v251
      %521 = vmatpush1.msra.mxu0 %v250
      %522 = vmatprep.subr.mxu0 %v406
      %523 = vmatpush2.msra.mxu0 %v405
      %524 = vmatprep.subr.mxu0 %v401
      %525 = vmatpush2.msra.mxu0 %v400
      %526 = vmatprep.subr.mxu0 %v396
      %527 = vmatpush2.msra.mxu0 %v395
      %528 = vmatprep.subr.mxu0 %v391
      %529 = vmatpush2.msra.mxu0 %v390
      %530 = vmatprep.subr.mxu0 %v386
      %531 = vmatpush2.msra.mxu0 %v385
      %532 = vmatprep.subr.mxu0 %v381
      %533 = vmatpush2.msra.mxu0 %v380
      %534 = vmatprep.subr.mxu0 %v376
      %535 = vmatpush2.msra.mxu0 %v375
      %536 = vmatprep.subr.mxu0 %v371
      %537 = vmatpush2.msra.mxu0 %v370
      %538 = vmatprep.subr.mxu0 %v366
      %539 = vmatpush2.msra.mxu0 %v365
      %540 = vmatprep.subr.mxu0 %v361
      %541 = vmatpush2.msra.mxu0 %v360
      %542 = vmatprep.subr.mxu0 %v356
      %543 = vmatpush2.msra.mxu0 %v355
      %544 = vmatprep.subr.mxu0 %v351
      %545 = vmatpush2.msra.mxu0 %v350
      %546 = vmatprep.subr.mxu0 %v346
      %547 = vmatpush2.msra.mxu0 %v345
      %548 = vmatprep.subr.mxu0 %v341
      %549 = vmatpush2.msra.mxu0 %v340
      %550 = vmatprep.subr.mxu0 %v336
      %551 = vmatpush2.msra.mxu0 %v335
      %552 = vmatprep.subr.mxu0 %v331
      %553 = vmatpush2.msra.mxu0 %v330
      %554 = vmatprep.mubr.f32.mxu0 %v416
      %555 = vmatmul.mubr.f32.gmra.mxu0 %v412
      %v556 = vpop.f32.mrf.mxu0
      %v557 = vadd.f32 0.0, %v556
      %v558 = vpop.f32.mrf.mxu0
      %v559 = vadd.f32 0.0, %v558
      %560 = vdwg.mxu0
      %561 = vmatprep.subr.mxu0 0.0
      %562 = vmatpush1.msra.mxu0 %v327
      %563 = vmatprep.subr.mxu0 0.0
      %564 = vmatpush1.msra.mxu0 %v322
      %565 = vmatprep.subr.mxu0 0.0
      %566 = vmatpush1.msra.mxu0 %v317
      %567 = vmatprep.subr.mxu0 0.0
      %568 = vmatpush1.msra.mxu0 %v312
      %569 = vmatprep.subr.mxu0 0.0
      %570 = vmatpush1.msra.mxu0 %v307
      %571 = vmatprep.subr.mxu0 0.0
      %572 = vmatpush1.msra.mxu0 %v302
      %573 = vmatprep.subr.mxu0 0.0
      %574 = vmatpush1.msra.mxu0 %v297
      %575 = vmatprep.subr.mxu0 0.0
      %576 = vmatpush1.msra.mxu0 %v292
      %577 = vmatprep.subr.mxu0 0.0
      %578 = vmatpush1.msra.mxu0 %v287
      %579 = vmatprep.subr.mxu0 0.0
      %580 = vmatpush1.msra.mxu0 %v282
      %581 = vmatprep.subr.mxu0 0.0
      %582 = vmatpush1.msra.mxu0 %v277
      %583 = vmatprep.subr.mxu0 0.0
      %584 = vmatpush1.msra.mxu0 %v272
      %585 = vmatprep.subr.mxu0 0.0
      %586 = vmatpush1.msra.mxu0 %v267
      %587 = vmatprep.subr.mxu0 0.0
      %588 = vmatpush1.msra.mxu0 %v262
      %589 = vmatprep.subr.mxu0 0.0
      %590 = vmatpush1.msra.mxu0 %v257
      %591 = vmatprep.subr.mxu0 0.0
      %592 = vmatpush1.msra.mxu0 %v252
      %593 = vmatprep.subr.mxu0 0.0
      %594 = vmatpush2.msra.mxu0 %v407
      %595 = vmatprep.subr.mxu0 0.0
      %596 = vmatpush2.msra.mxu0 %v402
      %597 = vmatprep.subr.mxu0 0.0
      %598 = vmatpush2.msra.mxu0 %v397
      %599 = vmatprep.subr.mxu0 0.0
      %600 = vmatpush2.msra.mxu0 %v392
      %601 = vmatprep.subr.mxu0 0.0
      %602 = vmatpush2.msra.mxu0 %v387
      %603 = vmatprep.subr.mxu0 0.0
      %604 = vmatpush2.msra.mxu0 %v382
      %605 = vmatprep.subr.mxu0 0.0
      %606 = vmatpush2.msra.mxu0 %v377
      %607 = vmatprep.subr.mxu0 0.0
      %608 = vmatpush2.msra.mxu0 %v372
      %609 = vmatprep.subr.mxu0 0.0
      %610 = vmatpush2.msra.mxu0 %v367
      %611 = vmatprep.subr.mxu0 0.0
      %612 = vmatpush2.msra.mxu0 %v362
      %613 = vmatprep.subr.mxu0 0.0
      %614 = vmatpush2.msra.mxu0 %v357
      %615 = vmatprep.subr.mxu0 0.0
      %616 = vmatpush2.msra.mxu0 %v352
      %617 = vmatprep.subr.mxu0 0.0
      %618 = vmatpush2.msra.mxu0 %v347
      %619 = vmatprep.subr.mxu0 0.0
      %620 = vmatpush2.msra.mxu0 %v342
      %621 = vmatprep.subr.mxu0 0.0
      %622 = vmatpush2.msra.mxu0 %v337
      %623 = vmatprep.subr.mxu0 0.0
      %624 = vmatpush2.msra.mxu0 %v332
      %625 = vmatprep.mubr.f32.mxu0 %v416
      %626 = vmatmul.mubr.f32.gmra.mxu0 %v412
      %v627 = vpop.f32.mrf.mxu0
      %v628 = vadd.f32 0.0, %v627
      %v629 = vpop.f32.mrf.mxu0
      %630 = vdwg.mxu0
      %v631 = vld [vmem:[%s4] sm:$0xff]
      %v632 = vld [vmem:[%s4 + $0x18] sm:$0xff]
      %v633 = vld [vmem:[%s5] sm:$0xff]
      %v634 = vld [vmem:[%s5 + $0x8] sm:$0xff]
      %636 = vset.pattern.permute.xlu0 0
      %637 = vperm.xlu0 %636, %v631
      %v638 = vpop.permute.xlu0 %637
      %641 = vset.pattern.permute.xlu0 0
      %642 = vperm.xlu0 %641, %v632
      %v643 = vpop.permute.xlu0 %642
      %v645 = vlaneseq
      %v646 = vshrl.u32 %v645, 7
      %v647 = vsub.s32 0, %v646
      %v648 = vrot.slane %v486, %v647
      %v649 = vmul.f32 %v638, %v648
      %v650 = vmul.f32 %v643, %v648
      %652 = vset.pattern.permute.xlu0 0
      %653 = vperm.xlu0 %652, %v633
      %v654 = vpop.permute.xlu0 %653
      %657 = vset.pattern.permute.xlu0 0
      %658 = vperm.xlu0 %657, %v634
      %v659 = vpop.permute.xlu0 %658
      %v661 = vadd.f32 %v654, %v649
      %v662 = vadd.f32 %v659, %v650
      %663 = vset.pattern.permute.xlu0 1
      %664 = vperm.xlu0 %663, %v631
      %v665 = vpop.permute.xlu0 %664
      %667 = vset.pattern.permute.xlu0 1
      %668 = vperm.xlu0 %667, %v632
      %v669 = vpop.permute.xlu0 %668
      %v671 = vlaneseq
      %v672 = vshrl.u32 %v671, 7
      %v673 = vsub.s32 0, %v672
      %v674 = vrot.slane %v488, %v673
      %v675 = vmul.f32 %v665, %v674
      %v676 = vmul.f32 %v669, %v674
      %v677 = vadd.f32 %v661, %v675
      %v678 = vadd.f32 %v662, %v676
      %679 = vset.pattern.permute.xlu0 2
      %680 = vperm.xlu0 %679, %v631
      %v681 = vpop.permute.xlu0 %680
      %683 = vset.pattern.permute.xlu0 2
      %684 = vperm.xlu0 %683, %v632
      %v685 = vpop.permute.xlu0 %684
      %v687 = vlaneseq
      %v688 = vshrl.u32 %v687, 7
      %v689 = vsub.s32 0, %v688
      %v690 = vrot.slane %v557, %v689
      %v691 = vmul.f32 %v681, %v690
      %v692 = vmul.f32 %v685, %v690
      %v693 = vadd.f32 %v677, %v691
      %v694 = vadd.f32 %v678, %v692
      %695 = vset.pattern.permute.xlu0 3
      %696 = vperm.xlu0 %695, %v631
      %v697 = vpop.permute.xlu0 %696
      %699 = vset.pattern.permute.xlu0 3
      %700 = vperm.xlu0 %699, %v632
      %v701 = vpop.permute.xlu0 %700
      %v703 = vlaneseq
      %v704 = vshrl.u32 %v703, 7
      %v705 = vsub.s32 0, %v704
      %v706 = vrot.slane %v559, %v705
      %v707 = vmul.f32 %v697, %v706
      %v708 = vmul.f32 %v701, %v706
      %v709 = vadd.f32 %v693, %v707
      %v710 = vadd.f32 %v694, %v708
      %711 = vset.pattern.permute.xlu0 4
      %712 = vperm.xlu0 %711, %v631
      %v713 = vpop.permute.xlu0 %712
      %715 = vset.pattern.permute.xlu0 4
      %716 = vperm.xlu0 %715, %v632
      %v717 = vpop.permute.xlu0 %716
      %v719 = vlaneseq
      %v720 = vshrl.u32 %v719, 7
      %v721 = vsub.s32 0, %v720
      %v722 = vrot.slane %v628, %v721
      %v723 = vmul.f32 %v713, %v722
      %v724 = vmul.f32 %v717, %v722
      %v725 = vadd.f32 %v709, %v723
      %v726 = vadd.f32 %v710, %v724
      %v727 = vmax.f32 %v725, 0.0
      %v728 = vmax.f32 %v726, 0.0
      %v729 = vld [vmem:[%s2] sm:$0xff]
      %v730 = vld [vmem:[%s2 + $0x8] sm:$0xff]
      %v731 = vld [vmem:[%s2 + $0x10] sm:$0xff]
      %v732 = vld [vmem:[%s2 + $0x18] sm:$0xff]
      %v733 = vld [vmem:[%s2 + $0x20] sm:$0xff]
      %v734 = vld [vmem:[%s2 + $0x28] sm:$0xff]
      %v735 = vld [vmem:[%s2 + $0x30] sm:$0xff]
      %v736 = vld [vmem:[%s2 + $0x38] sm:$0xff]
      %v737 = vld [vmem:[%s2 + $0x40] sm:$0xff]
      %v738 = vld [vmem:[%s2 + $0x48] sm:$0xff]
      %v739 = vld [vmem:[%s2 + $0x50] sm:$0xff]
      %v740 = vld [vmem:[%s2 + $0x58] sm:$0xff]
      %v741 = vld [vmem:[%s2 + $0x60] sm:$0xff]
      %v742 = vld [vmem:[%s2 + $0x68] sm:$0xff]
      %v743 = vld [vmem:[%s2 + $0x70] sm:$0xff]
      %v744 = vld [vmem:[%s2 + $0x78] sm:$0xff]
      %v745 = vld [vmem:[%s2 + $0x80] sm:$0xff]
      %v746 = vld [vmem:[%s2 + $0x88] sm:$0xff]
      %v747 = vld [vmem:[%s2 + $0x90] sm:$0xff]
      %v748 = vld [vmem:[%s2 + $0x98] sm:$0xff]
      %v749 = vld [vmem:[%s2 + $0xa0] sm:$0xff]
      %v750 = vld [vmem:[%s2 + $0xa8] sm:$0xff]
      %v751 = vld [vmem:[%s2 + $0xb0] sm:$0xff]
      %v752 = vld [vmem:[%s2 + $0xb8] sm:$0xff]
      %v753 = vld [vmem:[%s2 + $0xc0] sm:$0xff]
      %v754 = vld [vmem:[%s2 + $0xc8] sm:$0xff]
      %v755 = vld [vmem:[%s2 + $0xd0] sm:$0xff]
      %v756 = vld [vmem:[%s2 + $0xd8] sm:$0xff]
      %v757 = vld [vmem:[%s2 + $0xe0] sm:$0xff]
      %v758 = vld [vmem:[%s2 + $0xe8] sm:$0xff]
      %v759 = vld [vmem:[%s2 + $0xf0] sm:$0xff]
      %v760 = vld [vmem:[%s2 + $0xf8] sm:$0xff]
      %v761 = vld [vmem:[%s2 + $0x100] sm:$0xff]
      %v762 = vld [vmem:[%s2 + $0x108] sm:$0xff]
      %v763 = vld [vmem:[%s2 + $0x110] sm:$0xff]
      %v764 = vld [vmem:[%s2 + $0x118] sm:$0xff]
      %v765 = vld [vmem:[%s2 + $0x120] sm:$0xff]
      %v766 = vld [vmem:[%s2 + $0x128] sm:$0xff]
      %v767 = vld [vmem:[%s2 + $0x130] sm:$0xff]
      %v768 = vld [vmem:[%s2 + $0x138] sm:$0xff]
      %v769 = vld [vmem:[%s2 + $0x140] sm:$0xff]
      %v770 = vld [vmem:[%s2 + $0x148] sm:$0xff]
      %v771 = vld [vmem:[%s2 + $0x150] sm:$0xff]
      %v772 = vld [vmem:[%s2 + $0x158] sm:$0xff]
      %v773 = vld [vmem:[%s2 + $0x160] sm:$0xff]
      %v774 = vld [vmem:[%s2 + $0x168] sm:$0xff]
      %v775 = vld [vmem:[%s2 + $0x170] sm:$0xff]
      %v776 = vld [vmem:[%s2 + $0x178] sm:$0xff]
      %777 = vmatprep.subr.mxu0 %v775
      %778 = vmatpush1.msra.mxu0 %v774
      %779 = vmatprep.subr.mxu0 %v772
      %780 = vmatpush1.msra.mxu0 %v771
      %781 = vmatprep.subr.mxu0 %v769
      %782 = vmatpush1.msra.mxu0 %v768
      %783 = vmatprep.subr.mxu0 %v766
      %784 = vmatpush1.msra.mxu0 %v765
      %785 = vmatprep.subr.mxu0 %v763
      %786 = vmatpush1.msra.mxu0 %v762
      %787 = vmatprep.subr.mxu0 %v760
      %788 = vmatpush1.msra.mxu0 %v759
      %789 = vmatprep.subr.mxu0 %v757
      %790 = vmatpush1.msra.mxu0 %v756
      %791 = vmatprep.subr.mxu0 %v754
      %792 = vmatpush1.msra.mxu0 %v753
      %793 = vmatprep.subr.mxu0 %v751
      %794 = vmatpush1.msra.mxu0 %v750
      %795 = vmatprep.subr.mxu0 %v748
      %796 = vmatpush1.msra.mxu0 %v747
      %797 = vmatprep.subr.mxu0 %v745
      %798 = vmatpush1.msra.mxu0 %v744
      %799 = vmatprep.subr.mxu0 %v742
      %800 = vmatpush1.msra.mxu0 %v741
      %801 = vmatprep.subr.mxu0 %v739
      %802 = vmatpush1.msra.mxu0 %v738
      %803 = vmatprep.subr.mxu0 %v736
      %804 = vmatpush1.msra.mxu0 %v735
      %805 = vmatprep.subr.mxu0 %v733
      %806 = vmatpush1.msra.mxu0 %v732
      %807 = vmatprep.subr.mxu0 %v730
      %808 = vmatpush1.msra.mxu0 %v729
      %809 = vmatprep.subr.mxu0 0.0
      %810 = vmatpush2.msra.mxu0 0.0
      %811 = vmatprep.subr.mxu0 0.0
      %812 = vmatpush2.msra.mxu0 0.0
      %813 = vmatprep.subr.mxu0 0.0
      %814 = vmatpush2.msra.mxu0 0.0
      %815 = vmatprep.subr.mxu0 0.0
      %816 = vmatpush2.msra.mxu0 0.0
      %817 = vmatprep.subr.mxu0 0.0
      %818 = vmatpush2.msra.mxu0 0.0
      %819 = vmatprep.subr.mxu0 0.0
      %820 = vmatpush2.msra.mxu0 0.0
      %821 = vmatprep.subr.mxu0 0.0
      %822 = vmatpush2.msra.mxu0 0.0
      %823 = vmatprep.subr.mxu0 0.0
      %824 = vmatpush2.msra.mxu0 0.0
      %825 = vmatprep.subr.mxu0 0.0
      %826 = vmatpush2.msra.mxu0 0.0
      %827 = vmatprep.subr.mxu0 0.0
      %828 = vmatpush2.msra.mxu0 0.0
      %829 = vmatprep.subr.mxu0 0.0
      %830 = vmatpush2.msra.mxu0 0.0
      %831 = vmatprep.subr.mxu0 0.0
      %832 = vmatpush2.msra.mxu0 0.0
      %833 = vmatprep.subr.mxu0 0.0
      %834 = vmatpush2.msra.mxu0 0.0
      %835 = vmatprep.subr.mxu0 0.0
      %836 = vmatpush2.msra.mxu0 0.0
      %837 = vmatprep.subr.mxu0 0.0
      %838 = vmatpush2.msra.mxu0 0.0
      %839 = vmatprep.subr.mxu0 0.0
      %840 = vmatpush2.msra.mxu0 0.0
      %841 = vmatprep.mubr.f32.mxu0 0.0
      %842 = vmatmul.mubr.f32.gmra.mxu0 %v727
      %v843 = vpop.f32.mrf.mxu0
      %v844 = vadd.f32 0.0, %v843
      %v845 = vpop.f32.mrf.mxu0
      %v846 = vadd.f32 0.0, %v845
      %847 = vmatprep.mubr.f32.mxu0 0.0
      %848 = vmatmul.mubr.f32.gmra.mxu0 %v728
      %v849 = vpop.f32.mrf.mxu0
      %v850 = vadd.f32 0.0, %v849
      %v851 = vpop.f32.mrf.mxu0
      %v852 = vadd.f32 0.0, %v851
      %853 = vdwg.mxu0
      %854 = vmatprep.subr.mxu0 0.0
      %855 = vmatpush1.msra.mxu0 %v776
      %856 = vmatprep.subr.mxu0 0.0
      %857 = vmatpush1.msra.mxu0 %v773
      %858 = vmatprep.subr.mxu0 0.0
      %859 = vmatpush1.msra.mxu0 %v770
      %860 = vmatprep.subr.mxu0 0.0
      %861 = vmatpush1.msra.mxu0 %v767
      %862 = vmatprep.subr.mxu0 0.0
      %863 = vmatpush1.msra.mxu0 %v764
      %864 = vmatprep.subr.mxu0 0.0
      %865 = vmatpush1.msra.mxu0 %v761
      %866 = vmatprep.subr.mxu0 0.0
      %867 = vmatpush1.msra.mxu0 %v758
      %868 = vmatprep.subr.mxu0 0.0
      %869 = vmatpush1.msra.mxu0 %v755
      %870 = vmatprep.subr.mxu0 0.0
      %871 = vmatpush1.msra.mxu0 %v752
      %872 = vmatprep.subr.mxu0 0.0
      %873 = vmatpush1.msra.mxu0 %v749
      %874 = vmatprep.subr.mxu0 0.0
      %875 = vmatpush1.msra.mxu0 %v746
      %876 = vmatprep.subr.mxu0 0.0
      %877 = vmatpush1.msra.mxu0 %v743
      %878 = vmatprep.subr.mxu0 0.0
      %879 = vmatpush1.msra.mxu0 %v740
      %880 = vmatprep.subr.mxu0 0.0
      %881 = vmatpush1.msra.mxu0 %v737
      %882 = vmatprep.subr.mxu0 0.0
      %883 = vmatpush1.msra.mxu0 %v734
      %884 = vmatprep.subr.mxu0 0.0
      %885 = vmatpush1.msra.mxu0 %v731
      %886 = vmatprep.subr.mxu0 0.0
      %887 = vmatpush2.msra.mxu0 0.0
      %888 = vmatprep.subr.mxu0 0.0
      %889 = vmatpush2.msra.mxu0 0.0
      %890 = vmatprep.subr.mxu0 0.0
      %891 = vmatpush2.msra.mxu0 0.0
      %892 = vmatprep.subr.mxu0 0.0
      %893 = vmatpush2.msra.mxu0 0.0
      %894 = vmatprep.subr.mxu0 0.0
      %895 = vmatpush2.msra.mxu0 0.0
      %896 = vmatprep.subr.mxu0 0.0
      %897 = vmatpush2.msra.mxu0 0.0
      %898 = vmatprep.subr.mxu0 0.0
      %899 = vmatpush2.msra.mxu0 0.0
      %900 = vmatprep.subr.mxu0 0.0
      %901 = vmatpush2.msra.mxu0 0.0
      %902 = vmatprep.subr.mxu0 0.0
      %903 = vmatpush2.msra.mxu0 0.0
      %904 = vmatprep.subr.mxu0 0.0
      %905 = vmatpush2.msra.mxu0 0.0
      %906 = vmatprep.subr.mxu0 0.0
      %907 = vmatpush2.msra.mxu0 0.0
      %908 = vmatprep.subr.mxu0 0.0
      %909 = vmatpush2.msra.mxu0 0.0
      %910 = vmatprep.subr.mxu0 0.0
      %911 = vmatpush2.msra.mxu0 0.0
      %912 = vmatprep.subr.mxu0 0.0
      %913 = vmatpush2.msra.mxu0 0.0
      %914 = vmatprep.subr.mxu0 0.0
      %915 = vmatpush2.msra.mxu0 0.0
      %916 = vmatprep.subr.mxu0 0.0
      %917 = vmatpush2.msra.mxu0 0.0
      %918 = vmatprep.mubr.f32.mxu0 0.0
      %919 = vmatmul.mubr.f32.gmra.mxu0 %v727
      %v920 = vpop.f32.mrf.mxu0
      %v921 = vadd.f32 0.0, %v920
      %v922 = vpop.f32.mrf.mxu0
      %923 = vmatprep.mubr.f32.mxu0 0.0
      %924 = vmatmul.mubr.f32.gmra.mxu0 %v728
      %v925 = vpop.f32.mrf.mxu0
      %v926 = vadd.f32 0.0, %v925
      %v927 = vpop.f32.mrf.mxu0
      %928 = vdwg.mxu0
      %v929 = vld [vmem:[%s4 + $0x30] sm:$0xff]
      %v930 = vld [vmem:[%s4 + $0x48] sm:$0xff]
      %v931 = vld [vmem:[%s4 + $0x60] sm:$0xff]
      %v932 = vld [vmem:[%s4 + $0x78] sm:$0xff]
      %v933 = vld [vmem:[%s5 + $0x10] sm:$0xff]
      %v934 = vld [vmem:[%s5 + $0x18] sm:$0xff]
      %v935 = vld [vmem:[%s5 + $0x20] sm:$0xff]
      %v936 = vld [vmem:[%s5 + $0x28] sm:$0xff]
      %vm937 = vcmask 130048
      %v939 = vsel %vm937, %v929, 0
      %v942 = vsel %vm937, %v930, 0
      %v945 = vsel %vm937, %v931, 0
      %v948 = vsel %vm937, %v932, 0
      %950 = vmatprep.subr.mxu0 0.0
      %951 = vmatpush1.msra.mxu0 0.0
      %952 = vmatprep.subr.mxu0 0.0
      %953 = vmatpush1.msra.mxu0 0.0
      %954 = vmatprep.subr.mxu0 0.0
      %955 = vmatpush1.msra.mxu0 0.0
      %956 = vmatprep.subr.mxu0 0.0
      %957 = vmatpush1.msra.mxu0 0.0
      %958 = vmatprep.subr.mxu0 0.0
      %959 = vmatpush1.msra.mxu0 0.0
      %960 = vmatprep.subr.mxu0 0.0
      %961 = vmatpush1.msra.mxu0 0.0
      %962 = vmatprep.subr.mxu0 0.0
      %963 = vmatpush1.msra.mxu0 0.0
      %964 = vmatprep.subr.mxu0 0.0
      %965 = vmatpush1.msra.mxu0 0.0
      %966 = vmatprep.subr.mxu0 0.0
      %967 = vmatpush1.msra.mxu0 0.0
      %968 = vmatprep.subr.mxu0 0.0
      %969 = vmatpush1.msra.mxu0 0.0
      %970 = vmatprep.subr.mxu0 0.0
      %971 = vmatpush1.msra.mxu0 0.0
      %972 = vmatprep.subr.mxu0 0.0
      %973 = vmatpush1.msra.mxu0 0.0
      %974 = vmatprep.subr.mxu0 0.0
      %975 = vmatpush1.msra.mxu0 0.0
      %976 = vmatprep.subr.mxu0 0.0
      %977 = vmatpush1.msra.mxu0 0.0
      %978 = vmatprep.subr.mxu0 0.0
      %979 = vmatpush1.msra.mxu0 %v850
      %980 = vmatprep.subr.mxu0 0.0
      %981 = vmatpush1.msra.mxu0 %v844
      %982 = vmatprep.subr.mxu0 0.0
      %983 = vmatpush2.msra.mxu0 0.0
      %984 = vmatprep.subr.mxu0 0.0
      %985 = vmatpush2.msra.mxu0 0.0
      %986 = vmatprep.subr.mxu0 0.0
      %987 = vmatpush2.msra.mxu0 0.0
      %988 = vmatprep.subr.mxu0 0.0
      %989 = vmatpush2.msra.mxu0 0.0
      %990 = vmatprep.subr.mxu0 0.0
      %991 = vmatpush2.msra.mxu0 0.0
      %992 = vmatprep.subr.mxu0 0.0
      %993 = vmatpush2.msra.mxu0 0.0
      %994 = vmatprep.subr.mxu0 0.0
      %995 = vmatpush2.msra.mxu0 0.0
      %996 = vmatprep.subr.mxu0 0.0
      %997 = vmatpush2.msra.mxu0 0.0
      %998 = vmatprep.subr.mxu0 0.0
      %999 = vmatpush2.msra.mxu0 0.0
      %1000 = vmatprep.subr.mxu0 0.0
      %1001 = vmatpush2.msra.mxu0 0.0
      %1002 = vmatprep.subr.mxu0 0.0
      %1003 = vmatpush2.msra.mxu0 0.0
      %1004 = vmatprep.subr.mxu0 0.0
      %1005 = vmatpush2.msra.mxu0 0.0
      %1006 = vmatprep.subr.mxu0 0.0
      %1007 = vmatpush2.msra.mxu0 0.0
      %1008 = vmatprep.subr.mxu0 0.0
      %1009 = vmatpush2.msra.mxu0 0.0
      %1010 = vmatprep.subr.mxu0 0.0
      %1011 = vmatpush2.msra.mxu0 0.0
      %1012 = vmatprep.subr.mxu0 0.0
      %1013 = vmatpush2.msra.mxu0 0.0
      %1014 = vmatprep.mubr.f32.mxu0 0.0
      %1015 = vmatmul.mubr.f32.gmra.mxu0 %v939
      %v1016 = vpop.f32.mrf.mxu0
      %v1017 = vadd.f32 0.0, %v1016
      %v1018 = vpop.f32.mrf.mxu0
      %1019 = vmatprep.mubr.f32.mxu0 0.0
      %1020 = vmatmul.mubr.f32.gmra.mxu0 %v942
      %v1021 = vpop.f32.mrf.mxu0
      %v1022 = vadd.f32 0.0, %v1021
      %v1023 = vpop.f32.mrf.mxu0
      %1024 = vmatprep.mubr.f32.mxu0 0.0
      %1025 = vmatmul.mubr.f32.gmra.mxu0 %v945
      %v1026 = vpop.f32.mrf.mxu0
      %v1027 = vadd.f32 0.0, %v1026
      %v1028 = vpop.f32.mrf.mxu0
      %1029 = vmatprep.mubr.f32.mxu0 0.0
      %1030 = vmatmul.mubr.f32.gmra.mxu0 %v948
      %v1031 = vpop.f32.mrf.mxu0
      %v1032 = vadd.f32 0.0, %v1031
      %v1033 = vpop.f32.mrf.mxu0
      %1034 = vdwg.mxu0
      %1036 = vset.pattern.permute.xlu0 0
      %1037 = vperm.xlu0 %1036, %v933
      %v1038 = vpop.permute.xlu0 %1037
      %1041 = vset.pattern.permute.xlu0 0
      %1042 = vperm.xlu0 %1041, %v934
      %v1043 = vpop.permute.xlu0 %1042
      %1046 = vset.pattern.permute.xlu0 0
      %1047 = vperm.xlu0 %1046, %v935
      %v1048 = vpop.permute.xlu0 %1047
      %1051 = vset.pattern.permute.xlu0 0
      %1052 = vperm.xlu0 %1051, %v936
      %v1053 = vpop.permute.xlu0 %1052
      %v1055 = vadd.f32 %v1038, %v1017
      %v1056 = vadd.f32 %v1043, %v1022
      %v1057 = vadd.f32 %v1048, %v1027
      %v1058 = vadd.f32 %v1053, %v1032
      %1059 = vrot.lane.b32.xlu0 %v929, 112
      %v1060 = vpop.permute.xlu0 %1059
      %1061 = vrot.lane.b32.xlu0 %v930, 112
      %v1062 = vpop.permute.xlu0 %1061
      %1063 = vrot.lane.b32.xlu0 %v931, 112
      %v1064 = vpop.permute.xlu0 %1063
      %1065 = vrot.lane.b32.xlu0 %v932, 112
      %v1066 = vpop.permute.xlu0 %1065
      %1069 = vrot.lane.b32.xlu0 %v844, 64
      %v1070 = vpop.permute.xlu0 %1069
      %1071 = vrot.lane.b32.xlu0 %v850, 64
      %v1072 = vpop.permute.xlu0 %1071
      %v1075 = vsel %vm937, %v1060, 0
      %v1077 = vsel %vm937, %v1062, 0
      %v1079 = vsel %vm937, %v1064, 0
      %v1081 = vsel %vm937, %v1066, 0
      %1083 = vmatprep.subr.mxu0 0.0
      %1084 = vmatpush1.msra.mxu0 0.0
      %1085 = vmatprep.subr.mxu0 0.0
      %1086 = vmatpush1.msra.mxu0 0.0
      %1087 = vmatprep.subr.mxu0 0.0
      %1088 = vmatpush1.msra.mxu0 0.0
      %1089 = vmatprep.subr.mxu0 0.0
      %1090 = vmatpush1.msra.mxu0 0.0
      %1091 = vmatprep.subr.mxu0 0.0
      %1092 = vmatpush1.msra.mxu0 0.0
      %1093 = vmatprep.subr.mxu0 0.0
      %1094 = vmatpush1.msra.mxu0 0.0
      %1095 = vmatprep.subr.mxu0 0.0
      %1096 = vmatpush1.msra.mxu0 0.0
      %1097 = vmatprep.subr.mxu0 0.0
      %1098 = vmatpush1.msra.mxu0 0.0
      %1099 = vmatprep.subr.mxu0 0.0
      %1100 = vmatpush1.msra.mxu0 0.0
      %1101 = vmatprep.subr.mxu0 0.0
      %1102 = vmatpush1.msra.mxu0 0.0
      %1103 = vmatprep.subr.mxu0 0.0
      %1104 = vmatpush1.msra.mxu0 0.0
      %1105 = vmatprep.subr.mxu0 0.0
      %1106 = vmatpush1.msra.mxu0 0.0
      %1107 = vmatprep.subr.mxu0 0.0
      %1108 = vmatpush1.msra.mxu0 0.0
      %1109 = vmatprep.subr.mxu0 0.0
      %1110 = vmatpush1.msra.mxu0 0.0
      %1111 = vmatprep.subr.mxu0 0.0
      %1112 = vmatpush1.msra.mxu0 %v1072
      %1113 = vmatprep.subr.mxu0 0.0
      %1114 = vmatpush1.msra.mxu0 %v1070
      %1115 = vmatprep.subr.mxu0 0.0
      %1116 = vmatpush2.msra.mxu0 0.0
      %1117 = vmatprep.subr.mxu0 0.0
      %1118 = vmatpush2.msra.mxu0 0.0
      %1119 = vmatprep.subr.mxu0 0.0
      %1120 = vmatpush2.msra.mxu0 0.0
      %1121 = vmatprep.subr.mxu0 0.0
      %1122 = vmatpush2.msra.mxu0 0.0
      %1123 = vmatprep.subr.mxu0 0.0
      %1124 = vmatpush2.msra.mxu0 0.0
      %1125 = vmatprep.subr.mxu0 0.0
      %1126 = vmatpush2.msra.mxu0 0.0
      %1127 = vmatprep.subr.mxu0 0.0
      %1128 = vmatpush2.msra.mxu0 0.0
      %1129 = vmatprep.subr.mxu0 0.0
      %1130 = vmatpush2.msra.mxu0 0.0
      %1131 = vmatprep.subr.mxu0 0.0
      %1132 = vmatpush2.msra.mxu0 0.0
      %1133 = vmatprep.subr.mxu0 0.0
      %1134 = vmatpush2.msra.mxu0 0.0
      %1135 = vmatprep.subr.mxu0 0.0
      %1136 = vmatpush2.msra.mxu0 0.0
      %1137 = vmatprep.subr.mxu0 0.0
      %1138 = vmatpush2.msra.mxu0 0.0
      %1139 = vmatprep.subr.mxu0 0.0
      %1140 = vmatpush2.msra.mxu0 0.0
      %1141 = vmatprep.subr.mxu0 0.0
      %1142 = vmatpush2.msra.mxu0 0.0
      %1143 = vmatprep.subr.mxu0 0.0
      %1144 = vmatpush2.msra.mxu0 0.0
      %1145 = vmatprep.subr.mxu0 0.0
      %1146 = vmatpush2.msra.mxu0 0.0
      %1147 = vmatprep.mubr.f32.mxu0 0.0
      %1148 = vmatmul.mubr.f32.gmra.mxu0 %v1075
      %v1149 = vpop.f32.mrf.mxu0
      %v1150 = vadd.f32 0.0, %v1149
      %v1151 = vpop.f32.mrf.mxu0
      %1152 = vmatprep.mubr.f32.mxu0 0.0
      %1153 = vmatmul.mubr.f32.gmra.mxu0 %v1077
      %v1154 = vpop.f32.mrf.mxu0
      %v1155 = vadd.f32 0.0, %v1154
      %v1156 = vpop.f32.mrf.mxu0
      %1157 = vmatprep.mubr.f32.mxu0 0.0
      %1158 = vmatmul.mubr.f32.gmra.mxu0 %v1079
      %v1159 = vpop.f32.mrf.mxu0
      %v1160 = vadd.f32 0.0, %v1159
      %v1161 = vpop.f32.mrf.mxu0
      %1162 = vmatprep.mubr.f32.mxu0 0.0
      %1163 = vmatmul.mubr.f32.gmra.mxu0 %v1081
      %v1164 = vpop.f32.mrf.mxu0
      %v1165 = vadd.f32 0.0, %v1164
      %v1166 = vpop.f32.mrf.mxu0
      %1167 = vdwg.mxu0
      %v1168 = vadd.f32 %v1055, %v1150
      %v1169 = vadd.f32 %v1056, %v1155
      %v1170 = vadd.f32 %v1057, %v1160
      %v1171 = vadd.f32 %v1058, %v1165
      %1172 = vrot.lane.b32.xlu0 %v929, 96
      %v1173 = vpop.permute.xlu0 %1172
      %1174 = vrot.lane.b32.xlu0 %v930, 96
      %v1175 = vpop.permute.xlu0 %1174
      %1176 = vrot.lane.b32.xlu0 %v931, 96
      %v1177 = vpop.permute.xlu0 %1176
      %1178 = vrot.lane.b32.xlu0 %v932, 96
      %v1179 = vpop.permute.xlu0 %1178
      %v1180 = vsel %vm937, %v1173, 0
      %v1182 = vsel %vm937, %v1175, 0
      %v1184 = vsel %vm937, %v1177, 0
      %v1186 = vsel %vm937, %v1179, 0
      %1188 = vmatprep.subr.mxu0 0.0
      %1189 = vmatpush1.msra.mxu0 0.0
      %1190 = vmatprep.subr.mxu0 0.0
      %1191 = vmatpush1.msra.mxu0 0.0
      %1192 = vmatprep.subr.mxu0 0.0
      %1193 = vmatpush1.msra.mxu0 0.0
      %1194 = vmatprep.subr.mxu0 0.0
      %1195 = vmatpush1.msra.mxu0 0.0
      %1196 = vmatprep.subr.mxu0 0.0
      %1197 = vmatpush1.msra.mxu0 0.0
      %1198 = vmatprep.subr.mxu0 0.0
      %1199 = vmatpush1.msra.mxu0 0.0
      %1200 = vmatprep.subr.mxu0 0.0
      %1201 = vmatpush1.msra.mxu0 0.0
      %1202 = vmatprep.subr.mxu0 0.0
      %1203 = vmatpush1.msra.mxu0 0.0
      %1204 = vmatprep.subr.mxu0 0.0
      %1205 = vmatpush1.msra.mxu0 0.0
      %1206 = vmatprep.subr.mxu0 0.0
      %1207 = vmatpush1.msra.mxu0 0.0
      %1208 = vmatprep.subr.mxu0 0.0
      %1209 = vmatpush1.msra.mxu0 0.0
      %1210 = vmatprep.subr.mxu0 0.0
      %1211 = vmatpush1.msra.mxu0 0.0
      %1212 = vmatprep.subr.mxu0 0.0
      %1213 = vmatpush1.msra.mxu0 0.0
      %1214 = vmatprep.subr.mxu0 0.0
      %1215 = vmatpush1.msra.mxu0 0.0
      %1216 = vmatprep.subr.mxu0 0.0
      %1217 = vmatpush1.msra.mxu0 %v852
      %1218 = vmatprep.subr.mxu0 0.0
      %1219 = vmatpush1.msra.mxu0 %v846
      %1220 = vmatprep.subr.mxu0 0.0
      %1221 = vmatpush2.msra.mxu0 0.0
      %1222 = vmatprep.subr.mxu0 0.0
      %1223 = vmatpush2.msra.mxu0 0.0
      %1224 = vmatprep.subr.mxu0 0.0
      %1225 = vmatpush2.msra.mxu0 0.0
      %1226 = vmatprep.subr.mxu0 0.0
      %1227 = vmatpush2.msra.mxu0 0.0
      %1228 = vmatprep.subr.mxu0 0.0
      %1229 = vmatpush2.msra.mxu0 0.0
      %1230 = vmatprep.subr.mxu0 0.0
      %1231 = vmatpush2.msra.mxu0 0.0
      %1232 = vmatprep.subr.mxu0 0.0
      %1233 = vmatpush2.msra.mxu0 0.0
      %1234 = vmatprep.subr.mxu0 0.0
      %1235 = vmatpush2.msra.mxu0 0.0
      %1236 = vmatprep.subr.mxu0 0.0
      %1237 = vmatpush2.msra.mxu0 0.0
      %1238 = vmatprep.subr.mxu0 0.0
      %1239 = vmatpush2.msra.mxu0 0.0
      %1240 = vmatprep.subr.mxu0 0.0
      %1241 = vmatpush2.msra.mxu0 0.0
      %1242 = vmatprep.subr.mxu0 0.0
      %1243 = vmatpush2.msra.mxu0 0.0
      %1244 = vmatprep.subr.mxu0 0.0
      %1245 = vmatpush2.msra.mxu0 0.0
      %1246 = vmatprep.subr.mxu0 0.0
      %1247 = vmatpush2.msra.mxu0 0.0
      %1248 = vmatprep.subr.mxu0 0.0
      %1249 = vmatpush2.msra.mxu0 0.0
      %1250 = vmatprep.subr.mxu0 0.0
      %1251 = vmatpush2.msra.mxu0 0.0
      %1252 = vmatprep.mubr.f32.mxu0 0.0
      %1253 = vmatmul.mubr.f32.gmra.mxu0 %v1180
      %v1254 = vpop.f32.mrf.mxu0
      %v1255 = vadd.f32 0.0, %v1254
      %v1256 = vpop.f32.mrf.mxu0
      %1257 = vmatprep.mubr.f32.mxu0 0.0
      %1258 = vmatmul.mubr.f32.gmra.mxu0 %v1182
      %v1259 = vpop.f32.mrf.mxu0
      %v1260 = vadd.f32 0.0, %v1259
      %v1261 = vpop.f32.mrf.mxu0
      %1262 = vmatprep.mubr.f32.mxu0 0.0
      %1263 = vmatmul.mubr.f32.gmra.mxu0 %v1184
      %v1264 = vpop.f32.mrf.mxu0
      %v1265 = vadd.f32 0.0, %v1264
      %v1266 = vpop.f32.mrf.mxu0
      %1267 = vmatprep.mubr.f32.mxu0 0.0
      %1268 = vmatmul.mubr.f32.gmra.mxu0 %v1186
      %v1269 = vpop.f32.mrf.mxu0
      %v1270 = vadd.f32 0.0, %v1269
      %v1271 = vpop.f32.mrf.mxu0
      %1272 = vdwg.mxu0
      %v1273 = vadd.f32 %v1168, %v1255
      %v1274 = vadd.f32 %v1169, %v1260
      %v1275 = vadd.f32 %v1170, %v1265
      %v1276 = vadd.f32 %v1171, %v1270
      %1277 = vrot.lane.b32.xlu0 %v929, 80
      %v1278 = vpop.permute.xlu0 %1277
      %1279 = vrot.lane.b32.xlu0 %v930, 80
      %v1280 = vpop.permute.xlu0 %1279
      %1281 = vrot.lane.b32.xlu0 %v931, 80
      %v1282 = vpop.permute.xlu0 %1281
      %1283 = vrot.lane.b32.xlu0 %v932, 80
      %v1284 = vpop.permute.xlu0 %1283
      %1287 = vrot.lane.b32.xlu0 %v846, 64
      %v1288 = vpop.permute.xlu0 %1287
      %1289 = vrot.lane.b32.xlu0 %v852, 64
      %v1290 = vpop.permute.xlu0 %1289
      %v1293 = vsel %vm937, %v1278, 0
      %v1295 = vsel %vm937, %v1280, 0
      %v1297 = vsel %vm937, %v1282, 0
      %v1299 = vsel %vm937, %v1284, 0
      %1301 = vmatprep.subr.mxu0 0.0
      %1302 = vmatpush1.msra.mxu0 0.0
      %1303 = vmatprep.subr.mxu0 0.0
      %1304 = vmatpush1.msra.mxu0 0.0
      %1305 = vmatprep.subr.mxu0 0.0
      %1306 = vmatpush1.msra.mxu0 0.0
      %1307 = vmatprep.subr.mxu0 0.0
      %1308 = vmatpush1.msra.mxu0 0.0
      %1309 = vmatprep.subr.mxu0 0.0
      %1310 = vmatpush1.msra.mxu0 0.0
      %1311 = vmatprep.subr.mxu0 0.0
      %1312 = vmatpush1.msra.mxu0 0.0
      %1313 = vmatprep.subr.mxu0 0.0
      %1314 = vmatpush1.msra.mxu0 0.0
      %1315 = vmatprep.subr.mxu0 0.0
      %1316 = vmatpush1.msra.mxu0 0.0
      %1317 = vmatprep.subr.mxu0 0.0
      %1318 = vmatpush1.msra.mxu0 0.0
      %1319 = vmatprep.subr.mxu0 0.0
      %1320 = vmatpush1.msra.mxu0 0.0
      %1321 = vmatprep.subr.mxu0 0.0
      %1322 = vmatpush1.msra.mxu0 0.0
      %1323 = vmatprep.subr.mxu0 0.0
      %1324 = vmatpush1.msra.mxu0 0.0
      %1325 = vmatprep.subr.mxu0 0.0
      %1326 = vmatpush1.msra.mxu0 0.0
      %1327 = vmatprep.subr.mxu0 0.0
      %1328 = vmatpush1.msra.mxu0 0.0
      %1329 = vmatprep.subr.mxu0 0.0
      %1330 = vmatpush1.msra.mxu0 %v1290
      %1331 = vmatprep.subr.mxu0 0.0
      %1332 = vmatpush1.msra.mxu0 %v1288
      %1333 = vmatprep.subr.mxu0 0.0
      %1334 = vmatpush2.msra.mxu0 0.0
      %1335 = vmatprep.subr.mxu0 0.0
      %1336 = vmatpush2.msra.mxu0 0.0
      %1337 = vmatprep.subr.mxu0 0.0
      %1338 = vmatpush2.msra.mxu0 0.0
      %1339 = vmatprep.subr.mxu0 0.0
      %1340 = vmatpush2.msra.mxu0 0.0
      %1341 = vmatprep.subr.mxu0 0.0
      %1342 = vmatpush2.msra.mxu0 0.0
      %1343 = vmatprep.subr.mxu0 0.0
      %1344 = vmatpush2.msra.mxu0 0.0
      %1345 = vmatprep.subr.mxu0 0.0
      %1346 = vmatpush2.msra.mxu0 0.0
      %1347 = vmatprep.subr.mxu0 0.0
      %1348 = vmatpush2.msra.mxu0 0.0
      %1349 = vmatprep.subr.mxu0 0.0
      %1350 = vmatpush2.msra.mxu0 0.0
      %1351 = vmatprep.subr.mxu0 0.0
      %1352 = vmatpush2.msra.mxu0 0.0
      %1353 = vmatprep.subr.mxu0 0.0
      %1354 = vmatpush2.msra.mxu0 0.0
      %1355 = vmatprep.subr.mxu0 0.0
      %1356 = vmatpush2.msra.mxu0 0.0
      %1357 = vmatprep.subr.mxu0 0.0
      %1358 = vmatpush2.msra.mxu0 0.0
      %1359 = vmatprep.subr.mxu0 0.0
      %1360 = vmatpush2.msra.mxu0 0.0
      %1361 = vmatprep.subr.mxu0 0.0
      %1362 = vmatpush2.msra.mxu0 0.0
      %1363 = vmatprep.subr.mxu0 0.0
      %1364 = vmatpush2.msra.mxu0 0.0
      %1365 = vmatprep.mubr.f32.mxu0 0.0
      %1366 = vmatmul.mubr.f32.gmra.mxu0 %v1293
      %v1367 = vpop.f32.mrf.mxu0
      %v1368 = vadd.f32 0.0, %v1367
      %v1369 = vpop.f32.mrf.mxu0
      %1370 = vmatprep.mubr.f32.mxu0 0.0
      %1371 = vmatmul.mubr.f32.gmra.mxu0 %v1295
      %v1372 = vpop.f32.mrf.mxu0
      %v1373 = vadd.f32 0.0, %v1372
      %v1374 = vpop.f32.mrf.mxu0
      %1375 = vmatprep.mubr.f32.mxu0 0.0
      %1376 = vmatmul.mubr.f32.gmra.mxu0 %v1297
      %v1377 = vpop.f32.mrf.mxu0
      %v1378 = vadd.f32 0.0, %v1377
      %v1379 = vpop.f32.mrf.mxu0
      %1380 = vmatprep.mubr.f32.mxu0 0.0
      %1381 = vmatmul.mubr.f32.gmra.mxu0 %v1299
      %v1382 = vpop.f32.mrf.mxu0
      %v1383 = vadd.f32 0.0, %v1382
      %v1384 = vpop.f32.mrf.mxu0
      %1385 = vdwg.mxu0
      %v1386 = vadd.f32 %v1273, %v1368
      %v1387 = vadd.f32 %v1274, %v1373
      %v1388 = vadd.f32 %v1275, %v1378
      %v1389 = vadd.f32 %v1276, %v1383
      %1390 = vrot.lane.b32.xlu0 %v929, 64
      %v1391 = vpop.permute.xlu0 %1390
      %1392 = vrot.lane.b32.xlu0 %v930, 64
      %v1393 = vpop.permute.xlu0 %1392
      %1394 = vrot.lane.b32.xlu0 %v931, 64
      %v1395 = vpop.permute.xlu0 %1394
      %1396 = vrot.lane.b32.xlu0 %v932, 64
      %v1397 = vpop.permute.xlu0 %1396
      %v1398 = vsel %vm937, %v1391, 0
      %v1400 = vsel %vm937, %v1393, 0
      %v1402 = vsel %vm937, %v1395, 0
      %v1404 = vsel %vm937, %v1397, 0
      %1406 = vmatprep.subr.mxu0 0.0
      %1407 = vmatpush1.msra.mxu0 0.0
      %1408 = vmatprep.subr.mxu0 0.0
      %1409 = vmatpush1.msra.mxu0 0.0
      %1410 = vmatprep.subr.mxu0 0.0
      %1411 = vmatpush1.msra.mxu0 0.0
      %1412 = vmatprep.subr.mxu0 0.0
      %1413 = vmatpush1.msra.mxu0 0.0
      %1414 = vmatprep.subr.mxu0 0.0
      %1415 = vmatpush1.msra.mxu0 0.0
      %1416 = vmatprep.subr.mxu0 0.0
      %1417 = vmatpush1.msra.mxu0 0.0
      %1418 = vmatprep.subr.mxu0 0.0
      %1419 = vmatpush1.msra.mxu0 0.0
      %1420 = vmatprep.subr.mxu0 0.0
      %1421 = vmatpush1.msra.mxu0 0.0
      %1422 = vmatprep.subr.mxu0 0.0
      %1423 = vmatpush1.msra.mxu0 0.0
      %1424 = vmatprep.subr.mxu0 0.0
      %1425 = vmatpush1.msra.mxu0 0.0
      %1426 = vmatprep.subr.mxu0 0.0
      %1427 = vmatpush1.msra.mxu0 0.0
      %1428 = vmatprep.subr.mxu0 0.0
      %1429 = vmatpush1.msra.mxu0 0.0
      %1430 = vmatprep.subr.mxu0 0.0
      %1431 = vmatpush1.msra.mxu0 0.0
      %1432 = vmatprep.subr.mxu0 0.0
      %1433 = vmatpush1.msra.mxu0 0.0
      %1434 = vmatprep.subr.mxu0 0.0
      %1435 = vmatpush1.msra.mxu0 %v926
      %1436 = vmatprep.subr.mxu0 0.0
      %1437 = vmatpush1.msra.mxu0 %v921
      %1438 = vmatprep.subr.mxu0 0.0
      %1439 = vmatpush2.msra.mxu0 0.0
      %1440 = vmatprep.subr.mxu0 0.0
      %1441 = vmatpush2.msra.mxu0 0.0
      %1442 = vmatprep.subr.mxu0 0.0
      %1443 = vmatpush2.msra.mxu0 0.0
      %1444 = vmatprep.subr.mxu0 0.0
      %1445 = vmatpush2.msra.mxu0 0.0
      %1446 = vmatprep.subr.mxu0 0.0
      %1447 = vmatpush2.msra.mxu0 0.0
      %1448 = vmatprep.subr.mxu0 0.0
      %1449 = vmatpush2.msra.mxu0 0.0
      %1450 = vmatprep.subr.mxu0 0.0
      %1451 = vmatpush2.msra.mxu0 0.0
      %1452 = vmatprep.subr.mxu0 0.0
      %1453 = vmatpush2.msra.mxu0 0.0
      %1454 = vmatprep.subr.mxu0 0.0
      %1455 = vmatpush2.msra.mxu0 0.0
      %1456 = vmatprep.subr.mxu0 0.0
      %1457 = vmatpush2.msra.mxu0 0.0
      %1458 = vmatprep.subr.mxu0 0.0
      %1459 = vmatpush2.msra.mxu0 0.0
      %1460 = vmatprep.subr.mxu0 0.0
      %1461 = vmatpush2.msra.mxu0 0.0
      %1462 = vmatprep.subr.mxu0 0.0
      %1463 = vmatpush2.msra.mxu0 0.0
      %1464 = vmatprep.subr.mxu0 0.0
      %1465 = vmatpush2.msra.mxu0 0.0
      %1466 = vmatprep.subr.mxu0 0.0
      %1467 = vmatpush2.msra.mxu0 0.0
      %1468 = vmatprep.subr.mxu0 0.0
      %1469 = vmatpush2.msra.mxu0 0.0
      %1470 = vmatprep.mubr.f32.mxu0 0.0
      %1471 = vmatmul.mubr.f32.gmra.mxu0 %v1398
      %v1472 = vpop.f32.mrf.mxu0
      %v1473 = vadd.f32 0.0, %v1472
      %v1474 = vpop.f32.mrf.mxu0
      %1475 = vmatprep.mubr.f32.mxu0 0.0
      %1476 = vmatmul.mubr.f32.gmra.mxu0 %v1400
      %v1477 = vpop.f32.mrf.mxu0
      %v1478 = vadd.f32 0.0, %v1477
      %v1479 = vpop.f32.mrf.mxu0
      %1480 = vmatprep.mubr.f32.mxu0 0.0
      %1481 = vmatmul.mubr.f32.gmra.mxu0 %v1402
      %v1482 = vpop.f32.mrf.mxu0
      %v1483 = vadd.f32 0.0, %v1482
      %v1484 = vpop.f32.mrf.mxu0
      %1485 = vmatprep.mubr.f32.mxu0 0.0
      %1486 = vmatmul.mubr.f32.gmra.mxu0 %v1404
      %v1487 = vpop.f32.mrf.mxu0
      %v1488 = vadd.f32 0.0, %v1487
      %v1489 = vpop.f32.mrf.mxu0
      %1490 = vdwg.mxu0
      %v1491 = vadd.f32 %v1386, %v1473
      %v1492 = vadd.f32 %v1387, %v1478
      %v1493 = vadd.f32 %v1388, %v1483
      %v1494 = vadd.f32 %v1389, %v1488
      %v1495 = vmax.f32 %v1491, 0.0
      %v1496 = vmax.f32 %v1492, 0.0
      %v1497 = vmax.f32 %v1493, 0.0
      %v1498 = vmax.f32 %v1494, 0.0
      %v1499 = vld [vmem:[%s3] sm:$0xff]
      %v1500 = vld [vmem:[%s3 + $0x8] sm:$0xff]
      %v1501 = vld [vmem:[%s3 + $0x10] sm:$0xff]
      %v1502 = vld [vmem:[%s3 + $0x18] sm:$0xff]
      %v1503 = vld [vmem:[%s3 + $0x20] sm:$0xff]
      %v1504 = vld [vmem:[%s3 + $0x28] sm:$0xff]
      %v1505 = vld [vmem:[%s3 + $0x30] sm:$0xff]
      %v1506 = vld [vmem:[%s3 + $0x38] sm:$0xff]
      %vm1507 = vcmask 523264
      %v1509 = vsel %vm1507, %v1495, 0
      %v1512 = vsel %vm1507, %v1496, 0
      %v1515 = vsel %vm1507, %v1497, 0
      %v1518 = vsel %vm1507, %v1498, 0
      %1520 = vmatprep.subr.mxu0 0.0
      %1521 = vmatpush1.msra.mxu0 0.0
      %1522 = vmatprep.subr.mxu0 0.0
      %1523 = vmatpush1.msra.mxu0 0.0
      %1524 = vmatprep.subr.mxu0 0.0
      %1525 = vmatpush1.msra.mxu0 0.0
      %1526 = vmatprep.subr.mxu0 0.0
      %1527 = vmatpush1.msra.mxu0 0.0
      %1528 = vmatprep.subr.mxu0 0.0
      %1529 = vmatpush1.msra.mxu0 0.0
      %1530 = vmatprep.subr.mxu0 0.0
      %1531 = vmatpush1.msra.mxu0 0.0
      %1532 = vmatprep.subr.mxu0 0.0
      %1533 = vmatpush1.msra.mxu0 0.0
      %1534 = vmatprep.subr.mxu0 0.0
      %1535 = vmatpush1.msra.mxu0 0.0
      %1536 = vmatprep.subr.mxu0 0.0
      %1537 = vmatpush1.msra.mxu0 %v1506
      %1538 = vmatprep.subr.mxu0 0.0
      %1539 = vmatpush1.msra.mxu0 %v1505
      %1540 = vmatprep.subr.mxu0 0.0
      %1541 = vmatpush1.msra.mxu0 %v1504
      %1542 = vmatprep.subr.mxu0 0.0
      %1543 = vmatpush1.msra.mxu0 %v1503
      %1544 = vmatprep.subr.mxu0 0.0
      %1545 = vmatpush1.msra.mxu0 %v1502
      %1546 = vmatprep.subr.mxu0 0.0
      %1547 = vmatpush1.msra.mxu0 %v1501
      %1548 = vmatprep.subr.mxu0 0.0
      %1549 = vmatpush1.msra.mxu0 %v1500
      %1550 = vmatprep.subr.mxu0 0.0
      %1551 = vmatpush1.msra.mxu0 %v1499
      %1552 = vmatprep.subr.mxu0 0.0
      %1553 = vmatpush2.msra.mxu0 0.0
      %1554 = vmatprep.subr.mxu0 0.0
      %1555 = vmatpush2.msra.mxu0 0.0
      %1556 = vmatprep.subr.mxu0 0.0
      %1557 = vmatpush2.msra.mxu0 0.0
      %1558 = vmatprep.subr.mxu0 0.0
      %1559 = vmatpush2.msra.mxu0 0.0
      %1560 = vmatprep.subr.mxu0 0.0
      %1561 = vmatpush2.msra.mxu0 0.0
      %1562 = vmatprep.subr.mxu0 0.0
      %1563 = vmatpush2.msra.mxu0 0.0
      %1564 = vmatprep.subr.mxu0 0.0
      %1565 = vmatpush2.msra.mxu0 0.0
      %1566 = vmatprep.subr.mxu0 0.0
      %1567 = vmatpush2.msra.mxu0 0.0
      %1568 = vmatprep.subr.mxu0 0.0
      %1569 = vmatpush2.msra.mxu0 0.0
      %1570 = vmatprep.subr.mxu0 0.0
      %1571 = vmatpush2.msra.mxu0 0.0
      %1572 = vmatprep.subr.mxu0 0.0
      %1573 = vmatpush2.msra.mxu0 0.0
      %1574 = vmatprep.subr.mxu0 0.0
      %1575 = vmatpush2.msra.mxu0 0.0
      %1576 = vmatprep.subr.mxu0 0.0
      %1577 = vmatpush2.msra.mxu0 0.0
      %1578 = vmatprep.subr.mxu0 0.0
      %1579 = vmatpush2.msra.mxu0 0.0
      %1580 = vmatprep.subr.mxu0 0.0
      %1581 = vmatpush2.msra.mxu0 0.0
      %1582 = vmatprep.subr.mxu0 0.0
      %1583 = vmatpush2.msra.mxu0 0.0
      %1584 = vmatprep.mubr.f32.mxu0 0.0
      %1585 = vmatmul.mubr.f32.gmra.mxu0 %v1509
      %v1586 = vpop.f32.mrf.mxu0
      %v1587 = vadd.f32 0.0, %v1586
      %v1588 = vpop.f32.mrf.mxu0
      %1589 = vmatprep.mubr.f32.mxu0 0.0
      %1590 = vmatmul.mubr.f32.gmra.mxu0 %v1512
      %v1591 = vpop.f32.mrf.mxu0
      %v1592 = vadd.f32 0.0, %v1591
      %v1593 = vpop.f32.mrf.mxu0
      %1594 = vmatprep.mubr.f32.mxu0 0.0
      %1595 = vmatmul.mubr.f32.gmra.mxu0 %v1515
      %v1596 = vpop.f32.mrf.mxu0
      %v1597 = vadd.f32 0.0, %v1596
      %v1598 = vpop.f32.mrf.mxu0
      %1599 = vmatprep.mubr.f32.mxu0 0.0
      %1600 = vmatmul.mubr.f32.gmra.mxu0 %v1518
      %v1601 = vpop.f32.mrf.mxu0
      %v1602 = vadd.f32 0.0, %v1601
      %v1603 = vpop.f32.mrf.mxu0
      %1604 = vdwg.mxu0
      %v1605 = vld [vmem:[%s4 + $0x90] sm:$0xff]
      %v1606 = vld [vmem:[%s4 + $0xa8] sm:$0xff]
      %v1607 = vld [vmem:[%s4 + $0xc0] sm:$0xff]
      %v1608 = vld [vmem:[%s4 + $0xd8] sm:$0xff]
      %v1609 = vld [vmem:[%s4 + $0xf0] sm:$0xff]
      %v1610 = vld [vmem:[%s4 + $0x108] sm:$0xff]
      %v1611 = vld [vmem:[%s4 + $0x120] sm:$0xff]
      %v1612 = vld [vmem:[%s4 + $0x138] sm:$0xff]
      %v1614 = vsel %vm1507, %v1587, 0
      %v1617 = vsel %vm1507, %v1592, 0
      %v1620 = vsel %vm1507, %v1597, 0
      %v1623 = vsel %vm1507, %v1602, 0
      %1625 = vmatprep.subr.mxu0 0.0
      %1626 = vmatpush1.msra.mxu0 0.0
      %1627 = vmatprep.subr.mxu0 0.0
      %1628 = vmatpush1.msra.mxu0 0.0
      %1629 = vmatprep.subr.mxu0 0.0
      %1630 = vmatpush1.msra.mxu0 0.0
      %1631 = vmatprep.subr.mxu0 0.0
      %1632 = vmatpush1.msra.mxu0 0.0
      %1633 = vmatprep.subr.mxu0 0.0
      %1634 = vmatpush1.msra.mxu0 0.0
      %1635 = vmatprep.subr.mxu0 0.0
      %1636 = vmatpush1.msra.mxu0 0.0
      %1637 = vmatprep.subr.mxu0 0.0
      %1638 = vmatpush1.msra.mxu0 0.0
      %1639 = vmatprep.subr.mxu0 0.0
      %1640 = vmatpush1.msra.mxu0 0.0
      %1641 = vmatprep.subr.mxu0 0.0
      %1642 = vmatpush1.msra.mxu0 %v1612
      %1643 = vmatprep.subr.mxu0 0.0
      %1644 = vmatpush1.msra.mxu0 %v1611
      %1645 = vmatprep.subr.mxu0 0.0
      %1646 = vmatpush1.msra.mxu0 %v1610
      %1647 = vmatprep.subr.mxu0 0.0
      %1648 = vmatpush1.msra.mxu0 %v1609
      %1649 = vmatprep.subr.mxu0 0.0
      %1650 = vmatpush1.msra.mxu0 %v1608
      %1651 = vmatprep.subr.mxu0 0.0
      %1652 = vmatpush1.msra.mxu0 %v1607
      %1653 = vmatprep.subr.mxu0 0.0
      %1654 = vmatpush1.msra.mxu0 %v1606
      %1655 = vmatprep.subr.mxu0 0.0
      %1656 = vmatpush1.msra.mxu0 %v1605
      %1657 = vmatprep.subr.mxu0 0.0
      %1658 = vmatpush2.msra.mxu0 0.0
      %1659 = vmatprep.subr.mxu0 0.0
      %1660 = vmatpush2.msra.mxu0 0.0
      %1661 = vmatprep.subr.mxu0 0.0
      %1662 = vmatpush2.msra.mxu0 0.0
      %1663 = vmatprep.subr.mxu0 0.0
      %1664 = vmatpush2.msra.mxu0 0.0
      %1665 = vmatprep.subr.mxu0 0.0
      %1666 = vmatpush2.msra.mxu0 0.0
      %1667 = vmatprep.subr.mxu0 0.0
      %1668 = vmatpush2.msra.mxu0 0.0
      %1669 = vmatprep.subr.mxu0 0.0
      %1670 = vmatpush2.msra.mxu0 0.0
      %1671 = vmatprep.subr.mxu0 0.0
      %1672 = vmatpush2.msra.mxu0 0.0
      %1673 = vmatprep.subr.mxu0 0.0
      %1674 = vmatpush2.msra.mxu0 0.0
      %1675 = vmatprep.subr.mxu0 0.0
      %1676 = vmatpush2.msra.mxu0 0.0
      %1677 = vmatprep.subr.mxu0 0.0
      %1678 = vmatpush2.msra.mxu0 0.0
      %1679 = vmatprep.subr.mxu0 0.0
      %1680 = vmatpush2.msra.mxu0 0.0
      %1681 = vmatprep.subr.mxu0 0.0
      %1682 = vmatpush2.msra.mxu0 0.0
      %1683 = vmatprep.subr.mxu0 0.0
      %1684 = vmatpush2.msra.mxu0 0.0
      %1685 = vmatprep.subr.mxu0 0.0
      %1686 = vmatpush2.msra.mxu0 0.0
      %1687 = vmatprep.subr.mxu0 0.0
      %1688 = vmatpush2.msra.mxu0 0.0
      %1689 = vmatprep.mubr.f32.mxu0 0.0
      %1690 = vmatmul.mubr.f32.gmra.mxu0 %v1614
      %v1691 = vpop.f32.mrf.mxu0
      %v1692 = vadd.f32 0.0, %v1691
      %v1693 = vpop.f32.mrf.mxu0
      %1694 = vmatprep.mubr.f32.mxu0 0.0
      %1695 = vmatmul.mubr.f32.gmra.mxu0 %v1617
      %v1696 = vpop.f32.mrf.mxu0
      %v1697 = vadd.f32 0.0, %v1696
      %v1698 = vpop.f32.mrf.mxu0
      %1699 = vmatprep.mubr.f32.mxu0 0.0
      %1700 = vmatmul.mubr.f32.gmra.mxu0 %v1620
      %v1701 = vpop.f32.mrf.mxu0
      %v1702 = vadd.f32 0.0, %v1701
      %v1703 = vpop.f32.mrf.mxu0
      %1704 = vmatprep.mubr.f32.mxu0 0.0
      %1705 = vmatmul.mubr.f32.gmra.mxu0 %v1623
      %v1706 = vpop.f32.mrf.mxu0
      %v1707 = vadd.f32 0.0, %v1706
      %v1708 = vpop.f32.mrf.mxu0
      %1709 = vdwg.mxu0
      %1714 = vrot.lane.b32.xlu0 %v1692, 81
      %v1715 = vpop.permute.xlu0 %1714
      %1716 = vrot.lane.b32.xlu0 %v1697, 81
      %v1717 = vpop.permute.xlu0 %1716
      %1718 = vrot.lane.b32.xlu0 %v1702, 81
      %v1719 = vpop.permute.xlu0 %1718
      %1720 = vrot.lane.b32.xlu0 %v1707, 81
      %v1721 = vpop.permute.xlu0 %1720
      %1726 = vrot.lane.b32.xlu0 %v1692, 127
      %v1727 = vpop.permute.xlu0 %1726
      %1728 = vrot.lane.b32.xlu0 %v1697, 127
      %v1729 = vpop.permute.xlu0 %1728
      %1730 = vrot.lane.b32.xlu0 %v1702, 127
      %v1731 = vpop.permute.xlu0 %1730
      %1732 = vrot.lane.b32.xlu0 %v1707, 127
      %v1733 = vpop.permute.xlu0 %1732
      %1734 = vrot.lane.b32.xlu0 %v1715, 127
      %v1735 = vpop.permute.xlu0 %1734
      %1736 = vrot.lane.b32.xlu0 %v1717, 127
      %v1737 = vpop.permute.xlu0 %1736
      %1738 = vrot.lane.b32.xlu0 %v1719, 127
      %v1739 = vpop.permute.xlu0 %1738
      %1740 = vrot.lane.b32.xlu0 %v1721, 127
      %v1741 = vpop.permute.xlu0 %1740
      %1750 = vrot.lane.b32.xlu0 %v1692, 126
      %v1751 = vpop.permute.xlu0 %1750
      %1752 = vrot.lane.b32.xlu0 %v1697, 126
      %v1753 = vpop.permute.xlu0 %1752
      %1754 = vrot.lane.b32.xlu0 %v1702, 126
      %v1755 = vpop.permute.xlu0 %1754
      %1756 = vrot.lane.b32.xlu0 %v1707, 126
      %v1757 = vpop.permute.xlu0 %1756
      %1758 = vrot.lane.b32.xlu0 %v1715, 126
      %v1759 = vpop.permute.xlu0 %1758
      %1760 = vrot.lane.b32.xlu0 %v1717, 126
      %v1761 = vpop.permute.xlu0 %1760
      %1762 = vrot.lane.b32.xlu0 %v1719, 126
      %v1763 = vpop.permute.xlu0 %1762
      %1764 = vrot.lane.b32.xlu0 %v1721, 126
      %v1765 = vpop.permute.xlu0 %1764
      %v1774 = vld [vmem:[%s4 + $0x378] sm:$0xf]
      %v1775 = vld [vmem:[%s4 + $0x380] sm:$0xf]
      %v1776 = vld [vmem:[%s5 + $0x30] sm:$0xf]
      %1778 = vset.pattern.permute.xlu0 0
      %1779 = vperm.xlu0 %1778, %v1776
      %v1780 = vpop.permute.xlu0 %1779
      %v1783 = vsel %vm1507, %v1775, 0
      %1785 = vmatprep.subr.mxu0 0.0
      %1786 = vmatpush1.msra.mxu0 %v1741
      %1787 = vmatprep.subr.mxu0 0.0
      %1788 = vmatpush1.msra.mxu0 %v1739
      %1789 = vmatprep.subr.mxu0 0.0
      %1790 = vmatpush1.msra.mxu0 %v1737
      %1791 = vmatprep.subr.mxu0 0.0
      %1792 = vmatpush1.msra.mxu0 %v1735
      %1793 = vmatprep.subr.mxu0 0.0
      %1794 = vmatpush1.msra.mxu0 %v1733
      %1795 = vmatprep.subr.mxu0 0.0
      %1796 = vmatpush1.msra.mxu0 %v1731
      %1797 = vmatprep.subr.mxu0 0.0
      %1798 = vmatpush1.msra.mxu0 %v1729
      %1799 = vmatprep.subr.mxu0 0.0
      %1800 = vmatpush1.msra.mxu0 %v1727
      %1801 = vmatprep.subr.mxu0 0.0
      %1802 = vmatpush1.msra.mxu0 %v1721
      %1803 = vmatprep.subr.mxu0 0.0
      %1804 = vmatpush1.msra.mxu0 %v1719
      %1805 = vmatprep.subr.mxu0 0.0
      %1806 = vmatpush1.msra.mxu0 %v1717
      %1807 = vmatprep.subr.mxu0 0.0
      %1808 = vmatpush1.msra.mxu0 %v1715
      %1809 = vmatprep.subr.mxu0 0.0
      %1810 = vmatpush1.msra.mxu0 %v1707
      %1811 = vmatprep.subr.mxu0 0.0
      %1812 = vmatpush1.msra.mxu0 %v1702
      %1813 = vmatprep.subr.mxu0 0.0
      %1814 = vmatpush1.msra.mxu0 %v1697
      %1815 = vmatprep.subr.mxu0 0.0
      %1816 = vmatpush1.msra.mxu0 %v1692
      %1817 = vmatprep.subr.mxu0 0.0
      %1818 = vmatpush2.msra.mxu0 0.0
      %1819 = vmatprep.subr.mxu0 0.0
      %1820 = vmatpush2.msra.mxu0 0.0
      %1821 = vmatprep.subr.mxu0 0.0
      %1822 = vmatpush2.msra.mxu0 0.0
      %1823 = vmatprep.subr.mxu0 0.0
      %1824 = vmatpush2.msra.mxu0 0.0
      %1825 = vmatprep.subr.mxu0 0.0
      %1826 = vmatpush2.msra.mxu0 0.0
      %1827 = vmatprep.subr.mxu0 0.0
      %1828 = vmatpush2.msra.mxu0 0.0
      %1829 = vmatprep.subr.mxu0 0.0
      %1830 = vmatpush2.msra.mxu0 0.0
      %1831 = vmatprep.subr.mxu0 0.0
      %1832 = vmatpush2.msra.mxu0 0.0
      %1833 = vmatprep.subr.mxu0 0.0
      %1834 = vmatpush2.msra.mxu0 %v1765
      %1835 = vmatprep.subr.mxu0 0.0
      %1836 = vmatpush2.msra.mxu0 %v1763
      %1837 = vmatprep.subr.mxu0 0.0
      %1838 = vmatpush2.msra.mxu0 %v1761
      %1839 = vmatprep.subr.mxu0 0.0
      %1840 = vmatpush2.msra.mxu0 %v1759
      %1841 = vmatprep.subr.mxu0 0.0
      %1842 = vmatpush2.msra.mxu0 %v1757
      %1843 = vmatprep.subr.mxu0 0.0
      %1844 = vmatpush2.msra.mxu0 %v1755
      %1845 = vmatprep.subr.mxu0 0.0
      %1846 = vmatpush2.msra.mxu0 %v1753
      %1847 = vmatprep.subr.mxu0 0.0
      %1848 = vmatpush2.msra.mxu0 %v1751
      %1849 = vmatprep.mubr.f32.mxu0 %v1783
      %1850 = vmatmul.mubr.f32.gmra.mxu0 %v1774
      %v1851 = vpop.f32.mrf.mxu0
      %v1852 = vadd.f32 %v1780, %v1851
      %v1853 = vpop.f32.mrf.mxu0
      %1854 = vdwg.mxu0
      %v1855 = vld [vmem:[%s5 + $0x38] sm:$0xf]
      %v1856 = vld [vmem:[%s5 + $0x40] sm:$0xf]
      %vm1857 = vcmask 367616
      %v1859 = vsel %vm1857, %v1852, 0
      %vm1861 = vcmask 1044480
      %v1863 = vsel %vm1861, 0.022222223, 0
      %1865 = vmatprep.subr.mxu0 0.0
      %1866 = vmatpush1.msra.mxu0 0.0
      %1867 = vmatprep.subr.mxu0 0.0
      %1868 = vmatpush1.msra.mxu0 0.0
      %1869 = vmatprep.subr.mxu0 0.0
      %1870 = vmatpush1.msra.mxu0 0.0
      %1871 = vmatprep.subr.mxu0 0.0
      %1872 = vmatpush1.msra.mxu0 0.0
      %1873 = vmatprep.subr.mxu0 0.0
      %1874 = vmatpush1.msra.mxu0 0.0
      %1875 = vmatprep.subr.mxu0 0.0
      %1876 = vmatpush1.msra.mxu0 0.0
      %1877 = vmatprep.subr.mxu0 0.0
      %1878 = vmatpush1.msra.mxu0 0.0
      %1879 = vmatprep.subr.mxu0 0.0
      %1880 = vmatpush1.msra.mxu0 0.0
      %1881 = vmatprep.subr.mxu0 0.0
      %1882 = vmatpush1.msra.mxu0 0.0
      %1883 = vmatprep.subr.mxu0 0.0
      %1884 = vmatpush1.msra.mxu0 0.0
      %1885 = vmatprep.subr.mxu0 0.0
      %1886 = vmatpush1.msra.mxu0 %v1863
      %1887 = vmatprep.subr.mxu0 0.0
      %1888 = vmatpush1.msra.mxu0 0.022222223
      %1889 = vmatprep.subr.mxu0 0.0
      %1890 = vmatpush1.msra.mxu0 0.022222223
      %1891 = vmatprep.subr.mxu0 0.0
      %1892 = vmatpush1.msra.mxu0 0.022222223
      %1893 = vmatprep.subr.mxu0 0.0
      %1894 = vmatpush1.msra.mxu0 0.022222223
      %1895 = vmatprep.subr.mxu0 0.0
      %1896 = vmatpush1.msra.mxu0 0.022222223
      %1897 = vmatprep.subr.mxu0 0.0
      %1898 = vmatpush2.msra.mxu0 0.0
      %1899 = vmatprep.subr.mxu0 0.0
      %1900 = vmatpush2.msra.mxu0 0.0
      %1901 = vmatprep.subr.mxu0 0.0
      %1902 = vmatpush2.msra.mxu0 0.0
      %1903 = vmatprep.subr.mxu0 0.0
      %1904 = vmatpush2.msra.mxu0 0.0
      %1905 = vmatprep.subr.mxu0 0.0
      %1906 = vmatpush2.msra.mxu0 0.0
      %1907 = vmatprep.subr.mxu0 0.0
      %1908 = vmatpush2.msra.mxu0 0.0
      %1909 = vmatprep.subr.mxu0 0.0
      %1910 = vmatpush2.msra.mxu0 0.0
      %1911 = vmatprep.subr.mxu0 0.0
      %1912 = vmatpush2.msra.mxu0 0.0
      %1913 = vmatprep.subr.mxu0 0.0
      %1914 = vmatpush2.msra.mxu0 0.0
      %1915 = vmatprep.subr.mxu0 0.0
      %1916 = vmatpush2.msra.mxu0 0.0
      %1917 = vmatprep.subr.mxu0 0.0
      %1918 = vmatpush2.msra.mxu0 0.0
      %1919 = vmatprep.subr.mxu0 0.0
      %1920 = vmatpush2.msra.mxu0 0.0
      %1921 = vmatprep.subr.mxu0 0.0
      %1922 = vmatpush2.msra.mxu0 0.0
      %1923 = vmatprep.subr.mxu0 0.0
      %1924 = vmatpush2.msra.mxu0 0.0
      %1925 = vmatprep.subr.mxu0 0.0
      %1926 = vmatpush2.msra.mxu0 0.0
      %1927 = vmatprep.subr.mxu0 0.0
      %1928 = vmatpush2.msra.mxu0 0.0
      %1929 = vmatprep.mubr.f32.mxu0 0.0
      %1930 = vmatmul.mubr.f32.gmra.mxu0 %v1859
      %v1931 = vpop.f32.mrf.mxu0
      %v1932 = vadd.f32 0.0, %v1931
      %v1933 = vpop.f32.mrf.mxu0
      %1934 = vdwg.mxu0
      %v1935 = vmul.f32 %v1852, %v1852
      %v1937 = vsel %vm1857, %v1935, 0
      %1939 = vmatprep.subr.mxu0 0.0
      %1940 = vmatpush1.msra.mxu0 0.0
      %1941 = vmatprep.subr.mxu0 0.0
      %1942 = vmatpush1.msra.mxu0 0.0
      %1943 = vmatprep.subr.mxu0 0.0
      %1944 = vmatpush1.msra.mxu0 0.0
      %1945 = vmatprep.subr.mxu0 0.0
      %1946 = vmatpush1.msra.mxu0 0.0
      %1947 = vmatprep.subr.mxu0 0.0
      %1948 = vmatpush1.msra.mxu0 0.0
      %1949 = vmatprep.subr.mxu0 0.0
      %1950 = vmatpush1.msra.mxu0 0.0
      %1951 = vmatprep.subr.mxu0 0.0
      %1952 = vmatpush1.msra.mxu0 0.0
      %1953 = vmatprep.subr.mxu0 0.0
      %1954 = vmatpush1.msra.mxu0 0.0
      %1955 = vmatprep.subr.mxu0 0.0
      %1956 = vmatpush1.msra.mxu0 0.0
      %1957 = vmatprep.subr.mxu0 0.0
      %1958 = vmatpush1.msra.mxu0 0.0
      %1959 = vmatprep.subr.mxu0 0.0
      %1960 = vmatpush1.msra.mxu0 %v1863
      %1961 = vmatprep.subr.mxu0 0.0
      %1962 = vmatpush1.msra.mxu0 0.022222223
      %1963 = vmatprep.subr.mxu0 0.0
      %1964 = vmatpush1.msra.mxu0 0.022222223
      %1965 = vmatprep.subr.mxu0 0.0
      %1966 = vmatpush1.msra.mxu0 0.022222223
      %1967 = vmatprep.subr.mxu0 0.0
      %1968 = vmatpush1.msra.mxu0 0.022222223
      %1969 = vmatprep.subr.mxu0 0.0
      %1970 = vmatpush1.msra.mxu0 0.022222223
      %1971 = vmatprep.subr.mxu0 0.0
      %1972 = vmatpush2.msra.mxu0 0.0
      %1973 = vmatprep.subr.mxu0 0.0
      %1974 = vmatpush2.msra.mxu0 0.0
      %1975 = vmatprep.subr.mxu0 0.0
      %1976 = vmatpush2.msra.mxu0 0.0
      %1977 = vmatprep.subr.mxu0 0.0
      %1978 = vmatpush2.msra.mxu0 0.0
      %1979 = vmatprep.subr.mxu0 0.0
      %1980 = vmatpush2.msra.mxu0 0.0
      %1981 = vmatprep.subr.mxu0 0.0
      %1982 = vmatpush2.msra.mxu0 0.0
      %1983 = vmatprep.subr.mxu0 0.0
      %1984 = vmatpush2.msra.mxu0 0.0
      %1985 = vmatprep.subr.mxu0 0.0
      %1986 = vmatpush2.msra.mxu0 0.0
      %1987 = vmatprep.subr.mxu0 0.0
      %1988 = vmatpush2.msra.mxu0 0.0
      %1989 = vmatprep.subr.mxu0 0.0
      %1990 = vmatpush2.msra.mxu0 0.0
      %1991 = vmatprep.subr.mxu0 0.0
      %1992 = vmatpush2.msra.mxu0 0.0
      %1993 = vmatprep.subr.mxu0 0.0
      %1994 = vmatpush2.msra.mxu0 0.0
      %1995 = vmatprep.subr.mxu0 0.0
      %1996 = vmatpush2.msra.mxu0 0.0
      %1997 = vmatprep.subr.mxu0 0.0
      %1998 = vmatpush2.msra.mxu0 0.0
      %1999 = vmatprep.subr.mxu0 0.0
      %2000 = vmatpush2.msra.mxu0 0.0
      %2001 = vmatprep.subr.mxu0 0.0
      %2002 = vmatpush2.msra.mxu0 0.0
      %2003 = vmatprep.mubr.f32.mxu0 0.0
      %2004 = vmatmul.mubr.f32.gmra.mxu0 %v1937
      %v2005 = vpop.f32.mrf.mxu0
      %v2006 = vadd.f32 0.0, %v2005
      %v2007 = vpop.f32.mrf.mxu0
      %2008 = vdwg.mxu0
      %vm2009 = vcmask 1024
      %v2010 = vsel %vm2009, %v1932, 0.0
      %v2011 = vrot.slane %v2010, 4
      %v2012 = vadd.f32 %v2010, %v2011
      %v2013 = vrot.slane %v2012, 2
      %v2014 = vadd.f32 %v2012, %v2013
      %v2015 = vrot.slane %v2014, 1
      %v2016 = vadd.f32 %v2014, %v2015
      %v2017 = vrcp.pop 2.0
      %v2018 = vmul.f32 %v2016, %v2017
      %v2019 = vsel %vm2009, %v2006, 0.0
      %v2020 = vrot.slane %v2019, 4
      %v2021 = vadd.f32 %v2019, %v2020
      %v2022 = vrot.slane %v2021, 2
      %v2023 = vadd.f32 %v2021, %v2022
      %v2024 = vrot.slane %v2023, 1
      %v2025 = vadd.f32 %v2023, %v2024
      %v2026 = vmul.f32 %v2025, %v2017
      %v2027 = vmul.f32 %v2018, %v2018
      %v2028 = vsub.f32 %v2026, %v2027
      %v2029 = vadd.f32 %v2028, 1e-05
      %v2030 = vrsqrt.pop %v2029
      %2032 = vset.pattern.permute.xlu0 0
      %2033 = vperm.xlu0 %2032, %v2018
      %v2034 = vpop.permute.xlu0 %2033
      %v2036 = vsub.f32 %v1852, %v2034
      %2038 = vset.pattern.permute.xlu0 0
      %2039 = vperm.xlu0 %2038, %v2030
      %v2040 = vpop.permute.xlu0 %2039
      %v2042 = vmul.f32 %v2036, %v2040
      %2044 = vset.pattern.permute.xlu0 0
      %2045 = vperm.xlu0 %2044, %v1855
      %v2046 = vpop.permute.xlu0 %2045
      %v2048 = vmul.f32 %v2042, %v2046
      %2050 = vset.pattern.permute.xlu0 0
      %2051 = vperm.xlu0 %2050, %v1856
      %v2052 = vpop.permute.xlu0 %2051
      %v2054 = vadd.f32 %v2048, %v2052
      %v2056 = vrot.slane %v1932, 2
      %v2058 = vsel %vm2009, %v2056, 0.0
      %v2059 = vrot.slane %v2058, 4
      %v2060 = vadd.f32 %v2058, %v2059
      %v2061 = vrot.slane %v2060, 2
      %v2062 = vadd.f32 %v2060, %v2061
      %v2063 = vrot.slane %v2062, 1
      %v2064 = vadd.f32 %v2062, %v2063
      %v2065 = vmul.f32 %v2064, %v2017
      %v2067 = vrot.slane %v2006, 2
      %v2069 = vsel %vm2009, %v2067, 0.0
      %v2070 = vrot.slane %v2069, 4
      %v2071 = vadd.f32 %v2069, %v2070
      %v2072 = vrot.slane %v2071, 2
      %v2073 = vadd.f32 %v2071, %v2072
      %v2074 = vrot.slane %v2073, 1
      %v2075 = vadd.f32 %v2073, %v2074
      %v2076 = vmul.f32 %v2075, %v2017
      %v2077 = vmul.f32 %v2065, %v2065
      %v2078 = vsub.f32 %v2076, %v2077
      %v2079 = vadd.f32 %v2078, 1e-05
      %v2080 = vrsqrt.pop %v2079
      %2082 = vset.pattern.permute.xlu0 0
      %2083 = vperm.xlu0 %2082, %v2065
      %v2084 = vpop.permute.xlu0 %2083
      %v2086 = vsub.f32 %v1852, %v2084
      %2088 = vset.pattern.permute.xlu0 0
      %2089 = vperm.xlu0 %2088, %v2080
      %v2090 = vpop.permute.xlu0 %2089
      %v2092 = vmul.f32 %v2086, %v2090
      %v2093 = vmul.f32 %v2092, %v2046
      %v2094 = vadd.f32 %v2093, %v2052
      %vm2095 = vcmask 1041408
      %v2096 = vsel %vm2095, %v2054, %v2094
      %v2097 = vmax.f32 %v2096, 0.0
      %v2098 = vld [vmem:[%s4 + $0x150] sm:$0xff]
      %v2099 = vld [vmem:[%s4 + $0x168] sm:$0xff]
      %v2100 = vld [vmem:[%s4 + $0x180] sm:$0xff]
      %v2101 = vld [vmem:[%s4 + $0x198] sm:$0xff]
      %v2102 = vld [vmem:[%s4 + $0x1b0] sm:$0xff]
      %v2103 = vld [vmem:[%s4 + $0x1c8] sm:$0x1f]
      %v2105 = vsel %vm1857, %v2097, 0
      %v2108 = vsel %vm1861, %v2103, 0
      %2110 = vmatprep.subr.mxu0 0.0
      %2111 = vmatpush1.msra.mxu0 0.0
      %2112 = vmatprep.subr.mxu0 0.0
      %2113 = vmatpush1.msra.mxu0 0.0
      %2114 = vmatprep.subr.mxu0 0.0
      %2115 = vmatpush1.msra.mxu0 0.0
      %2116 = vmatprep.subr.mxu0 0.0
      %2117 = vmatpush1.msra.mxu0 0.0
      %2118 = vmatprep.subr.mxu0 0.0
      %2119 = vmatpush1.msra.mxu0 0.0
      %2120 = vmatprep.subr.mxu0 0.0
      %2121 = vmatpush1.msra.mxu0 0.0
      %2122 = vmatprep.subr.mxu0 0.0
      %2123 = vmatpush1.msra.mxu0 0.0
      %2124 = vmatprep.subr.mxu0 0.0
      %2125 = vmatpush1.msra.mxu0 0.0
      %2126 = vmatprep.subr.mxu0 0.0
      %2127 = vmatpush1.msra.mxu0 0.0
      %2128 = vmatprep.subr.mxu0 0.0
      %2129 = vmatpush1.msra.mxu0 0.0
      %2130 = vmatprep.subr.mxu0 0.0
      %2131 = vmatpush1.msra.mxu0 %v2108
      %2132 = vmatprep.subr.mxu0 0.0
      %2133 = vmatpush1.msra.mxu0 %v2102
      %2134 = vmatprep.subr.mxu0 0.0
      %2135 = vmatpush1.msra.mxu0 %v2101
      %2136 = vmatprep.subr.mxu0 0.0
      %2137 = vmatpush1.msra.mxu0 %v2100
      %2138 = vmatprep.subr.mxu0 0.0
      %2139 = vmatpush1.msra.mxu0 %v2099
      %2140 = vmatprep.subr.mxu0 0.0
      %2141 = vmatpush1.msra.mxu0 %v2098
      %2142 = vmatprep.subr.mxu0 0.0
      %2143 = vmatpush2.msra.mxu0 0.0
      %2144 = vmatprep.subr.mxu0 0.0
      %2145 = vmatpush2.msra.mxu0 0.0
      %2146 = vmatprep.subr.mxu0 0.0
      %2147 = vmatpush2.msra.mxu0 0.0
      %2148 = vmatprep.subr.mxu0 0.0
      %2149 = vmatpush2.msra.mxu0 0.0
      %2150 = vmatprep.subr.mxu0 0.0
      %2151 = vmatpush2.msra.mxu0 0.0
      %2152 = vmatprep.subr.mxu0 0.0
      %2153 = vmatpush2.msra.mxu0 0.0
      %2154 = vmatprep.subr.mxu0 0.0
      %2155 = vmatpush2.msra.mxu0 0.0
      %2156 = vmatprep.subr.mxu0 0.0
      %2157 = vmatpush2.msra.mxu0 0.0
      %2158 = vmatprep.subr.mxu0 0.0
      %2159 = vmatpush2.msra.mxu0 0.0
      %2160 = vmatprep.subr.mxu0 0.0
      %2161 = vmatpush2.msra.mxu0 0.0
      %2162 = vmatprep.subr.mxu0 0.0
      %2163 = vmatpush2.msra.mxu0 0.0
      %2164 = vmatprep.subr.mxu0 0.0
      %2165 = vmatpush2.msra.mxu0 0.0
      %2166 = vmatprep.subr.mxu0 0.0
      %2167 = vmatpush2.msra.mxu0 0.0
      %2168 = vmatprep.subr.mxu0 0.0
      %2169 = vmatpush2.msra.mxu0 0.0
      %2170 = vmatprep.subr.mxu0 0.0
      %2171 = vmatpush2.msra.mxu0 0.0
      %2172 = vmatprep.subr.mxu0 0.0
      %2173 = vmatpush2.msra.mxu0 0.0
      %2174 = vmatprep.mubr.f32.mxu0 0.0
      %2175 = vmatmul.mubr.f32.gmra.mxu0 %v2105
      %v2176 = vpop.f32.mrf.mxu0
      %v2177 = vadd.f32 0.0, %v2176
      %v2178 = vpop.f32.mrf.mxu0
      %2179 = vdwg.mxu0
      %v2181 = vrot.slane %v2177, 4
      %2182 = vrot.lane.b32.xlu0 %v2181, 90
      %v2183 = vpop.permute.xlu0 %2182
      %vm2185 = vcmask 1043456
      %v2186 = vsel %vm2185, %v2177, %v2183
      %2188 = vrot.lane.b32.xlu0 %v2186, 1
      %v2189 = vpop.permute.xlu0 %2188
      %vm2191 = vcmask 7168
      %v2192 = vsel %vm2191, 0.0, %v2189
      %vm2193 = vcmask 318464
      %v2194 = vsel %vm2193, %v2192, 0.0
      %2196 = vrot.lane.b32.xlu0 %v2194, 127
      %v2197 = vpop.permute.xlu0 %2196
      %2199 = vrot.lane.b32.xlu0 %v2194, 126
      %v2200 = vpop.permute.xlu0 %2199
      %v2202 = vld [vmem:[%s4 + $0x678] sm:$0xff]
      %v2203 = vld [vmem:[%s5 + $0x330] sm:$0xff]
      %2205 = vset.pattern.permute.xlu0 0
      %2206 = vperm.xlu0 %2205, %v2203
      %v2207 = vpop.permute.xlu0 %2206
      %vm2209 = vcmask 195584
      %v2211 = vsel %vm2209, %v2202, 0
      %2213 = vmatprep.subr.mxu0 0.0
      %2214 = vmatpush1.msra.mxu0 0.0
      %2215 = vmatprep.subr.mxu0 0.0
      %2216 = vmatpush1.msra.mxu0 0.0
      %2217 = vmatprep.subr.mxu0 0.0
      %2218 = vmatpush1.msra.mxu0 0.0
      %2219 = vmatprep.subr.mxu0 0.0
      %2220 = vmatpush1.msra.mxu0 0.0
      %2221 = vmatprep.subr.mxu0 0.0
      %2222 = vmatpush1.msra.mxu0 0.0
      %2223 = vmatprep.subr.mxu0 0.0
      %2224 = vmatpush1.msra.mxu0 0.0
      %2225 = vmatprep.subr.mxu0 0.0
      %2226 = vmatpush1.msra.mxu0 0.0
      %2227 = vmatprep.subr.mxu0 0.0
      %2228 = vmatpush1.msra.mxu0 0.0
      %2229 = vmatprep.subr.mxu0 0.0
      %2230 = vmatpush1.msra.mxu0 0.0
      %2231 = vmatprep.subr.mxu0 0.0
      %2232 = vmatpush1.msra.mxu0 0.0
      %2233 = vmatprep.subr.mxu0 0.0
      %2234 = vmatpush1.msra.mxu0 0.0
      %2235 = vmatprep.subr.mxu0 0.0
      %2236 = vmatpush1.msra.mxu0 0.0
      %2237 = vmatprep.subr.mxu0 0.0
      %2238 = vmatpush1.msra.mxu0 0.0
      %2239 = vmatprep.subr.mxu0 0.0
      %2240 = vmatpush1.msra.mxu0 %v2200
      %2241 = vmatprep.subr.mxu0 0.0
      %2242 = vmatpush1.msra.mxu0 %v2197
      %2243 = vmatprep.subr.mxu0 0.0
      %2244 = vmatpush1.msra.mxu0 %v2194
      %2245 = vmatprep.subr.mxu0 0.0
      %2246 = vmatpush2.msra.mxu0 0.0
      %2247 = vmatprep.subr.mxu0 0.0
      %2248 = vmatpush2.msra.mxu0 0.0
      %2249 = vmatprep.subr.mxu0 0.0
      %2250 = vmatpush2.msra.mxu0 0.0
      %2251 = vmatprep.subr.mxu0 0.0
      %2252 = vmatpush2.msra.mxu0 0.0
      %2253 = vmatprep.subr.mxu0 0.0
      %2254 = vmatpush2.msra.mxu0 0.0
      %2255 = vmatprep.subr.mxu0 0.0
      %2256 = vmatpush2.msra.mxu0 0.0
      %2257 = vmatprep.subr.mxu0 0.0
      %2258 = vmatpush2.msra.mxu0 0.0
      %2259 = vmatprep.subr.mxu0 0.0
      %2260 = vmatpush2.msra.mxu0 0.0
      %2261 = vmatprep.subr.mxu0 0.0
      %2262 = vmatpush2.msra.mxu0 0.0
      %2263 = vmatprep.subr.mxu0 0.0
      %2264 = vmatpush2.msra.mxu0 0.0
      %2265 = vmatprep.subr.mxu0 0.0
      %2266 = vmatpush2.msra.mxu0 0.0
      %2267 = vmatprep.subr.mxu0 0.0
      %2268 = vmatpush2.msra.mxu0 0.0
      %2269 = vmatprep.subr.mxu0 0.0
      %2270 = vmatpush2.msra.mxu0 0.0
      %2271 = vmatprep.subr.mxu0 0.0
      %2272 = vmatpush2.msra.mxu0 0.0
      %2273 = vmatprep.subr.mxu0 0.0
      %2274 = vmatpush2.msra.mxu0 0.0
      %2275 = vmatprep.subr.mxu0 0.0
      %2276 = vmatpush2.msra.mxu0 0.0
      %2277 = vmatprep.mubr.f32.mxu0 0.0
      %2278 = vmatmul.mubr.f32.gmra.mxu0 %v2211
      %v2279 = vpop.f32.mrf.mxu0
      %v2280 = vadd.f32 %v2207, %v2279
      %v2281 = vpop.f32.mrf.mxu0
      %2282 = vdwg.mxu0
      %v2283 = vmax.f32 %v2280, 0.0
      %vm2284 = vcmask 310272
      %v2286 = vsel %vm2284, %v2283, 0
      %vm2288 = vcmask 1045504
      %v2290 = vsel %vm2288, 0.02631579, 0
      %2292 = vmatprep.subr.mxu0 0.0
      %2293 = vmatpush1.msra.mxu0 0.0
      %2294 = vmatprep.subr.mxu0 0.0
      %2295 = vmatpush1.msra.mxu0 0.0
      %2296 = vmatprep.subr.mxu0 0.0
      %2297 = vmatpush1.msra.mxu0 0.0
      %2298 = vmatprep.subr.mxu0 0.0
      %2299 = vmatpush1.msra.mxu0 0.0
      %2300 = vmatprep.subr.mxu0 0.0
      %2301 = vmatpush1.msra.mxu0 0.0
      %2302 = vmatprep.subr.mxu0 0.0
      %2303 = vmatpush1.msra.mxu0 0.0
      %2304 = vmatprep.subr.mxu0 0.0
      %2305 = vmatpush1.msra.mxu0 0.0
      %2306 = vmatprep.subr.mxu0 0.0
      %2307 = vmatpush1.msra.mxu0 0.0
      %2308 = vmatprep.subr.mxu0 0.0
      %2309 = vmatpush1.msra.mxu0 0.0
      %2310 = vmatprep.subr.mxu0 0.0
      %2311 = vmatpush1.msra.mxu0 0.0
      %2312 = vmatprep.subr.mxu0 0.0
      %2313 = vmatpush1.msra.mxu0 0.0
      %2314 = vmatprep.subr.mxu0 0.0
      %2315 = vmatpush1.msra.mxu0 %v2290
      %2316 = vmatprep.subr.mxu0 0.0
      %2317 = vmatpush1.msra.mxu0 0.02631579
      %2318 = vmatprep.subr.mxu0 0.0
      %2319 = vmatpush1.msra.mxu0 0.02631579
      %2320 = vmatprep.subr.mxu0 0.0
      %2321 = vmatpush1.msra.mxu0 0.02631579
      %2322 = vmatprep.subr.mxu0 0.0
      %2323 = vmatpush1.msra.mxu0 0.02631579
      %2324 = vmatprep.subr.mxu0 0.0
      %2325 = vmatpush2.msra.mxu0 0.0
      %2326 = vmatprep.subr.mxu0 0.0
      %2327 = vmatpush2.msra.mxu0 0.0
      %2328 = vmatprep.subr.mxu0 0.0
      %2329 = vmatpush2.msra.mxu0 0.0
      %2330 = vmatprep.subr.mxu0 0.0
      %2331 = vmatpush2.msra.mxu0 0.0
      %2332 = vmatprep.subr.mxu0 0.0
      %2333 = vmatpush2.msra.mxu0 0.0
      %2334 = vmatprep.subr.mxu0 0.0
      %2335 = vmatpush2.msra.mxu0 0.0
      %2336 = vmatprep.subr.mxu0 0.0
      %2337 = vmatpush2.msra.mxu0 0.0
      %2338 = vmatprep.subr.mxu0 0.0
      %2339 = vmatpush2.msra.mxu0 0.0
      %2340 = vmatprep.subr.mxu0 0.0
      %2341 = vmatpush2.msra.mxu0 0.0
      %2342 = vmatprep.subr.mxu0 0.0
      %2343 = vmatpush2.msra.mxu0 0.0
      %2344 = vmatprep.subr.mxu0 0.0
      %2345 = vmatpush2.msra.mxu0 0.0
      %2346 = vmatprep.subr.mxu0 0.0
      %2347 = vmatpush2.msra.mxu0 0.0
      %2348 = vmatprep.subr.mxu0 0.0
      %2349 = vmatpush2.msra.mxu0 0.0
      %2350 = vmatprep.subr.mxu0 0.0
      %2351 = vmatpush2.msra.mxu0 0.0
      %2352 = vmatprep.subr.mxu0 0.0
      %2353 = vmatpush2.msra.mxu0 0.0
      %2354 = vmatprep.subr.mxu0 0.0
      %2355 = vmatpush2.msra.mxu0 0.0
      %2356 = vmatprep.mubr.f32.mxu0 0.0
      %2357 = vmatmul.mubr.f32.gmra.mxu0 %v2286
      %v2358 = vpop.f32.mrf.mxu0
      %v2359 = vadd.f32 0.0, %v2358
      %v2360 = vpop.f32.mrf.mxu0
      %2361 = vdwg.mxu0
      %v2362 = vld [vmem:[%s4 + $0x690] sm:$0xf]
      %v2363 = vld [vmem:[%s5 + $0x338] sm:$0xf]
      %vm2364 = vcmask 64512
      %v2366 = vsel %vm2364, %v2362, 0
      %2368 = vmatprep.subr.mxu0 0.0
      %2369 = vmatpush1.msra.mxu0 0.0
      %2370 = vmatprep.subr.mxu0 0.0
      %2371 = vmatpush1.msra.mxu0 0.0
      %2372 = vmatprep.subr.mxu0 0.0
      %2373 = vmatpush1.msra.mxu0 0.0
      %2374 = vmatprep.subr.mxu0 0.0
      %2375 = vmatpush1.msra.mxu0 0.0
      %2376 = vmatprep.subr.mxu0 0.0
      %2377 = vmatpush1.msra.mxu0 0.0
      %2378 = vmatprep.subr.mxu0 0.0
      %2379 = vmatpush1.msra.mxu0 0.0
      %2380 = vmatprep.subr.mxu0 0.0
      %2381 = vmatpush1.msra.mxu0 0.0
      %2382 = vmatprep.subr.mxu0 0.0
      %2383 = vmatpush1.msra.mxu0 0.0
      %2384 = vmatprep.subr.mxu0 0.0
      %2385 = vmatpush1.msra.mxu0 0.0
      %2386 = vmatprep.subr.mxu0 0.0
      %2387 = vmatpush1.msra.mxu0 0.0
      %2388 = vmatprep.subr.mxu0 0.0
      %2389 = vmatpush1.msra.mxu0 0.0
      %2390 = vmatprep.subr.mxu0 0.0
      %2391 = vmatpush1.msra.mxu0 0.0
      %2392 = vmatprep.subr.mxu0 0.0
      %2393 = vmatpush1.msra.mxu0 0.0
      %2394 = vmatprep.subr.mxu0 0.0
      %2395 = vmatpush1.msra.mxu0 0.0
      %2396 = vmatprep.subr.mxu0 0.0
      %2397 = vmatpush1.msra.mxu0 0.0
      %2398 = vmatprep.subr.mxu0 0.0
      %2399 = vmatpush1.msra.mxu0 %v2359
      %2400 = vmatprep.subr.mxu0 0.0
      %2401 = vmatpush2.msra.mxu0 0.0
      %2402 = vmatprep.subr.mxu0 0.0
      %2403 = vmatpush2.msra.mxu0 0.0
      %2404 = vmatprep.subr.mxu0 0.0
      %2405 = vmatpush2.msra.mxu0 0.0
      %2406 = vmatprep.subr.mxu0 0.0
      %2407 = vmatpush2.msra.mxu0 0.0
      %2408 = vmatprep.subr.mxu0 0.0
      %2409 = vmatpush2.msra.mxu0 0.0
      %2410 = vmatprep.subr.mxu0 0.0
      %2411 = vmatpush2.msra.mxu0 0.0
      %2412 = vmatprep.subr.mxu0 0.0
      %2413 = vmatpush2.msra.mxu0 0.0
      %2414 = vmatprep.subr.mxu0 0.0
      %2415 = vmatpush2.msra.mxu0 0.0
      %2416 = vmatprep.subr.mxu0 0.0
      %2417 = vmatpush2.msra.mxu0 0.0
      %2418 = vmatprep.subr.mxu0 0.0
      %2419 = vmatpush2.msra.mxu0 0.0
      %2420 = vmatprep.subr.mxu0 0.0
      %2421 = vmatpush2.msra.mxu0 0.0
      %2422 = vmatprep.subr.mxu0 0.0
      %2423 = vmatpush2.msra.mxu0 0.0
      %2424 = vmatprep.subr.mxu0 0.0
      %2425 = vmatpush2.msra.mxu0 0.0
      %2426 = vmatprep.subr.mxu0 0.0
      %2427 = vmatpush2.msra.mxu0 0.0
      %2428 = vmatprep.subr.mxu0 0.0
      %2429 = vmatpush2.msra.mxu0 0.0
      %2430 = vmatprep.subr.mxu0 0.0
      %2431 = vmatpush2.msra.mxu0 0.0
      %2432 = vmatprep.mubr.f32.mxu0 0.0
      %2433 = vmatmul.mubr.f32.gmra.mxu0 %v2366
      %v2434 = vpop.f32.mrf.mxu0
      %v2435 = vadd.f32 %v2363, %v2434
      %v2436 = vpop.f32.mrf.mxu0
      %2437 = vdwg.mxu0
      %v2438 = vmax.f32 %v2435, 0.0
      %v2439 = vld [vmem:[%s4 + $0x6a8] sm:$0xff]
      %v2440 = vld [vmem:[%s5 + $0x340] sm:$0xff]
      %vm2441 = vcmask 31744
      %v2443 = vsel %vm2441, %v2439, 0
      %v2446 = vsel %vm2185, %v2438, 0
      %2448 = vmatprep.subr.mxu0 0.0
      %2449 = vmatpush1.msra.mxu0 0.0
      %2450 = vmatprep.subr.mxu0 0.0
      %2451 = vmatpush1.msra.mxu0 0.0
      %2452 = vmatprep.subr.mxu0 0.0
      %2453 = vmatpush1.msra.mxu0 0.0
      %2454 = vmatprep.subr.mxu0 0.0
      %2455 = vmatpush1.msra.mxu0 0.0
      %2456 = vmatprep.subr.mxu0 0.0
      %2457 = vmatpush1.msra.mxu0 0.0
      %2458 = vmatprep.subr.mxu0 0.0
      %2459 = vmatpush1.msra.mxu0 0.0
      %2460 = vmatprep.subr.mxu0 0.0
      %2461 = vmatpush1.msra.mxu0 0.0
      %2462 = vmatprep.subr.mxu0 0.0
      %2463 = vmatpush1.msra.mxu0 0.0
      %2464 = vmatprep.subr.mxu0 0.0
      %2465 = vmatpush1.msra.mxu0 0.0
      %2466 = vmatprep.subr.mxu0 0.0
      %2467 = vmatpush1.msra.mxu0 0.0
      %2468 = vmatprep.subr.mxu0 0.0
      %2469 = vmatpush1.msra.mxu0 0.0
      %2470 = vmatprep.subr.mxu0 0.0
      %2471 = vmatpush1.msra.mxu0 0.0
      %2472 = vmatprep.subr.mxu0 0.0
      %2473 = vmatpush1.msra.mxu0 0.0
      %2474 = vmatprep.subr.mxu0 0.0
      %2475 = vmatpush1.msra.mxu0 0.0
      %2476 = vmatprep.subr.mxu0 0.0
      %2477 = vmatpush1.msra.mxu0 0.0
      %2478 = vmatprep.subr.mxu0 0.0
      %2479 = vmatpush1.msra.mxu0 %v2446
      %2480 = vmatprep.subr.mxu0 0.0
      %2481 = vmatpush2.msra.mxu0 0.0
      %2482 = vmatprep.subr.mxu0 0.0
      %2483 = vmatpush2.msra.mxu0 0.0
      %2484 = vmatprep.subr.mxu0 0.0
      %2485 = vmatpush2.msra.mxu0 0.0
      %2486 = vmatprep.subr.mxu0 0.0
      %2487 = vmatpush2.msra.mxu0 0.0
      %2488 = vmatprep.subr.mxu0 0.0
      %2489 = vmatpush2.msra.mxu0 0.0
      %2490 = vmatprep.subr.mxu0 0.0
      %2491 = vmatpush2.msra.mxu0 0.0
      %2492 = vmatprep.subr.mxu0 0.0
      %2493 = vmatpush2.msra.mxu0 0.0
      %2494 = vmatprep.subr.mxu0 0.0
      %2495 = vmatpush2.msra.mxu0 0.0
      %2496 = vmatprep.subr.mxu0 0.0
      %2497 = vmatpush2.msra.mxu0 0.0
      %2498 = vmatprep.subr.mxu0 0.0
      %2499 = vmatpush2.msra.mxu0 0.0
      %2500 = vmatprep.subr.mxu0 0.0
      %2501 = vmatpush2.msra.mxu0 0.0
      %2502 = vmatprep.subr.mxu0 0.0
      %2503 = vmatpush2.msra.mxu0 0.0
      %2504 = vmatprep.subr.mxu0 0.0
      %2505 = vmatpush2.msra.mxu0 0.0
      %2506 = vmatprep.subr.mxu0 0.0
      %2507 = vmatpush2.msra.mxu0 0.0
      %2508 = vmatprep.subr.mxu0 0.0
      %2509 = vmatpush2.msra.mxu0 0.0
      %2510 = vmatprep.subr.mxu0 0.0
      %2511 = vmatpush2.msra.mxu0 0.0
      %2512 = vmatprep.mubr.f32.mxu0 0.0
      %2513 = vmatmul.mubr.f32.gmra.mxu0 %v2443
      %v2514 = vpop.f32.mrf.mxu0
      %v2515 = vadd.f32 %v2440, %v2514
      %v2516 = vpop.f32.mrf.mxu0
      %2517 = vdwg.mxu0
      %v2518 = vxor.u32 %v2515, 2147483648
      %v2519 = vmul.f32 %v2518, 1.442695
      %v2520 = vpow.pop %v2519
      %v2521 = vadd.f32 %v2520, 1.0
      %v2522 = vrcp.pop %v2521
      %v2523 = vmul.f32 1.0, %v2522
      %v2524 = vadd.f32 %v2523, 1.0
      %2526 = vset.pattern.permute.xlu0 0
      %2527 = vperm.xlu0 %2526, %v2524
      %v2528 = vpop.permute.xlu0 %2527
      %v2530 = vmul.f32 %v2186, %v2528
      %2532 = vrot.lane.b32.xlu0 %v2530, 127
      %v2533 = vpop.permute.xlu0 %2532
      %2535 = vrot.lane.b32.xlu0 %v2530, 126
      %v2536 = vpop.permute.xlu0 %2535
      %v2538 = vld [vmem:[%s4 + $0x390] sm:$0xff]
      %v2539 = vld [vmem:[%s5 + $0x48] sm:$0xff]
      %2541 = vset.pattern.permute.xlu0 0
      %2542 = vperm.xlu0 %2541, %v2539
      %v2543 = vpop.permute.xlu0 %2542
      %v2546 = vsel %vm2209, %v2538, 0
      %2548 = vmatprep.subr.mxu0 0.0
      %2549 = vmatpush1.msra.mxu0 0.0
      %2550 = vmatprep.subr.mxu0 0.0
      %2551 = vmatpush1.msra.mxu0 0.0
      %2552 = vmatprep.subr.mxu0 0.0
      %2553 = vmatpush1.msra.mxu0 0.0
      %2554 = vmatprep.subr.mxu0 0.0
      %2555 = vmatpush1.msra.mxu0 0.0
      %2556 = vmatprep.subr.mxu0 0.0
      %2557 = vmatpush1.msra.mxu0 0.0
      %2558 = vmatprep.subr.mxu0 0.0
      %2559 = vmatpush1.msra.mxu0 0.0
      %2560 = vmatprep.subr.mxu0 0.0
      %2561 = vmatpush1.msra.mxu0 0.0
      %2562 = vmatprep.subr.mxu0 0.0
      %2563 = vmatpush1.msra.mxu0 0.0
      %2564 = vmatprep.subr.mxu0 0.0
      %2565 = vmatpush1.msra.mxu0 0.0
      %2566 = vmatprep.subr.mxu0 0.0
      %2567 = vmatpush1.msra.mxu0 0.0
      %2568 = vmatprep.subr.mxu0 0.0
      %2569 = vmatpush1.msra.mxu0 0.0
      %2570 = vmatprep.subr.mxu0 0.0
      %2571 = vmatpush1.msra.mxu0 0.0
      %2572 = vmatprep.subr.mxu0 0.0
      %2573 = vmatpush1.msra.mxu0 0.0
      %2574 = vmatprep.subr.mxu0 0.0
      %2575 = vmatpush1.msra.mxu0 %v2536
      %2576 = vmatprep.subr.mxu0 0.0
      %2577 = vmatpush1.msra.mxu0 %v2533
      %2578 = vmatprep.subr.mxu0 0.0
      %2579 = vmatpush1.msra.mxu0 %v2530
      %2580 = vmatprep.subr.mxu0 0.0
      %2581 = vmatpush2.msra.mxu0 0.0
      %2582 = vmatprep.subr.mxu0 0.0
      %2583 = vmatpush2.msra.mxu0 0.0
      %2584 = vmatprep.subr.mxu0 0.0
      %2585 = vmatpush2.msra.mxu0 0.0
      %2586 = vmatprep.subr.mxu0 0.0
      %2587 = vmatpush2.msra.mxu0 0.0
      %2588 = vmatprep.subr.mxu0 0.0
      %2589 = vmatpush2.msra.mxu0 0.0
      %2590 = vmatprep.subr.mxu0 0.0
      %2591 = vmatpush2.msra.mxu0 0.0
      %2592 = vmatprep.subr.mxu0 0.0
      %2593 = vmatpush2.msra.mxu0 0.0
      %2594 = vmatprep.subr.mxu0 0.0
      %2595 = vmatpush2.msra.mxu0 0.0
      %2596 = vmatprep.subr.mxu0 0.0
      %2597 = vmatpush2.msra.mxu0 0.0
      %2598 = vmatprep.subr.mxu0 0.0
      %2599 = vmatpush2.msra.mxu0 0.0
      %2600 = vmatprep.subr.mxu0 0.0
      %2601 = vmatpush2.msra.mxu0 0.0
      %2602 = vmatprep.subr.mxu0 0.0
      %2603 = vmatpush2.msra.mxu0 0.0
      %2604 = vmatprep.subr.mxu0 0.0
      %2605 = vmatpush2.msra.mxu0 0.0
      %2606 = vmatprep.subr.mxu0 0.0
      %2607 = vmatpush2.msra.mxu0 0.0
      %2608 = vmatprep.subr.mxu0 0.0
      %2609 = vmatpush2.msra.mxu0 0.0
      %2610 = vmatprep.subr.mxu0 0.0
      %2611 = vmatpush2.msra.mxu0 0.0
      %2612 = vmatprep.mubr.f32.mxu0 0.0
      %2613 = vmatmul.mubr.f32.gmra.mxu0 %v2546
      %v2614 = vpop.f32.mrf.mxu0
      %v2615 = vadd.f32 %v2543, %v2614
      %v2616 = vpop.f32.mrf.mxu0
      %2617 = vdwg.mxu0
      %v2618 = vld [vmem:[%s5 + $0x50] sm:$0xff]
      %v2619 = vld [vmem:[%s5 + $0x58] sm:$0xff]
      %vm2620 = vcmask 293888
      %v2622 = vsel %vm2620, %v2615, 0
      %v2625 = vsel %vm2185, 0.027777778, 0
      %2627 = vmatprep.subr.mxu0 0.0
      %2628 = vmatpush1.msra.mxu0 0.0
      %2629 = vmatprep.subr.mxu0 0.0
      %2630 = vmatpush1.msra.mxu0 0.0
      %2631 = vmatprep.subr.mxu0 0.0
      %2632 = vmatpush1.msra.mxu0 0.0
      %2633 = vmatprep.subr.mxu0 0.0
      %2634 = vmatpush1.msra.mxu0 0.0
      %2635 = vmatprep.subr.mxu0 0.0
      %2636 = vmatpush1.msra.mxu0 0.0
      %2637 = vmatprep.subr.mxu0 0.0
      %2638 = vmatpush1.msra.mxu0 0.0
      %2639 = vmatprep.subr.mxu0 0.0
      %2640 = vmatpush1.msra.mxu0 0.0
      %2641 = vmatprep.subr.mxu0 0.0
      %2642 = vmatpush1.msra.mxu0 0.0
      %2643 = vmatprep.subr.mxu0 0.0
      %2644 = vmatpush1.msra.mxu0 0.0
      %2645 = vmatprep.subr.mxu0 0.0
      %2646 = vmatpush1.msra.mxu0 0.0
      %2647 = vmatprep.subr.mxu0 0.0
      %2648 = vmatpush1.msra.mxu0 0.0
      %2649 = vmatprep.subr.mxu0 0.0
      %2650 = vmatpush1.msra.mxu0 %v2625
      %2651 = vmatprep.subr.mxu0 0.0
      %2652 = vmatpush1.msra.mxu0 0.027777778
      %2653 = vmatprep.subr.mxu0 0.0
      %2654 = vmatpush1.msra.mxu0 0.027777778
      %2655 = vmatprep.subr.mxu0 0.0
      %2656 = vmatpush1.msra.mxu0 0.027777778
      %2657 = vmatprep.subr.mxu0 0.0
      %2658 = vmatpush1.msra.mxu0 0.027777778
      %2659 = vmatprep.subr.mxu0 0.0
      %2660 = vmatpush2.msra.mxu0 0.0
      %2661 = vmatprep.subr.mxu0 0.0
      %2662 = vmatpush2.msra.mxu0 0.0
      %2663 = vmatprep.subr.mxu0 0.0
      %2664 = vmatpush2.msra.mxu0 0.0
      %2665 = vmatprep.subr.mxu0 0.0
      %2666 = vmatpush2.msra.mxu0 0.0
      %2667 = vmatprep.subr.mxu0 0.0
      %2668 = vmatpush2.msra.mxu0 0.0
      %2669 = vmatprep.subr.mxu0 0.0
      %2670 = vmatpush2.msra.mxu0 0.0
      %2671 = vmatprep.subr.mxu0 0.0
      %2672 = vmatpush2.msra.mxu0 0.0
      %2673 = vmatprep.subr.mxu0 0.0
      %2674 = vmatpush2.msra.mxu0 0.0
      %2675 = vmatprep.subr.mxu0 0.0
      %2676 = vmatpush2.msra.mxu0 0.0
      %2677 = vmatprep.subr.mxu0 0.0
      %2678 = vmatpush2.msra.mxu0 0.0
      %2679 = vmatprep.subr.mxu0 0.0
      %2680 = vmatpush2.msra.mxu0 0.0
      %2681 = vmatprep.subr.mxu0 0.0
      %2682 = vmatpush2.msra.mxu0 0.0
      %2683 = vmatprep.subr.mxu0 0.0
      %2684 = vmatpush2.msra.mxu0 0.0
      %2685 = vmatprep.subr.mxu0 0.0
      %2686 = vmatpush2.msra.mxu0 0.0
      %2687 = vmatprep.subr.mxu0 0.0
      %2688 = vmatpush2.msra.mxu0 0.0
      %2689 = vmatprep.subr.mxu0 0.0
      %2690 = vmatpush2.msra.mxu0 0.0
      %2691 = vmatprep.mubr.f32.mxu0 0.0
      %2692 = vmatmul.mubr.f32.gmra.mxu0 %v2622
      %v2693 = vpop.f32.mrf.mxu0
      %v2694 = vadd.f32 0.0, %v2693
      %v2695 = vpop.f32.mrf.mxu0
      %2696 = vdwg.mxu0
      %v2697 = vmul.f32 %v2615, %v2615
      %v2699 = vsel %vm2620, %v2697, 0
      %2701 = vmatprep.subr.mxu0 0.0
      %2702 = vmatpush1.msra.mxu0 0.0
      %2703 = vmatprep.subr.mxu0 0.0
      %2704 = vmatpush1.msra.mxu0 0.0
      %2705 = vmatprep.subr.mxu0 0.0
      %2706 = vmatpush1.msra.mxu0 0.0
      %2707 = vmatprep.subr.mxu0 0.0
      %2708 = vmatpush1.msra.mxu0 0.0
      %2709 = vmatprep.subr.mxu0 0.0
      %2710 = vmatpush1.msra.mxu0 0.0
      %2711 = vmatprep.subr.mxu0 0.0
      %2712 = vmatpush1.msra.mxu0 0.0
      %2713 = vmatprep.subr.mxu0 0.0
      %2714 = vmatpush1.msra.mxu0 0.0
      %2715 = vmatprep.subr.mxu0 0.0
      %2716 = vmatpush1.msra.mxu0 0.0
      %2717 = vmatprep.subr.mxu0 0.0
      %2718 = vmatpush1.msra.mxu0 0.0
      %2719 = vmatprep.subr.mxu0 0.0
      %2720 = vmatpush1.msra.mxu0 0.0
      %2721 = vmatprep.subr.mxu0 0.0
      %2722 = vmatpush1.msra.mxu0 0.0
      %2723 = vmatprep.subr.mxu0 0.0
      %2724 = vmatpush1.msra.mxu0 %v2625
      %2725 = vmatprep.subr.mxu0 0.0
      %2726 = vmatpush1.msra.mxu0 0.027777778
      %2727 = vmatprep.subr.mxu0 0.0
      %2728 = vmatpush1.msra.mxu0 0.027777778
      %2729 = vmatprep.subr.mxu0 0.0
      %2730 = vmatpush1.msra.mxu0 0.027777778
      %2731 = vmatprep.subr.mxu0 0.0
      %2732 = vmatpush1.msra.mxu0 0.027777778
      %2733 = vmatprep.subr.mxu0 0.0
      %2734 = vmatpush2.msra.mxu0 0.0
      %2735 = vmatprep.subr.mxu0 0.0
      %2736 = vmatpush2.msra.mxu0 0.0
      %2737 = vmatprep.subr.mxu0 0.0
      %2738 = vmatpush2.msra.mxu0 0.0
      %2739 = vmatprep.subr.mxu0 0.0
      %2740 = vmatpush2.msra.mxu0 0.0
      %2741 = vmatprep.subr.mxu0 0.0
      %2742 = vmatpush2.msra.mxu0 0.0
      %2743 = vmatprep.subr.mxu0 0.0
      %2744 = vmatpush2.msra.mxu0 0.0
      %2745 = vmatprep.subr.mxu0 0.0
      %2746 = vmatpush2.msra.mxu0 0.0
      %2747 = vmatprep.subr.mxu0 0.0
      %2748 = vmatpush2.msra.mxu0 0.0
      %2749 = vmatprep.subr.mxu0 0.0
      %2750 = vmatpush2.msra.mxu0 0.0
      %2751 = vmatprep.subr.mxu0 0.0
      %2752 = vmatpush2.msra.mxu0 0.0
      %2753 = vmatprep.subr.mxu0 0.0
      %2754 = vmatpush2.msra.mxu0 0.0
      %2755 = vmatprep.subr.mxu0 0.0
      %2756 = vmatpush2.msra.mxu0 0.0
      %2757 = vmatprep.subr.mxu0 0.0
      %2758 = vmatpush2.msra.mxu0 0.0
      %2759 = vmatprep.subr.mxu0 0.0
      %2760 = vmatpush2.msra.mxu0 0.0
      %2761 = vmatprep.subr.mxu0 0.0
      %2762 = vmatpush2.msra.mxu0 0.0
      %2763 = vmatprep.subr.mxu0 0.0
      %2764 = vmatpush2.msra.mxu0 0.0
      %2765 = vmatprep.mubr.f32.mxu0 0.0
      %2766 = vmatmul.mubr.f32.gmra.mxu0 %v2699
      %v2767 = vpop.f32.mrf.mxu0
      %v2768 = vadd.f32 0.0, %v2767
      %v2769 = vpop.f32.mrf.mxu0
      %2770 = vdwg.mxu0
      %vm2771 = vcmask 3072
      %v2772 = vsel %vm2771, %v2694, 0.0
      %v2773 = vrot.slane %v2772, 4
      %v2774 = vadd.f32 %v2772, %v2773
      %v2775 = vrot.slane %v2774, 2
      %v2776 = vadd.f32 %v2774, %v2775
      %v2777 = vrot.slane %v2776, 1
      %v2778 = vadd.f32 %v2776, %v2777
      %v2779 = vrcp.pop 4.0
      %v2780 = vmul.f32 %v2778, %v2779
      %v2781 = vsel %vm2771, %v2768, 0.0
      %v2782 = vrot.slane %v2781, 4
      %v2783 = vadd.f32 %v2781, %v2782
      %v2784 = vrot.slane %v2783, 2
      %v2785 = vadd.f32 %v2783, %v2784
      %v2786 = vrot.slane %v2785, 1
      %v2787 = vadd.f32 %v2785, %v2786
      %v2788 = vmul.f32 %v2787, %v2779
      %v2789 = vmul.f32 %v2780, %v2780
      %v2790 = vsub.f32 %v2788, %v2789
      %v2791 = vadd.f32 %v2790, 1e-05
      %v2792 = vrsqrt.pop %v2791
      %2794 = vset.pattern.permute.xlu0 0
      %2795 = vperm.xlu0 %2794, %v2780
      %v2796 = vpop.permute.xlu0 %2795
      %v2798 = vsub.f32 %v2615, %v2796
      %2800 = vset.pattern.permute.xlu0 0
      %2801 = vperm.xlu0 %2800, %v2792
      %v2802 = vpop.permute.xlu0 %2801
      %v2804 = vmul.f32 %v2798, %v2802
      %2806 = vset.pattern.permute.xlu0 0
      %2807 = vperm.xlu0 %2806, %v2618
      %v2808 = vpop.permute.xlu0 %2807
      %v2810 = vmul.f32 %v2804, %v2808
      %2812 = vset.pattern.permute.xlu0 0
      %2813 = vperm.xlu0 %2812, %v2619
      %v2814 = vpop.permute.xlu0 %2813
      %v2816 = vadd.f32 %v2810, %v2814
      %v2818 = vrot.slane %v2694, 4
      %v2820 = vsel %vm2771, %v2818, 0.0
      %v2821 = vrot.slane %v2820, 4
      %v2822 = vadd.f32 %v2820, %v2821
      %v2823 = vrot.slane %v2822, 2
      %v2824 = vadd.f32 %v2822, %v2823
      %v2825 = vrot.slane %v2824, 1
      %v2826 = vadd.f32 %v2824, %v2825
      %v2827 = vmul.f32 %v2826, %v2779
      %v2829 = vrot.slane %v2768, 4
      %v2831 = vsel %vm2771, %v2829, 0.0
      %v2832 = vrot.slane %v2831, 4
      %v2833 = vadd.f32 %v2831, %v2832
      %v2834 = vrot.slane %v2833, 2
      %v2835 = vadd.f32 %v2833, %v2834
      %v2836 = vrot.slane %v2835, 1
      %v2837 = vadd.f32 %v2835, %v2836
      %v2838 = vmul.f32 %v2837, %v2779
      %v2839 = vmul.f32 %v2827, %v2827
      %v2840 = vsub.f32 %v2838, %v2839
      %v2841 = vadd.f32 %v2840, 1e-05
      %v2842 = vrsqrt.pop %v2841
      %2844 = vset.pattern.permute.xlu0 0
      %2845 = vperm.xlu0 %2844, %v2827
      %v2846 = vpop.permute.xlu0 %2845
      %v2848 = vsub.f32 %v2615, %v2846
      %2850 = vset.pattern.permute.xlu0 0
      %2851 = vperm.xlu0 %2850, %v2842
      %v2852 = vpop.permute.xlu0 %2851
      %v2854 = vmul.f32 %v2848, %v2852
      %v2855 = vmul.f32 %v2854, %v2808
      %v2856 = vadd.f32 %v2855, %v2814
      %v2857 = vsel %vm2185, %v2816, %v2856
      %v2858 = vmax.f32 %v2857, 0.0
      %v2859 = vld [vmem:[%s4 + $0x1e0] sm:$0xff]
      %v2860 = vld [vmem:[%s4 + $0x1f8] sm:$0xff]
      %v2861 = vld [vmem:[%s4 + $0x210] sm:$0xff]
      %v2862 = vld [vmem:[%s4 + $0x228] sm:$0xff]
      %v2863 = vld [vmem:[%s4 + $0x240] sm:$0xf]
      %v2865 = vsel %vm2620, %v2858, 0
      %v2868 = vsel %vm2185, %v2863, 0
      %2870 = vmatprep.subr.mxu0 0.0
      %2871 = vmatpush1.msra.mxu0 0.0
      %2872 = vmatprep.subr.mxu0 0.0
      %2873 = vmatpush1.msra.mxu0 0.0
      %2874 = vmatprep.subr.mxu0 0.0
      %2875 = vmatpush1.msra.mxu0 0.0
      %2876 = vmatprep.subr.mxu0 0.0
      %2877 = vmatpush1.msra.mxu0 0.0
      %2878 = vmatprep.subr.mxu0 0.0
      %2879 = vmatpush1.msra.mxu0 0.0
      %2880 = vmatprep.subr.mxu0 0.0
      %2881 = vmatpush1.msra.mxu0 0.0
      %2882 = vmatprep.subr.mxu0 0.0
      %2883 = vmatpush1.msra.mxu0 0.0
      %2884 = vmatprep.subr.mxu0 0.0
      %2885 = vmatpush1.msra.mxu0 0.0
      %2886 = vmatprep.subr.mxu0 0.0
      %2887 = vmatpush1.msra.mxu0 0.0
      %2888 = vmatprep.subr.mxu0 0.0
      %2889 = vmatpush1.msra.mxu0 0.0
      %2890 = vmatprep.subr.mxu0 0.0
      %2891 = vmatpush1.msra.mxu0 0.0
      %2892 = vmatprep.subr.mxu0 0.0
      %2893 = vmatpush1.msra.mxu0 %v2868
      %2894 = vmatprep.subr.mxu0 0.0
      %2895 = vmatpush1.msra.mxu0 %v2862
      %2896 = vmatprep.subr.mxu0 0.0
      %2897 = vmatpush1.msra.mxu0 %v2861
      %2898 = vmatprep.subr.mxu0 0.0
      %2899 = vmatpush1.msra.mxu0 %v2860
      %2900 = vmatprep.subr.mxu0 0.0
      %2901 = vmatpush1.msra.mxu0 %v2859
      %2902 = vmatprep.subr.mxu0 0.0
      %2903 = vmatpush2.msra.mxu0 0.0
      %2904 = vmatprep.subr.mxu0 0.0
      %2905 = vmatpush2.msra.mxu0 0.0
      %2906 = vmatprep.subr.mxu0 0.0
      %2907 = vmatpush2.msra.mxu0 0.0
      %2908 = vmatprep.subr.mxu0 0.0
      %2909 = vmatpush2.msra.mxu0 0.0
      %2910 = vmatprep.subr.mxu0 0.0
      %2911 = vmatpush2.msra.mxu0 0.0
      %2912 = vmatprep.subr.mxu0 0.0
      %2913 = vmatpush2.msra.mxu0 0.0
      %2914 = vmatprep.subr.mxu0 0.0
      %2915 = vmatpush2.msra.mxu0 0.0
      %2916 = vmatprep.subr.mxu0 0.0
      %2917 = vmatpush2.msra.mxu0 0.0
      %2918 = vmatprep.subr.mxu0 0.0
      %2919 = vmatpush2.msra.mxu0 0.0
      %2920 = vmatprep.subr.mxu0 0.0
      %2921 = vmatpush2.msra.mxu0 0.0
      %2922 = vmatprep.subr.mxu0 0.0
      %2923 = vmatpush2.msra.mxu0 0.0
      %2924 = vmatprep.subr.mxu0 0.0
      %2925 = vmatpush2.msra.mxu0 0.0
      %2926 = vmatprep.subr.mxu0 0.0
      %2927 = vmatpush2.msra.mxu0 0.0
      %2928 = vmatprep.subr.mxu0 0.0
      %2929 = vmatpush2.msra.mxu0 0.0
      %2930 = vmatprep.subr.mxu0 0.0
      %2931 = vmatpush2.msra.mxu0 0.0
      %2932 = vmatprep.subr.mxu0 0.0
      %2933 = vmatpush2.msra.mxu0 0.0
      %2934 = vmatprep.mubr.f32.mxu0 0.0
      %2935 = vmatmul.mubr.f32.gmra.mxu0 %v2865
      %v2936 = vpop.f32.mrf.mxu0
      %v2937 = vadd.f32 0.0, %v2936
      %v2938 = vpop.f32.mrf.mxu0
      %2939 = vdwg.mxu0
      %2941 = vrot.lane.b32.xlu0 %v2937, 95
      %v2942 = vpop.permute.xlu0 %2941
      %2944 = vrot.lane.b32.xlu0 %v2937, 1
      %v2945 = vpop.permute.xlu0 %2944
      %2946 = vrot.lane.b32.xlu0 %v2942, 1
      %v2947 = vpop.permute.xlu0 %2946
      %v2950 = vsel %vm2191, 0.0, %v2945
      %v2951 = vsel %vm2191, 0.0, %v2947
      %vm2952 = vcmask 277504
      %v2953 = vsel %vm2952, %v2950, 0.0
      %v2954 = vsel %vm2952, %v2951, 0.0
      %2957 = vrot.lane.b32.xlu0 %v2953, 127
      %v2958 = vpop.permute.xlu0 %2957
      %2959 = vrot.lane.b32.xlu0 %v2954, 127
      %v2960 = vpop.permute.xlu0 %2959
      %2963 = vrot.lane.b32.xlu0 %v2953, 126
      %v2964 = vpop.permute.xlu0 %2963
      %2965 = vrot.lane.b32.xlu0 %v2954, 126
      %v2966 = vpop.permute.xlu0 %2965
      %v2969 = vld [vmem:[%s4 + $0x6c0] sm:$0xff]
      %v2970 = vld [vmem:[%s4 + $0x6d8] sm:$0xff]
      %v2971 = vld [vmem:[%s5 + $0x348] sm:$0xff]
      %v2972 = vld [vmem:[%s5 + $0x350] sm:$0xff]
      %2974 = vset.pattern.permute.xlu0 0
      %2975 = vperm.xlu0 %2974, %v2971
      %v2976 = vpop.permute.xlu0 %2975
      %2979 = vset.pattern.permute.xlu0 0
      %2980 = vperm.xlu0 %2979, %v2972
      %v2981 = vpop.permute.xlu0 %2980
      %vm2983 = vcmask 392192
      %v2985 = vsel %vm2983, %v2969, 0
      %v2988 = vsel %vm2983, %v2970, 0
      %2990 = vmatprep.subr.mxu0 0.0
      %2991 = vmatpush1.msra.mxu0 0.0
      %2992 = vmatprep.subr.mxu0 0.0
      %2993 = vmatpush1.msra.mxu0 0.0
      %2994 = vmatprep.subr.mxu0 0.0
      %2995 = vmatpush1.msra.mxu0 0.0
      %2996 = vmatprep.subr.mxu0 0.0
      %2997 = vmatpush1.msra.mxu0 0.0
      %2998 = vmatprep.subr.mxu0 0.0
      %2999 = vmatpush1.msra.mxu0 0.0
      %3000 = vmatprep.subr.mxu0 0.0
      %3001 = vmatpush1.msra.mxu0 0.0
      %3002 = vmatprep.subr.mxu0 0.0
      %3003 = vmatpush1.msra.mxu0 0.0
      %3004 = vmatprep.subr.mxu0 0.0
      %3005 = vmatpush1.msra.mxu0 0.0
      %3006 = vmatprep.subr.mxu0 0.0
      %3007 = vmatpush1.msra.mxu0 0.0
      %3008 = vmatprep.subr.mxu0 0.0
      %3009 = vmatpush1.msra.mxu0 0.0
      %3010 = vmatprep.subr.mxu0 0.0
      %3011 = vmatpush1.msra.mxu0 %v2966
      %3012 = vmatprep.subr.mxu0 0.0
      %3013 = vmatpush1.msra.mxu0 %v2964
      %3014 = vmatprep.subr.mxu0 0.0
      %3015 = vmatpush1.msra.mxu0 %v2960
      %3016 = vmatprep.subr.mxu0 0.0
      %3017 = vmatpush1.msra.mxu0 %v2958
      %3018 = vmatprep.subr.mxu0 0.0
      %3019 = vmatpush1.msra.mxu0 %v2954
      %3020 = vmatprep.subr.mxu0 0.0
      %3021 = vmatpush1.msra.mxu0 %v2953
      %3022 = vmatprep.subr.mxu0 0.0
      %3023 = vmatpush2.msra.mxu0 0.0
      %3024 = vmatprep.subr.mxu0 0.0
      %3025 = vmatpush2.msra.mxu0 0.0
      %3026 = vmatprep.subr.mxu0 0.0
      %3027 = vmatpush2.msra.mxu0 0.0
      %3028 = vmatprep.subr.mxu0 0.0
      %3029 = vmatpush2.msra.mxu0 0.0
      %3030 = vmatprep.subr.mxu0 0.0
      %3031 = vmatpush2.msra.mxu0 0.0
      %3032 = vmatprep.subr.mxu0 0.0
      %3033 = vmatpush2.msra.mxu0 0.0
      %3034 = vmatprep.subr.mxu0 0.0
      %3035 = vmatpush2.msra.mxu0 0.0
      %3036 = vmatprep.subr.mxu0 0.0
      %3037 = vmatpush2.msra.mxu0 0.0
      %3038 = vmatprep.subr.mxu0 0.0
      %3039 = vmatpush2.msra.mxu0 0.0
      %3040 = vmatprep.subr.mxu0 0.0
      %3041 = vmatpush2.msra.mxu0 0.0
      %3042 = vmatprep.subr.mxu0 0.0
      %3043 = vmatpush2.msra.mxu0 0.0
      %3044 = vmatprep.subr.mxu0 0.0
      %3045 = vmatpush2.msra.mxu0 0.0
      %3046 = vmatprep.subr.mxu0 0.0
      %3047 = vmatpush2.msra.mxu0 0.0
      %3048 = vmatprep.subr.mxu0 0.0
      %3049 = vmatpush2.msra.mxu0 0.0
      %3050 = vmatprep.subr.mxu0 0.0
      %3051 = vmatpush2.msra.mxu0 0.0
      %3052 = vmatprep.subr.mxu0 0.0
      %3053 = vmatpush2.msra.mxu0 0.0
      %3054 = vmatprep.mubr.f32.mxu0 0.0
      %3055 = vmatmul.mubr.f32.gmra.mxu0 %v2985
      %v3056 = vpop.f32.mrf.mxu0
      %v3057 = vadd.f32 %v2976, %v3056
      %v3058 = vpop.f32.mrf.mxu0
      %3059 = vmatprep.mubr.f32.mxu0 0.0
      %3060 = vmatmul.mubr.f32.gmra.mxu0 %v2988
      %v3061 = vpop.f32.mrf.mxu0
      %v3062 = vadd.f32 %v2981, %v3061
      %v3063 = vpop.f32.mrf.mxu0
      %3064 = vdwg.mxu0
      %v3065 = vmax.f32 %v3057, 0.0
      %v3066 = vmax.f32 %v3062, 0.0
      %vm3067 = vcmask 269312
      %v3069 = vsel %vm3067, %v3065, 0
      %v3072 = vsel %vm3067, %v3066, 0
      %vm3074 = vcmask 1040384
      %v3076 = vsel %vm3074, 0.030303031, 0
      %3078 = vmatprep.subr.mxu0 0.0
      %3079 = vmatpush1.msra.mxu0 0.0
      %3080 = vmatprep.subr.mxu0 0.0
      %3081 = vmatpush1.msra.mxu0 0.0
      %3082 = vmatprep.subr.mxu0 0.0
      %3083 = vmatpush1.msra.mxu0 0.0
      %3084 = vmatprep.subr.mxu0 0.0
      %3085 = vmatpush1.msra.mxu0 0.0
      %3086 = vmatprep.subr.mxu0 0.0
      %3087 = vmatpush1.msra.mxu0 0.0
      %3088 = vmatprep.subr.mxu0 0.0
      %3089 = vmatpush1.msra.mxu0 0.0
      %3090 = vmatprep.subr.mxu0 0.0
      %3091 = vmatpush1.msra.mxu0 0.0
      %3092 = vmatprep.subr.mxu0 0.0
      %3093 = vmatpush1.msra.mxu0 0.0
      %3094 = vmatprep.subr.mxu0 0.0
      %3095 = vmatpush1.msra.mxu0 0.0
      %3096 = vmatprep.subr.mxu0 0.0
      %3097 = vmatpush1.msra.mxu0 0.0
      %3098 = vmatprep.subr.mxu0 0.0
      %3099 = vmatpush1.msra.mxu0 0.0
      %3100 = vmatprep.subr.mxu0 0.0
      %3101 = vmatpush1.msra.mxu0 %v3076
      %3102 = vmatprep.subr.mxu0 0.0
      %3103 = vmatpush1.msra.mxu0 0.030303031
      %3104 = vmatprep.subr.mxu0 0.0
      %3105 = vmatpush1.msra.mxu0 0.030303031
      %3106 = vmatprep.subr.mxu0 0.0
      %3107 = vmatpush1.msra.mxu0 0.030303031
      %3108 = vmatprep.subr.mxu0 0.0
      %3109 = vmatpush1.msra.mxu0 0.030303031
      %3110 = vmatprep.subr.mxu0 0.0
      %3111 = vmatpush2.msra.mxu0 0.0
      %3112 = vmatprep.subr.mxu0 0.0
      %3113 = vmatpush2.msra.mxu0 0.0
      %3114 = vmatprep.subr.mxu0 0.0
      %3115 = vmatpush2.msra.mxu0 0.0
      %3116 = vmatprep.subr.mxu0 0.0
      %3117 = vmatpush2.msra.mxu0 0.0
      %3118 = vmatprep.subr.mxu0 0.0
      %3119 = vmatpush2.msra.mxu0 0.0
      %3120 = vmatprep.subr.mxu0 0.0
      %3121 = vmatpush2.msra.mxu0 0.0
      %3122 = vmatprep.subr.mxu0 0.0
      %3123 = vmatpush2.msra.mxu0 0.0
      %3124 = vmatprep.subr.mxu0 0.0
      %3125 = vmatpush2.msra.mxu0 0.0
      %3126 = vmatprep.subr.mxu0 0.0
      %3127 = vmatpush2.msra.mxu0 0.0
      %3128 = vmatprep.subr.mxu0 0.0
      %3129 = vmatpush2.msra.mxu0 0.0
      %3130 = vmatprep.subr.mxu0 0.0
      %3131 = vmatpush2.msra.mxu0 0.0
      %3132 = vmatprep.subr.mxu0 0.0
      %3133 = vmatpush2.msra.mxu0 0.0
      %3134 = vmatprep.subr.mxu0 0.0
      %3135 = vmatpush2.msra.mxu0 0.0
      %3136 = vmatprep.subr.mxu0 0.0
      %3137 = vmatpush2.msra.mxu0 0.0
      %3138 = vmatprep.subr.mxu0 0.0
      %3139 = vmatpush2.msra.mxu0 0.0
      %3140 = vmatprep.subr.mxu0 0.0
      %3141 = vmatpush2.msra.mxu0 0.0
      %3142 = vmatprep.mubr.f32.mxu0 0.0
      %3143 = vmatmul.mubr.f32.gmra.mxu0 %v3069
      %v3144 = vpop.f32.mrf.mxu0
      %v3145 = vadd.f32 0.0, %v3144
      %v3146 = vpop.f32.mrf.mxu0
      %3147 = vmatprep.mubr.f32.mxu0 0.0
      %3148 = vmatmul.mubr.f32.gmra.mxu0 %v3072
      %v3149 = vpop.f32.mrf.mxu0
      %v3150 = vadd.f32 0.0, %v3149
      %v3151 = vpop.f32.mrf.mxu0
      %3152 = vdwg.mxu0
      %v3153 = vld [vmem:[%s4 + $0x6f0] sm:$0xff]
      %v3154 = vld [vmem:[%s5 + $0x358] sm:$0xff]
      %v3156 = vsel %vm937, %v3153, 0
      %3158 = vmatprep.subr.mxu0 0.0
      %3159 = vmatpush1.msra.mxu0 0.0
      %3160 = vmatprep.subr.mxu0 0.0
      %3161 = vmatpush1.msra.mxu0 0.0
      %3162 = vmatprep.subr.mxu0 0.0
      %3163 = vmatpush1.msra.mxu0 0.0
      %3164 = vmatprep.subr.mxu0 0.0
      %3165 = vmatpush1.msra.mxu0 0.0
      %3166 = vmatprep.subr.mxu0 0.0
      %3167 = vmatpush1.msra.mxu0 0.0
      %3168 = vmatprep.subr.mxu0 0.0
      %3169 = vmatpush1.msra.mxu0 0.0
      %3170 = vmatprep.subr.mxu0 0.0
      %3171 = vmatpush1.msra.mxu0 0.0
      %3172 = vmatprep.subr.mxu0 0.0
      %3173 = vmatpush1.msra.mxu0 0.0
      %3174 = vmatprep.subr.mxu0 0.0
      %3175 = vmatpush1.msra.mxu0 0.0
      %3176 = vmatprep.subr.mxu0 0.0
      %3177 = vmatpush1.msra.mxu0 0.0
      %3178 = vmatprep.subr.mxu0 0.0
      %3179 = vmatpush1.msra.mxu0 0.0
      %3180 = vmatprep.subr.mxu0 0.0
      %3181 = vmatpush1.msra.mxu0 0.0
      %3182 = vmatprep.subr.mxu0 0.0
      %3183 = vmatpush1.msra.mxu0 0.0
      %3184 = vmatprep.subr.mxu0 0.0
      %3185 = vmatpush1.msra.mxu0 0.0
      %3186 = vmatprep.subr.mxu0 0.0
      %3187 = vmatpush1.msra.mxu0 %v3150
      %3188 = vmatprep.subr.mxu0 0.0
      %3189 = vmatpush1.msra.mxu0 %v3145
      %3190 = vmatprep.subr.mxu0 0.0
      %3191 = vmatpush2.msra.mxu0 0.0
      %3192 = vmatprep.subr.mxu0 0.0
      %3193 = vmatpush2.msra.mxu0 0.0
      %3194 = vmatprep.subr.mxu0 0.0
      %3195 = vmatpush2.msra.mxu0 0.0
      %3196 = vmatprep.subr.mxu0 0.0
      %3197 = vmatpush2.msra.mxu0 0.0
      %3198 = vmatprep.subr.mxu0 0.0
      %3199 = vmatpush2.msra.mxu0 0.0
      %3200 = vmatprep.subr.mxu0 0.0
      %3201 = vmatpush2.msra.mxu0 0.0
      %3202 = vmatprep.subr.mxu0 0.0
      %3203 = vmatpush2.msra.mxu0 0.0
      %3204 = vmatprep.subr.mxu0 0.0
      %3205 = vmatpush2.msra.mxu0 0.0
      %3206 = vmatprep.subr.mxu0 0.0
      %3207 = vmatpush2.msra.mxu0 0.0
      %3208 = vmatprep.subr.mxu0 0.0
      %3209 = vmatpush2.msra.mxu0 0.0
      %3210 = vmatprep.subr.mxu0 0.0
      %3211 = vmatpush2.msra.mxu0 0.0
      %3212 = vmatprep.subr.mxu0 0.0
      %3213 = vmatpush2.msra.mxu0 0.0
      %3214 = vmatprep.subr.mxu0 0.0
      %3215 = vmatpush2.msra.mxu0 0.0
      %3216 = vmatprep.subr.mxu0 0.0
      %3217 = vmatpush2.msra.mxu0 0.0
      %3218 = vmatprep.subr.mxu0 0.0
      %3219 = vmatpush2.msra.mxu0 0.0
      %3220 = vmatprep.subr.mxu0 0.0
      %3221 = vmatpush2.msra.mxu0 0.0
      %3222 = vmatprep.mubr.f32.mxu0 0.0
      %3223 = vmatmul.mubr.f32.gmra.mxu0 %v3156
      %v3224 = vpop.f32.mrf.mxu0
      %v3225 = vadd.f32 %v3154, %v3224
      %v3226 = vpop.f32.mrf.mxu0
      %3227 = vdwg.mxu0
      %v3228 = vmax.f32 %v3225, 0.0
      %v3229 = vld [vmem:[%s4 + $0x708] sm:$0xff]
      %v3230 = vld [vmem:[%s4 + $0x720] sm:$0xff]
      %v3231 = vld [vmem:[%s5 + $0x360] sm:$0xff]
      %v3232 = vld [vmem:[%s5 + $0x368] sm:$0xff]
      %v3234 = vsel %vm2364, %v3229, 0
      %v3237 = vsel %vm2364, %v3230, 0
      %3239 = vmatprep.subr.mxu0 0.0
      %3240 = vmatpush1.msra.mxu0 0.0
      %3241 = vmatprep.subr.mxu0 0.0
      %3242 = vmatpush1.msra.mxu0 0.0
      %3243 = vmatprep.subr.mxu0 0.0
      %3244 = vmatpush1.msra.mxu0 0.0
      %3245 = vmatprep.subr.mxu0 0.0
      %3246 = vmatpush1.msra.mxu0 0.0
      %3247 = vmatprep.subr.mxu0 0.0
      %3248 = vmatpush1.msra.mxu0 0.0
      %3249 = vmatprep.subr.mxu0 0.0
      %3250 = vmatpush1.msra.mxu0 0.0
      %3251 = vmatprep.subr.mxu0 0.0
      %3252 = vmatpush1.msra.mxu0 0.0
      %3253 = vmatprep.subr.mxu0 0.0
      %3254 = vmatpush1.msra.mxu0 0.0
      %3255 = vmatprep.subr.mxu0 0.0
      %3256 = vmatpush1.msra.mxu0 0.0
      %3257 = vmatprep.subr.mxu0 0.0
      %3258 = vmatpush1.msra.mxu0 0.0
      %3259 = vmatprep.subr.mxu0 0.0
      %3260 = vmatpush1.msra.mxu0 0.0
      %3261 = vmatprep.subr.mxu0 0.0
      %3262 = vmatpush1.msra.mxu0 0.0
      %3263 = vmatprep.subr.mxu0 0.0
      %3264 = vmatpush1.msra.mxu0 0.0
      %3265 = vmatprep.subr.mxu0 0.0
      %3266 = vmatpush1.msra.mxu0 0.0
      %3267 = vmatprep.subr.mxu0 0.0
      %3268 = vmatpush1.msra.mxu0 0.0
      %3269 = vmatprep.subr.mxu0 0.0
      %3270 = vmatpush1.msra.mxu0 %v3228
      %3271 = vmatprep.subr.mxu0 0.0
      %3272 = vmatpush2.msra.mxu0 0.0
      %3273 = vmatprep.subr.mxu0 0.0
      %3274 = vmatpush2.msra.mxu0 0.0
      %3275 = vmatprep.subr.mxu0 0.0
      %3276 = vmatpush2.msra.mxu0 0.0
      %3277 = vmatprep.subr.mxu0 0.0
      %3278 = vmatpush2.msra.mxu0 0.0
      %3279 = vmatprep.subr.mxu0 0.0
      %3280 = vmatpush2.msra.mxu0 0.0
      %3281 = vmatprep.subr.mxu0 0.0
      %3282 = vmatpush2.msra.mxu0 0.0
      %3283 = vmatprep.subr.mxu0 0.0
      %3284 = vmatpush2.msra.mxu0 0.0
      %3285 = vmatprep.subr.mxu0 0.0
      %3286 = vmatpush2.msra.mxu0 0.0
      %3287 = vmatprep.subr.mxu0 0.0
      %3288 = vmatpush2.msra.mxu0 0.0
      %3289 = vmatprep.subr.mxu0 0.0
      %3290 = vmatpush2.msra.mxu0 0.0
      %3291 = vmatprep.subr.mxu0 0.0
      %3292 = vmatpush2.msra.mxu0 0.0
      %3293 = vmatprep.subr.mxu0 0.0
      %3294 = vmatpush2.msra.mxu0 0.0
      %3295 = vmatprep.subr.mxu0 0.0
      %3296 = vmatpush2.msra.mxu0 0.0
      %3297 = vmatprep.subr.mxu0 0.0
      %3298 = vmatpush2.msra.mxu0 0.0
      %3299 = vmatprep.subr.mxu0 0.0
      %3300 = vmatpush2.msra.mxu0 0.0
      %3301 = vmatprep.subr.mxu0 0.0
      %3302 = vmatpush2.msra.mxu0 0.0
      %3303 = vmatprep.mubr.f32.mxu0 0.0
      %3304 = vmatmul.mubr.f32.gmra.mxu0 %v3234
      %v3305 = vpop.f32.mrf.mxu0
      %v3306 = vadd.f32 %v3231, %v3305
      %v3307 = vpop.f32.mrf.mxu0
      %3308 = vmatprep.mubr.f32.mxu0 0.0
      %3309 = vmatmul.mubr.f32.gmra.mxu0 %v3237
      %v3310 = vpop.f32.mrf.mxu0
      %v3311 = vadd.f32 %v3232, %v3310
      %v3312 = vpop.f32.mrf.mxu0
      %3313 = vdwg.mxu0
      %v3314 = vxor.u32 %v3306, 2147483648
      %v3315 = vxor.u32 %v3311, 2147483648
      %v3316 = vmul.f32 %v3314, 1.442695
      %v3317 = vpow.pop %v3316
      %v3318 = vmul.f32 %v3315, 1.442695
      %v3319 = vpow.pop %v3318
      %v3320 = vadd.f32 %v3317, 1.0
      %v3321 = vadd.f32 %v3319, 1.0
      %v3322 = vrcp.pop %v3320
      %v3323 = vmul.f32 1.0, %v3322
      %v3324 = vrcp.pop %v3321
      %v3325 = vmul.f32 1.0, %v3324
      %v3326 = vadd.f32 %v3323, 1.0
      %v3327 = vadd.f32 %v3325, 1.0
      %3329 = vset.pattern.permute.xlu0 0
      %3330 = vperm.xlu0 %3329, %v3326
      %v3331 = vpop.permute.xlu0 %3330
      %3334 = vset.pattern.permute.xlu0 0
      %3335 = vperm.xlu0 %3334, %v3327
      %v3336 = vpop.permute.xlu0 %3335
      %v3338 = vmul.f32 %v2937, %v3331
      %v3339 = vmul.f32 %v2942, %v3336
      %3342 = vrot.lane.b32.xlu0 %v3338, 127
      %v3343 = vpop.permute.xlu0 %3342
      %3344 = vrot.lane.b32.xlu0 %v3339, 127
      %v3345 = vpop.permute.xlu0 %3344
      %3348 = vrot.lane.b32.xlu0 %v3338, 126
      %v3349 = vpop.permute.xlu0 %3348
      %3350 = vrot.lane.b32.xlu0 %v3339, 126
      %v3351 = vpop.permute.xlu0 %3350
      %v3354 = vld [vmem:[%s4 + $0x3a8] sm:$0xff]
      %v3355 = vld [vmem:[%s4 + $0x3c0] sm:$0xff]
      %v3356 = vld [vmem:[%s5 + $0x60] sm:$0xff]
      %v3357 = vld [vmem:[%s5 + $0x68] sm:$0xff]
      %3359 = vset.pattern.permute.xlu0 0
      %3360 = vperm.xlu0 %3359, %v3356
      %v3361 = vpop.permute.xlu0 %3360
      %3364 = vset.pattern.permute.xlu0 0
      %3365 = vperm.xlu0 %3364, %v3357
      %v3366 = vpop.permute.xlu0 %3365
      %v3369 = vsel %vm2983, %v3354, 0
      %v3372 = vsel %vm2983, %v3355, 0
      %3374 = vmatprep.subr.mxu0 0.0
      %3375 = vmatpush1.msra.mxu0 0.0
      %3376 = vmatprep.subr.mxu0 0.0
      %3377 = vmatpush1.msra.mxu0 0.0
      %3378 = vmatprep.subr.mxu0 0.0
      %3379 = vmatpush1.msra.mxu0 0.0
      %3380 = vmatprep.subr.mxu0 0.0
      %3381 = vmatpush1.msra.mxu0 0.0
      %3382 = vmatprep.subr.mxu0 0.0
      %3383 = vmatpush1.msra.mxu0 0.0
      %3384 = vmatprep.subr.mxu0 0.0
      %3385 = vmatpush1.msra.mxu0 0.0
      %3386 = vmatprep.subr.mxu0 0.0
      %3387 = vmatpush1.msra.mxu0 0.0
      %3388 = vmatprep.subr.mxu0 0.0
      %3389 = vmatpush1.msra.mxu0 0.0
      %3390 = vmatprep.subr.mxu0 0.0
      %3391 = vmatpush1.msra.mxu0 0.0
      %3392 = vmatprep.subr.mxu0 0.0
      %3393 = vmatpush1.msra.mxu0 0.0
      %3394 = vmatprep.subr.mxu0 0.0
      %3395 = vmatpush1.msra.mxu0 %v3351
      %3396 = vmatprep.subr.mxu0 0.0
      %3397 = vmatpush1.msra.mxu0 %v3349
      %3398 = vmatprep.subr.mxu0 0.0
      %3399 = vmatpush1.msra.mxu0 %v3345
      %3400 = vmatprep.subr.mxu0 0.0
      %3401 = vmatpush1.msra.mxu0 %v3343
      %3402 = vmatprep.subr.mxu0 0.0
      %3403 = vmatpush1.msra.mxu0 %v3339
      %3404 = vmatprep.subr.mxu0 0.0
      %3405 = vmatpush1.msra.mxu0 %v3338
      %3406 = vmatprep.subr.mxu0 0.0
      %3407 = vmatpush2.msra.mxu0 0.0
      %3408 = vmatprep.subr.mxu0 0.0
      %3409 = vmatpush2.msra.mxu0 0.0
      %3410 = vmatprep.subr.mxu0 0.0
      %3411 = vmatpush2.msra.mxu0 0.0
      %3412 = vmatprep.subr.mxu0 0.0
      %3413 = vmatpush2.msra.mxu0 0.0
      %3414 = vmatprep.subr.mxu0 0.0
      %3415 = vmatpush2.msra.mxu0 0.0
      %3416 = vmatprep.subr.mxu0 0.0
      %3417 = vmatpush2.msra.mxu0 0.0
      %3418 = vmatprep.subr.mxu0 0.0
      %3419 = vmatpush2.msra.mxu0 0.0
      %3420 = vmatprep.subr.mxu0 0.0
      %3421 = vmatpush2.msra.mxu0 0.0
      %3422 = vmatprep.subr.mxu0 0.0
      %3423 = vmatpush2.msra.mxu0 0.0
      %3424 = vmatprep.subr.mxu0 0.0
      %3425 = vmatpush2.msra.mxu0 0.0
      %3426 = vmatprep.subr.mxu0 0.0
      %3427 = vmatpush2.msra.mxu0 0.0
      %3428 = vmatprep.subr.mxu0 0.0
      %3429 = vmatpush2.msra.mxu0 0.0
      %3430 = vmatprep.subr.mxu0 0.0
      %3431 = vmatpush2.msra.mxu0 0.0
      %3432 = vmatprep.subr.mxu0 0.0
      %3433 = vmatpush2.msra.mxu0 0.0
      %3434 = vmatprep.subr.mxu0 0.0
      %3435 = vmatpush2.msra.mxu0 0.0
      %3436 = vmatprep.subr.mxu0 0.0
      %3437 = vmatpush2.msra.mxu0 0.0
      %3438 = vmatprep.mubr.f32.mxu0 0.0
      %3439 = vmatmul.mubr.f32.gmra.mxu0 %v3369
      %v3440 = vpop.f32.mrf.mxu0
      %v3441 = vadd.f32 %v3361, %v3440
      %v3442 = vpop.f32.mrf.mxu0
      %3443 = vmatprep.mubr.f32.mxu0 0.0
      %3444 = vmatmul.mubr.f32.gmra.mxu0 %v3372
      %v3445 = vpop.f32.mrf.mxu0
      %v3446 = vadd.f32 %v3366, %v3445
      %v3447 = vpop.f32.mrf.mxu0
      %3448 = vdwg.mxu0
      %v3449 = vld [vmem:[%s5 + $0x70] sm:$0xff]
      %v3450 = vld [vmem:[%s5 + $0x78] sm:$0xff]
      %v3451 = vld [vmem:[%s5 + $0x80] sm:$0xff]
      %v3452 = vld [vmem:[%s5 + $0x88] sm:$0xff]
      %vm3453 = vcmask 252928
      %v3455 = vsel %vm3453, %v3441, 0
      %v3458 = vsel %vm3453, %v3446, 0
      %vm3460 = vcmask 1046528
      %v3462 = vsel %vm3460, 0.032258064, 0
      %3464 = vmatprep.subr.mxu0 0.0
      %3465 = vmatpush1.msra.mxu0 0.0
      %3466 = vmatprep.subr.mxu0 0.0
      %3467 = vmatpush1.msra.mxu0 0.0
      %3468 = vmatprep.subr.mxu0 0.0
      %3469 = vmatpush1.msra.mxu0 0.0
      %3470 = vmatprep.subr.mxu0 0.0
      %3471 = vmatpush1.msra.mxu0 0.0
      %3472 = vmatprep.subr.mxu0 0.0
      %3473 = vmatpush1.msra.mxu0 0.0
      %3474 = vmatprep.subr.mxu0 0.0
      %3475 = vmatpush1.msra.mxu0 0.0
      %3476 = vmatprep.subr.mxu0 0.0
      %3477 = vmatpush1.msra.mxu0 0.0
      %3478 = vmatprep.subr.mxu0 0.0
      %3479 = vmatpush1.msra.mxu0 0.0
      %3480 = vmatprep.subr.mxu0 0.0
      %3481 = vmatpush1.msra.mxu0 0.0
      %3482 = vmatprep.subr.mxu0 0.0
      %3483 = vmatpush1.msra.mxu0 0.0
      %3484 = vmatprep.subr.mxu0 0.0
      %3485 = vmatpush1.msra.mxu0 0.0
      %3486 = vmatprep.subr.mxu0 0.0
      %3487 = vmatpush1.msra.mxu0 0.0
      %3488 = vmatprep.subr.mxu0 0.0
      %3489 = vmatpush1.msra.mxu0 %v3462
      %3490 = vmatprep.subr.mxu0 0.0
      %3491 = vmatpush1.msra.mxu0 0.032258064
      %3492 = vmatprep.subr.mxu0 0.0
      %3493 = vmatpush1.msra.mxu0 0.032258064
      %3494 = vmatprep.subr.mxu0 0.0
      %3495 = vmatpush1.msra.mxu0 0.032258064
      %3496 = vmatprep.subr.mxu0 0.0
      %3497 = vmatpush2.msra.mxu0 0.0
      %3498 = vmatprep.subr.mxu0 0.0
      %3499 = vmatpush2.msra.mxu0 0.0
      %3500 = vmatprep.subr.mxu0 0.0
      %3501 = vmatpush2.msra.mxu0 0.0
      %3502 = vmatprep.subr.mxu0 0.0
      %3503 = vmatpush2.msra.mxu0 0.0
      %3504 = vmatprep.subr.mxu0 0.0
      %3505 = vmatpush2.msra.mxu0 0.0
      %3506 = vmatprep.subr.mxu0 0.0
      %3507 = vmatpush2.msra.mxu0 0.0
      %3508 = vmatprep.subr.mxu0 0.0
      %3509 = vmatpush2.msra.mxu0 0.0
      %3510 = vmatprep.subr.mxu0 0.0
      %3511 = vmatpush2.msra.mxu0 0.0
      %3512 = vmatprep.subr.mxu0 0.0
      %3513 = vmatpush2.msra.mxu0 0.0
      %3514 = vmatprep.subr.mxu0 0.0
      %3515 = vmatpush2.msra.mxu0 0.0
      %3516 = vmatprep.subr.mxu0 0.0
      %3517 = vmatpush2.msra.mxu0 0.0
      %3518 = vmatprep.subr.mxu0 0.0
      %3519 = vmatpush2.msra.mxu0 0.0
      %3520 = vmatprep.subr.mxu0 0.0
      %3521 = vmatpush2.msra.mxu0 0.0
      %3522 = vmatprep.subr.mxu0 0.0
      %3523 = vmatpush2.msra.mxu0 0.0
      %3524 = vmatprep.subr.mxu0 0.0
      %3525 = vmatpush2.msra.mxu0 0.0
      %3526 = vmatprep.subr.mxu0 0.0
      %3527 = vmatpush2.msra.mxu0 0.0
      %3528 = vmatprep.mubr.f32.mxu0 0.0
      %3529 = vmatmul.mubr.f32.gmra.mxu0 %v3455
      %v3530 = vpop.f32.mrf.mxu0
      %v3531 = vadd.f32 0.0, %v3530
      %v3532 = vpop.f32.mrf.mxu0
      %3533 = vmatprep.mubr.f32.mxu0 0.0
      %3534 = vmatmul.mubr.f32.gmra.mxu0 %v3458
      %v3535 = vpop.f32.mrf.mxu0
      %v3536 = vadd.f32 0.0, %v3535
      %v3537 = vpop.f32.mrf.mxu0
      %3538 = vdwg.mxu0
      %v3539 = vmul.f32 %v3441, %v3441
      %v3540 = vmul.f32 %v3446, %v3446
      %v3542 = vsel %vm3453, %v3539, 0
      %v3545 = vsel %vm3453, %v3540, 0
      %3547 = vmatprep.subr.mxu0 0.0
      %3548 = vmatpush1.msra.mxu0 0.0
      %3549 = vmatprep.subr.mxu0 0.0
      %3550 = vmatpush1.msra.mxu0 0.0
      %3551 = vmatprep.subr.mxu0 0.0
      %3552 = vmatpush1.msra.mxu0 0.0
      %3553 = vmatprep.subr.mxu0 0.0
      %3554 = vmatpush1.msra.mxu0 0.0
      %3555 = vmatprep.subr.mxu0 0.0
      %3556 = vmatpush1.msra.mxu0 0.0
      %3557 = vmatprep.subr.mxu0 0.0
      %3558 = vmatpush1.msra.mxu0 0.0
      %3559 = vmatprep.subr.mxu0 0.0
      %3560 = vmatpush1.msra.mxu0 0.0
      %3561 = vmatprep.subr.mxu0 0.0
      %3562 = vmatpush1.msra.mxu0 0.0
      %3563 = vmatprep.subr.mxu0 0.0
      %3564 = vmatpush1.msra.mxu0 0.0
      %3565 = vmatprep.subr.mxu0 0.0
      %3566 = vmatpush1.msra.mxu0 0.0
      %3567 = vmatprep.subr.mxu0 0.0
      %3568 = vmatpush1.msra.mxu0 0.0
      %3569 = vmatprep.subr.mxu0 0.0
      %3570 = vmatpush1.msra.mxu0 0.0
      %3571 = vmatprep.subr.mxu0 0.0
      %3572 = vmatpush1.msra.mxu0 %v3462
      %3573 = vmatprep.subr.mxu0 0.0
      %3574 = vmatpush1.msra.mxu0 0.032258064
      %3575 = vmatprep.subr.mxu0 0.0
      %3576 = vmatpush1.msra.mxu0 0.032258064
      %3577 = vmatprep.subr.mxu0 0.0
      %3578 = vmatpush1.msra.mxu0 0.032258064
      %3579 = vmatprep.subr.mxu0 0.0
      %3580 = vmatpush2.msra.mxu0 0.0
      %3581 = vmatprep.subr.mxu0 0.0
      %3582 = vmatpush2.msra.mxu0 0.0
      %3583 = vmatprep.subr.mxu0 0.0
      %3584 = vmatpush2.msra.mxu0 0.0
      %3585 = vmatprep.subr.mxu0 0.0
      %3586 = vmatpush2.msra.mxu0 0.0
      %3587 = vmatprep.subr.mxu0 0.0
      %3588 = vmatpush2.msra.mxu0 0.0
      %3589 = vmatprep.subr.mxu0 0.0
      %3590 = vmatpush2.msra.mxu0 0.0
      %3591 = vmatprep.subr.mxu0 0.0
      %3592 = vmatpush2.msra.mxu0 0.0
      %3593 = vmatprep.subr.mxu0 0.0
      %3594 = vmatpush2.msra.mxu0 0.0
      %3595 = vmatprep.subr.mxu0 0.0
      %3596 = vmatpush2.msra.mxu0 0.0
      %3597 = vmatprep.subr.mxu0 0.0
      %3598 = vmatpush2.msra.mxu0 0.0
      %3599 = vmatprep.subr.mxu0 0.0
      %3600 = vmatpush2.msra.mxu0 0.0
      %3601 = vmatprep.subr.mxu0 0.0
      %3602 = vmatpush2.msra.mxu0 0.0
      %3603 = vmatprep.subr.mxu0 0.0
      %3604 = vmatpush2.msra.mxu0 0.0
      %3605 = vmatprep.subr.mxu0 0.0
      %3606 = vmatpush2.msra.mxu0 0.0
      %3607 = vmatprep.subr.mxu0 0.0
      %3608 = vmatpush2.msra.mxu0 0.0
      %3609 = vmatprep.subr.mxu0 0.0
      %3610 = vmatpush2.msra.mxu0 0.0
      %3611 = vmatprep.mubr.f32.mxu0 0.0
      %3612 = vmatmul.mubr.f32.gmra.mxu0 %v3542
      %v3613 = vpop.f32.mrf.mxu0
      %v3614 = vadd.f32 0.0, %v3613
      %v3615 = vpop.f32.mrf.mxu0
      %3616 = vmatprep.mubr.f32.mxu0 0.0
      %3617 = vmatmul.mubr.f32.gmra.mxu0 %v3545
      %v3618 = vpop.f32.mrf.mxu0
      %v3619 = vadd.f32 0.0, %v3618
      %v3620 = vpop.f32.mrf.mxu0
      %3621 = vdwg.mxu0
      %v3622 = vsel %vm2191, %v3531, 0.0
      %v3623 = vrot.slane %v3622, 4
      %v3624 = vadd.f32 %v3622, %v3623
      %v3625 = vrot.slane %v3624, 2
      %v3626 = vadd.f32 %v3624, %v3625
      %v3627 = vrot.slane %v3626, 1
      %v3628 = vadd.f32 %v3626, %v3627
      %v3629 = vrcp.pop 8.0
      %v3630 = vmul.f32 %v3628, %v3629
      %v3631 = vsel %vm2191, %v3614, 0.0
      %v3632 = vrot.slane %v3631, 4
      %v3633 = vadd.f32 %v3631, %v3632
      %v3634 = vrot.slane %v3633, 2
      %v3635 = vadd.f32 %v3633, %v3634
      %v3636 = vrot.slane %v3635, 1
      %v3637 = vadd.f32 %v3635, %v3636
      %v3638 = vmul.f32 %v3637, %v3629
      %v3639 = vmul.f32 %v3630, %v3630
      %v3640 = vsub.f32 %v3638, %v3639
      %v3641 = vadd.f32 %v3640, 1e-05
      %v3642 = vrsqrt.pop %v3641
      %3644 = vset.pattern.permute.xlu0 0
      %3645 = vperm.xlu0 %3644, %v3630
      %v3646 = vpop.permute.xlu0 %3645
      %v3648 = vsub.f32 %v3441, %v3646
      %3650 = vset.pattern.permute.xlu0 0
      %3651 = vperm.xlu0 %3650, %v3642
      %v3652 = vpop.permute.xlu0 %3651
      %v3654 = vmul.f32 %v3648, %v3652
      %3656 = vset.pattern.permute.xlu0 0
      %3657 = vperm.xlu0 %3656, %v3449
      %v3658 = vpop.permute.xlu0 %3657
      %v3660 = vmul.f32 %v3654, %v3658
      %3662 = vset.pattern.permute.xlu0 0
      %3663 = vperm.xlu0 %3662, %v3451
      %v3664 = vpop.permute.xlu0 %3663
      %v3666 = vadd.f32 %v3660, %v3664
      %v3667 = vsel %vm2191, %v3536, 0.0
      %v3668 = vrot.slane %v3667, 4
      %v3669 = vadd.f32 %v3667, %v3668
      %v3670 = vrot.slane %v3669, 2
      %v3671 = vadd.f32 %v3669, %v3670
      %v3672 = vrot.slane %v3671, 1
      %v3673 = vadd.f32 %v3671, %v3672
      %v3674 = vmul.f32 %v3673, %v3629
      %v3675 = vsel %vm2191, %v3619, 0.0
      %v3676 = vrot.slane %v3675, 4
      %v3677 = vadd.f32 %v3675, %v3676
      %v3678 = vrot.slane %v3677, 2
      %v3679 = vadd.f32 %v3677, %v3678
      %v3680 = vrot.slane %v3679, 1
      %v3681 = vadd.f32 %v3679, %v3680
      %v3682 = vmul.f32 %v3681, %v3629
      %v3683 = vmul.f32 %v3674, %v3674
      %v3684 = vsub.f32 %v3682, %v3683
      %v3685 = vadd.f32 %v3684, 1e-05
      %v3686 = vrsqrt.pop %v3685
      %3688 = vset.pattern.permute.xlu0 0
      %3689 = vperm.xlu0 %3688, %v3674
      %v3690 = vpop.permute.xlu0 %3689
      %v3692 = vsub.f32 %v3446, %v3690
      %3694 = vset.pattern.permute.xlu0 0
      %3695 = vperm.xlu0 %3694, %v3686
      %v3696 = vpop.permute.xlu0 %3695
      %v3698 = vmul.f32 %v3692, %v3696
      %3700 = vset.pattern.permute.xlu0 0
      %3701 = vperm.xlu0 %3700, %v3450
      %v3702 = vpop.permute.xlu0 %3701
      %v3704 = vmul.f32 %v3698, %v3702
      %3706 = vset.pattern.permute.xlu0 0
      %3707 = vperm.xlu0 %3706, %v3452
      %v3708 = vpop.permute.xlu0 %3707
      %v3710 = vadd.f32 %v3704, %v3708
      %v3711 = vmax.f32 %v3666, 0.0
      %v3712 = vmax.f32 %v3710, 0.0
      %v3713 = vld [vmem:[%s4 + $0x258] sm:$0xff]
      %v3714 = vld [vmem:[%s4 + $0x270] sm:$0xff]
      %v3715 = vld [vmem:[%s4 + $0x288] sm:$0xff]
      %v3716 = vld [vmem:[%s4 + $0x2a0] sm:$0x7f]
      %v3718 = vsel %vm3453, %v3711, 0
      %v3721 = vsel %vm3453, %v3712, 0
      %v3724 = vsel %vm3460, %v3716, 0
      %3726 = vmatprep.subr.mxu0 0.0
      %3727 = vmatpush1.msra.mxu0 0.0
      %3728 = vmatprep.subr.mxu0 0.0
      %3729 = vmatpush1.msra.mxu0 0.0
      %3730 = vmatprep.subr.mxu0 0.0
      %3731 = vmatpush1.msra.mxu0 0.0
      %3732 = vmatprep.subr.mxu0 0.0
      %3733 = vmatpush1.msra.mxu0 0.0
      %3734 = vmatprep.subr.mxu0 0.0
      %3735 = vmatpush1.msra.mxu0 0.0
      %3736 = vmatprep.subr.mxu0 0.0
      %3737 = vmatpush1.msra.mxu0 0.0
      %3738 = vmatprep.subr.mxu0 0.0
      %3739 = vmatpush1.msra.mxu0 0.0
      %3740 = vmatprep.subr.mxu0 0.0
      %3741 = vmatpush1.msra.mxu0 0.0
      %3742 = vmatprep.subr.mxu0 0.0
      %3743 = vmatpush1.msra.mxu0 0.0
      %3744 = vmatprep.subr.mxu0 0.0
      %3745 = vmatpush1.msra.mxu0 0.0
      %3746 = vmatprep.subr.mxu0 0.0
      %3747 = vmatpush1.msra.mxu0 0.0
      %3748 = vmatprep.subr.mxu0 0.0
      %3749 = vmatpush1.msra.mxu0 0.0
      %3750 = vmatprep.subr.mxu0 0.0
      %3751 = vmatpush1.msra.mxu0 %v3724
      %3752 = vmatprep.subr.mxu0 0.0
      %3753 = vmatpush1.msra.mxu0 %v3715
      %3754 = vmatprep.subr.mxu0 0.0
      %3755 = vmatpush1.msra.mxu0 %v3714
      %3756 = vmatprep.subr.mxu0 0.0
      %3757 = vmatpush1.msra.mxu0 %v3713
      %3758 = vmatprep.subr.mxu0 0.0
      %3759 = vmatpush2.msra.mxu0 0.0
      %3760 = vmatprep.subr.mxu0 0.0
      %3761 = vmatpush2.msra.mxu0 0.0
      %3762 = vmatprep.subr.mxu0 0.0
      %3763 = vmatpush2.msra.mxu0 0.0
      %3764 = vmatprep.subr.mxu0 0.0
      %3765 = vmatpush2.msra.mxu0 0.0
      %3766 = vmatprep.subr.mxu0 0.0
      %3767 = vmatpush2.msra.mxu0 0.0
      %3768 = vmatprep.subr.mxu0 0.0
      %3769 = vmatpush2.msra.mxu0 0.0
      %3770 = vmatprep.subr.mxu0 0.0
      %3771 = vmatpush2.msra.mxu0 0.0
      %3772 = vmatprep.subr.mxu0 0.0
      %3773 = vmatpush2.msra.mxu0 0.0
      %3774 = vmatprep.subr.mxu0 0.0
      %3775 = vmatpush2.msra.mxu0 0.0
      %3776 = vmatprep.subr.mxu0 0.0
      %3777 = vmatpush2.msra.mxu0 0.0
      %3778 = vmatprep.subr.mxu0 0.0
      %3779 = vmatpush2.msra.mxu0 0.0
      %3780 = vmatprep.subr.mxu0 0.0
      %3781 = vmatpush2.msra.mxu0 0.0
      %3782 = vmatprep.subr.mxu0 0.0
      %3783 = vmatpush2.msra.mxu0 0.0
      %3784 = vmatprep.subr.mxu0 0.0
      %3785 = vmatpush2.msra.mxu0 0.0
      %3786 = vmatprep.subr.mxu0 0.0
      %3787 = vmatpush2.msra.mxu0 0.0
      %3788 = vmatprep.subr.mxu0 0.0
      %3789 = vmatpush2.msra.mxu0 0.0
      %3790 = vmatprep.mubr.f32.mxu0 0.0
      %3791 = vmatmul.mubr.f32.gmra.mxu0 %v3718
      %v3792 = vpop.f32.mrf.mxu0
      %v3793 = vadd.f32 0.0, %v3792
      %v3794 = vpop.f32.mrf.mxu0
      %3795 = vmatprep.mubr.f32.mxu0 0.0
      %3796 = vmatmul.mubr.f32.gmra.mxu0 %v3721
      %v3797 = vpop.f32.mrf.mxu0
      %v3798 = vadd.f32 0.0, %v3797
      %v3799 = vpop.f32.mrf.mxu0
      %3800 = vdwg.mxu0
      %3803 = vrot.lane.b32.xlu0 %v3793, 97
      %v3804 = vpop.permute.xlu0 %3803
      %3805 = vrot.lane.b32.xlu0 %v3798, 97
      %v3806 = vpop.permute.xlu0 %3805
      %3809 = vrot.lane.b32.xlu0 %v3793, 1
      %v3810 = vpop.permute.xlu0 %3809
      %3811 = vrot.lane.b32.xlu0 %v3798, 1
      %v3812 = vpop.permute.xlu0 %3811
      %3813 = vrot.lane.b32.xlu0 %v3804, 1
      %v3814 = vpop.permute.xlu0 %3813
      %3815 = vrot.lane.b32.xlu0 %v3806, 1
      %v3816 = vpop.permute.xlu0 %3815
      %v3821 = vsel %vm2191, 0.0, %v3810
      %v3822 = vsel %vm2191, 0.0, %v3812
      %v3823 = vsel %vm2191, 0.0, %v3814
      %v3824 = vsel %vm2191, 0.0, %v3816
      %vm3825 = vcmask 261120
      %v3826 = vsel %vm3825, %v3821, 0.0
      %v3827 = vsel %vm3825, %v3822, 0.0
      %v3828 = vsel %vm3825, %v3823, 0.0
      %v3829 = vsel %vm3825, %v3824, 0.0
      %3834 = vrot.lane.b32.xlu0 %v3826, 127
      %v3835 = vpop.permute.xlu0 %3834
      %3836 = vrot.lane.b32.xlu0 %v3827, 127
      %v3837 = vpop.permute.xlu0 %3836
      %3838 = vrot.lane.b32.xlu0 %v3828, 127
      %v3839 = vpop.permute.xlu0 %3838
      %3840 = vrot.lane.b32.xlu0 %v3829, 127
      %v3841 = vpop.permute.xlu0 %3840
      %3846 = vrot.lane.b32.xlu0 %v3826, 126
      %v3847 = vpop.permute.xlu0 %3846
      %3848 = vrot.lane.b32.xlu0 %v3827, 126
      %v3849 = vpop.permute.xlu0 %3848
      %3850 = vrot.lane.b32.xlu0 %v3828, 126
      %v3851 = vpop.permute.xlu0 %3850
      %3852 = vrot.lane.b32.xlu0 %v3829, 126
      %v3853 = vpop.permute.xlu0 %3852
      %v3858 = vld [vmem:[%s4 + $0x738] sm:$0xff]
      %v3859 = vld [vmem:[%s4 + $0x750] sm:$0xff]
      %v3860 = vld [vmem:[%s4 + $0x768] sm:$0xff]
      %v3861 = vld [vmem:[%s4 + $0x780] sm:$0xff]
      %v3862 = vld [vmem:[%s5 + $0x370] sm:$0xff]
      %v3863 = vld [vmem:[%s5 + $0x378] sm:$0xff]
      %v3864 = vld [vmem:[%s5 + $0x380] sm:$0xff]
      %v3865 = vld [vmem:[%s5 + $0x388] sm:$0xff]
      %3867 = vset.pattern.permute.xlu0 0
      %3868 = vperm.xlu0 %3867, %v3862
      %v3869 = vpop.permute.xlu0 %3868
      %3872 = vset.pattern.permute.xlu0 0
      %3873 = vperm.xlu0 %3872, %v3863
      %v3874 = vpop.permute.xlu0 %3873
      %3877 = vset.pattern.permute.xlu0 0
      %3878 = vperm.xlu0 %3877, %v3864
      %v3879 = vpop.permute.xlu0 %3878
      %3882 = vset.pattern.permute.xlu0 0
      %3883 = vperm.xlu0 %3882, %v3865
      %v3884 = vpop.permute.xlu0 %3883
      %vm3886 = vcmask 785408
      %v3888 = vsel %vm3886, %v3858, 0
      %v3891 = vsel %vm3886, %v3859, 0
      %v3894 = vsel %vm3886, %v3860, 0
      %v3897 = vsel %vm3886, %v3861, 0
      %3899 = vmatprep.subr.mxu0 0.0
      %3900 = vmatpush1.msra.mxu0 0.0
      %3901 = vmatprep.subr.mxu0 0.0
      %3902 = vmatpush1.msra.mxu0 0.0
      %3903 = vmatprep.subr.mxu0 0.0
      %3904 = vmatpush1.msra.mxu0 0.0
      %3905 = vmatprep.subr.mxu0 0.0
      %3906 = vmatpush1.msra.mxu0 0.0
      %3907 = vmatprep.subr.mxu0 0.0
      %3908 = vmatpush1.msra.mxu0 %v3853
      %3909 = vmatprep.subr.mxu0 0.0
      %3910 = vmatpush1.msra.mxu0 %v3851
      %3911 = vmatprep.subr.mxu0 0.0
      %3912 = vmatpush1.msra.mxu0 %v3849
      %3913 = vmatprep.subr.mxu0 0.0
      %3914 = vmatpush1.msra.mxu0 %v3847
      %3915 = vmatprep.subr.mxu0 0.0
      %3916 = vmatpush1.msra.mxu0 %v3841
      %3917 = vmatprep.subr.mxu0 0.0
      %3918 = vmatpush1.msra.mxu0 %v3839
      %3919 = vmatprep.subr.mxu0 0.0
      %3920 = vmatpush1.msra.mxu0 %v3837
      %3921 = vmatprep.subr.mxu0 0.0
      %3922 = vmatpush1.msra.mxu0 %v3835
      %3923 = vmatprep.subr.mxu0 0.0
      %3924 = vmatpush1.msra.mxu0 %v3829
      %3925 = vmatprep.subr.mxu0 0.0
      %3926 = vmatpush1.msra.mxu0 %v3828
      %3927 = vmatprep.subr.mxu0 0.0
      %3928 = vmatpush1.msra.mxu0 %v3827
      %3929 = vmatprep.subr.mxu0 0.0
      %3930 = vmatpush1.msra.mxu0 %v3826
      %3931 = vmatprep.subr.mxu0 0.0
      %3932 = vmatpush2.msra.mxu0 0.0
      %3933 = vmatprep.subr.mxu0 0.0
      %3934 = vmatpush2.msra.mxu0 0.0
      %3935 = vmatprep.subr.mxu0 0.0
      %3936 = vmatpush2.msra.mxu0 0.0
      %3937 = vmatprep.subr.mxu0 0.0
      %3938 = vmatpush2.msra.mxu0 0.0
      %3939 = vmatprep.subr.mxu0 0.0
      %3940 = vmatpush2.msra.mxu0 0.0
      %3941 = vmatprep.subr.mxu0 0.0
      %3942 = vmatpush2.msra.mxu0 0.0
      %3943 = vmatprep.subr.mxu0 0.0
      %3944 = vmatpush2.msra.mxu0 0.0
      %3945 = vmatprep.subr.mxu0 0.0
      %3946 = vmatpush2.msra.mxu0 0.0
      %3947 = vmatprep.subr.mxu0 0.0
      %3948 = vmatpush2.msra.mxu0 0.0
      %3949 = vmatprep.subr.mxu0 0.0
      %3950 = vmatpush2.msra.mxu0 0.0
      %3951 = vmatprep.subr.mxu0 0.0
      %3952 = vmatpush2.msra.mxu0 0.0
      %3953 = vmatprep.subr.mxu0 0.0
      %3954 = vmatpush2.msra.mxu0 0.0
      %3955 = vmatprep.subr.mxu0 0.0
      %3956 = vmatpush2.msra.mxu0 0.0
      %3957 = vmatprep.subr.mxu0 0.0
      %3958 = vmatpush2.msra.mxu0 0.0
      %3959 = vmatprep.subr.mxu0 0.0
      %3960 = vmatpush2.msra.mxu0 0.0
      %3961 = vmatprep.subr.mxu0 0.0
      %3962 = vmatpush2.msra.mxu0 0.0
      %3963 = vmatprep.mubr.f32.mxu0 0.0
      %3964 = vmatmul.mubr.f32.gmra.mxu0 %v3888
      %v3965 = vpop.f32.mrf.mxu0
      %v3966 = vadd.f32 %v3869, %v3965
      %v3967 = vpop.f32.mrf.mxu0
      %3968 = vmatprep.mubr.f32.mxu0 0.0
      %3969 = vmatmul.mubr.f32.gmra.mxu0 %v3891
      %v3970 = vpop.f32.mrf.mxu0
      %v3971 = vadd.f32 %v3874, %v3970
      %v3972 = vpop.f32.mrf.mxu0
      %3973 = vmatprep.mubr.f32.mxu0 0.0
      %3974 = vmatmul.mubr.f32.gmra.mxu0 %v3894
      %v3975 = vpop.f32.mrf.mxu0
      %v3976 = vadd.f32 %v3879, %v3975
      %v3977 = vpop.f32.mrf.mxu0
      %3978 = vmatprep.mubr.f32.mxu0 0.0
      %3979 = vmatmul.mubr.f32.gmra.mxu0 %v3897
      %v3980 = vpop.f32.mrf.mxu0
      %v3981 = vadd.f32 %v3884, %v3980
      %v3982 = vpop.f32.mrf.mxu0
      %3983 = vdwg.mxu0
      %v3984 = vmax.f32 %v3966, 0.0
      %v3985 = vmax.f32 %v3971, 0.0
      %v3986 = vmax.f32 %v3976, 0.0
      %v3987 = vmax.f32 %v3981, 0.0
      %v3989 = vsel %vm3453, %v3984, 0
      %v3992 = vsel %vm3453, %v3985, 0
      %v3995 = vsel %vm3453, %v3986, 0
      %v3998 = vsel %vm3453, %v3987, 0
      %4000 = vmatprep.subr.mxu0 0.0
      %4001 = vmatpush1.msra.mxu0 0.0
      %4002 = vmatprep.subr.mxu0 0.0
      %4003 = vmatpush1.msra.mxu0 0.0
      %4004 = vmatprep.subr.mxu0 0.0
      %4005 = vmatpush1.msra.mxu0 0.0
      %4006 = vmatprep.subr.mxu0 0.0
      %4007 = vmatpush1.msra.mxu0 0.0
      %4008 = vmatprep.subr.mxu0 0.0
      %4009 = vmatpush1.msra.mxu0 0.0
      %4010 = vmatprep.subr.mxu0 0.0
      %4011 = vmatpush1.msra.mxu0 0.0
      %4012 = vmatprep.subr.mxu0 0.0
      %4013 = vmatpush1.msra.mxu0 0.0
      %4014 = vmatprep.subr.mxu0 0.0
      %4015 = vmatpush1.msra.mxu0 0.0
      %4016 = vmatprep.subr.mxu0 0.0
      %4017 = vmatpush1.msra.mxu0 0.0
      %4018 = vmatprep.subr.mxu0 0.0
      %4019 = vmatpush1.msra.mxu0 0.0
      %4020 = vmatprep.subr.mxu0 0.0
      %4021 = vmatpush1.msra.mxu0 0.0
      %4022 = vmatprep.subr.mxu0 0.0
      %4023 = vmatpush1.msra.mxu0 0.0
      %4024 = vmatprep.subr.mxu0 0.0
      %4025 = vmatpush1.msra.mxu0 %v3462
      %4026 = vmatprep.subr.mxu0 0.0
      %4027 = vmatpush1.msra.mxu0 0.032258064
      %4028 = vmatprep.subr.mxu0 0.0
      %4029 = vmatpush1.msra.mxu0 0.032258064
      %4030 = vmatprep.subr.mxu0 0.0
      %4031 = vmatpush1.msra.mxu0 0.032258064
      %4032 = vmatprep.subr.mxu0 0.0
      %4033 = vmatpush2.msra.mxu0 0.0
      %4034 = vmatprep.subr.mxu0 0.0
      %4035 = vmatpush2.msra.mxu0 0.0
      %4036 = vmatprep.subr.mxu0 0.0
      %4037 = vmatpush2.msra.mxu0 0.0
      %4038 = vmatprep.subr.mxu0 0.0
      %4039 = vmatpush2.msra.mxu0 0.0
      %4040 = vmatprep.subr.mxu0 0.0
      %4041 = vmatpush2.msra.mxu0 0.0
      %4042 = vmatprep.subr.mxu0 0.0
      %4043 = vmatpush2.msra.mxu0 0.0
      %4044 = vmatprep.subr.mxu0 0.0
      %4045 = vmatpush2.msra.mxu0 0.0
      %4046 = vmatprep.subr.mxu0 0.0
      %4047 = vmatpush2.msra.mxu0 0.0
      %4048 = vmatprep.subr.mxu0 0.0
      %4049 = vmatpush2.msra.mxu0 0.0
      %4050 = vmatprep.subr.mxu0 0.0
      %4051 = vmatpush2.msra.mxu0 0.0
      %4052 = vmatprep.subr.mxu0 0.0
      %4053 = vmatpush2.msra.mxu0 0.0
      %4054 = vmatprep.subr.mxu0 0.0
      %4055 = vmatpush2.msra.mxu0 0.0
      %4056 = vmatprep.subr.mxu0 0.0
      %4057 = vmatpush2.msra.mxu0 0.0
      %4058 = vmatprep.subr.mxu0 0.0
      %4059 = vmatpush2.msra.mxu0 0.0
      %4060 = vmatprep.subr.mxu0 0.0
      %4061 = vmatpush2.msra.mxu0 0.0
      %4062 = vmatprep.subr.mxu0 0.0
      %4063 = vmatpush2.msra.mxu0 0.0
      %4064 = vmatprep.mubr.f32.mxu0 0.0
      %4065 = vmatmul.mubr.f32.gmra.mxu0 %v3989
      %v4066 = vpop.f32.mrf.mxu0
      %v4067 = vadd.f32 0.0, %v4066
      %v4068 = vpop.f32.mrf.mxu0
      %4069 = vmatprep.mubr.f32.mxu0 0.0
      %4070 = vmatmul.mubr.f32.gmra.mxu0 %v3992
      %v4071 = vpop.f32.mrf.mxu0
      %v4072 = vadd.f32 0.0, %v4071
      %v4073 = vpop.f32.mrf.mxu0
      %4074 = vmatprep.mubr.f32.mxu0 0.0
      %4075 = vmatmul.mubr.f32.gmra.mxu0 %v3995
      %v4076 = vpop.f32.mrf.mxu0
      %v4077 = vadd.f32 0.0, %v4076
      %v4078 = vpop.f32.mrf.mxu0
      %4079 = vmatprep.mubr.f32.mxu0 0.0
      %4080 = vmatmul.mubr.f32.gmra.mxu0 %v3998
      %v4081 = vpop.f32.mrf.mxu0
      %v4082 = vadd.f32 0.0, %v4081
      %v4083 = vpop.f32.mrf.mxu0
      %4084 = vdwg.mxu0
      %v4085 = vld [vmem:[%s4 + $0x798] sm:$0xff]
      %v4086 = vld [vmem:[%s4 + $0x7b0] sm:$0xff]
      %v4087 = vld [vmem:[%s5 + $0x390] sm:$0xff]
      %v4088 = vld [vmem:[%s5 + $0x398] sm:$0xff]
      %v4090 = vsel %vm3825, %v4085, 0
      %v4093 = vsel %vm3825, %v4086, 0
      %4095 = vmatprep.subr.mxu0 0.0
      %4096 = vmatpush1.msra.mxu0 0.0
      %4097 = vmatprep.subr.mxu0 0.0
      %4098 = vmatpush1.msra.mxu0 0.0
      %4099 = vmatprep.subr.mxu0 0.0
      %4100 = vmatpush1.msra.mxu0 0.0
      %4101 = vmatprep.subr.mxu0 0.0
      %4102 = vmatpush1.msra.mxu0 0.0
      %4103 = vmatprep.subr.mxu0 0.0
      %4104 = vmatpush1.msra.mxu0 0.0
      %4105 = vmatprep.subr.mxu0 0.0
      %4106 = vmatpush1.msra.mxu0 0.0
      %4107 = vmatprep.subr.mxu0 0.0
      %4108 = vmatpush1.msra.mxu0 0.0
      %4109 = vmatprep.subr.mxu0 0.0
      %4110 = vmatpush1.msra.mxu0 0.0
      %4111 = vmatprep.subr.mxu0 0.0
      %4112 = vmatpush1.msra.mxu0 0.0
      %4113 = vmatprep.subr.mxu0 0.0
      %4114 = vmatpush1.msra.mxu0 0.0
      %4115 = vmatprep.subr.mxu0 0.0
      %4116 = vmatpush1.msra.mxu0 0.0
      %4117 = vmatprep.subr.mxu0 0.0
      %4118 = vmatpush1.msra.mxu0 0.0
      %4119 = vmatprep.subr.mxu0 0.0
      %4120 = vmatpush1.msra.mxu0 %v4082
      %4121 = vmatprep.subr.mxu0 0.0
      %4122 = vmatpush1.msra.mxu0 %v4077
      %4123 = vmatprep.subr.mxu0 0.0
      %4124 = vmatpush1.msra.mxu0 %v4072
      %4125 = vmatprep.subr.mxu0 0.0
      %4126 = vmatpush1.msra.mxu0 %v4067
      %4127 = vmatprep.subr.mxu0 0.0
      %4128 = vmatpush2.msra.mxu0 0.0
      %4129 = vmatprep.subr.mxu0 0.0
      %4130 = vmatpush2.msra.mxu0 0.0
      %4131 = vmatprep.subr.mxu0 0.0
      %4132 = vmatpush2.msra.mxu0 0.0
      %4133 = vmatprep.subr.mxu0 0.0
      %4134 = vmatpush2.msra.mxu0 0.0
      %4135 = vmatprep.subr.mxu0 0.0
      %4136 = vmatpush2.msra.mxu0 0.0
      %4137 = vmatprep.subr.mxu0 0.0
      %4138 = vmatpush2.msra.mxu0 0.0
      %4139 = vmatprep.subr.mxu0 0.0
      %4140 = vmatpush2.msra.mxu0 0.0
      %4141 = vmatprep.subr.mxu0 0.0
      %4142 = vmatpush2.msra.mxu0 0.0
      %4143 = vmatprep.subr.mxu0 0.0
      %4144 = vmatpush2.msra.mxu0 0.0
      %4145 = vmatprep.subr.mxu0 0.0
      %4146 = vmatpush2.msra.mxu0 0.0
      %4147 = vmatprep.subr.mxu0 0.0
      %4148 = vmatpush2.msra.mxu0 0.0
      %4149 = vmatprep.subr.mxu0 0.0
      %4150 = vmatpush2.msra.mxu0 0.0
      %4151 = vmatprep.subr.mxu0 0.0
      %4152 = vmatpush2.msra.mxu0 0.0
      %4153 = vmatprep.subr.mxu0 0.0
      %4154 = vmatpush2.msra.mxu0 0.0
      %4155 = vmatprep.subr.mxu0 0.0
      %4156 = vmatpush2.msra.mxu0 0.0
      %4157 = vmatprep.subr.mxu0 0.0
      %4158 = vmatpush2.msra.mxu0 0.0
      %4159 = vmatprep.mubr.f32.mxu0 0.0
      %4160 = vmatmul.mubr.f32.gmra.mxu0 %v4090
      %v4161 = vpop.f32.mrf.mxu0
      %v4162 = vadd.f32 %v4087, %v4161
      %v4163 = vpop.f32.mrf.mxu0
      %4164 = vmatprep.mubr.f32.mxu0 0.0
      %4165 = vmatmul.mubr.f32.gmra.mxu0 %v4093
      %v4166 = vpop.f32.mrf.mxu0
      %v4167 = vadd.f32 %v4088, %v4166
      %v4168 = vpop.f32.mrf.mxu0
      %4169 = vdwg.mxu0
      %v4170 = vmax.f32 %v4162, 0.0
      %v4171 = vmax.f32 %v4167, 0.0
      %v4172 = vld [vmem:[%s4 + $0x7c8] sm:$0xff]
      %v4173 = vld [vmem:[%s4 + $0x7e0] sm:$0xff]
      %v4174 = vld [vmem:[%s4 + $0x7f8] sm:$0xff]
      %v4175 = vld [vmem:[%s4 + $0x810] sm:$0xff]
      %v4176 = vld [vmem:[%s5 + $0x3a0] sm:$0xff]
      %v4177 = vld [vmem:[%s5 + $0x3a8] sm:$0xff]
      %v4178 = vld [vmem:[%s5 + $0x3b0] sm:$0xff]
      %v4179 = vld [vmem:[%s5 + $0x3b8] sm:$0xff]
      %v4181 = vsel %vm937, %v4172, 0
      %v4184 = vsel %vm937, %v4173, 0
      %v4187 = vsel %vm937, %v4174, 0
      %v4190 = vsel %vm937, %v4175, 0
      %4192 = vmatprep.subr.mxu0 0.0
      %4193 = vmatpush1.msra.mxu0 0.0
      %4194 = vmatprep.subr.mxu0 0.0
      %4195 = vmatpush1.msra.mxu0 0.0
      %4196 = vmatprep.subr.mxu0 0.0
      %4197 = vmatpush1.msra.mxu0 0.0
      %4198 = vmatprep.subr.mxu0 0.0
      %4199 = vmatpush1.msra.mxu0 0.0
      %4200 = vmatprep.subr.mxu0 0.0
      %4201 = vmatpush1.msra.mxu0 0.0
      %4202 = vmatprep.subr.mxu0 0.0
      %4203 = vmatpush1.msra.mxu0 0.0
      %4204 = vmatprep.subr.mxu0 0.0
      %4205 = vmatpush1.msra.mxu0 0.0
      %4206 = vmatprep.subr.mxu0 0.0
      %4207 = vmatpush1.msra.mxu0 0.0
      %4208 = vmatprep.subr.mxu0 0.0
      %4209 = vmatpush1.msra.mxu0 0.0
      %4210 = vmatprep.subr.mxu0 0.0
      %4211 = vmatpush1.msra.mxu0 0.0
      %4212 = vmatprep.subr.mxu0 0.0
      %4213 = vmatpush1.msra.mxu0 0.0
      %4214 = vmatprep.subr.mxu0 0.0
      %4215 = vmatpush1.msra.mxu0 0.0
      %4216 = vmatprep.subr.mxu0 0.0
      %4217 = vmatpush1.msra.mxu0 0.0
      %4218 = vmatprep.subr.mxu0 0.0
      %4219 = vmatpush1.msra.mxu0 0.0
      %4220 = vmatprep.subr.mxu0 0.0
      %4221 = vmatpush1.msra.mxu0 %v4171
      %4222 = vmatprep.subr.mxu0 0.0
      %4223 = vmatpush1.msra.mxu0 %v4170
      %4224 = vmatprep.subr.mxu0 0.0
      %4225 = vmatpush2.msra.mxu0 0.0
      %4226 = vmatprep.subr.mxu0 0.0
      %4227 = vmatpush2.msra.mxu0 0.0
      %4228 = vmatprep.subr.mxu0 0.0
      %4229 = vmatpush2.msra.mxu0 0.0
      %4230 = vmatprep.subr.mxu0 0.0
      %4231 = vmatpush2.msra.mxu0 0.0
      %4232 = vmatprep.subr.mxu0 0.0
      %4233 = vmatpush2.msra.mxu0 0.0
      %4234 = vmatprep.subr.mxu0 0.0
      %4235 = vmatpush2.msra.mxu0 0.0
      %4236 = vmatprep.subr.mxu0 0.0
      %4237 = vmatpush2.msra.mxu0 0.0
      %4238 = vmatprep.subr.mxu0 0.0
      %4239 = vmatpush2.msra.mxu0 0.0
      %4240 = vmatprep.subr.mxu0 0.0
      %4241 = vmatpush2.msra.mxu0 0.0
      %4242 = vmatprep.subr.mxu0 0.0
      %4243 = vmatpush2.msra.mxu0 0.0
      %4244 = vmatprep.subr.mxu0 0.0
      %4245 = vmatpush2.msra.mxu0 0.0
      %4246 = vmatprep.subr.mxu0 0.0
      %4247 = vmatpush2.msra.mxu0 0.0
      %4248 = vmatprep.subr.mxu0 0.0
      %4249 = vmatpush2.msra.mxu0 0.0
      %4250 = vmatprep.subr.mxu0 0.0
      %4251 = vmatpush2.msra.mxu0 0.0
      %4252 = vmatprep.subr.mxu0 0.0
      %4253 = vmatpush2.msra.mxu0 0.0
      %4254 = vmatprep.subr.mxu0 0.0
      %4255 = vmatpush2.msra.mxu0 0.0
      %4256 = vmatprep.mubr.f32.mxu0 0.0
      %4257 = vmatmul.mubr.f32.gmra.mxu0 %v4181
      %v4258 = vpop.f32.mrf.mxu0
      %v4259 = vadd.f32 %v4176, %v4258
      %v4260 = vpop.f32.mrf.mxu0
      %4261 = vmatprep.mubr.f32.mxu0 0.0
      %4262 = vmatmul.mubr.f32.gmra.mxu0 %v4184
      %v4263 = vpop.f32.mrf.mxu0
      %v4264 = vadd.f32 %v4177, %v4263
      %v4265 = vpop.f32.mrf.mxu0
      %4266 = vmatprep.mubr.f32.mxu0 0.0
      %4267 = vmatmul.mubr.f32.gmra.mxu0 %v4187
      %v4268 = vpop.f32.mrf.mxu0
      %v4269 = vadd.f32 %v4178, %v4268
      %v4270 = vpop.f32.mrf.mxu0
      %4271 = vmatprep.mubr.f32.mxu0 0.0
      %4272 = vmatmul.mubr.f32.gmra.mxu0 %v4190
      %v4273 = vpop.f32.mrf.mxu0
      %v4274 = vadd.f32 %v4179, %v4273
      %v4275 = vpop.f32.mrf.mxu0
      %4276 = vdwg.mxu0
      %v4277 = vxor.u32 %v4259, 2147483648
      %v4278 = vxor.u32 %v4264, 2147483648
      %v4279 = vxor.u32 %v4269, 2147483648
      %v4280 = vxor.u32 %v4274, 2147483648
      %v4281 = vmul.f32 %v4277, 1.442695
      %v4282 = vpow.pop %v4281
      %v4283 = vmul.f32 %v4278, 1.442695
      %v4284 = vpow.pop %v4283
      %v4285 = vmul.f32 %v4279, 1.442695
      %v4286 = vpow.pop %v4285
      %v4287 = vmul.f32 %v4280, 1.442695
      %v4288 = vpow.pop %v4287
      %v4289 = vadd.f32 %v4282, 1.0
      %v4290 = vadd.f32 %v4284, 1.0
      %v4291 = vadd.f32 %v4286, 1.0
      %v4292 = vadd.f32 %v4288, 1.0
      %v4293 = vrcp.pop %v4289
      %v4294 = vmul.f32 1.0, %v4293
      %v4295 = vrcp.pop %v4290
      %v4296 = vmul.f32 1.0, %v4295
      %v4297 = vrcp.pop %v4291
      %v4298 = vmul.f32 1.0, %v4297
      %v4299 = vrcp.pop %v4292
      %v4300 = vmul.f32 1.0, %v4299
      %v4301 = vadd.f32 %v4294, 1.0
      %v4302 = vadd.f32 %v4296, 1.0
      %v4303 = vadd.f32 %v4298, 1.0
      %v4304 = vadd.f32 %v4300, 1.0
      %4306 = vset.pattern.permute.xlu0 0
      %4307 = vperm.xlu0 %4306, %v4301
      %v4308 = vpop.permute.xlu0 %4307
      %4311 = vset.pattern.permute.xlu0 0
      %4312 = vperm.xlu0 %4311, %v4302
      %v4313 = vpop.permute.xlu0 %4312
      %4316 = vset.pattern.permute.xlu0 0
      %4317 = vperm.xlu0 %4316, %v4303
      %v4318 = vpop.permute.xlu0 %4317
      %4321 = vset.pattern.permute.xlu0 0
      %4322 = vperm.xlu0 %4321, %v4304
      %v4323 = vpop.permute.xlu0 %4322
      %v4325 = vmul.f32 %v3793, %v4308
      %v4326 = vmul.f32 %v3798, %v4313
      %v4327 = vmul.f32 %v3804, %v4318
      %v4328 = vmul.f32 %v3806, %v4323
      %4333 = vrot.lane.b32.xlu0 %v4325, 127
      %v4334 = vpop.permute.xlu0 %4333
      %4335 = vrot.lane.b32.xlu0 %v4326, 127
      %v4336 = vpop.permute.xlu0 %4335
      %4337 = vrot.lane.b32.xlu0 %v4327, 127
      %v4338 = vpop.permute.xlu0 %4337
      %4339 = vrot.lane.b32.xlu0 %v4328, 127
      %v4340 = vpop.permute.xlu0 %4339
      %4345 = vrot.lane.b32.xlu0 %v4325, 126
      %v4346 = vpop.permute.xlu0 %4345
      %4347 = vrot.lane.b32.xlu0 %v4326, 126
      %v4348 = vpop.permute.xlu0 %4347
      %4349 = vrot.lane.b32.xlu0 %v4327, 126
      %v4350 = vpop.permute.xlu0 %4349
      %4351 = vrot.lane.b32.xlu0 %v4328, 126
      %v4352 = vpop.permute.xlu0 %4351
      %v4357 = vld [vmem:[%s4 + $0x3d8] sm:$0xff]
      %v4358 = vld [vmem:[%s4 + $0x3f0] sm:$0xff]
      %v4359 = vld [vmem:[%s4 + $0x408] sm:$0xff]
      %v4360 = vld [vmem:[%s4 + $0x420] sm:$0xff]
      %v4361 = vld [vmem:[%s5 + $0x90] sm:$0xff]
      %v4362 = vld [vmem:[%s5 + $0x98] sm:$0xff]
      %v4363 = vld [vmem:[%s5 + $0xa0] sm:$0xff]
      %v4364 = vld [vmem:[%s5 + $0xa8] sm:$0xff]
      %4366 = vset.pattern.permute.xlu0 0
      %4367 = vperm.xlu0 %4366, %v4361
      %v4368 = vpop.permute.xlu0 %4367
      %4371 = vset.pattern.permute.xlu0 0
      %4372 = vperm.xlu0 %4371, %v4362
      %v4373 = vpop.permute.xlu0 %4372
      %4376 = vset.pattern.permute.xlu0 0
      %4377 = vperm.xlu0 %4376, %v4363
      %v4378 = vpop.permute.xlu0 %4377
      %4381 = vset.pattern.permute.xlu0 0
      %4382 = vperm.xlu0 %4381, %v4364
      %v4383 = vpop.permute.xlu0 %4382
      %v4386 = vsel %vm3886, %v4357, 0
      %v4389 = vsel %vm3886, %v4358, 0
      %v4392 = vsel %vm3886, %v4359, 0
      %v4395 = vsel %vm3886, %v4360, 0
      %4397 = vmatprep.subr.mxu0 0.0
      %4398 = vmatpush1.msra.mxu0 0.0
      %4399 = vmatprep.subr.mxu0 0.0
      %4400 = vmatpush1.msra.mxu0 0.0
      %4401 = vmatprep.subr.mxu0 0.0
      %4402 = vmatpush1.msra.mxu0 0.0
      %4403 = vmatprep.subr.mxu0 0.0
      %4404 = vmatpush1.msra.mxu0 0.0
      %4405 = vmatprep.subr.mxu0 0.0
      %4406 = vmatpush1.msra.mxu0 %v4352
      %4407 = vmatprep.subr.mxu0 0.0
      %4408 = vmatpush1.msra.mxu0 %v4350
      %4409 = vmatprep.subr.mxu0 0.0
      %4410 = vmatpush1.msra.mxu0 %v4348
      %4411 = vmatprep.subr.mxu0 0.0
      %4412 = vmatpush1.msra.mxu0 %v4346
      %4413 = vmatprep.subr.mxu0 0.0
      %4414 = vmatpush1.msra.mxu0 %v4340
      %4415 = vmatprep.subr.mxu0 0.0
      %4416 = vmatpush1.msra.mxu0 %v4338
      %4417 = vmatprep.subr.mxu0 0.0
      %4418 = vmatpush1.msra.mxu0 %v4336
      %4419 = vmatprep.subr.mxu0 0.0
      %4420 = vmatpush1.msra.mxu0 %v4334
      %4421 = vmatprep.subr.mxu0 0.0
      %4422 = vmatpush1.msra.mxu0 %v4328
      %4423 = vmatprep.subr.mxu0 0.0
      %4424 = vmatpush1.msra.mxu0 %v4327
      %4425 = vmatprep.subr.mxu0 0.0
      %4426 = vmatpush1.msra.mxu0 %v4326
      %4427 = vmatprep.subr.mxu0 0.0
      %4428 = vmatpush1.msra.mxu0 %v4325
      %4429 = vmatprep.subr.mxu0 0.0
      %4430 = vmatpush2.msra.mxu0 0.0
      %4431 = vmatprep.subr.mxu0 0.0
      %4432 = vmatpush2.msra.mxu0 0.0
      %4433 = vmatprep.subr.mxu0 0.0
      %4434 = vmatpush2.msra.mxu0 0.0
      %4435 = vmatprep.subr.mxu0 0.0
      %4436 = vmatpush2.msra.mxu0 0.0
      %4437 = vmatprep.subr.mxu0 0.0
      %4438 = vmatpush2.msra.mxu0 0.0
      %4439 = vmatprep.subr.mxu0 0.0
      %4440 = vmatpush2.msra.mxu0 0.0
      %4441 = vmatprep.subr.mxu0 0.0
      %4442 = vmatpush2.msra.mxu0 0.0
      %4443 = vmatprep.subr.mxu0 0.0
      %4444 = vmatpush2.msra.mxu0 0.0
      %4445 = vmatprep.subr.mxu0 0.0
      %4446 = vmatpush2.msra.mxu0 0.0
      %4447 = vmatprep.subr.mxu0 0.0
      %4448 = vmatpush2.msra.mxu0 0.0
      %4449 = vmatprep.subr.mxu0 0.0
      %4450 = vmatpush2.msra.mxu0 0.0
      %4451 = vmatprep.subr.mxu0 0.0
      %4452 = vmatpush2.msra.mxu0 0.0
      %4453 = vmatprep.subr.mxu0 0.0
      %4454 = vmatpush2.msra.mxu0 0.0
      %4455 = vmatprep.subr.mxu0 0.0
      %4456 = vmatpush2.msra.mxu0 0.0
      %4457 = vmatprep.subr.mxu0 0.0
      %4458 = vmatpush2.msra.mxu0 0.0
      %4459 = vmatprep.subr.mxu0 0.0
      %4460 = vmatpush2.msra.mxu0 0.0
      %4461 = vmatprep.mubr.f32.mxu0 0.0
      %4462 = vmatmul.mubr.f32.gmra.mxu0 %v4386
      %v4463 = vpop.f32.mrf.mxu0
      %v4464 = vadd.f32 %v4368, %v4463
      %v4465 = vpop.f32.mrf.mxu0
      %4466 = vmatprep.mubr.f32.mxu0 0.0
      %4467 = vmatmul.mubr.f32.gmra.mxu0 %v4389
      %v4468 = vpop.f32.mrf.mxu0
      %v4469 = vadd.f32 %v4373, %v4468
      %v4470 = vpop.f32.mrf.mxu0
      %4471 = vmatprep.mubr.f32.mxu0 0.0
      %4472 = vmatmul.mubr.f32.gmra.mxu0 %v4392
      %v4473 = vpop.f32.mrf.mxu0
      %v4474 = vadd.f32 %v4378, %v4473
      %v4475 = vpop.f32.mrf.mxu0
      %4476 = vmatprep.mubr.f32.mxu0 0.0
      %4477 = vmatmul.mubr.f32.gmra.mxu0 %v4395
      %v4478 = vpop.f32.mrf.mxu0
      %v4479 = vadd.f32 %v4383, %v4478
      %v4480 = vpop.f32.mrf.mxu0
      %4481 = vdwg.mxu0
      %v4482 = vld [vmem:[%s5 + $0xb0] sm:$0xff]
      %v4483 = vld [vmem:[%s5 + $0xb8] sm:$0xff]
      %v4484 = vld [vmem:[%s5 + $0xc0] sm:$0xff]
      %v4485 = vld [vmem:[%s5 + $0xc8] sm:$0xff]
      %v4486 = vld [vmem:[%s5 + $0xd0] sm:$0xff]
      %v4487 = vld [vmem:[%s5 + $0xd8] sm:$0xff]
      %v4488 = vld [vmem:[%s5 + $0xe0] sm:$0xff]
      %v4489 = vld [vmem:[%s5 + $0xe8] sm:$0xff]
      %vm4490 = vcmask 236544
      %v4492 = vsel %vm4490, %v4464, 0
      %v4495 = vsel %vm4490, %v4469, 0
      %v4498 = vsel %vm4490, %v4474, 0
      %v4501 = vsel %vm4490, %v4479, 0
      %v4504 = vsel %vm1861, 0.03448276, 0
      %4506 = vmatprep.subr.mxu0 0.0
      %4507 = vmatpush1.msra.mxu0 0.0
      %4508 = vmatprep.subr.mxu0 0.0
      %4509 = vmatpush1.msra.mxu0 0.0
      %4510 = vmatprep.subr.mxu0 0.0
      %4511 = vmatpush1.msra.mxu0 0.0
      %4512 = vmatprep.subr.mxu0 0.0
      %4513 = vmatpush1.msra.mxu0 0.0
      %4514 = vmatprep.subr.mxu0 0.0
      %4515 = vmatpush1.msra.mxu0 0.0
      %4516 = vmatprep.subr.mxu0 0.0
      %4517 = vmatpush1.msra.mxu0 0.0
      %4518 = vmatprep.subr.mxu0 0.0
      %4519 = vmatpush1.msra.mxu0 0.0
      %4520 = vmatprep.subr.mxu0 0.0
      %4521 = vmatpush1.msra.mxu0 0.0
      %4522 = vmatprep.subr.mxu0 0.0
      %4523 = vmatpush1.msra.mxu0 0.0
      %4524 = vmatprep.subr.mxu0 0.0
      %4525 = vmatpush1.msra.mxu0 0.0
      %4526 = vmatprep.subr.mxu0 0.0
      %4527 = vmatpush1.msra.mxu0 0.0
      %4528 = vmatprep.subr.mxu0 0.0
      %4529 = vmatpush1.msra.mxu0 0.0
      %4530 = vmatprep.subr.mxu0 0.0
      %4531 = vmatpush1.msra.mxu0 %v4504
      %4532 = vmatprep.subr.mxu0 0.0
      %4533 = vmatpush1.msra.mxu0 0.03448276
      %4534 = vmatprep.subr.mxu0 0.0
      %4535 = vmatpush1.msra.mxu0 0.03448276
      %4536 = vmatprep.subr.mxu0 0.0
      %4537 = vmatpush1.msra.mxu0 0.03448276
      %4538 = vmatprep.subr.mxu0 0.0
      %4539 = vmatpush2.msra.mxu0 0.0
      %4540 = vmatprep.subr.mxu0 0.0
      %4541 = vmatpush2.msra.mxu0 0.0
      %4542 = vmatprep.subr.mxu0 0.0
      %4543 = vmatpush2.msra.mxu0 0.0
      %4544 = vmatprep.subr.mxu0 0.0
      %4545 = vmatpush2.msra.mxu0 0.0
      %4546 = vmatprep.subr.mxu0 0.0
      %4547 = vmatpush2.msra.mxu0 0.0
      %4548 = vmatprep.subr.mxu0 0.0
      %4549 = vmatpush2.msra.mxu0 0.0
      %4550 = vmatprep.subr.mxu0 0.0
      %4551 = vmatpush2.msra.mxu0 0.0
      %4552 = vmatprep.subr.mxu0 0.0
      %4553 = vmatpush2.msra.mxu0 0.0
      %4554 = vmatprep.subr.mxu0 0.0
      %4555 = vmatpush2.msra.mxu0 0.0
      %4556 = vmatprep.subr.mxu0 0.0
      %4557 = vmatpush2.msra.mxu0 0.0
      %4558 = vmatprep.subr.mxu0 0.0
      %4559 = vmatpush2.msra.mxu0 0.0
      %4560 = vmatprep.subr.mxu0 0.0
      %4561 = vmatpush2.msra.mxu0 0.0
      %4562 = vmatprep.subr.mxu0 0.0
      %4563 = vmatpush2.msra.mxu0 0.0
      %4564 = vmatprep.subr.mxu0 0.0
      %4565 = vmatpush2.msra.mxu0 0.0
      %4566 = vmatprep.subr.mxu0 0.0
      %4567 = vmatpush2.msra.mxu0 0.0
      %4568 = vmatprep.subr.mxu0 0.0
      %4569 = vmatpush2.msra.mxu0 0.0
      %4570 = vmatprep.mubr.f32.mxu0 0.0
      %4571 = vmatmul.mubr.f32.gmra.mxu0 %v4492
      %v4572 = vpop.f32.mrf.mxu0
      %v4573 = vadd.f32 0.0, %v4572
      %v4574 = vpop.f32.mrf.mxu0
      %4575 = vmatprep.mubr.f32.mxu0 0.0
      %4576 = vmatmul.mubr.f32.gmra.mxu0 %v4495
      %v4577 = vpop.f32.mrf.mxu0
      %v4578 = vadd.f32 0.0, %v4577
      %v4579 = vpop.f32.mrf.mxu0
      %4580 = vmatprep.mubr.f32.mxu0 0.0
      %4581 = vmatmul.mubr.f32.gmra.mxu0 %v4498
      %v4582 = vpop.f32.mrf.mxu0
      %v4583 = vadd.f32 0.0, %v4582
      %v4584 = vpop.f32.mrf.mxu0
      %4585 = vmatprep.mubr.f32.mxu0 0.0
      %4586 = vmatmul.mubr.f32.gmra.mxu0 %v4501
      %v4587 = vpop.f32.mrf.mxu0
      %v4588 = vadd.f32 0.0, %v4587
      %v4589 = vpop.f32.mrf.mxu0
      %4590 = vdwg.mxu0
      %v4591 = vmul.f32 %v4464, %v4464
      %v4592 = vmul.f32 %v4469, %v4469
      %v4593 = vmul.f32 %v4474, %v4474
      %v4594 = vmul.f32 %v4479, %v4479
      %v4596 = vsel %vm4490, %v4591, 0
      %v4599 = vsel %vm4490, %v4592, 0
      %v4602 = vsel %vm4490, %v4593, 0
      %v4605 = vsel %vm4490, %v4594, 0
      %4607 = vmatprep.subr.mxu0 0.0
      %4608 = vmatpush1.msra.mxu0 0.0
      %4609 = vmatprep.subr.mxu0 0.0
      %4610 = vmatpush1.msra.mxu0 0.0
      %4611 = vmatprep.subr.mxu0 0.0
      %4612 = vmatpush1.msra.mxu0 0.0
      %4613 = vmatprep.subr.mxu0 0.0
      %4614 = vmatpush1.msra.mxu0 0.0
      %4615 = vmatprep.subr.mxu0 0.0
      %4616 = vmatpush1.msra.mxu0 0.0
      %4617 = vmatprep.subr.mxu0 0.0
      %4618 = vmatpush1.msra.mxu0 0.0
      %4619 = vmatprep.subr.mxu0 0.0
      %4620 = vmatpush1.msra.mxu0 0.0
      %4621 = vmatprep.subr.mxu0 0.0
      %4622 = vmatpush1.msra.mxu0 0.0
      %4623 = vmatprep.subr.mxu0 0.0
      %4624 = vmatpush1.msra.mxu0 0.0
      %4625 = vmatprep.subr.mxu0 0.0
      %4626 = vmatpush1.msra.mxu0 0.0
      %4627 = vmatprep.subr.mxu0 0.0
      %4628 = vmatpush1.msra.mxu0 0.0
      %4629 = vmatprep.subr.mxu0 0.0
      %4630 = vmatpush1.msra.mxu0 0.0
      %4631 = vmatprep.subr.mxu0 0.0
      %4632 = vmatpush1.msra.mxu0 %v4504
      %4633 = vmatprep.subr.mxu0 0.0
      %4634 = vmatpush1.msra.mxu0 0.03448276
      %4635 = vmatprep.subr.mxu0 0.0
      %4636 = vmatpush1.msra.mxu0 0.03448276
      %4637 = vmatprep.subr.mxu0 0.0
      %4638 = vmatpush1.msra.mxu0 0.03448276
      %4639 = vmatprep.subr.mxu0 0.0
      %4640 = vmatpush2.msra.mxu0 0.0
      %4641 = vmatprep.subr.mxu0 0.0
      %4642 = vmatpush2.msra.mxu0 0.0
      %4643 = vmatprep.subr.mxu0 0.0
      %4644 = vmatpush2.msra.mxu0 0.0
      %4645 = vmatprep.subr.mxu0 0.0
      %4646 = vmatpush2.msra.mxu0 0.0
      %4647 = vmatprep.subr.mxu0 0.0
      %4648 = vmatpush2.msra.mxu0 0.0
      %4649 = vmatprep.subr.mxu0 0.0
      %4650 = vmatpush2.msra.mxu0 0.0
      %4651 = vmatprep.subr.mxu0 0.0
      %4652 = vmatpush2.msra.mxu0 0.0
      %4653 = vmatprep.subr.mxu0 0.0
      %4654 = vmatpush2.msra.mxu0 0.0
      %4655 = vmatprep.subr.mxu0 0.0
      %4656 = vmatpush2.msra.mxu0 0.0
      %4657 = vmatprep.subr.mxu0 0.0
      %4658 = vmatpush2.msra.mxu0 0.0
      %4659 = vmatprep.subr.mxu0 0.0
      %4660 = vmatpush2.msra.mxu0 0.0
      %4661 = vmatprep.subr.mxu0 0.0
      %4662 = vmatpush2.msra.mxu0 0.0
      %4663 = vmatprep.subr.mxu0 0.0
      %4664 = vmatpush2.msra.mxu0 0.0
      %4665 = vmatprep.subr.mxu0 0.0
      %4666 = vmatpush2.msra.mxu0 0.0
      %4667 = vmatprep.subr.mxu0 0.0
      %4668 = vmatpush2.msra.mxu0 0.0
      %4669 = vmatprep.subr.mxu0 0.0
      %4670 = vmatpush2.msra.mxu0 0.0
      %4671 = vmatprep.mubr.f32.mxu0 0.0
      %4672 = vmatmul.mubr.f32.gmra.mxu0 %v4596
      %v4673 = vpop.f32.mrf.mxu0
      %v4674 = vadd.f32 0.0, %v4673
      %v4675 = vpop.f32.mrf.mxu0
      %4676 = vmatprep.mubr.f32.mxu0 0.0
      %4677 = vmatmul.mubr.f32.gmra.mxu0 %v4599
      %v4678 = vpop.f32.mrf.mxu0
      %v4679 = vadd.f32 0.0, %v4678
      %v4680 = vpop.f32.mrf.mxu0
      %4681 = vmatprep.mubr.f32.mxu0 0.0
      %4682 = vmatmul.mubr.f32.gmra.mxu0 %v4602
      %v4683 = vpop.f32.mrf.mxu0
      %v4684 = vadd.f32 0.0, %v4683
      %v4685 = vpop.f32.mrf.mxu0
      %4686 = vmatprep.mubr.f32.mxu0 0.0
      %4687 = vmatmul.mubr.f32.gmra.mxu0 %v4605
      %v4688 = vpop.f32.mrf.mxu0
      %v4689 = vadd.f32 0.0, %v4688
      %v4690 = vpop.f32.mrf.mxu0
      %4691 = vdwg.mxu0
      %v4692 = vsel %vm2191, %v4573, 0.0
      %v4693 = vsel %vm2191, %v4578, 0.0
      %v4694 = vadd.f32 %v4692, %v4693
      %v4695 = vrot.slane %v4694, 4
      %v4696 = vadd.f32 %v4694, %v4695
      %v4697 = vrot.slane %v4696, 2
      %v4698 = vadd.f32 %v4696, %v4697
      %v4699 = vrot.slane %v4698, 1
      %v4700 = vadd.f32 %v4698, %v4699
      %v4701 = vrcp.pop 16.0
      %v4702 = vmul.f32 %v4700, %v4701
      %v4703 = vsel %vm2191, %v4674, 0.0
      %v4704 = vsel %vm2191, %v4679, 0.0
      %v4705 = vadd.f32 %v4703, %v4704
      %v4706 = vrot.slane %v4705, 4
      %v4707 = vadd.f32 %v4705, %v4706
      %v4708 = vrot.slane %v4707, 2
      %v4709 = vadd.f32 %v4707, %v4708
      %v4710 = vrot.slane %v4709, 1
      %v4711 = vadd.f32 %v4709, %v4710
      %v4712 = vmul.f32 %v4711, %v4701
      %v4713 = vmul.f32 %v4702, %v4702
      %v4714 = vsub.f32 %v4712, %v4713
      %v4715 = vadd.f32 %v4714, 1e-05
      %v4716 = vrsqrt.pop %v4715
      %4718 = vset.pattern.permute.xlu0 0
      %4719 = vperm.xlu0 %4718, %v4702
      %v4720 = vpop.permute.xlu0 %4719
      %v4722 = vsub.f32 %v4464, %v4720
      %v4723 = vsub.f32 %v4469, %v4720
      %4725 = vset.pattern.permute.xlu0 0
      %4726 = vperm.xlu0 %4725, %v4716
      %v4727 = vpop.permute.xlu0 %4726
      %v4729 = vmul.f32 %v4722, %v4727
      %v4730 = vmul.f32 %v4723, %v4727
      %4732 = vset.pattern.permute.xlu0 0
      %4733 = vperm.xlu0 %4732, %v4482
      %v4734 = vpop.permute.xlu0 %4733
      %4737 = vset.pattern.permute.xlu0 0
      %4738 = vperm.xlu0 %4737, %v4483
      %v4739 = vpop.permute.xlu0 %4738
      %v4741 = vmul.f32 %v4729, %v4734
      %v4742 = vmul.f32 %v4730, %v4739
      %4744 = vset.pattern.permute.xlu0 0
      %4745 = vperm.xlu0 %4744, %v4486
      %v4746 = vpop.permute.xlu0 %4745
      %4749 = vset.pattern.permute.xlu0 0
      %4750 = vperm.xlu0 %4749, %v4487
      %v4751 = vpop.permute.xlu0 %4750
      %v4753 = vadd.f32 %v4741, %v4746
      %v4754 = vadd.f32 %v4742, %v4751
      %v4755 = vsel %vm2191, %v4583, 0.0
      %v4756 = vsel %vm2191, %v4588, 0.0
      %v4757 = vadd.f32 %v4755, %v4756
      %v4758 = vrot.slane %v4757, 4
      %v4759 = vadd.f32 %v4757, %v4758
      %v4760 = vrot.slane %v4759, 2
      %v4761 = vadd.f32 %v4759, %v4760
      %v4762 = vrot.slane %v4761, 1
      %v4763 = vadd.f32 %v4761, %v4762
      %v4764 = vmul.f32 %v4763, %v4701
      %v4765 = vsel %vm2191, %v4684, 0.0
      %v4766 = vsel %vm2191, %v4689, 0.0
      %v4767 = vadd.f32 %v4765, %v4766
      %v4768 = vrot.slane %v4767, 4
      %v4769 = vadd.f32 %v4767, %v4768
      %v4770 = vrot.slane %v4769, 2
      %v4771 = vadd.f32 %v4769, %v4770
      %v4772 = vrot.slane %v4771, 1
      %v4773 = vadd.f32 %v4771, %v4772
      %v4774 = vmul.f32 %v4773, %v4701
      %v4775 = vmul.f32 %v4764, %v4764
      %v4776 = vsub.f32 %v4774, %v4775
      %v4777 = vadd.f32 %v4776, 1e-05
      %v4778 = vrsqrt.pop %v4777
      %4780 = vset.pattern.permute.xlu0 0
      %4781 = vperm.xlu0 %4780, %v4764
      %v4782 = vpop.permute.xlu0 %4781
      %v4784 = vsub.f32 %v4474, %v4782
      %v4785 = vsub.f32 %v4479, %v4782
      %4787 = vset.pattern.permute.xlu0 0
      %4788 = vperm.xlu0 %4787, %v4778
      %v4789 = vpop.permute.xlu0 %4788
      %v4791 = vmul.f32 %v4784, %v4789
      %v4792 = vmul.f32 %v4785, %v4789
      %4794 = vset.pattern.permute.xlu0 0
      %4795 = vperm.xlu0 %4794, %v4484
      %v4796 = vpop.permute.xlu0 %4795
      %4799 = vset.pattern.permute.xlu0 0
      %4800 = vperm.xlu0 %4799, %v4485
      %v4801 = vpop.permute.xlu0 %4800
      %v4803 = vmul.f32 %v4791, %v4796
      %v4804 = vmul.f32 %v4792, %v4801
      %4806 = vset.pattern.permute.xlu0 0
      %4807 = vperm.xlu0 %4806, %v4488
      %v4808 = vpop.permute.xlu0 %4807
      %4811 = vset.pattern.permute.xlu0 0
      %4812 = vperm.xlu0 %4811, %v4489
      %v4813 = vpop.permute.xlu0 %4812
      %v4815 = vadd.f32 %v4803, %v4808
      %v4816 = vadd.f32 %v4804, %v4813
      %v4817 = vmax.f32 %v4753, 0.0
      %v4818 = vmax.f32 %v4754, 0.0
      %v4819 = vmax.f32 %v4815, 0.0
      %v4820 = vmax.f32 %v4816, 0.0
      %v4821 = vld [vmem:[%s4 + $0x2b8] sm:$0xff]
      %v4822 = vld [vmem:[%s4 + $0x2d0] sm:$0xff]
      %v4823 = vld [vmem:[%s4 + $0x2e8] sm:$0xff]
      %v4824 = vld [vmem:[%s4 + $0x300] sm:$0x1f]
      %v4826 = vsel %vm4490, %v4817, 0
      %v4829 = vsel %vm4490, %v4818, 0
      %v4832 = vsel %vm4490, %v4819, 0
      %v4835 = vsel %vm4490, %v4820, 0
      %v4838 = vsel %vm1861, %v4824, 0
      %4840 = vmatprep.subr.mxu0 0.0
      %4841 = vmatpush1.msra.mxu0 0.0
      %4842 = vmatprep.subr.mxu0 0.0
      %4843 = vmatpush1.msra.mxu0 0.0
      %4844 = vmatprep.subr.mxu0 0.0
      %4845 = vmatpush1.msra.mxu0 0.0
      %4846 = vmatprep.subr.mxu0 0.0
      %4847 = vmatpush1.msra.mxu0 0.0
      %4848 = vmatprep.subr.mxu0 0.0
      %4849 = vmatpush1.msra.mxu0 0.0
      %4850 = vmatprep.subr.mxu0 0.0
      %4851 = vmatpush1.msra.mxu0 0.0
      %4852 = vmatprep.subr.mxu0 0.0
      %4853 = vmatpush1.msra.mxu0 0.0
      %4854 = vmatprep.subr.mxu0 0.0
      %4855 = vmatpush1.msra.mxu0 0.0
      %4856 = vmatprep.subr.mxu0 0.0
      %4857 = vmatpush1.msra.mxu0 0.0
      %4858 = vmatprep.subr.mxu0 0.0
      %4859 = vmatpush1.msra.mxu0 0.0
      %4860 = vmatprep.subr.mxu0 0.0
      %4861 = vmatpush1.msra.mxu0 0.0
      %4862 = vmatprep.subr.mxu0 0.0
      %4863 = vmatpush1.msra.mxu0 0.0
      %4864 = vmatprep.subr.mxu0 0.0
      %4865 = vmatpush1.msra.mxu0 %v4838
      %4866 = vmatprep.subr.mxu0 0.0
      %4867 = vmatpush1.msra.mxu0 %v4823
      %4868 = vmatprep.subr.mxu0 0.0
      %4869 = vmatpush1.msra.mxu0 %v4822
      %4870 = vmatprep.subr.mxu0 0.0
      %4871 = vmatpush1.msra.mxu0 %v4821
      %4872 = vmatprep.subr.mxu0 0.0
      %4873 = vmatpush2.msra.mxu0 0.0
      %4874 = vmatprep.subr.mxu0 0.0
      %4875 = vmatpush2.msra.mxu0 0.0
      %4876 = vmatprep.subr.mxu0 0.0
      %4877 = vmatpush2.msra.mxu0 0.0
      %4878 = vmatprep.subr.mxu0 0.0
      %4879 = vmatpush2.msra.mxu0 0.0
      %4880 = vmatprep.subr.mxu0 0.0
      %4881 = vmatpush2.msra.mxu0 0.0
      %4882 = vmatprep.subr.mxu0 0.0
      %4883 = vmatpush2.msra.mxu0 0.0
      %4884 = vmatprep.subr.mxu0 0.0
      %4885 = vmatpush2.msra.mxu0 0.0
      %4886 = vmatprep.subr.mxu0 0.0
      %4887 = vmatpush2.msra.mxu0 0.0
      %4888 = vmatprep.subr.mxu0 0.0
      %4889 = vmatpush2.msra.mxu0 0.0
      %4890 = vmatprep.subr.mxu0 0.0
      %4891 = vmatpush2.msra.mxu0 0.0
      %4892 = vmatprep.subr.mxu0 0.0
      %4893 = vmatpush2.msra.mxu0 0.0
      %4894 = vmatprep.subr.mxu0 0.0
      %4895 = vmatpush2.msra.mxu0 0.0
      %4896 = vmatprep.subr.mxu0 0.0
      %4897 = vmatpush2.msra.mxu0 0.0
      %4898 = vmatprep.subr.mxu0 0.0
      %4899 = vmatpush2.msra.mxu0 0.0
      %4900 = vmatprep.subr.mxu0 0.0
      %4901 = vmatpush2.msra.mxu0 0.0
      %4902 = vmatprep.subr.mxu0 0.0
      %4903 = vmatpush2.msra.mxu0 0.0
      %4904 = vmatprep.mubr.f32.mxu0 0.0
      %4905 = vmatmul.mubr.f32.gmra.mxu0 %v4826
      %v4906 = vpop.f32.mrf.mxu0
      %v4907 = vadd.f32 0.0, %v4906
      %v4908 = vpop.f32.mrf.mxu0
      %4909 = vmatprep.mubr.f32.mxu0 0.0
      %4910 = vmatmul.mubr.f32.gmra.mxu0 %v4829
      %v4911 = vpop.f32.mrf.mxu0
      %v4912 = vadd.f32 0.0, %v4911
      %v4913 = vpop.f32.mrf.mxu0
      %4914 = vmatprep.mubr.f32.mxu0 0.0
      %4915 = vmatmul.mubr.f32.gmra.mxu0 %v4832
      %v4916 = vpop.f32.mrf.mxu0
      %v4917 = vadd.f32 0.0, %v4916
      %v4918 = vpop.f32.mrf.mxu0
      %4919 = vmatprep.mubr.f32.mxu0 0.0
      %4920 = vmatmul.mubr.f32.gmra.mxu0 %v4835
      %v4921 = vpop.f32.mrf.mxu0
      %v4922 = vadd.f32 0.0, %v4921
      %v4923 = vpop.f32.mrf.mxu0
      %4924 = vdwg.mxu0
      %4929 = vrot.lane.b32.xlu0 %v4907, 98
      %v4930 = vpop.permute.xlu0 %4929
      %4931 = vrot.lane.b32.xlu0 %v4912, 98
      %v4932 = vpop.permute.xlu0 %4931
      %4933 = vrot.lane.b32.xlu0 %v4917, 98
      %v4934 = vpop.permute.xlu0 %4933
      %4935 = vrot.lane.b32.xlu0 %v4922, 98
      %v4936 = vpop.permute.xlu0 %4935
      %4941 = vrot.lane.b32.xlu0 %v4907, 1
      %v4942 = vpop.permute.xlu0 %4941
      %4943 = vrot.lane.b32.xlu0 %v4912, 1
      %v4944 = vpop.permute.xlu0 %4943
      %4945 = vrot.lane.b32.xlu0 %v4917, 1
      %v4946 = vpop.permute.xlu0 %4945
      %4947 = vrot.lane.b32.xlu0 %v4922, 1
      %v4948 = vpop.permute.xlu0 %4947
      %4949 = vrot.lane.b32.xlu0 %v4930, 1
      %v4950 = vpop.permute.xlu0 %4949
      %4951 = vrot.lane.b32.xlu0 %v4932, 1
      %v4952 = vpop.permute.xlu0 %4951
      %4953 = vrot.lane.b32.xlu0 %v4934, 1
      %v4954 = vpop.permute.xlu0 %4953
      %4955 = vrot.lane.b32.xlu0 %v4936, 1
      %v4956 = vpop.permute.xlu0 %4955
      %v4965 = vsel %vm2191, 0.0, %v4942
      %v4966 = vsel %vm2191, 0.0, %v4944
      %v4967 = vsel %vm2191, 0.0, %v4946
      %v4968 = vsel %vm2191, 0.0, %v4948
      %v4969 = vsel %vm2191, 0.0, %v4950
      %v4970 = vsel %vm2191, 0.0, %v4952
      %v4971 = vsel %vm2191, 0.0, %v4954
      %v4972 = vsel %vm2191, 0.0, %v4956
      %v4973 = vsel %vm3453, %v4965, 0.0
      %v4974 = vsel %vm3453, %v4966, 0.0
      %v4975 = vsel %vm3453, %v4967, 0.0
      %v4976 = vsel %vm3453, %v4968, 0.0
      %v4977 = vsel %vm3453, %v4969, 0.0
      %v4978 = vsel %vm3453, %v4970, 0.0
      %v4979 = vsel %vm3453, %v4971, 0.0
      %v4980 = vsel %vm3453, %v4972, 0.0
      %4989 = vrot.lane.b32.xlu0 %v4973, 127
      %v4990 = vpop.permute.xlu0 %4989
      %4991 = vrot.lane.b32.xlu0 %v4974, 127
      %v4992 = vpop.permute.xlu0 %4991
      %4993 = vrot.lane.b32.xlu0 %v4975, 127
      %v4994 = vpop.permute.xlu0 %4993
      %4995 = vrot.lane.b32.xlu0 %v4976, 127
      %v4996 = vpop.permute.xlu0 %4995
      %4997 = vrot.lane.b32.xlu0 %v4977, 127
      %v4998 = vpop.permute.xlu0 %4997
      %4999 = vrot.lane.b32.xlu0 %v4978, 127
      %v5000 = vpop.permute.xlu0 %4999
      %5001 = vrot.lane.b32.xlu0 %v4979, 127
      %v5002 = vpop.permute.xlu0 %5001
      %5003 = vrot.lane.b32.xlu0 %v4980, 127
      %v5004 = vpop.permute.xlu0 %5003
      %5013 = vrot.lane.b32.xlu0 %v4973, 126
      %v5014 = vpop.permute.xlu0 %5013
      %5015 = vrot.lane.b32.xlu0 %v4974, 126
      %v5016 = vpop.permute.xlu0 %5015
      %5017 = vrot.lane.b32.xlu0 %v4975, 126
      %v5018 = vpop.permute.xlu0 %5017
      %5019 = vrot.lane.b32.xlu0 %v4976, 126
      %v5020 = vpop.permute.xlu0 %5019
      %5021 = vrot.lane.b32.xlu0 %v4977, 126
      %v5022 = vpop.permute.xlu0 %5021
      %5023 = vrot.lane.b32.xlu0 %v4978, 126
      %v5024 = vpop.permute.xlu0 %5023
      %5025 = vrot.lane.b32.xlu0 %v4979, 126
      %v5026 = vpop.permute.xlu0 %5025
      %5027 = vrot.lane.b32.xlu0 %v4980, 126
      %v5028 = vpop.permute.xlu0 %5027
      %v5037 = vld [vmem:[%s4 + $0x828] sm:$0xff]
      %v5038 = vld [vmem:[%s4 + $0x830] sm:$0xff]
      %v5039 = vld [vmem:[%s4 + $0x840] sm:$0xff]
      %v5040 = vld [vmem:[%s4 + $0x848] sm:$0xff]
      %v5041 = vld [vmem:[%s4 + $0x858] sm:$0xff]
      %v5042 = vld [vmem:[%s4 + $0x860] sm:$0xff]
      %v5043 = vld [vmem:[%s4 + $0x870] sm:$0xff]
      %v5044 = vld [vmem:[%s4 + $0x878] sm:$0xff]
      %v5045 = vld [vmem:[%s4 + $0x888] sm:$0xff]
      %v5046 = vld [vmem:[%s4 + $0x890] sm:$0xff]
      %v5047 = vld [vmem:[%s4 + $0x8a0] sm:$0xff]
      %v5048 = vld [vmem:[%s4 + $0x8a8] sm:$0xff]
      %v5049 = vld [vmem:[%s4 + $0x8b8] sm:$0xff]
      %v5050 = vld [vmem:[%s4 + $0x8c0] sm:$0xff]
      %v5051 = vld [vmem:[%s4 + $0x8d0] sm:$0xff]
      %v5052 = vld [vmem:[%s4 + $0x8d8] sm:$0xff]
      %v5053 = vld [vmem:[%s5 + $0x3c0] sm:$0xff]
      %v5054 = vld [vmem:[%s5 + $0x3c8] sm:$0xff]
      %v5055 = vld [vmem:[%s5 + $0x3d0] sm:$0xff]
      %v5056 = vld [vmem:[%s5 + $0x3d8] sm:$0xff]
      %v5057 = vld [vmem:[%s5 + $0x3e0] sm:$0xff]
      %v5058 = vld [vmem:[%s5 + $0x3e8] sm:$0xff]
      %v5059 = vld [vmem:[%s5 + $0x3f0] sm:$0xff]
      %v5060 = vld [vmem:[%s5 + $0x3f8] sm:$0xff]
      %5062 = vset.pattern.permute.xlu0 0
      %5063 = vperm.xlu0 %5062, %v5053
      %v5064 = vpop.permute.xlu0 %5063
      %5067 = vset.pattern.permute.xlu0 0
      %5068 = vperm.xlu0 %5067, %v5054
      %v5069 = vpop.permute.xlu0 %5068
      %5072 = vset.pattern.permute.xlu0 0
      %5073 = vperm.xlu0 %5072, %v5055
      %v5074 = vpop.permute.xlu0 %5073
      %5077 = vset.pattern.permute.xlu0 0
      %5078 = vperm.xlu0 %5077, %v5056
      %v5079 = vpop.permute.xlu0 %5078
      %5082 = vset.pattern.permute.xlu0 0
      %5083 = vperm.xlu0 %5082, %v5057
      %v5084 = vpop.permute.xlu0 %5083
      %5087 = vset.pattern.permute.xlu0 0
      %5088 = vperm.xlu0 %5087, %v5058
      %v5089 = vpop.permute.xlu0 %5088
      %5092 = vset.pattern.permute.xlu0 0
      %5093 = vperm.xlu0 %5092, %v5059
      %v5094 = vpop.permute.xlu0 %5093
      %5097 = vset.pattern.permute.xlu0 0
      %5098 = vperm.xlu0 %5097, %v5060
      %v5099 = vpop.permute.xlu0 %5098
      %v5102 = vsel %vm1507, %v5038, 0
      %v5105 = vsel %vm1507, %v5040, 0
      %v5108 = vsel %vm1507, %v5042, 0
      %v5111 = vsel %vm1507, %v5044, 0
      %v5114 = vsel %vm1507, %v5046, 0
      %v5117 = vsel %vm1507, %v5048, 0
      %v5120 = vsel %vm1507, %v5050, 0
      %v5123 = vsel %vm1507, %v5052, 0
      %5125 = vmatprep.subr.mxu0 0.0
      %5126 = vmatpush1.msra.mxu0 %v5004
      %5127 = vmatprep.subr.mxu0 0.0
      %5128 = vmatpush1.msra.mxu0 %v5002
      %5129 = vmatprep.subr.mxu0 0.0
      %5130 = vmatpush1.msra.mxu0 %v5000
      %5131 = vmatprep.subr.mxu0 0.0
      %5132 = vmatpush1.msra.mxu0 %v4998
      %5133 = vmatprep.subr.mxu0 0.0
      %5134 = vmatpush1.msra.mxu0 %v4996
      %5135 = vmatprep.subr.mxu0 0.0
      %5136 = vmatpush1.msra.mxu0 %v4994
      %5137 = vmatprep.subr.mxu0 0.0
      %5138 = vmatpush1.msra.mxu0 %v4992
      %5139 = vmatprep.subr.mxu0 0.0
      %5140 = vmatpush1.msra.mxu0 %v4990
      %5141 = vmatprep.subr.mxu0 0.0
      %5142 = vmatpush1.msra.mxu0 %v4980
      %5143 = vmatprep.subr.mxu0 0.0
      %5144 = vmatpush1.msra.mxu0 %v4979
      %5145 = vmatprep.subr.mxu0 0.0
      %5146 = vmatpush1.msra.mxu0 %v4978
      %5147 = vmatprep.subr.mxu0 0.0
      %5148 = vmatpush1.msra.mxu0 %v4977
      %5149 = vmatprep.subr.mxu0 0.0
      %5150 = vmatpush1.msra.mxu0 %v4976
      %5151 = vmatprep.subr.mxu0 0.0
      %5152 = vmatpush1.msra.mxu0 %v4975
      %5153 = vmatprep.subr.mxu0 0.0
      %5154 = vmatpush1.msra.mxu0 %v4974
      %5155 = vmatprep.subr.mxu0 0.0
      %5156 = vmatpush1.msra.mxu0 %v4973
      %5157 = vmatprep.subr.mxu0 0.0
      %5158 = vmatpush2.msra.mxu0 0.0
      %5159 = vmatprep.subr.mxu0 0.0
      %5160 = vmatpush2.msra.mxu0 0.0
      %5161 = vmatprep.subr.mxu0 0.0
      %5162 = vmatpush2.msra.mxu0 0.0
      %5163 = vmatprep.subr.mxu0 0.0
      %5164 = vmatpush2.msra.mxu0 0.0
      %5165 = vmatprep.subr.mxu0 0.0
      %5166 = vmatpush2.msra.mxu0 0.0
      %5167 = vmatprep.subr.mxu0 0.0
      %5168 = vmatpush2.msra.mxu0 0.0
      %5169 = vmatprep.subr.mxu0 0.0
      %5170 = vmatpush2.msra.mxu0 0.0
      %5171 = vmatprep.subr.mxu0 0.0
      %5172 = vmatpush2.msra.mxu0 0.0
      %5173 = vmatprep.subr.mxu0 0.0
      %5174 = vmatpush2.msra.mxu0 %v5028
      %5175 = vmatprep.subr.mxu0 0.0
      %5176 = vmatpush2.msra.mxu0 %v5026
      %5177 = vmatprep.subr.mxu0 0.0
      %5178 = vmatpush2.msra.mxu0 %v5024
      %5179 = vmatprep.subr.mxu0 0.0
      %5180 = vmatpush2.msra.mxu0 %v5022
      %5181 = vmatprep.subr.mxu0 0.0
      %5182 = vmatpush2.msra.mxu0 %v5020
      %5183 = vmatprep.subr.mxu0 0.0
      %5184 = vmatpush2.msra.mxu0 %v5018
      %5185 = vmatprep.subr.mxu0 0.0
      %5186 = vmatpush2.msra.mxu0 %v5016
      %5187 = vmatprep.subr.mxu0 0.0
      %5188 = vmatpush2.msra.mxu0 %v5014
      %5189 = vmatprep.mubr.f32.mxu0 %v5102
      %5190 = vmatmul.mubr.f32.gmra.mxu0 %v5037
      %v5191 = vpop.f32.mrf.mxu0
      %v5192 = vadd.f32 %v5064, %v5191
      %v5193 = vpop.f32.mrf.mxu0
      %5194 = vmatprep.mubr.f32.mxu0 %v5105
      %5195 = vmatmul.mubr.f32.gmra.mxu0 %v5039
      %v5196 = vpop.f32.mrf.mxu0
      %v5197 = vadd.f32 %v5069, %v5196
      %v5198 = vpop.f32.mrf.mxu0
      %5199 = vmatprep.mubr.f32.mxu0 %v5108
      %5200 = vmatmul.mubr.f32.gmra.mxu0 %v5041
      %v5201 = vpop.f32.mrf.mxu0
      %v5202 = vadd.f32 %v5074, %v5201
      %v5203 = vpop.f32.mrf.mxu0
      %5204 = vmatprep.mubr.f32.mxu0 %v5111
      %5205 = vmatmul.mubr.f32.gmra.mxu0 %v5043
      %v5206 = vpop.f32.mrf.mxu0
      %v5207 = vadd.f32 %v5079, %v5206
      %v5208 = vpop.f32.mrf.mxu0
      %5209 = vmatprep.mubr.f32.mxu0 %v5114
      %5210 = vmatmul.mubr.f32.gmra.mxu0 %v5045
      %v5211 = vpop.f32.mrf.mxu0
      %v5212 = vadd.f32 %v5084, %v5211
      %v5213 = vpop.f32.mrf.mxu0
      %5214 = vmatprep.mubr.f32.mxu0 %v5117
      %5215 = vmatmul.mubr.f32.gmra.mxu0 %v5047
      %v5216 = vpop.f32.mrf.mxu0
      %v5217 = vadd.f32 %v5089, %v5216
      %v5218 = vpop.f32.mrf.mxu0
      %5219 = vmatprep.mubr.f32.mxu0 %v5120
      %5220 = vmatmul.mubr.f32.gmra.mxu0 %v5049
      %v5221 = vpop.f32.mrf.mxu0
      %v5222 = vadd.f32 %v5094, %v5221
      %v5223 = vpop.f32.mrf.mxu0
      %5224 = vmatprep.mubr.f32.mxu0 %v5123
      %5225 = vmatmul.mubr.f32.gmra.mxu0 %v5051
      %v5226 = vpop.f32.mrf.mxu0
      %v5227 = vadd.f32 %v5099, %v5226
      %v5228 = vpop.f32.mrf.mxu0
      %5229 = vdwg.mxu0
      %v5230 = vmax.f32 %v5192, 0.0
      %v5231 = vmax.f32 %v5197, 0.0
      %v5232 = vmax.f32 %v5202, 0.0
      %v5233 = vmax.f32 %v5207, 0.0
      %v5234 = vmax.f32 %v5212, 0.0
      %v5235 = vmax.f32 %v5217, 0.0
      %v5236 = vmax.f32 %v5222, 0.0
      %v5237 = vmax.f32 %v5227, 0.0
      %vm5238 = vcmask 244736
      %v5240 = vsel %vm5238, %v5230, 0
      %v5243 = vsel %vm5238, %v5231, 0
      %v5246 = vsel %vm5238, %v5232, 0
      %v5249 = vsel %vm5238, %v5233, 0
      %v5252 = vsel %vm5238, %v5234, 0
      %v5255 = vsel %vm5238, %v5235, 0
      %v5258 = vsel %vm5238, %v5236, 0
      %v5261 = vsel %vm5238, %v5237, 0
      %v5264 = vsel %vm2288, 0.033333335, 0
      %5266 = vmatprep.subr.mxu0 0.0
      %5267 = vmatpush1.msra.mxu0 0.0
      %5268 = vmatprep.subr.mxu0 0.0
      %5269 = vmatpush1.msra.mxu0 0.0
      %5270 = vmatprep.subr.mxu0 0.0
      %5271 = vmatpush1.msra.mxu0 0.0
      %5272 = vmatprep.subr.mxu0 0.0
      %5273 = vmatpush1.msra.mxu0 0.0
      %5274 = vmatprep.subr.mxu0 0.0
      %5275 = vmatpush1.msra.mxu0 0.0
      %5276 = vmatprep.subr.mxu0 0.0
      %5277 = vmatpush1.msra.mxu0 0.0
      %5278 = vmatprep.subr.mxu0 0.0
      %5279 = vmatpush1.msra.mxu0 0.0
      %5280 = vmatprep.subr.mxu0 0.0
      %5281 = vmatpush1.msra.mxu0 0.0
      %5282 = vmatprep.subr.mxu0 0.0
      %5283 = vmatpush1.msra.mxu0 0.0
      %5284 = vmatprep.subr.mxu0 0.0
      %5285 = vmatpush1.msra.mxu0 0.0
      %5286 = vmatprep.subr.mxu0 0.0
      %5287 = vmatpush1.msra.mxu0 0.0
      %5288 = vmatprep.subr.mxu0 0.0
      %5289 = vmatpush1.msra.mxu0 0.0
      %5290 = vmatprep.subr.mxu0 0.0
      %5291 = vmatpush1.msra.mxu0 %v5264
      %5292 = vmatprep.subr.mxu0 0.0
      %5293 = vmatpush1.msra.mxu0 0.033333335
      %5294 = vmatprep.subr.mxu0 0.0
      %5295 = vmatpush1.msra.mxu0 0.033333335
      %5296 = vmatprep.subr.mxu0 0.0
      %5297 = vmatpush1.msra.mxu0 0.033333335
      %5298 = vmatprep.subr.mxu0 0.0
      %5299 = vmatpush2.msra.mxu0 0.0
      %5300 = vmatprep.subr.mxu0 0.0
      %5301 = vmatpush2.msra.mxu0 0.0
      %5302 = vmatprep.subr.mxu0 0.0
      %5303 = vmatpush2.msra.mxu0 0.0
      %5304 = vmatprep.subr.mxu0 0.0
      %5305 = vmatpush2.msra.mxu0 0.0
      %5306 = vmatprep.subr.mxu0 0.0
      %5307 = vmatpush2.msra.mxu0 0.0
      %5308 = vmatprep.subr.mxu0 0.0
      %5309 = vmatpush2.msra.mxu0 0.0
      %5310 = vmatprep.subr.mxu0 0.0
      %5311 = vmatpush2.msra.mxu0 0.0
      %5312 = vmatprep.subr.mxu0 0.0
      %5313 = vmatpush2.msra.mxu0 0.0
      %5314 = vmatprep.subr.mxu0 0.0
      %5315 = vmatpush2.msra.mxu0 0.0
      %5316 = vmatprep.subr.mxu0 0.0
      %5317 = vmatpush2.msra.mxu0 0.0
      %5318 = vmatprep.subr.mxu0 0.0
      %5319 = vmatpush2.msra.mxu0 0.0
      %5320 = vmatprep.subr.mxu0 0.0
      %5321 = vmatpush2.msra.mxu0 0.0
      %5322 = vmatprep.subr.mxu0 0.0
      %5323 = vmatpush2.msra.mxu0 0.0
      %5324 = vmatprep.subr.mxu0 0.0
      %5325 = vmatpush2.msra.mxu0 0.0
      %5326 = vmatprep.subr.mxu0 0.0
      %5327 = vmatpush2.msra.mxu0 0.0
      %5328 = vmatprep.subr.mxu0 0.0
      %5329 = vmatpush2.msra.mxu0 0.0
      %5330 = vmatprep.mubr.f32.mxu0 0.0
      %5331 = vmatmul.mubr.f32.gmra.mxu0 %v5240
      %v5332 = vpop.f32.mrf.mxu0
      %v5333 = vadd.f32 0.0, %v5332
      %v5334 = vpop.f32.mrf.mxu0
      %5335 = vmatprep.mubr.f32.mxu0 0.0
      %5336 = vmatmul.mubr.f32.gmra.mxu0 %v5243
      %v5337 = vpop.f32.mrf.mxu0
      %v5338 = vadd.f32 0.0, %v5337
      %v5339 = vpop.f32.mrf.mxu0
      %5340 = vmatprep.mubr.f32.mxu0 0.0
      %5341 = vmatmul.mubr.f32.gmra.mxu0 %v5246
      %v5342 = vpop.f32.mrf.mxu0
      %v5343 = vadd.f32 0.0, %v5342
      %v5344 = vpop.f32.mrf.mxu0
      %5345 = vmatprep.mubr.f32.mxu0 0.0
      %5346 = vmatmul.mubr.f32.gmra.mxu0 %v5249
      %v5347 = vpop.f32.mrf.mxu0
      %v5348 = vadd.f32 0.0, %v5347
      %v5349 = vpop.f32.mrf.mxu0
      %5350 = vmatprep.mubr.f32.mxu0 0.0
      %5351 = vmatmul.mubr.f32.gmra.mxu0 %v5252
      %v5352 = vpop.f32.mrf.mxu0
      %v5353 = vadd.f32 0.0, %v5352
      %v5354 = vpop.f32.mrf.mxu0
      %5355 = vmatprep.mubr.f32.mxu0 0.0
      %5356 = vmatmul.mubr.f32.gmra.mxu0 %v5255
      %v5357 = vpop.f32.mrf.mxu0
      %v5358 = vadd.f32 0.0, %v5357
      %v5359 = vpop.f32.mrf.mxu0
      %5360 = vmatprep.mubr.f32.mxu0 0.0
      %5361 = vmatmul.mubr.f32.gmra.mxu0 %v5258
      %v5362 = vpop.f32.mrf.mxu0
      %v5363 = vadd.f32 0.0, %v5362
      %v5364 = vpop.f32.mrf.mxu0
      %5365 = vmatprep.mubr.f32.mxu0 0.0
      %5366 = vmatmul.mubr.f32.gmra.mxu0 %v5261
      %v5367 = vpop.f32.mrf.mxu0
      %v5368 = vadd.f32 0.0, %v5367
      %v5369 = vpop.f32.mrf.mxu0
      %5370 = vdwg.mxu0
      %v5371 = vld [vmem:[%s4 + $0x8e8] sm:$0xff]
      %v5372 = vld [vmem:[%s4 + $0x900] sm:$0xff]
      %v5373 = vld [vmem:[%s4 + $0x918] sm:$0xff]
      %v5374 = vld [vmem:[%s4 + $0x930] sm:$0xff]
      %v5375 = vld [vmem:[%s5 + $0x400] sm:$0xff]
      %v5376 = vld [vmem:[%s5 + $0x408] sm:$0xff]
      %v5377 = vld [vmem:[%s5 + $0x410] sm:$0xff]
      %v5378 = vld [vmem:[%s5 + $0x418] sm:$0xff]
      %v5380 = vsel %vm1507, %v5371, 0
      %v5383 = vsel %vm1507, %v5372, 0
      %v5386 = vsel %vm1507, %v5373, 0
      %v5389 = vsel %vm1507, %v5374, 0
      %5391 = vmatprep.subr.mxu0 0.0
      %5392 = vmatpush1.msra.mxu0 0.0
      %5393 = vmatprep.subr.mxu0 0.0
      %5394 = vmatpush1.msra.mxu0 0.0
      %5395 = vmatprep.subr.mxu0 0.0
      %5396 = vmatpush1.msra.mxu0 0.0
      %5397 = vmatprep.subr.mxu0 0.0
      %5398 = vmatpush1.msra.mxu0 0.0
      %5399 = vmatprep.subr.mxu0 0.0
      %5400 = vmatpush1.msra.mxu0 0.0
      %5401 = vmatprep.subr.mxu0 0.0
      %5402 = vmatpush1.msra.mxu0 0.0
      %5403 = vmatprep.subr.mxu0 0.0
      %5404 = vmatpush1.msra.mxu0 0.0
      %5405 = vmatprep.subr.mxu0 0.0
      %5406 = vmatpush1.msra.mxu0 0.0
      %5407 = vmatprep.subr.mxu0 0.0
      %5408 = vmatpush1.msra.mxu0 %v5368
      %5409 = vmatprep.subr.mxu0 0.0
      %5410 = vmatpush1.msra.mxu0 %v5363
      %5411 = vmatprep.subr.mxu0 0.0
      %5412 = vmatpush1.msra.mxu0 %v5358
      %5413 = vmatprep.subr.mxu0 0.0
      %5414 = vmatpush1.msra.mxu0 %v5353
      %5415 = vmatprep.subr.mxu0 0.0
      %5416 = vmatpush1.msra.mxu0 %v5348
      %5417 = vmatprep.subr.mxu0 0.0
      %5418 = vmatpush1.msra.mxu0 %v5343
      %5419 = vmatprep.subr.mxu0 0.0
      %5420 = vmatpush1.msra.mxu0 %v5338
      %5421 = vmatprep.subr.mxu0 0.0
      %5422 = vmatpush1.msra.mxu0 %v5333
      %5423 = vmatprep.subr.mxu0 0.0
      %5424 = vmatpush2.msra.mxu0 0.0
      %5425 = vmatprep.subr.mxu0 0.0
      %5426 = vmatpush2.msra.mxu0 0.0
      %5427 = vmatprep.subr.mxu0 0.0
      %5428 = vmatpush2.msra.mxu0 0.0
      %5429 = vmatprep.subr.mxu0 0.0
      %5430 = vmatpush2.msra.mxu0 0.0
      %5431 = vmatprep.subr.mxu0 0.0
      %5432 = vmatpush2.msra.mxu0 0.0
      %5433 = vmatprep.subr.mxu0 0.0
      %5434 = vmatpush2.msra.mxu0 0.0
      %5435 = vmatprep.subr.mxu0 0.0
      %5436 = vmatpush2.msra.mxu0 0.0
      %5437 = vmatprep.subr.mxu0 0.0
      %5438 = vmatpush2.msra.mxu0 0.0
      %5439 = vmatprep.subr.mxu0 0.0
      %5440 = vmatpush2.msra.mxu0 0.0
      %5441 = vmatprep.subr.mxu0 0.0
      %5442 = vmatpush2.msra.mxu0 0.0
      %5443 = vmatprep.subr.mxu0 0.0
      %5444 = vmatpush2.msra.mxu0 0.0
      %5445 = vmatprep.subr.mxu0 0.0
      %5446 = vmatpush2.msra.mxu0 0.0
      %5447 = vmatprep.subr.mxu0 0.0
      %5448 = vmatpush2.msra.mxu0 0.0
      %5449 = vmatprep.subr.mxu0 0.0
      %5450 = vmatpush2.msra.mxu0 0.0
      %5451 = vmatprep.subr.mxu0 0.0
      %5452 = vmatpush2.msra.mxu0 0.0
      %5453 = vmatprep.subr.mxu0 0.0
      %5454 = vmatpush2.msra.mxu0 0.0
      %5455 = vmatprep.mubr.f32.mxu0 0.0
      %5456 = vmatmul.mubr.f32.gmra.mxu0 %v5380
      %v5457 = vpop.f32.mrf.mxu0
      %v5458 = vadd.f32 %v5375, %v5457
      %v5459 = vpop.f32.mrf.mxu0
      %5460 = vmatprep.mubr.f32.mxu0 0.0
      %5461 = vmatmul.mubr.f32.gmra.mxu0 %v5383
      %v5462 = vpop.f32.mrf.mxu0
      %v5463 = vadd.f32 %v5376, %v5462
      %v5464 = vpop.f32.mrf.mxu0
      %5465 = vmatprep.mubr.f32.mxu0 0.0
      %5466 = vmatmul.mubr.f32.gmra.mxu0 %v5386
      %v5467 = vpop.f32.mrf.mxu0
      %v5468 = vadd.f32 %v5377, %v5467
      %v5469 = vpop.f32.mrf.mxu0
      %5470 = vmatprep.mubr.f32.mxu0 0.0
      %5471 = vmatmul.mubr.f32.gmra.mxu0 %v5389
      %v5472 = vpop.f32.mrf.mxu0
      %v5473 = vadd.f32 %v5378, %v5472
      %v5474 = vpop.f32.mrf.mxu0
      %5475 = vdwg.mxu0
      %v5476 = vmax.f32 %v5458, 0.0
      %v5477 = vmax.f32 %v5463, 0.0
      %v5478 = vmax.f32 %v5468, 0.0
      %v5479 = vmax.f32 %v5473, 0.0
      %v5480 = vld [vmem:[%s4 + $0x948] sm:$0xff]
      %v5481 = vld [vmem:[%s4 + $0x960] sm:$0xff]
      %v5482 = vld [vmem:[%s4 + $0x978] sm:$0xff]
      %v5483 = vld [vmem:[%s4 + $0x990] sm:$0xff]
      %v5484 = vld [vmem:[%s4 + $0x9a8] sm:$0xff]
      %v5485 = vld [vmem:[%s4 + $0x9c0] sm:$0xff]
      %v5486 = vld [vmem:[%s4 + $0x9d8] sm:$0xff]
      %v5487 = vld [vmem:[%s4 + $0x9f0] sm:$0xff]
      %v5488 = vld [vmem:[%s5 + $0x420] sm:$0xff]
      %v5489 = vld [vmem:[%s5 + $0x428] sm:$0xff]
      %v5490 = vld [vmem:[%s5 + $0x430] sm:$0xff]
      %v5491 = vld [vmem:[%s5 + $0x438] sm:$0xff]
      %v5492 = vld [vmem:[%s5 + $0x440] sm:$0xff]
      %v5493 = vld [vmem:[%s5 + $0x448] sm:$0xff]
      %v5494 = vld [vmem:[%s5 + $0x450] sm:$0xff]
      %v5495 = vld [vmem:[%s5 + $0x458] sm:$0xff]
      %v5497 = vsel %vm3825, %v5480, 0
      %v5500 = vsel %vm3825, %v5481, 0
      %v5503 = vsel %vm3825, %v5482, 0
      %v5506 = vsel %vm3825, %v5483, 0
      %v5509 = vsel %vm3825, %v5484, 0
      %v5512 = vsel %vm3825, %v5485, 0
      %v5515 = vsel %vm3825, %v5486, 0
      %v5518 = vsel %vm3825, %v5487, 0
      %5520 = vmatprep.subr.mxu0 0.0
      %5521 = vmatpush1.msra.mxu0 0.0
      %5522 = vmatprep.subr.mxu0 0.0
      %5523 = vmatpush1.msra.mxu0 0.0
      %5524 = vmatprep.subr.mxu0 0.0
      %5525 = vmatpush1.msra.mxu0 0.0
      %5526 = vmatprep.subr.mxu0 0.0
      %5527 = vmatpush1.msra.mxu0 0.0
      %5528 = vmatprep.subr.mxu0 0.0
      %5529 = vmatpush1.msra.mxu0 0.0
      %5530 = vmatprep.subr.mxu0 0.0
      %5531 = vmatpush1.msra.mxu0 0.0
      %5532 = vmatprep.subr.mxu0 0.0
      %5533 = vmatpush1.msra.mxu0 0.0
      %5534 = vmatprep.subr.mxu0 0.0
      %5535 = vmatpush1.msra.mxu0 0.0
      %5536 = vmatprep.subr.mxu0 0.0
      %5537 = vmatpush1.msra.mxu0 0.0
      %5538 = vmatprep.subr.mxu0 0.0
      %5539 = vmatpush1.msra.mxu0 0.0
      %5540 = vmatprep.subr.mxu0 0.0
      %5541 = vmatpush1.msra.mxu0 0.0
      %5542 = vmatprep.subr.mxu0 0.0
      %5543 = vmatpush1.msra.mxu0 0.0
      %5544 = vmatprep.subr.mxu0 0.0
      %5545 = vmatpush1.msra.mxu0 %v5479
      %5546 = vmatprep.subr.mxu0 0.0
      %5547 = vmatpush1.msra.mxu0 %v5478
      %5548 = vmatprep.subr.mxu0 0.0
      %5549 = vmatpush1.msra.mxu0 %v5477
      %5550 = vmatprep.subr.mxu0 0.0
      %5551 = vmatpush1.msra.mxu0 %v5476
      %5552 = vmatprep.subr.mxu0 0.0
      %5553 = vmatpush2.msra.mxu0 0.0
      %5554 = vmatprep.subr.mxu0 0.0
      %5555 = vmatpush2.msra.mxu0 0.0
      %5556 = vmatprep.subr.mxu0 0.0
      %5557 = vmatpush2.msra.mxu0 0.0
      %5558 = vmatprep.subr.mxu0 0.0
      %5559 = vmatpush2.msra.mxu0 0.0
      %5560 = vmatprep.subr.mxu0 0.0
      %5561 = vmatpush2.msra.mxu0 0.0
      %5562 = vmatprep.subr.mxu0 0.0
      %5563 = vmatpush2.msra.mxu0 0.0
      %5564 = vmatprep.subr.mxu0 0.0
      %5565 = vmatpush2.msra.mxu0 0.0
      %5566 = vmatprep.subr.mxu0 0.0
      %5567 = vmatpush2.msra.mxu0 0.0
      %5568 = vmatprep.subr.mxu0 0.0
      %5569 = vmatpush2.msra.mxu0 0.0
      %5570 = vmatprep.subr.mxu0 0.0
      %5571 = vmatpush2.msra.mxu0 0.0
      %5572 = vmatprep.subr.mxu0 0.0
      %5573 = vmatpush2.msra.mxu0 0.0
      %5574 = vmatprep.subr.mxu0 0.0
      %5575 = vmatpush2.msra.mxu0 0.0
      %5576 = vmatprep.subr.mxu0 0.0
      %5577 = vmatpush2.msra.mxu0 0.0
      %5578 = vmatprep.subr.mxu0 0.0
      %5579 = vmatpush2.msra.mxu0 0.0
      %5580 = vmatprep.subr.mxu0 0.0
      %5581 = vmatpush2.msra.mxu0 0.0
      %5582 = vmatprep.subr.mxu0 0.0
      %5583 = vmatpush2.msra.mxu0 0.0
      %5584 = vmatprep.mubr.f32.mxu0 0.0
      %5585 = vmatmul.mubr.f32.gmra.mxu0 %v5497
      %v5586 = vpop.f32.mrf.mxu0
      %v5587 = vadd.f32 %v5488, %v5586
      %v5588 = vpop.f32.mrf.mxu0
      %5589 = vmatprep.mubr.f32.mxu0 0.0
      %5590 = vmatmul.mubr.f32.gmra.mxu0 %v5500
      %v5591 = vpop.f32.mrf.mxu0
      %v5592 = vadd.f32 %v5489, %v5591
      %v5593 = vpop.f32.mrf.mxu0
      %5594 = vmatprep.mubr.f32.mxu0 0.0
      %5595 = vmatmul.mubr.f32.gmra.mxu0 %v5503
      %v5596 = vpop.f32.mrf.mxu0
      %v5597 = vadd.f32 %v5490, %v5596
      %v5598 = vpop.f32.mrf.mxu0
      %5599 = vmatprep.mubr.f32.mxu0 0.0
      %5600 = vmatmul.mubr.f32.gmra.mxu0 %v5506
      %v5601 = vpop.f32.mrf.mxu0
      %v5602 = vadd.f32 %v5491, %v5601
      %v5603 = vpop.f32.mrf.mxu0
      %5604 = vmatprep.mubr.f32.mxu0 0.0
      %5605 = vmatmul.mubr.f32.gmra.mxu0 %v5509
      %v5606 = vpop.f32.mrf.mxu0
      %v5607 = vadd.f32 %v5492, %v5606
      %v5608 = vpop.f32.mrf.mxu0
      %5609 = vmatprep.mubr.f32.mxu0 0.0
      %5610 = vmatmul.mubr.f32.gmra.mxu0 %v5512
      %v5611 = vpop.f32.mrf.mxu0
      %v5612 = vadd.f32 %v5493, %v5611
      %v5613 = vpop.f32.mrf.mxu0
      %5614 = vmatprep.mubr.f32.mxu0 0.0
      %5615 = vmatmul.mubr.f32.gmra.mxu0 %v5515
      %v5616 = vpop.f32.mrf.mxu0
      %v5617 = vadd.f32 %v5494, %v5616
      %v5618 = vpop.f32.mrf.mxu0
      %5619 = vmatprep.mubr.f32.mxu0 0.0
      %5620 = vmatmul.mubr.f32.gmra.mxu0 %v5518
      %v5621 = vpop.f32.mrf.mxu0
      %v5622 = vadd.f32 %v5495, %v5621
      %v5623 = vpop.f32.mrf.mxu0
      %5624 = vdwg.mxu0
      %v5625 = vxor.u32 %v5587, 2147483648
      %v5626 = vxor.u32 %v5592, 2147483648
      %v5627 = vxor.u32 %v5597, 2147483648
      %v5628 = vxor.u32 %v5602, 2147483648
      %v5629 = vxor.u32 %v5607, 2147483648
      %v5630 = vxor.u32 %v5612, 2147483648
      %v5631 = vxor.u32 %v5617, 2147483648
      %v5632 = vxor.u32 %v5622, 2147483648
      %v5633 = vmul.f32 %v5625, 1.442695
      %v5634 = vpow.pop %v5633
      %v5635 = vmul.f32 %v5626, 1.442695
      %v5636 = vpow.pop %v5635
      %v5637 = vmul.f32 %v5627, 1.442695
      %v5638 = vpow.pop %v5637
      %v5639 = vmul.f32 %v5628, 1.442695
      %v5640 = vpow.pop %v5639
      %v5641 = vmul.f32 %v5629, 1.442695
      %v5642 = vpow.pop %v5641
      %v5643 = vmul.f32 %v5630, 1.442695
      %v5644 = vpow.pop %v5643
      %v5645 = vmul.f32 %v5631, 1.442695
      %v5646 = vpow.pop %v5645
      %v5647 = vmul.f32 %v5632, 1.442695
      %v5648 = vpow.pop %v5647
      %v5649 = vadd.f32 %v5634, 1.0
      %v5650 = vadd.f32 %v5636, 1.0
      %v5651 = vadd.f32 %v5638, 1.0
      %v5652 = vadd.f32 %v5640, 1.0
      %v5653 = vadd.f32 %v5642, 1.0
      %v5654 = vadd.f32 %v5644, 1.0
      %v5655 = vadd.f32 %v5646, 1.0
      %v5656 = vadd.f32 %v5648, 1.0
      %v5657 = vrcp.pop %v5649
      %v5658 = vmul.f32 1.0, %v5657
      %v5659 = vrcp.pop %v5650
      %v5660 = vmul.f32 1.0, %v5659
      %v5661 = vrcp.pop %v5651
      %v5662 = vmul.f32 1.0, %v5661
      %v5663 = vrcp.pop %v5652
      %v5664 = vmul.f32 1.0, %v5663
      %v5665 = vrcp.pop %v5653
      %v5666 = vmul.f32 1.0, %v5665
      %v5667 = vrcp.pop %v5654
      %v5668 = vmul.f32 1.0, %v5667
      %v5669 = vrcp.pop %v5655
      %v5670 = vmul.f32 1.0, %v5669
      %v5671 = vrcp.pop %v5656
      %v5672 = vmul.f32 1.0, %v5671
      %v5673 = vadd.f32 %v5658, 1.0
      %v5674 = vadd.f32 %v5660, 1.0
      %v5675 = vadd.f32 %v5662, 1.0
      %v5676 = vadd.f32 %v5664, 1.0
      %v5677 = vadd.f32 %v5666, 1.0
      %v5678 = vadd.f32 %v5668, 1.0
      %v5679 = vadd.f32 %v5670, 1.0
      %v5680 = vadd.f32 %v5672, 1.0
      %5682 = vset.pattern.permute.xlu0 0
      %5683 = vperm.xlu0 %5682, %v5673
      %v5684 = vpop.permute.xlu0 %5683
      %5687 = vset.pattern.permute.xlu0 0
      %5688 = vperm.xlu0 %5687, %v5674
      %v5689 = vpop.permute.xlu0 %5688
      %5692 = vset.pattern.permute.xlu0 0
      %5693 = vperm.xlu0 %5692, %v5675
      %v5694 = vpop.permute.xlu0 %5693
      %5697 = vset.pattern.permute.xlu0 0
      %5698 = vperm.xlu0 %5697, %v5676
      %v5699 = vpop.permute.xlu0 %5698
      %5702 = vset.pattern.permute.xlu0 0
      %5703 = vperm.xlu0 %5702, %v5677
      %v5704 = vpop.permute.xlu0 %5703
      %5707 = vset.pattern.permute.xlu0 0
      %5708 = vperm.xlu0 %5707, %v5678
      %v5709 = vpop.permute.xlu0 %5708
      %5712 = vset.pattern.permute.xlu0 0
      %5713 = vperm.xlu0 %5712, %v5679
      %v5714 = vpop.permute.xlu0 %5713
      %5717 = vset.pattern.permute.xlu0 0
      %5718 = vperm.xlu0 %5717, %v5680
      %v5719 = vpop.permute.xlu0 %5718
      %v5721 = vmul.f32 %v4907, %v5684
      %v5722 = vmul.f32 %v4912, %v5689
      %v5723 = vmul.f32 %v4917, %v5694
      %v5724 = vmul.f32 %v4922, %v5699
      %v5725 = vmul.f32 %v4930, %v5704
      %v5726 = vmul.f32 %v4932, %v5709
      %v5727 = vmul.f32 %v4934, %v5714
      %v5728 = vmul.f32 %v4936, %v5719
      %5737 = vrot.lane.b32.xlu0 %v5721, 127
      %v5738 = vpop.permute.xlu0 %5737
      %5739 = vrot.lane.b32.xlu0 %v5722, 127
      %v5740 = vpop.permute.xlu0 %5739
      %5741 = vrot.lane.b32.xlu0 %v5723, 127
      %v5742 = vpop.permute.xlu0 %5741
      %5743 = vrot.lane.b32.xlu0 %v5724, 127
      %v5744 = vpop.permute.xlu0 %5743
      %5745 = vrot.lane.b32.xlu0 %v5725, 127
      %v5746 = vpop.permute.xlu0 %5745
      %5747 = vrot.lane.b32.xlu0 %v5726, 127
      %v5748 = vpop.permute.xlu0 %5747
      %5749 = vrot.lane.b32.xlu0 %v5727, 127
      %v5750 = vpop.permute.xlu0 %5749
      %5751 = vrot.lane.b32.xlu0 %v5728, 127
      %v5752 = vpop.permute.xlu0 %5751
      %5761 = vrot.lane.b32.xlu0 %v5721, 126
      %v5762 = vpop.permute.xlu0 %5761
      %5763 = vrot.lane.b32.xlu0 %v5722, 126
      %v5764 = vpop.permute.xlu0 %5763
      %5765 = vrot.lane.b32.xlu0 %v5723, 126
      %v5766 = vpop.permute.xlu0 %5765
      %5767 = vrot.lane.b32.xlu0 %v5724, 126
      %v5768 = vpop.permute.xlu0 %5767
      %5769 = vrot.lane.b32.xlu0 %v5725, 126
      %v5770 = vpop.permute.xlu0 %5769
      %5771 = vrot.lane.b32.xlu0 %v5726, 126
      %v5772 = vpop.permute.xlu0 %5771
      %5773 = vrot.lane.b32.xlu0 %v5727, 126
      %v5774 = vpop.permute.xlu0 %5773
      %5775 = vrot.lane.b32.xlu0 %v5728, 126
      %v5776 = vpop.permute.xlu0 %5775
      %v5785 = vld [vmem:[%s4 + $0x438] sm:$0xff]
      %v5786 = vld [vmem:[%s4 + $0x440] sm:$0xff]
      %v5787 = vld [vmem:[%s4 + $0x450] sm:$0xff]
      %v5788 = vld [vmem:[%s4 + $0x458] sm:$0xff]
      %v5789 = vld [vmem:[%s4 + $0x468] sm:$0xff]
      %v5790 = vld [vmem:[%s4 + $0x470] sm:$0xff]
      %v5791 = vld [vmem:[%s4 + $0x480] sm:$0xff]
      %v5792 = vld [vmem:[%s4 + $0x488] sm:$0xff]
      %v5793 = vld [vmem:[%s4 + $0x498] sm:$0xff]
      %v5794 = vld [vmem:[%s4 + $0x4a0] sm:$0xff]
      %v5795 = vld [vmem:[%s4 + $0x4b0] sm:$0xff]
      %v5796 = vld [vmem:[%s4 + $0x4b8] sm:$0xff]
      %v5797 = vld [vmem:[%s4 + $0x4c8] sm:$0xff]
      %v5798 = vld [vmem:[%s4 + $0x4d0] sm:$0xff]
      %v5799 = vld [vmem:[%s4 + $0x4e0] sm:$0xff]
      %v5800 = vld [vmem:[%s4 + $0x4e8] sm:$0xff]
      %v5801 = vld [vmem:[%s5 + $0xf0] sm:$0xff]
      %v5802 = vld [vmem:[%s5 + $0xf8] sm:$0xff]
      %v5803 = vld [vmem:[%s5 + $0x100] sm:$0xff]
      %v5804 = vld [vmem:[%s5 + $0x108] sm:$0xff]
      %v5805 = vld [vmem:[%s5 + $0x110] sm:$0xff]
      %v5806 = vld [vmem:[%s5 + $0x118] sm:$0xff]
      %v5807 = vld [vmem:[%s5 + $0x120] sm:$0xff]
      %v5808 = vld [vmem:[%s5 + $0x128] sm:$0xff]
      %5810 = vset.pattern.permute.xlu0 0
      %5811 = vperm.xlu0 %5810, %v5801
      %v5812 = vpop.permute.xlu0 %5811
      %5815 = vset.pattern.permute.xlu0 0
      %5816 = vperm.xlu0 %5815, %v5802
      %v5817 = vpop.permute.xlu0 %5816
      %5820 = vset.pattern.permute.xlu0 0
      %5821 = vperm.xlu0 %5820, %v5803
      %v5822 = vpop.permute.xlu0 %5821
      %5825 = vset.pattern.permute.xlu0 0
      %5826 = vperm.xlu0 %5825, %v5804
      %v5827 = vpop.permute.xlu0 %5826
      %5830 = vset.pattern.permute.xlu0 0
      %5831 = vperm.xlu0 %5830, %v5805
      %v5832 = vpop.permute.xlu0 %5831
      %5835 = vset.pattern.permute.xlu0 0
      %5836 = vperm.xlu0 %5835, %v5806
      %v5837 = vpop.permute.xlu0 %5836
      %5840 = vset.pattern.permute.xlu0 0
      %5841 = vperm.xlu0 %5840, %v5807
      %v5842 = vpop.permute.xlu0 %5841
      %5845 = vset.pattern.permute.xlu0 0
      %5846 = vperm.xlu0 %5845, %v5808
      %v5847 = vpop.permute.xlu0 %5846
      %v5850 = vsel %vm1507, %v5786, 0
      %v5853 = vsel %vm1507, %v5788, 0
      %v5856 = vsel %vm1507, %v5790, 0
      %v5859 = vsel %vm1507, %v5792, 0
      %v5862 = vsel %vm1507, %v5794, 0
      %v5865 = vsel %vm1507, %v5796, 0
      %v5868 = vsel %vm1507, %v5798, 0
      %v5871 = vsel %vm1507, %v5800, 0
      %5873 = vmatprep.subr.mxu0 0.0
      %5874 = vmatpush1.msra.mxu0 %v5752
      %5875 = vmatprep.subr.mxu0 0.0
      %5876 = vmatpush1.msra.mxu0 %v5750
      %5877 = vmatprep.subr.mxu0 0.0
      %5878 = vmatpush1.msra.mxu0 %v5748
      %5879 = vmatprep.subr.mxu0 0.0
      %5880 = vmatpush1.msra.mxu0 %v5746
      %5881 = vmatprep.subr.mxu0 0.0
      %5882 = vmatpush1.msra.mxu0 %v5744
      %5883 = vmatprep.subr.mxu0 0.0
      %5884 = vmatpush1.msra.mxu0 %v5742
      %5885 = vmatprep.subr.mxu0 0.0
      %5886 = vmatpush1.msra.mxu0 %v5740
      %5887 = vmatprep.subr.mxu0 0.0
      %5888 = vmatpush1.msra.mxu0 %v5738
      %5889 = vmatprep.subr.mxu0 0.0
      %5890 = vmatpush1.msra.mxu0 %v5728
      %5891 = vmatprep.subr.mxu0 0.0
      %5892 = vmatpush1.msra.mxu0 %v5727
      %5893 = vmatprep.subr.mxu0 0.0
      %5894 = vmatpush1.msra.mxu0 %v5726
      %5895 = vmatprep.subr.mxu0 0.0
      %5896 = vmatpush1.msra.mxu0 %v5725
      %5897 = vmatprep.subr.mxu0 0.0
      %5898 = vmatpush1.msra.mxu0 %v5724
      %5899 = vmatprep.subr.mxu0 0.0
      %5900 = vmatpush1.msra.mxu0 %v5723
      %5901 = vmatprep.subr.mxu0 0.0
      %5902 = vmatpush1.msra.mxu0 %v5722
      %5903 = vmatprep.subr.mxu0 0.0
      %5904 = vmatpush1.msra.mxu0 %v5721
      %5905 = vmatprep.subr.mxu0 0.0
      %5906 = vmatpush2.msra.mxu0 0.0
      %5907 = vmatprep.subr.mxu0 0.0
      %5908 = vmatpush2.msra.mxu0 0.0
      %5909 = vmatprep.subr.mxu0 0.0
      %5910 = vmatpush2.msra.mxu0 0.0
      %5911 = vmatprep.subr.mxu0 0.0
      %5912 = vmatpush2.msra.mxu0 0.0
      %5913 = vmatprep.subr.mxu0 0.0
      %5914 = vmatpush2.msra.mxu0 0.0
      %5915 = vmatprep.subr.mxu0 0.0
      %5916 = vmatpush2.msra.mxu0 0.0
      %5917 = vmatprep.subr.mxu0 0.0
      %5918 = vmatpush2.msra.mxu0 0.0
      %5919 = vmatprep.subr.mxu0 0.0
      %5920 = vmatpush2.msra.mxu0 0.0
      %5921 = vmatprep.subr.mxu0 0.0
      %5922 = vmatpush2.msra.mxu0 %v5776
      %5923 = vmatprep.subr.mxu0 0.0
      %5924 = vmatpush2.msra.mxu0 %v5774
      %5925 = vmatprep.subr.mxu0 0.0
      %5926 = vmatpush2.msra.mxu0 %v5772
      %5927 = vmatprep.subr.mxu0 0.0
      %5928 = vmatpush2.msra.mxu0 %v5770
      %5929 = vmatprep.subr.mxu0 0.0
      %5930 = vmatpush2.msra.mxu0 %v5768
      %5931 = vmatprep.subr.mxu0 0.0
      %5932 = vmatpush2.msra.mxu0 %v5766
      %5933 = vmatprep.subr.mxu0 0.0
      %5934 = vmatpush2.msra.mxu0 %v5764
      %5935 = vmatprep.subr.mxu0 0.0
      %5936 = vmatpush2.msra.mxu0 %v5762
      %5937 = vmatprep.mubr.f32.mxu0 %v5850
      %5938 = vmatmul.mubr.f32.gmra.mxu0 %v5785
      %v5939 = vpop.f32.mrf.mxu0
      %v5940 = vadd.f32 %v5812, %v5939
      %v5941 = vpop.f32.mrf.mxu0
      %5942 = vmatprep.mubr.f32.mxu0 %v5853
      %5943 = vmatmul.mubr.f32.gmra.mxu0 %v5787
      %v5944 = vpop.f32.mrf.mxu0
      %v5945 = vadd.f32 %v5817, %v5944
      %v5946 = vpop.f32.mrf.mxu0
      %5947 = vmatprep.mubr.f32.mxu0 %v5856
      %5948 = vmatmul.mubr.f32.gmra.mxu0 %v5789
      %v5949 = vpop.f32.mrf.mxu0
      %v5950 = vadd.f32 %v5822, %v5949
      %v5951 = vpop.f32.mrf.mxu0
      %5952 = vmatprep.mubr.f32.mxu0 %v5859
      %5953 = vmatmul.mubr.f32.gmra.mxu0 %v5791
      %v5954 = vpop.f32.mrf.mxu0
      %v5955 = vadd.f32 %v5827, %v5954
      %v5956 = vpop.f32.mrf.mxu0
      %5957 = vmatprep.mubr.f32.mxu0 %v5862
      %5958 = vmatmul.mubr.f32.gmra.mxu0 %v5793
      %v5959 = vpop.f32.mrf.mxu0
      %v5960 = vadd.f32 %v5832, %v5959
      %v5961 = vpop.f32.mrf.mxu0
      %5962 = vmatprep.mubr.f32.mxu0 %v5865
      %5963 = vmatmul.mubr.f32.gmra.mxu0 %v5795
      %v5964 = vpop.f32.mrf.mxu0
      %v5965 = vadd.f32 %v5837, %v5964
      %v5966 = vpop.f32.mrf.mxu0
      %5967 = vmatprep.mubr.f32.mxu0 %v5868
      %5968 = vmatmul.mubr.f32.gmra.mxu0 %v5797
      %v5969 = vpop.f32.mrf.mxu0
      %v5970 = vadd.f32 %v5842, %v5969
      %v5971 = vpop.f32.mrf.mxu0
      %5972 = vmatprep.mubr.f32.mxu0 %v5871
      %5973 = vmatmul.mubr.f32.gmra.mxu0 %v5799
      %v5974 = vpop.f32.mrf.mxu0
      %v5975 = vadd.f32 %v5847, %v5974
      %v5976 = vpop.f32.mrf.mxu0
      %5977 = vdwg.mxu0
      %v5978 = vld [vmem:[%s5 + $0x130] sm:$0xff]
      %v5979 = vld [vmem:[%s5 + $0x138] sm:$0xff]
      %v5980 = vld [vmem:[%s5 + $0x140] sm:$0xff]
      %v5981 = vld [vmem:[%s5 + $0x148] sm:$0xff]
      %v5982 = vld [vmem:[%s5 + $0x150] sm:$0xff]
      %v5983 = vld [vmem:[%s5 + $0x158] sm:$0xff]
      %v5984 = vld [vmem:[%s5 + $0x160] sm:$0xff]
      %v5985 = vld [vmem:[%s5 + $0x168] sm:$0xff]
      %v5986 = vld [vmem:[%s5 + $0x170] sm:$0xff]
      %v5987 = vld [vmem:[%s5 + $0x178] sm:$0xff]
      %v5988 = vld [vmem:[%s5 + $0x180] sm:$0xff]
      %v5989 = vld [vmem:[%s5 + $0x188] sm:$0xff]
      %v5990 = vld [vmem:[%s5 + $0x190] sm:$0xff]
      %v5991 = vld [vmem:[%s5 + $0x198] sm:$0xff]
      %v5992 = vld [vmem:[%s5 + $0x1a0] sm:$0xff]
      %v5993 = vld [vmem:[%s5 + $0x1a8] sm:$0xff]
      %vm5994 = vcmask 228352
      %v5996 = vsel %vm5994, %v5940, 0
      %v5999 = vsel %vm5994, %v5945, 0
      %v6002 = vsel %vm5994, %v5950, 0
      %v6005 = vsel %vm5994, %v5955, 0
      %v6008 = vsel %vm5994, %v5960, 0
      %v6011 = vsel %vm5994, %v5965, 0
      %v6014 = vsel %vm5994, %v5970, 0
      %v6017 = vsel %vm5994, %v5975, 0
      %v6020 = vsel %vm2185, 0.035714287, 0
      %6022 = vmatprep.subr.mxu0 0.0
      %6023 = vmatpush1.msra.mxu0 0.0
      %6024 = vmatprep.subr.mxu0 0.0
      %6025 = vmatpush1.msra.mxu0 0.0
      %6026 = vmatprep.subr.mxu0 0.0
      %6027 = vmatpush1.msra.mxu0 0.0
      %6028 = vmatprep.subr.mxu0 0.0
      %6029 = vmatpush1.msra.mxu0 0.0
      %6030 = vmatprep.subr.mxu0 0.0
      %6031 = vmatpush1.msra.mxu0 0.0
      %6032 = vmatprep.subr.mxu0 0.0
      %6033 = vmatpush1.msra.mxu0 0.0
      %6034 = vmatprep.subr.mxu0 0.0
      %6035 = vmatpush1.msra.mxu0 0.0
      %6036 = vmatprep.subr.mxu0 0.0
      %6037 = vmatpush1.msra.mxu0 0.0
      %6038 = vmatprep.subr.mxu0 0.0
      %6039 = vmatpush1.msra.mxu0 0.0
      %6040 = vmatprep.subr.mxu0 0.0
      %6041 = vmatpush1.msra.mxu0 0.0
      %6042 = vmatprep.subr.mxu0 0.0
      %6043 = vmatpush1.msra.mxu0 0.0
      %6044 = vmatprep.subr.mxu0 0.0
      %6045 = vmatpush1.msra.mxu0 0.0
      %6046 = vmatprep.subr.mxu0 0.0
      %6047 = vmatpush1.msra.mxu0 %v6020
      %6048 = vmatprep.subr.mxu0 0.0
      %6049 = vmatpush1.msra.mxu0 0.035714287
      %6050 = vmatprep.subr.mxu0 0.0
      %6051 = vmatpush1.msra.mxu0 0.035714287
      %6052 = vmatprep.subr.mxu0 0.0
      %6053 = vmatpush1.msra.mxu0 0.035714287
      %6054 = vmatprep.subr.mxu0 0.0
      %6055 = vmatpush2.msra.mxu0 0.0
      %6056 = vmatprep.subr.mxu0 0.0
      %6057 = vmatpush2.msra.mxu0 0.0
      %6058 = vmatprep.subr.mxu0 0.0
      %6059 = vmatpush2.msra.mxu0 0.0
      %6060 = vmatprep.subr.mxu0 0.0
      %6061 = vmatpush2.msra.mxu0 0.0
      %6062 = vmatprep.subr.mxu0 0.0
      %6063 = vmatpush2.msra.mxu0 0.0
      %6064 = vmatprep.subr.mxu0 0.0
      %6065 = vmatpush2.msra.mxu0 0.0
      %6066 = vmatprep.subr.mxu0 0.0
      %6067 = vmatpush2.msra.mxu0 0.0
      %6068 = vmatprep.subr.mxu0 0.0
      %6069 = vmatpush2.msra.mxu0 0.0
      %6070 = vmatprep.subr.mxu0 0.0
      %6071 = vmatpush2.msra.mxu0 0.0
      %6072 = vmatprep.subr.mxu0 0.0
      %6073 = vmatpush2.msra.mxu0 0.0
      %6074 = vmatprep.subr.mxu0 0.0
      %6075 = vmatpush2.msra.mxu0 0.0
      %6076 = vmatprep.subr.mxu0 0.0
      %6077 = vmatpush2.msra.mxu0 0.0
      %6078 = vmatprep.subr.mxu0 0.0
      %6079 = vmatpush2.msra.mxu0 0.0
      %6080 = vmatprep.subr.mxu0 0.0
      %6081 = vmatpush2.msra.mxu0 0.0
      %6082 = vmatprep.subr.mxu0 0.0
      %6083 = vmatpush2.msra.mxu0 0.0
      %6084 = vmatprep.subr.mxu0 0.0
      %6085 = vmatpush2.msra.mxu0 0.0
      %6086 = vmatprep.mubr.f32.mxu0 0.0
      %6087 = vmatmul.mubr.f32.gmra.mxu0 %v5996
      %v6088 = vpop.f32.mrf.mxu0
      %v6089 = vadd.f32 0.0, %v6088
      %v6090 = vpop.f32.mrf.mxu0
      %6091 = vmatprep.mubr.f32.mxu0 0.0
      %6092 = vmatmul.mubr.f32.gmra.mxu0 %v5999
      %v6093 = vpop.f32.mrf.mxu0
      %v6094 = vadd.f32 0.0, %v6093
      %v6095 = vpop.f32.mrf.mxu0
      %6096 = vmatprep.mubr.f32.mxu0 0.0
      %6097 = vmatmul.mubr.f32.gmra.mxu0 %v6002
      %v6098 = vpop.f32.mrf.mxu0
      %v6099 = vadd.f32 0.0, %v6098
      %v6100 = vpop.f32.mrf.mxu0
      %6101 = vmatprep.mubr.f32.mxu0 0.0
      %6102 = vmatmul.mubr.f32.gmra.mxu0 %v6005
      %v6103 = vpop.f32.mrf.mxu0
      %v6104 = vadd.f32 0.0, %v6103
      %v6105 = vpop.f32.mrf.mxu0
      %6106 = vmatprep.mubr.f32.mxu0 0.0
      %6107 = vmatmul.mubr.f32.gmra.mxu0 %v6008
      %v6108 = vpop.f32.mrf.mxu0
      %v6109 = vadd.f32 0.0, %v6108
      %v6110 = vpop.f32.mrf.mxu0
      %6111 = vmatprep.mubr.f32.mxu0 0.0
      %6112 = vmatmul.mubr.f32.gmra.mxu0 %v6011
      %v6113 = vpop.f32.mrf.mxu0
      %v6114 = vadd.f32 0.0, %v6113
      %v6115 = vpop.f32.mrf.mxu0
      %6116 = vmatprep.mubr.f32.mxu0 0.0
      %6117 = vmatmul.mubr.f32.gmra.mxu0 %v6014
      %v6118 = vpop.f32.mrf.mxu0
      %v6119 = vadd.f32 0.0, %v6118
      %v6120 = vpop.f32.mrf.mxu0
      %6121 = vmatprep.mubr.f32.mxu0 0.0
      %6122 = vmatmul.mubr.f32.gmra.mxu0 %v6017
      %v6123 = vpop.f32.mrf.mxu0
      %v6124 = vadd.f32 0.0, %v6123
      %v6125 = vpop.f32.mrf.mxu0
      %6126 = vdwg.mxu0
      %v6127 = vmul.f32 %v5940, %v5940
      %v6128 = vmul.f32 %v5945, %v5945
      %v6129 = vmul.f32 %v5950, %v5950
      %v6130 = vmul.f32 %v5955, %v5955
      %v6131 = vmul.f32 %v5960, %v5960
      %v6132 = vmul.f32 %v5965, %v5965
      %v6133 = vmul.f32 %v5970, %v5970
      %v6134 = vmul.f32 %v5975, %v5975
      %v6136 = vsel %vm5994, %v6127, 0
      %v6139 = vsel %vm5994, %v6128, 0
      %v6142 = vsel %vm5994, %v6129, 0
      %v6145 = vsel %vm5994, %v6130, 0
      %v6148 = vsel %vm5994, %v6131, 0
      %v6151 = vsel %vm5994, %v6132, 0
      %v6154 = vsel %vm5994, %v6133, 0
      %v6157 = vsel %vm5994, %v6134, 0
      %6159 = vmatprep.subr.mxu0 0.0
      %6160 = vmatpush1.msra.mxu0 0.0
      %6161 = vmatprep.subr.mxu0 0.0
      %6162 = vmatpush1.msra.mxu0 0.0
      %6163 = vmatprep.subr.mxu0 0.0
      %6164 = vmatpush1.msra.mxu0 0.0
      %6165 = vmatprep.subr.mxu0 0.0
      %6166 = vmatpush1.msra.mxu0 0.0
      %6167 = vmatprep.subr.mxu0 0.0
      %6168 = vmatpush1.msra.mxu0 0.0
      %6169 = vmatprep.subr.mxu0 0.0
      %6170 = vmatpush1.msra.mxu0 0.0
      %6171 = vmatprep.subr.mxu0 0.0
      %6172 = vmatpush1.msra.mxu0 0.0
      %6173 = vmatprep.subr.mxu0 0.0
      %6174 = vmatpush1.msra.mxu0 0.0
      %6175 = vmatprep.subr.mxu0 0.0
      %6176 = vmatpush1.msra.mxu0 0.0
      %6177 = vmatprep.subr.mxu0 0.0
      %6178 = vmatpush1.msra.mxu0 0.0
      %6179 = vmatprep.subr.mxu0 0.0
      %6180 = vmatpush1.msra.mxu0 0.0
      %6181 = vmatprep.subr.mxu0 0.0
      %6182 = vmatpush1.msra.mxu0 0.0
      %6183 = vmatprep.subr.mxu0 0.0
      %6184 = vmatpush1.msra.mxu0 %v6020
      %6185 = vmatprep.subr.mxu0 0.0
      %6186 = vmatpush1.msra.mxu0 0.035714287
      %6187 = vmatprep.subr.mxu0 0.0
      %6188 = vmatpush1.msra.mxu0 0.035714287
      %6189 = vmatprep.subr.mxu0 0.0
      %6190 = vmatpush1.msra.mxu0 0.035714287
      %6191 = vmatprep.subr.mxu0 0.0
      %6192 = vmatpush2.msra.mxu0 0.0
      %6193 = vmatprep.subr.mxu0 0.0
      %6194 = vmatpush2.msra.mxu0 0.0
      %6195 = vmatprep.subr.mxu0 0.0
      %6196 = vmatpush2.msra.mxu0 0.0
      %6197 = vmatprep.subr.mxu0 0.0
      %6198 = vmatpush2.msra.mxu0 0.0
      %6199 = vmatprep.subr.mxu0 0.0
      %6200 = vmatpush2.msra.mxu0 0.0
      %6201 = vmatprep.subr.mxu0 0.0
      %6202 = vmatpush2.msra.mxu0 0.0
      %6203 = vmatprep.subr.mxu0 0.0
      %6204 = vmatpush2.msra.mxu0 0.0
      %6205 = vmatprep.subr.mxu0 0.0
      %6206 = vmatpush2.msra.mxu0 0.0
      %6207 = vmatprep.subr.mxu0 0.0
      %6208 = vmatpush2.msra.mxu0 0.0
      %6209 = vmatprep.subr.mxu0 0.0
      %6210 = vmatpush2.msra.mxu0 0.0
      %6211 = vmatprep.subr.mxu0 0.0
      %6212 = vmatpush2.msra.mxu0 0.0
      %6213 = vmatprep.subr.mxu0 0.0
      %6214 = vmatpush2.msra.mxu0 0.0
      %6215 = vmatprep.subr.mxu0 0.0
      %6216 = vmatpush2.msra.mxu0 0.0
      %6217 = vmatprep.subr.mxu0 0.0
      %6218 = vmatpush2.msra.mxu0 0.0
      %6219 = vmatprep.subr.mxu0 0.0
      %6220 = vmatpush2.msra.mxu0 0.0
      %6221 = vmatprep.subr.mxu0 0.0
      %6222 = vmatpush2.msra.mxu0 0.0
      %6223 = vmatprep.mubr.f32.mxu0 0.0
      %6224 = vmatmul.mubr.f32.gmra.mxu0 %v6136
      %v6225 = vpop.f32.mrf.mxu0
      %v6226 = vadd.f32 0.0, %v6225
      %v6227 = vpop.f32.mrf.mxu0
      %6228 = vmatprep.mubr.f32.mxu0 0.0
      %6229 = vmatmul.mubr.f32.gmra.mxu0 %v6139
      %v6230 = vpop.f32.mrf.mxu0
      %v6231 = vadd.f32 0.0, %v6230
      %v6232 = vpop.f32.mrf.mxu0
      %6233 = vmatprep.mubr.f32.mxu0 0.0
      %6234 = vmatmul.mubr.f32.gmra.mxu0 %v6142
      %v6235 = vpop.f32.mrf.mxu0
      %v6236 = vadd.f32 0.0, %v6235
      %v6237 = vpop.f32.mrf.mxu0
      %6238 = vmatprep.mubr.f32.mxu0 0.0
      %6239 = vmatmul.mubr.f32.gmra.mxu0 %v6145
      %v6240 = vpop.f32.mrf.mxu0
      %v6241 = vadd.f32 0.0, %v6240
      %v6242 = vpop.f32.mrf.mxu0
      %6243 = vmatprep.mubr.f32.mxu0 0.0
      %6244 = vmatmul.mubr.f32.gmra.mxu0 %v6148
      %v6245 = vpop.f32.mrf.mxu0
      %v6246 = vadd.f32 0.0, %v6245
      %v6247 = vpop.f32.mrf.mxu0
      %6248 = vmatprep.mubr.f32.mxu0 0.0
      %6249 = vmatmul.mubr.f32.gmra.mxu0 %v6151
      %v6250 = vpop.f32.mrf.mxu0
      %v6251 = vadd.f32 0.0, %v6250
      %v6252 = vpop.f32.mrf.mxu0
      %6253 = vmatprep.mubr.f32.mxu0 0.0
      %6254 = vmatmul.mubr.f32.gmra.mxu0 %v6154
      %v6255 = vpop.f32.mrf.mxu0
      %v6256 = vadd.f32 0.0, %v6255
      %v6257 = vpop.f32.mrf.mxu0
      %6258 = vmatprep.mubr.f32.mxu0 0.0
      %6259 = vmatmul.mubr.f32.gmra.mxu0 %v6157
      %v6260 = vpop.f32.mrf.mxu0
      %v6261 = vadd.f32 0.0, %v6260
      %v6262 = vpop.f32.mrf.mxu0
      %6263 = vdwg.mxu0
      %v6264 = vsel %vm2191, %v6089, 0.0
      %v6265 = vsel %vm2191, %v6094, 0.0
      %v6266 = vadd.f32 %v6264, %v6265
      %v6267 = vsel %vm2191, %v6099, 0.0
      %v6268 = vadd.f32 %v6266, %v6267
      %v6269 = vsel %vm2191, %v6104, 0.0
      %v6270 = vadd.f32 %v6268, %v6269
      %v6271 = vrot.slane %v6270, 4
      %v6272 = vadd.f32 %v6270, %v6271
      %v6273 = vrot.slane %v6272, 2
      %v6274 = vadd.f32 %v6272, %v6273
      %v6275 = vrot.slane %v6274, 1
      %v6276 = vadd.f32 %v6274, %v6275
      %v6277 = vrcp.pop 32.0
      %v6278 = vmul.f32 %v6276, %v6277
      %v6279 = vsel %vm2191, %v6226, 0.0
      %v6280 = vsel %vm2191, %v6231, 0.0
      %v6281 = vadd.f32 %v6279, %v6280
      %v6282 = vsel %vm2191, %v6236, 0.0
      %v6283 = vadd.f32 %v6281, %v6282
      %v6284 = vsel %vm2191, %v6241, 0.0
      %v6285 = vadd.f32 %v6283, %v6284
      %v6286 = vrot.slane %v6285, 4
      %v6287 = vadd.f32 %v6285, %v6286
      %v6288 = vrot.slane %v6287, 2
      %v6289 = vadd.f32 %v6287, %v6288
      %v6290 = vrot.slane %v6289, 1
      %v6291 = vadd.f32 %v6289, %v6290
      %v6292 = vmul.f32 %v6291, %v6277
      %v6293 = vmul.f32 %v6278, %v6278
      %v6294 = vsub.f32 %v6292, %v6293
      %v6295 = vadd.f32 %v6294, 1e-05
      %v6296 = vrsqrt.pop %v6295
      %6298 = vset.pattern.permute.xlu0 0
      %6299 = vperm.xlu0 %6298, %v6278
      %v6300 = vpop.permute.xlu0 %6299
      %v6302 = vsub.f32 %v5940, %v6300
      %v6303 = vsub.f32 %v5945, %v6300
      %v6304 = vsub.f32 %v5950, %v6300
      %v6305 = vsub.f32 %v5955, %v6300
      %6307 = vset.pattern.permute.xlu0 0
      %6308 = vperm.xlu0 %6307, %v6296
      %v6309 = vpop.permute.xlu0 %6308
      %v6311 = vmul.f32 %v6302, %v6309
      %v6312 = vmul.f32 %v6303, %v6309
      %v6313 = vmul.f32 %v6304, %v6309
      %v6314 = vmul.f32 %v6305, %v6309
      %6316 = vset.pattern.permute.xlu0 0
      %6317 = vperm.xlu0 %6316, %v5978
      %v6318 = vpop.permute.xlu0 %6317
      %6321 = vset.pattern.permute.xlu0 0
      %6322 = vperm.xlu0 %6321, %v5979
      %v6323 = vpop.permute.xlu0 %6322
      %6326 = vset.pattern.permute.xlu0 0
      %6327 = vperm.xlu0 %6326, %v5980
      %v6328 = vpop.permute.xlu0 %6327
      %6331 = vset.pattern.permute.xlu0 0
      %6332 = vperm.xlu0 %6331, %v5981
      %v6333 = vpop.permute.xlu0 %6332
      %v6335 = vmul.f32 %v6311, %v6318
      %v6336 = vmul.f32 %v6312, %v6323
      %v6337 = vmul.f32 %v6313, %v6328
      %v6338 = vmul.f32 %v6314, %v6333
      %6340 = vset.pattern.permute.xlu0 0
      %6341 = vperm.xlu0 %6340, %v5986
      %v6342 = vpop.permute.xlu0 %6341
      %6345 = vset.pattern.permute.xlu0 0
      %6346 = vperm.xlu0 %6345, %v5987
      %v6347 = vpop.permute.xlu0 %6346
      %6350 = vset.pattern.permute.xlu0 0
      %6351 = vperm.xlu0 %6350, %v5988
      %v6352 = vpop.permute.xlu0 %6351
      %6355 = vset.pattern.permute.xlu0 0
      %6356 = vperm.xlu0 %6355, %v5989
      %v6357 = vpop.permute.xlu0 %6356
      %v6359 = vadd.f32 %v6335, %v6342
      %v6360 = vadd.f32 %v6336, %v6347
      %v6361 = vadd.f32 %v6337, %v6352
      %v6362 = vadd.f32 %v6338, %v6357
      %v6363 = vsel %vm2191, %v6109, 0.0
      %v6364 = vsel %vm2191, %v6114, 0.0
      %v6365 = vadd.f32 %v6363, %v6364
      %v6366 = vsel %vm2191, %v6119, 0.0
      %v6367 = vadd.f32 %v6365, %v6366
      %v6368 = vsel %vm2191, %v6124, 0.0
      %v6369 = vadd.f32 %v6367, %v6368
      %v6370 = vrot.slane %v6369, 4
      %v6371 = vadd.f32 %v6369, %v6370
      %v6372 = vrot.slane %v6371, 2
      %v6373 = vadd.f32 %v6371, %v6372
      %v6374 = vrot.slane %v6373, 1
      %v6375 = vadd.f32 %v6373, %v6374
      %v6376 = vmul.f32 %v6375, %v6277
      %v6377 = vsel %vm2191, %v6246, 0.0
      %v6378 = vsel %vm2191, %v6251, 0.0
      %v6379 = vadd.f32 %v6377, %v6378
      %v6380 = vsel %vm2191, %v6256, 0.0
      %v6381 = vadd.f32 %v6379, %v6380
      %v6382 = vsel %vm2191, %v6261, 0.0
      %v6383 = vadd.f32 %v6381, %v6382
      %v6384 = vrot.slane %v6383, 4
      %v6385 = vadd.f32 %v6383, %v6384
      %v6386 = vrot.slane %v6385, 2
      %v6387 = vadd.f32 %v6385, %v6386
      %v6388 = vrot.slane %v6387, 1
      %v6389 = vadd.f32 %v6387, %v6388
      %v6390 = vmul.f32 %v6389, %v6277
      %v6391 = vmul.f32 %v6376, %v6376
      %v6392 = vsub.f32 %v6390, %v6391
      %v6393 = vadd.f32 %v6392, 1e-05
      %v6394 = vrsqrt.pop %v6393
      %6396 = vset.pattern.permute.xlu0 0
      %6397 = vperm.xlu0 %6396, %v6376
      %v6398 = vpop.permute.xlu0 %6397
      %v6400 = vsub.f32 %v5960, %v6398
      %v6401 = vsub.f32 %v5965, %v6398
      %v6402 = vsub.f32 %v5970, %v6398
      %v6403 = vsub.f32 %v5975, %v6398
      %6405 = vset.pattern.permute.xlu0 0
      %6406 = vperm.xlu0 %6405, %v6394
      %v6407 = vpop.permute.xlu0 %6406
      %v6409 = vmul.f32 %v6400, %v6407
      %v6410 = vmul.f32 %v6401, %v6407
      %v6411 = vmul.f32 %v6402, %v6407
      %v6412 = vmul.f32 %v6403, %v6407
      %6414 = vset.pattern.permute.xlu0 0
      %6415 = vperm.xlu0 %6414, %v5982
      %v6416 = vpop.permute.xlu0 %6415
      %6419 = vset.pattern.permute.xlu0 0
      %6420 = vperm.xlu0 %6419, %v5983
      %v6421 = vpop.permute.xlu0 %6420
      %6424 = vset.pattern.permute.xlu0 0
      %6425 = vperm.xlu0 %6424, %v5984
      %v6426 = vpop.permute.xlu0 %6425
      %6429 = vset.pattern.permute.xlu0 0
      %6430 = vperm.xlu0 %6429, %v5985
      %v6431 = vpop.permute.xlu0 %6430
      %v6433 = vmul.f32 %v6409, %v6416
      %v6434 = vmul.f32 %v6410, %v6421
      %v6435 = vmul.f32 %v6411, %v6426
      %v6436 = vmul.f32 %v6412, %v6431
      %6438 = vset.pattern.permute.xlu0 0
      %6439 = vperm.xlu0 %6438, %v5990
      %v6440 = vpop.permute.xlu0 %6439
      %6443 = vset.pattern.permute.xlu0 0
      %6444 = vperm.xlu0 %6443, %v5991
      %v6445 = vpop.permute.xlu0 %6444
      %6448 = vset.pattern.permute.xlu0 0
      %6449 = vperm.xlu0 %6448, %v5992
      %v6450 = vpop.permute.xlu0 %6449
      %6453 = vset.pattern.permute.xlu0 0
      %6454 = vperm.xlu0 %6453, %v5993
      %v6455 = vpop.permute.xlu0 %6454
      %v6457 = vadd.f32 %v6433, %v6440
      %v6458 = vadd.f32 %v6434, %v6445
      %v6459 = vadd.f32 %v6435, %v6450
      %v6460 = vadd.f32 %v6436, %v6455
      %v6461 = vmax.f32 %v6359, 0.0
      %v6462 = vmax.f32 %v6360, 0.0
      %v6463 = vmax.f32 %v6361, 0.0
      %v6464 = vmax.f32 %v6362, 0.0
      %v6465 = vmax.f32 %v6457, 0.0
      %v6466 = vmax.f32 %v6458, 0.0
      %v6467 = vmax.f32 %v6459, 0.0
      %v6468 = vmax.f32 %v6460, 0.0
      %v6469 = vld [vmem:[%s4 + $0x318] sm:$0xff]
      %v6470 = vld [vmem:[%s4 + $0x330] sm:$0xff]
      %v6471 = vld [vmem:[%s4 + $0x348] sm:$0xff]
      %v6472 = vld [vmem:[%s4 + $0x360] sm:$0xf]
      %v6474 = vsel %vm5994, %v6461, 0
      %v6477 = vsel %vm5994, %v6462, 0
      %v6480 = vsel %vm5994, %v6463, 0
      %v6483 = vsel %vm5994, %v6464, 0
      %v6486 = vsel %vm5994, %v6465, 0
      %v6489 = vsel %vm5994, %v6466, 0
      %v6492 = vsel %vm5994, %v6467, 0
      %v6495 = vsel %vm5994, %v6468, 0
      %v6498 = vsel %vm2185, %v6472, 0
      %6500 = vmatprep.subr.mxu0 0.0
      %6501 = vmatpush1.msra.mxu0 0.0
      %6502 = vmatprep.subr.mxu0 0.0
      %6503 = vmatpush1.msra.mxu0 0.0
      %6504 = vmatprep.subr.mxu0 0.0
      %6505 = vmatpush1.msra.mxu0 0.0
      %6506 = vmatprep.subr.mxu0 0.0
      %6507 = vmatpush1.msra.mxu0 0.0
      %6508 = vmatprep.subr.mxu0 0.0
      %6509 = vmatpush1.msra.mxu0 0.0
      %6510 = vmatprep.subr.mxu0 0.0
      %6511 = vmatpush1.msra.mxu0 0.0
      %6512 = vmatprep.subr.mxu0 0.0
      %6513 = vmatpush1.msra.mxu0 0.0
      %6514 = vmatprep.subr.mxu0 0.0
      %6515 = vmatpush1.msra.mxu0 0.0
      %6516 = vmatprep.subr.mxu0 0.0
      %6517 = vmatpush1.msra.mxu0 0.0
      %6518 = vmatprep.subr.mxu0 0.0
      %6519 = vmatpush1.msra.mxu0 0.0
      %6520 = vmatprep.subr.mxu0 0.0
      %6521 = vmatpush1.msra.mxu0 0.0
      %6522 = vmatprep.subr.mxu0 0.0
      %6523 = vmatpush1.msra.mxu0 0.0
      %6524 = vmatprep.subr.mxu0 0.0
      %6525 = vmatpush1.msra.mxu0 %v6498
      %6526 = vmatprep.subr.mxu0 0.0
      %6527 = vmatpush1.msra.mxu0 %v6471
      %6528 = vmatprep.subr.mxu0 0.0
      %6529 = vmatpush1.msra.mxu0 %v6470
      %6530 = vmatprep.subr.mxu0 0.0
      %6531 = vmatpush1.msra.mxu0 %v6469
      %6532 = vmatprep.subr.mxu0 0.0
      %6533 = vmatpush2.msra.mxu0 0.0
      %6534 = vmatprep.subr.mxu0 0.0
      %6535 = vmatpush2.msra.mxu0 0.0
      %6536 = vmatprep.subr.mxu0 0.0
      %6537 = vmatpush2.msra.mxu0 0.0
      %6538 = vmatprep.subr.mxu0 0.0
      %6539 = vmatpush2.msra.mxu0 0.0
      %6540 = vmatprep.subr.mxu0 0.0
      %6541 = vmatpush2.msra.mxu0 0.0
      %6542 = vmatprep.subr.mxu0 0.0
      %6543 = vmatpush2.msra.mxu0 0.0
      %6544 = vmatprep.subr.mxu0 0.0
      %6545 = vmatpush2.msra.mxu0 0.0
      %6546 = vmatprep.subr.mxu0 0.0
      %6547 = vmatpush2.msra.mxu0 0.0
      %6548 = vmatprep.subr.mxu0 0.0
      %6549 = vmatpush2.msra.mxu0 0.0
      %6550 = vmatprep.subr.mxu0 0.0
      %6551 = vmatpush2.msra.mxu0 0.0
      %6552 = vmatprep.subr.mxu0 0.0
      %6553 = vmatpush2.msra.mxu0 0.0
      %6554 = vmatprep.subr.mxu0 0.0
      %6555 = vmatpush2.msra.mxu0 0.0
      %6556 = vmatprep.subr.mxu0 0.0
      %6557 = vmatpush2.msra.mxu0 0.0
      %6558 = vmatprep.subr.mxu0 0.0
      %6559 = vmatpush2.msra.mxu0 0.0
      %6560 = vmatprep.subr.mxu0 0.0
      %6561 = vmatpush2.msra.mxu0 0.0
      %6562 = vmatprep.subr.mxu0 0.0
      %6563 = vmatpush2.msra.mxu0 0.0
      %6564 = vmatprep.mubr.f32.mxu0 0.0
      %6565 = vmatmul.mubr.f32.gmra.mxu0 %v6474
      %v6566 = vpop.f32.mrf.mxu0
      %v6567 = vadd.f32 0.0, %v6566
      %v6568 = vpop.f32.mrf.mxu0
      %6569 = vmatprep.mubr.f32.mxu0 0.0
      %6570 = vmatmul.mubr.f32.gmra.mxu0 %v6477
      %v6571 = vpop.f32.mrf.mxu0
      %v6572 = vadd.f32 0.0, %v6571
      %v6573 = vpop.f32.mrf.mxu0
      %6574 = vmatprep.mubr.f32.mxu0 0.0
      %6575 = vmatmul.mubr.f32.gmra.mxu0 %v6480
      %v6576 = vpop.f32.mrf.mxu0
      %v6577 = vadd.f32 0.0, %v6576
      %v6578 = vpop.f32.mrf.mxu0
      %6579 = vmatprep.mubr.f32.mxu0 0.0
      %6580 = vmatmul.mubr.f32.gmra.mxu0 %v6483
      %v6581 = vpop.f32.mrf.mxu0
      %v6582 = vadd.f32 0.0, %v6581
      %v6583 = vpop.f32.mrf.mxu0
      %6584 = vmatprep.mubr.f32.mxu0 0.0
      %6585 = vmatmul.mubr.f32.gmra.mxu0 %v6486
      %v6586 = vpop.f32.mrf.mxu0
      %v6587 = vadd.f32 0.0, %v6586
      %v6588 = vpop.f32.mrf.mxu0
      %6589 = vmatprep.mubr.f32.mxu0 0.0
      %6590 = vmatmul.mubr.f32.gmra.mxu0 %v6489
      %v6591 = vpop.f32.mrf.mxu0
      %v6592 = vadd.f32 0.0, %v6591
      %v6593 = vpop.f32.mrf.mxu0
      %6594 = vmatprep.mubr.f32.mxu0 0.0
      %6595 = vmatmul.mubr.f32.gmra.mxu0 %v6492
      %v6596 = vpop.f32.mrf.mxu0
      %v6597 = vadd.f32 0.0, %v6596
      %v6598 = vpop.f32.mrf.mxu0
      %6599 = vmatprep.mubr.f32.mxu0 0.0
      %6600 = vmatmul.mubr.f32.gmra.mxu0 %v6495
      %v6601 = vpop.f32.mrf.mxu0
      %v6602 = vadd.f32 0.0, %v6601
      %v6603 = vpop.f32.mrf.mxu0
      %6604 = vdwg.mxu0
      %6613 = vrot.lane.b32.xlu0 %v6567, 99
      %v6614 = vpop.permute.xlu0 %6613
      %6615 = vrot.lane.b32.xlu0 %v6572, 99
      %v6616 = vpop.permute.xlu0 %6615
      %6617 = vrot.lane.b32.xlu0 %v6577, 99
      %v6618 = vpop.permute.xlu0 %6617
      %6619 = vrot.lane.b32.xlu0 %v6582, 99
      %v6620 = vpop.permute.xlu0 %6619
      %6621 = vrot.lane.b32.xlu0 %v6587, 99
      %v6622 = vpop.permute.xlu0 %6621
      %6623 = vrot.lane.b32.xlu0 %v6592, 99
      %v6624 = vpop.permute.xlu0 %6623
      %6625 = vrot.lane.b32.xlu0 %v6597, 99
      %v6626 = vpop.permute.xlu0 %6625
      %6627 = vrot.lane.b32.xlu0 %v6602, 99
      %v6628 = vpop.permute.xlu0 %6627
      %6637 = vrot.lane.b32.xlu0 %v6567, 1
      %v6638 = vpop.permute.xlu0 %6637
      %6639 = vrot.lane.b32.xlu0 %v6572, 1
      %v6640 = vpop.permute.xlu0 %6639
      %6641 = vrot.lane.b32.xlu0 %v6577, 1
      %v6642 = vpop.permute.xlu0 %6641
      %6643 = vrot.lane.b32.xlu0 %v6582, 1
      %v6644 = vpop.permute.xlu0 %6643
      %6645 = vrot.lane.b32.xlu0 %v6587, 1
      %v6646 = vpop.permute.xlu0 %6645
      %6647 = vrot.lane.b32.xlu0 %v6592, 1
      %v6648 = vpop.permute.xlu0 %6647
      %6649 = vrot.lane.b32.xlu0 %v6597, 1
      %v6650 = vpop.permute.xlu0 %6649
      %6651 = vrot.lane.b32.xlu0 %v6602, 1
      %v6652 = vpop.permute.xlu0 %6651
      %6653 = vrot.lane.b32.xlu0 %v6614, 1
      %v6654 = vpop.permute.xlu0 %6653
      %6655 = vrot.lane.b32.xlu0 %v6616, 1
      %v6656 = vpop.permute.xlu0 %6655
      %6657 = vrot.lane.b32.xlu0 %v6618, 1
      %v6658 = vpop.permute.xlu0 %6657
      %6659 = vrot.lane.b32.xlu0 %v6620, 1
      %v6660 = vpop.permute.xlu0 %6659
      %6661 = vrot.lane.b32.xlu0 %v6622, 1
      %v6662 = vpop.permute.xlu0 %6661
      %6663 = vrot.lane.b32.xlu0 %v6624, 1
      %v6664 = vpop.permute.xlu0 %6663
      %6665 = vrot.lane.b32.xlu0 %v6626, 1
      %v6666 = vpop.permute.xlu0 %6665
      %6667 = vrot.lane.b32.xlu0 %v6628, 1
      %v6668 = vpop.permute.xlu0 %6667
      %v6685 = vsel %vm2191, 0.0, %v6638
      %v6686 = vsel %vm2191, 0.0, %v6640
      %v6687 = vsel %vm2191, 0.0, %v6642
      %v6688 = vsel %vm2191, 0.0, %v6644
      %v6689 = vsel %vm2191, 0.0, %v6646
      %v6690 = vsel %vm2191, 0.0, %v6648
      %v6691 = vsel %vm2191, 0.0, %v6650
      %v6692 = vsel %vm2191, 0.0, %v6652
      %v6693 = vsel %vm2191, 0.0, %v6654
      %v6694 = vsel %vm2191, 0.0, %v6656
      %v6695 = vsel %vm2191, 0.0, %v6658
      %v6696 = vsel %vm2191, 0.0, %v6660
      %v6697 = vsel %vm2191, 0.0, %v6662
      %v6698 = vsel %vm2191, 0.0, %v6664
      %v6699 = vsel %vm2191, 0.0, %v6666
      %v6700 = vsel %vm2191, 0.0, %v6668
      %v6701 = vsel %vm5238, %v6685, 0.0
      %v6702 = vsel %vm5238, %v6686, 0.0
      %v6703 = vsel %vm5238, %v6687, 0.0
      %v6704 = vsel %vm5238, %v6688, 0.0
      %v6705 = vsel %vm5238, %v6689, 0.0
      %v6706 = vsel %vm5238, %v6690, 0.0
      %v6707 = vsel %vm5238, %v6691, 0.0
      %v6708 = vsel %vm5238, %v6692, 0.0
      %v6709 = vsel %vm5238, %v6693, 0.0
      %v6710 = vsel %vm5238, %v6694, 0.0
      %v6711 = vsel %vm5238, %v6695, 0.0
      %v6712 = vsel %vm5238, %v6696, 0.0
      %v6713 = vsel %vm5238, %v6697, 0.0
      %v6714 = vsel %vm5238, %v6698, 0.0
      %v6715 = vsel %vm5238, %v6699, 0.0
      %v6716 = vsel %vm5238, %v6700, 0.0
      %6733 = vrot.lane.b32.xlu0 %v6701, 127
      %v6734 = vpop.permute.xlu0 %6733
      %6735 = vrot.lane.b32.xlu0 %v6702, 127
      %v6736 = vpop.permute.xlu0 %6735
      %6737 = vrot.lane.b32.xlu0 %v6703, 127
      %v6738 = vpop.permute.xlu0 %6737
      %6739 = vrot.lane.b32.xlu0 %v6704, 127
      %v6740 = vpop.permute.xlu0 %6739
      %6741 = vrot.lane.b32.xlu0 %v6705, 127
      %v6742 = vpop.permute.xlu0 %6741
      %6743 = vrot.lane.b32.xlu0 %v6706, 127
      %v6744 = vpop.permute.xlu0 %6743
      %6745 = vrot.lane.b32.xlu0 %v6707, 127
      %v6746 = vpop.permute.xlu0 %6745
      %6747 = vrot.lane.b32.xlu0 %v6708, 127
      %v6748 = vpop.permute.xlu0 %6747
      %6749 = vrot.lane.b32.xlu0 %v6709, 127
      %v6750 = vpop.permute.xlu0 %6749
      %6751 = vrot.lane.b32.xlu0 %v6710, 127
      %v6752 = vpop.permute.xlu0 %6751
      %6753 = vrot.lane.b32.xlu0 %v6711, 127
      %v6754 = vpop.permute.xlu0 %6753
      %6755 = vrot.lane.b32.xlu0 %v6712, 127
      %v6756 = vpop.permute.xlu0 %6755
      %6757 = vrot.lane.b32.xlu0 %v6713, 127
      %v6758 = vpop.permute.xlu0 %6757
      %6759 = vrot.lane.b32.xlu0 %v6714, 127
      %v6760 = vpop.permute.xlu0 %6759
      %6761 = vrot.lane.b32.xlu0 %v6715, 127
      %v6762 = vpop.permute.xlu0 %6761
      %6763 = vrot.lane.b32.xlu0 %v6716, 127
      %v6764 = vpop.permute.xlu0 %6763
      %6781 = vrot.lane.b32.xlu0 %v6701, 126
      %v6782 = vpop.permute.xlu0 %6781
      %6783 = vrot.lane.b32.xlu0 %v6702, 126
      %v6784 = vpop.permute.xlu0 %6783
      %6785 = vrot.lane.b32.xlu0 %v6703, 126
      %v6786 = vpop.permute.xlu0 %6785
      %6787 = vrot.lane.b32.xlu0 %v6704, 126
      %v6788 = vpop.permute.xlu0 %6787
      %6789 = vrot.lane.b32.xlu0 %v6705, 126
      %v6790 = vpop.permute.xlu0 %6789
      %6791 = vrot.lane.b32.xlu0 %v6706, 126
      %v6792 = vpop.permute.xlu0 %6791
      %6793 = vrot.lane.b32.xlu0 %v6707, 126
      %v6794 = vpop.permute.xlu0 %6793
      %6795 = vrot.lane.b32.xlu0 %v6708, 126
      %v6796 = vpop.permute.xlu0 %6795
      %6797 = vrot.lane.b32.xlu0 %v6709, 126
      %v6798 = vpop.permute.xlu0 %6797
      %6799 = vrot.lane.b32.xlu0 %v6710, 126
      %v6800 = vpop.permute.xlu0 %6799
      %6801 = vrot.lane.b32.xlu0 %v6711, 126
      %v6802 = vpop.permute.xlu0 %6801
      %6803 = vrot.lane.b32.xlu0 %v6712, 126
      %v6804 = vpop.permute.xlu0 %6803
      %6805 = vrot.lane.b32.xlu0 %v6713, 126
      %v6806 = vpop.permute.xlu0 %6805
      %6807 = vrot.lane.b32.xlu0 %v6714, 126
      %v6808 = vpop.permute.xlu0 %6807
      %6809 = vrot.lane.b32.xlu0 %v6715, 126
      %v6810 = vpop.permute.xlu0 %6809
      %6811 = vrot.lane.b32.xlu0 %v6716, 126
      %v6812 = vpop.permute.xlu0 %6811
      %v6829 = vld [vmem:[%s4 + $0xa08] sm:$0xff]
      %v6830 = vld [vmem:[%s4 + $0xa10] sm:$0xff]
      %v6831 = vld [vmem:[%s4 + $0xa18] sm:$0xff]
      %v6832 = vld [vmem:[%s4 + $0xa20] sm:$0xff]
      %v6833 = vld [vmem:[%s4 + $0xa28] sm:$0xff]
      %v6834 = vld [vmem:[%s4 + $0xa30] sm:$0xff]
      %v6835 = vld [vmem:[%s4 + $0xa38] sm:$0xff]
      %v6836 = vld [vmem:[%s4 + $0xa40] sm:$0xff]
      %v6837 = vld [vmem:[%s4 + $0xa48] sm:$0xff]
      %v6838 = vld [vmem:[%s4 + $0xa50] sm:$0xff]
      %v6839 = vld [vmem:[%s4 + $0xa58] sm:$0xff]
      %v6840 = vld [vmem:[%s4 + $0xa60] sm:$0xff]
      %v6841 = vld [vmem:[%s4 + $0xa68] sm:$0xff]
      %v6842 = vld [vmem:[%s4 + $0xa70] sm:$0xff]
      %v6843 = vld [vmem:[%s4 + $0xa78] sm:$0xff]
      %v6844 = vld [vmem:[%s4 + $0xa80] sm:$0xff]
      %v6845 = vld [vmem:[%s4 + $0xa88] sm:$0xff]
      %v6846 = vld [vmem:[%s4 + $0xa90] sm:$0xff]
      %v6847 = vld [vmem:[%s4 + $0xa98] sm:$0xff]
      %v6848 = vld [vmem:[%s4 + $0xaa0] sm:$0xff]
      %v6849 = vld [vmem:[%s4 + $0xaa8] sm:$0xff]
      %v6850 = vld [vmem:[%s4 + $0xab0] sm:$0xff]
      %v6851 = vld [vmem:[%s4 + $0xab8] sm:$0xff]
      %v6852 = vld [vmem:[%s4 + $0xac0] sm:$0xff]
      %v6853 = vld [vmem:[%s4 + $0xac8] sm:$0xff]
      %v6854 = vld [vmem:[%s4 + $0xad0] sm:$0xff]
      %v6855 = vld [vmem:[%s4 + $0xad8] sm:$0xff]
      %v6856 = vld [vmem:[%s4 + $0xae0] sm:$0xff]
      %v6857 = vld [vmem:[%s4 + $0xae8] sm:$0xff]
      %v6858 = vld [vmem:[%s4 + $0xaf0] sm:$0xff]
      %v6859 = vld [vmem:[%s4 + $0xaf8] sm:$0xff]
      %v6860 = vld [vmem:[%s4 + $0xb00] sm:$0xff]
      %v6861 = vld [vmem:[%s4 + $0xb08] sm:$0xff]
      %v6862 = vld [vmem:[%s4 + $0xb10] sm:$0xff]
      %v6863 = vld [vmem:[%s4 + $0xb18] sm:$0xff]
      %v6864 = vld [vmem:[%s4 + $0xb20] sm:$0xff]
      %v6865 = vld [vmem:[%s4 + $0xb28] sm:$0xff]
      %v6866 = vld [vmem:[%s4 + $0xb30] sm:$0xff]
      %v6867 = vld [vmem:[%s4 + $0xb38] sm:$0xff]
      %v6868 = vld [vmem:[%s4 + $0xb40] sm:$0xff]
      %v6869 = vld [vmem:[%s4 + $0xb48] sm:$0xff]
      %v6870 = vld [vmem:[%s4 + $0xb50] sm:$0xff]
      %v6871 = vld [vmem:[%s4 + $0xb58] sm:$0xff]
      %v6872 = vld [vmem:[%s4 + $0xb60] sm:$0xff]
      %v6873 = vld [vmem:[%s4 + $0xb68] sm:$0xff]
      %v6874 = vld [vmem:[%s4 + $0xb70] sm:$0xff]
      %v6875 = vld [vmem:[%s4 + $0xb78] sm:$0xff]
      %v6876 = vld [vmem:[%s4 + $0xb80] sm:$0xff]
      %v6877 = vld [vmem:[%s5 + $0x460] sm:$0xff]
      %v6878 = vld [vmem:[%s5 + $0x468] sm:$0xff]
      %v6879 = vld [vmem:[%s5 + $0x470] sm:$0xff]
      %v6880 = vld [vmem:[%s5 + $0x478] sm:$0xff]
      %v6881 = vld [vmem:[%s5 + $0x480] sm:$0xff]
      %v6882 = vld [vmem:[%s5 + $0x488] sm:$0xff]
      %v6883 = vld [vmem:[%s5 + $0x490] sm:$0xff]
      %v6884 = vld [vmem:[%s5 + $0x498] sm:$0xff]
      %v6885 = vld [vmem:[%s5 + $0x4a0] sm:$0xff]
      %v6886 = vld [vmem:[%s5 + $0x4a8] sm:$0xff]
      %v6887 = vld [vmem:[%s5 + $0x4b0] sm:$0xff]
      %v6888 = vld [vmem:[%s5 + $0x4b8] sm:$0xff]
      %v6889 = vld [vmem:[%s5 + $0x4c0] sm:$0xff]
      %v6890 = vld [vmem:[%s5 + $0x4c8] sm:$0xff]
      %v6891 = vld [vmem:[%s5 + $0x4d0] sm:$0xff]
      %v6892 = vld [vmem:[%s5 + $0x4d8] sm:$0xff]
      %6894 = vset.pattern.permute.xlu0 0
      %6895 = vperm.xlu0 %6894, %v6877
      %v6896 = vpop.permute.xlu0 %6895
      %6899 = vset.pattern.permute.xlu0 0
      %6900 = vperm.xlu0 %6899, %v6878
      %v6901 = vpop.permute.xlu0 %6900
      %6904 = vset.pattern.permute.xlu0 0
      %6905 = vperm.xlu0 %6904, %v6879
      %v6906 = vpop.permute.xlu0 %6905
      %6909 = vset.pattern.permute.xlu0 0
      %6910 = vperm.xlu0 %6909, %v6880
      %v6911 = vpop.permute.xlu0 %6910
      %6914 = vset.pattern.permute.xlu0 0
      %6915 = vperm.xlu0 %6914, %v6881
      %v6916 = vpop.permute.xlu0 %6915
      %6919 = vset.pattern.permute.xlu0 0
      %6920 = vperm.xlu0 %6919, %v6882
      %v6921 = vpop.permute.xlu0 %6920
      %6924 = vset.pattern.permute.xlu0 0
      %6925 = vperm.xlu0 %6924, %v6883
      %v6926 = vpop.permute.xlu0 %6925
      %6929 = vset.pattern.permute.xlu0 0
      %6930 = vperm.xlu0 %6929, %v6884
      %v6931 = vpop.permute.xlu0 %6930
      %6934 = vset.pattern.permute.xlu0 0
      %6935 = vperm.xlu0 %6934, %v6885
      %v6936 = vpop.permute.xlu0 %6935
      %6939 = vset.pattern.permute.xlu0 0
      %6940 = vperm.xlu0 %6939, %v6886
      %v6941 = vpop.permute.xlu0 %6940
      %6944 = vset.pattern.permute.xlu0 0
      %6945 = vperm.xlu0 %6944, %v6887
      %v6946 = vpop.permute.xlu0 %6945
      %6949 = vset.pattern.permute.xlu0 0
      %6950 = vperm.xlu0 %6949, %v6888
      %v6951 = vpop.permute.xlu0 %6950
      %6954 = vset.pattern.permute.xlu0 0
      %6955 = vperm.xlu0 %6954, %v6889
      %v6956 = vpop.permute.xlu0 %6955
      %6959 = vset.pattern.permute.xlu0 0
      %6960 = vperm.xlu0 %6959, %v6890
      %v6961 = vpop.permute.xlu0 %6960
      %6964 = vset.pattern.permute.xlu0 0
      %6965 = vperm.xlu0 %6964, %v6891
      %v6966 = vpop.permute.xlu0 %6965
      %6969 = vset.pattern.permute.xlu0 0
      %6970 = vperm.xlu0 %6969, %v6892
      %v6971 = vpop.permute.xlu0 %6970
      %6973 = vmatprep.subr.mxu0 0.0
      %6974 = vmatpush1.msra.mxu0 %v6716
      %6975 = vmatprep.subr.mxu0 0.0
      %6976 = vmatpush1.msra.mxu0 %v6715
      %6977 = vmatprep.subr.mxu0 0.0
      %6978 = vmatpush1.msra.mxu0 %v6714
      %6979 = vmatprep.subr.mxu0 0.0
      %6980 = vmatpush1.msra.mxu0 %v6713
      %6981 = vmatprep.subr.mxu0 0.0
      %6982 = vmatpush1.msra.mxu0 %v6712
      %6983 = vmatprep.subr.mxu0 0.0
      %6984 = vmatpush1.msra.mxu0 %v6711
      %6985 = vmatprep.subr.mxu0 0.0
      %6986 = vmatpush1.msra.mxu0 %v6710
      %6987 = vmatprep.subr.mxu0 0.0
      %6988 = vmatpush1.msra.mxu0 %v6709
      %6989 = vmatprep.subr.mxu0 0.0
      %6990 = vmatpush1.msra.mxu0 %v6708
      %6991 = vmatprep.subr.mxu0 0.0
      %6992 = vmatpush1.msra.mxu0 %v6707
      %6993 = vmatprep.subr.mxu0 0.0
      %6994 = vmatpush1.msra.mxu0 %v6706
      %6995 = vmatprep.subr.mxu0 0.0
      %6996 = vmatpush1.msra.mxu0 %v6705
      %6997 = vmatprep.subr.mxu0 0.0
      %6998 = vmatpush1.msra.mxu0 %v6704
      %6999 = vmatprep.subr.mxu0 0.0
      %7000 = vmatpush1.msra.mxu0 %v6703
      %7001 = vmatprep.subr.mxu0 0.0
      %7002 = vmatpush1.msra.mxu0 %v6702
      %7003 = vmatprep.subr.mxu0 0.0
      %7004 = vmatpush1.msra.mxu0 %v6701
      %7005 = vmatprep.subr.mxu0 0.0
      %7006 = vmatpush2.msra.mxu0 %v6764
      %7007 = vmatprep.subr.mxu0 0.0
      %7008 = vmatpush2.msra.mxu0 %v6762
      %7009 = vmatprep.subr.mxu0 0.0
      %7010 = vmatpush2.msra.mxu0 %v6760
      %7011 = vmatprep.subr.mxu0 0.0
      %7012 = vmatpush2.msra.mxu0 %v6758
      %7013 = vmatprep.subr.mxu0 0.0
      %7014 = vmatpush2.msra.mxu0 %v6756
      %7015 = vmatprep.subr.mxu0 0.0
      %7016 = vmatpush2.msra.mxu0 %v6754
      %7017 = vmatprep.subr.mxu0 0.0
      %7018 = vmatpush2.msra.mxu0 %v6752
      %7019 = vmatprep.subr.mxu0 0.0
      %7020 = vmatpush2.msra.mxu0 %v6750
      %7021 = vmatprep.subr.mxu0 0.0
      %7022 = vmatpush2.msra.mxu0 %v6748
      %7023 = vmatprep.subr.mxu0 0.0
      %7024 = vmatpush2.msra.mxu0 %v6746
      %7025 = vmatprep.subr.mxu0 0.0
      %7026 = vmatpush2.msra.mxu0 %v6744
      %7027 = vmatprep.subr.mxu0 0.0
      %7028 = vmatpush2.msra.mxu0 %v6742
      %7029 = vmatprep.subr.mxu0 0.0
      %7030 = vmatpush2.msra.mxu0 %v6740
      %7031 = vmatprep.subr.mxu0 0.0
      %7032 = vmatpush2.msra.mxu0 %v6738
      %7033 = vmatprep.subr.mxu0 0.0
      %7034 = vmatpush2.msra.mxu0 %v6736
      %7035 = vmatprep.subr.mxu0 0.0
      %7036 = vmatpush2.msra.mxu0 %v6734
      %7037 = vmatprep.mubr.f32.mxu0 %v6830
      %7038 = vmatmul.mubr.f32.gmra.mxu0 %v6829
      %v7039 = vpop.f32.mrf.mxu0
      %v7040 = vadd.f32 %v6896, %v7039
      %v7041 = vpop.f32.mrf.mxu0
      %7042 = vmatprep.mubr.f32.mxu0 %v6833
      %7043 = vmatmul.mubr.f32.gmra.mxu0 %v6832
      %v7044 = vpop.f32.mrf.mxu0
      %v7045 = vadd.f32 %v6901, %v7044
      %v7046 = vpop.f32.mrf.mxu0
      %7047 = vmatprep.mubr.f32.mxu0 %v6836
      %7048 = vmatmul.mubr.f32.gmra.mxu0 %v6835
      %v7049 = vpop.f32.mrf.mxu0
      %v7050 = vadd.f32 %v6906, %v7049
      %v7051 = vpop.f32.mrf.mxu0
      %7052 = vmatprep.mubr.f32.mxu0 %v6839
      %7053 = vmatmul.mubr.f32.gmra.mxu0 %v6838
      %v7054 = vpop.f32.mrf.mxu0
      %v7055 = vadd.f32 %v6911, %v7054
      %v7056 = vpop.f32.mrf.mxu0
      %7057 = vmatprep.mubr.f32.mxu0 %v6842
      %7058 = vmatmul.mubr.f32.gmra.mxu0 %v6841
      %v7059 = vpop.f32.mrf.mxu0
      %v7060 = vadd.f32 %v6916, %v7059
      %v7061 = vpop.f32.mrf.mxu0
      %7062 = vmatprep.mubr.f32.mxu0 %v6845
      %7063 = vmatmul.mubr.f32.gmra.mxu0 %v6844
      %v7064 = vpop.f32.mrf.mxu0
      %v7065 = vadd.f32 %v6921, %v7064
      %v7066 = vpop.f32.mrf.mxu0
      %7067 = vmatprep.mubr.f32.mxu0 %v6848
      %7068 = vmatmul.mubr.f32.gmra.mxu0 %v6847
      %v7069 = vpop.f32.mrf.mxu0
      %v7070 = vadd.f32 %v6926, %v7069
      %v7071 = vpop.f32.mrf.mxu0
      %7072 = vmatprep.mubr.f32.mxu0 %v6851
      %7073 = vmatmul.mubr.f32.gmra.mxu0 %v6850
      %v7074 = vpop.f32.mrf.mxu0
      %v7075 = vadd.f32 %v6931, %v7074
      %v7076 = vpop.f32.mrf.mxu0
      %7077 = vmatprep.mubr.f32.mxu0 %v6854
      %7078 = vmatmul.mubr.f32.gmra.mxu0 %v6853
      %v7079 = vpop.f32.mrf.mxu0
      %v7080 = vadd.f32 %v6936, %v7079
      %v7081 = vpop.f32.mrf.mxu0
      %7082 = vmatprep.mubr.f32.mxu0 %v6857
      %7083 = vmatmul.mubr.f32.gmra.mxu0 %v6856
      %v7084 = vpop.f32.mrf.mxu0
      %v7085 = vadd.f32 %v6941, %v7084
      %v7086 = vpop.f32.mrf.mxu0
      %7087 = vmatprep.mubr.f32.mxu0 %v6860
      %7088 = vmatmul.mubr.f32.gmra.mxu0 %v6859
      %v7089 = vpop.f32.mrf.mxu0
      %v7090 = vadd.f32 %v6946, %v7089
      %v7091 = vpop.f32.mrf.mxu0
      %7092 = vmatprep.mubr.f32.mxu0 %v6863
      %7093 = vmatmul.mubr.f32.gmra.mxu0 %v6862
      %v7094 = vpop.f32.mrf.mxu0
      %v7095 = vadd.f32 %v6951, %v7094
      %v7096 = vpop.f32.mrf.mxu0
      %7097 = vmatprep.mubr.f32.mxu0 %v6866
      %7098 = vmatmul.mubr.f32.gmra.mxu0 %v6865
      %v7099 = vpop.f32.mrf.mxu0
      %v7100 = vadd.f32 %v6956, %v7099
      %v7101 = vpop.f32.mrf.mxu0
      %7102 = vmatprep.mubr.f32.mxu0 %v6869
      %7103 = vmatmul.mubr.f32.gmra.mxu0 %v6868
      %v7104 = vpop.f32.mrf.mxu0
      %v7105 = vadd.f32 %v6961, %v7104
      %v7106 = vpop.f32.mrf.mxu0
      %7107 = vmatprep.mubr.f32.mxu0 %v6872
      %7108 = vmatmul.mubr.f32.gmra.mxu0 %v6871
      %v7109 = vpop.f32.mrf.mxu0
      %v7110 = vadd.f32 %v6966, %v7109
      %v7111 = vpop.f32.mrf.mxu0
      %7112 = vmatprep.mubr.f32.mxu0 %v6875
      %7113 = vmatmul.mubr.f32.gmra.mxu0 %v6874
      %v7114 = vpop.f32.mrf.mxu0
      %v7115 = vadd.f32 %v6971, %v7114
      %v7116 = vpop.f32.mrf.mxu0
      %7117 = vdwg.mxu0
      %7118 = vmatprep.subr.mxu0 0.0
      %7119 = vmatpush1.msra.mxu0 %v6812
      %7120 = vmatprep.subr.mxu0 0.0
      %7121 = vmatpush1.msra.mxu0 %v6810
      %7122 = vmatprep.subr.mxu0 0.0
      %7123 = vmatpush1.msra.mxu0 %v6808
      %7124 = vmatprep.subr.mxu0 0.0
      %7125 = vmatpush1.msra.mxu0 %v6806
      %7126 = vmatprep.subr.mxu0 0.0
      %7127 = vmatpush1.msra.mxu0 %v6804
      %7128 = vmatprep.subr.mxu0 0.0
      %7129 = vmatpush1.msra.mxu0 %v6802
      %7130 = vmatprep.subr.mxu0 0.0
      %7131 = vmatpush1.msra.mxu0 %v6800
      %7132 = vmatprep.subr.mxu0 0.0
      %7133 = vmatpush1.msra.mxu0 %v6798
      %7134 = vmatprep.subr.mxu0 0.0
      %7135 = vmatpush1.msra.mxu0 %v6796
      %7136 = vmatprep.subr.mxu0 0.0
      %7137 = vmatpush1.msra.mxu0 %v6794
      %7138 = vmatprep.subr.mxu0 0.0
      %7139 = vmatpush1.msra.mxu0 %v6792
      %7140 = vmatprep.subr.mxu0 0.0
      %7141 = vmatpush1.msra.mxu0 %v6790
      %7142 = vmatprep.subr.mxu0 0.0
      %7143 = vmatpush1.msra.mxu0 %v6788
      %7144 = vmatprep.subr.mxu0 0.0
      %7145 = vmatpush1.msra.mxu0 %v6786
      %7146 = vmatprep.subr.mxu0 0.0
      %7147 = vmatpush1.msra.mxu0 %v6784
      %7148 = vmatprep.subr.mxu0 0.0
      %7149 = vmatpush1.msra.mxu0 %v6782
      %7150 = vmatprep.subr.mxu0 0.0
      %7151 = vmatpush2.msra.mxu0 0.0
      %7152 = vmatprep.subr.mxu0 0.0
      %7153 = vmatpush2.msra.mxu0 0.0
      %7154 = vmatprep.subr.mxu0 0.0
      %7155 = vmatpush2.msra.mxu0 0.0
      %7156 = vmatprep.subr.mxu0 0.0
      %7157 = vmatpush2.msra.mxu0 0.0
      %7158 = vmatprep.subr.mxu0 0.0
      %7159 = vmatpush2.msra.mxu0 0.0
      %7160 = vmatprep.subr.mxu0 0.0
      %7161 = vmatpush2.msra.mxu0 0.0
      %7162 = vmatprep.subr.mxu0 0.0
      %7163 = vmatpush2.msra.mxu0 0.0
      %7164 = vmatprep.subr.mxu0 0.0
      %7165 = vmatpush2.msra.mxu0 0.0
      %7166 = vmatprep.subr.mxu0 0.0
      %7167 = vmatpush2.msra.mxu0 0.0
      %7168 = vmatprep.subr.mxu0 0.0
      %7169 = vmatpush2.msra.mxu0 0.0
      %7170 = vmatprep.subr.mxu0 0.0
      %7171 = vmatpush2.msra.mxu0 0.0
      %7172 = vmatprep.subr.mxu0 0.0
      %7173 = vmatpush2.msra.mxu0 0.0
      %7174 = vmatprep.subr.mxu0 0.0
      %7175 = vmatpush2.msra.mxu0 0.0
      %7176 = vmatprep.subr.mxu0 0.0
      %7177 = vmatpush2.msra.mxu0 0.0
      %7178 = vmatprep.subr.mxu0 0.0
      %7179 = vmatpush2.msra.mxu0 0.0
      %7180 = vmatprep.subr.mxu0 0.0
      %7181 = vmatpush2.msra.mxu0 0.0
      %7182 = vmatprep.mubr.f32.mxu0 0.0
      %7183 = vmatmul.mubr.f32.gmra.mxu0 %v6831
      %v7184 = vpop.f32.mrf.mxu0
      %v7185 = vadd.f32 %v7040, %v7184
      %v7186 = vpop.f32.mrf.mxu0
      %7187 = vmatprep.mubr.f32.mxu0 0.0
      %7188 = vmatmul.mubr.f32.gmra.mxu0 %v6834
      %v7189 = vpop.f32.mrf.mxu0
      %v7190 = vadd.f32 %v7045, %v7189
      %v7191 = vpop.f32.mrf.mxu0
      %7192 = vmatprep.mubr.f32.mxu0 0.0
      %7193 = vmatmul.mubr.f32.gmra.mxu0 %v6837
      %v7194 = vpop.f32.mrf.mxu0
      %v7195 = vadd.f32 %v7050, %v7194
      %v7196 = vpop.f32.mrf.mxu0
      %7197 = vmatprep.mubr.f32.mxu0 0.0
      %7198 = vmatmul.mubr.f32.gmra.mxu0 %v6840
      %v7199 = vpop.f32.mrf.mxu0
      %v7200 = vadd.f32 %v7055, %v7199
      %v7201 = vpop.f32.mrf.mxu0
      %7202 = vmatprep.mubr.f32.mxu0 0.0
      %7203 = vmatmul.mubr.f32.gmra.mxu0 %v6843
      %v7204 = vpop.f32.mrf.mxu0
      %v7205 = vadd.f32 %v7060, %v7204
      %v7206 = vpop.f32.mrf.mxu0
      %7207 = vmatprep.mubr.f32.mxu0 0.0
      %7208 = vmatmul.mubr.f32.gmra.mxu0 %v6846
      %v7209 = vpop.f32.mrf.mxu0
      %v7210 = vadd.f32 %v7065, %v7209
      %v7211 = vpop.f32.mrf.mxu0
      %7212 = vmatprep.mubr.f32.mxu0 0.0
      %7213 = vmatmul.mubr.f32.gmra.mxu0 %v6849
      %v7214 = vpop.f32.mrf.mxu0
      %v7215 = vadd.f32 %v7070, %v7214
      %v7216 = vpop.f32.mrf.mxu0
      %7217 = vmatprep.mubr.f32.mxu0 0.0
      %7218 = vmatmul.mubr.f32.gmra.mxu0 %v6852
      %v7219 = vpop.f32.mrf.mxu0
      %v7220 = vadd.f32 %v7075, %v7219
      %v7221 = vpop.f32.mrf.mxu0
      %7222 = vmatprep.mubr.f32.mxu0 0.0
      %7223 = vmatmul.mubr.f32.gmra.mxu0 %v6855
      %v7224 = vpop.f32.mrf.mxu0
      %v7225 = vadd.f32 %v7080, %v7224
      %v7226 = vpop.f32.mrf.mxu0
      %7227 = vmatprep.mubr.f32.mxu0 0.0
      %7228 = vmatmul.mubr.f32.gmra.mxu0 %v6858
      %v7229 = vpop.f32.mrf.mxu0
      %v7230 = vadd.f32 %v7085, %v7229
      %v7231 = vpop.f32.mrf.mxu0
      %7232 = vmatprep.mubr.f32.mxu0 0.0
      %7233 = vmatmul.mubr.f32.gmra.mxu0 %v6861
      %v7234 = vpop.f32.mrf.mxu0
      %v7235 = vadd.f32 %v7090, %v7234
      %v7236 = vpop.f32.mrf.mxu0
      %7237 = vmatprep.mubr.f32.mxu0 0.0
      %7238 = vmatmul.mubr.f32.gmra.mxu0 %v6864
      %v7239 = vpop.f32.mrf.mxu0
      %v7240 = vadd.f32 %v7095, %v7239
      %v7241 = vpop.f32.mrf.mxu0
      %7242 = vmatprep.mubr.f32.mxu0 0.0
      %7243 = vmatmul.mubr.f32.gmra.mxu0 %v6867
      %v7244 = vpop.f32.mrf.mxu0
      %v7245 = vadd.f32 %v7100, %v7244
      %v7246 = vpop.f32.mrf.mxu0
      %7247 = vmatprep.mubr.f32.mxu0 0.0
      %7248 = vmatmul.mubr.f32.gmra.mxu0 %v6870
      %v7249 = vpop.f32.mrf.mxu0
      %v7250 = vadd.f32 %v7105, %v7249
      %v7251 = vpop.f32.mrf.mxu0
      %7252 = vmatprep.mubr.f32.mxu0 0.0
      %7253 = vmatmul.mubr.f32.gmra.mxu0 %v6873
      %v7254 = vpop.f32.mrf.mxu0
      %v7255 = vadd.f32 %v7110, %v7254
      %v7256 = vpop.f32.mrf.mxu0
      %7257 = vmatprep.mubr.f32.mxu0 0.0
      %7258 = vmatmul.mubr.f32.gmra.mxu0 %v6876
      %v7259 = vpop.f32.mrf.mxu0
      %v7260 = vadd.f32 %v7115, %v7259
      %v7261 = vpop.f32.mrf.mxu0
      %7262 = vdwg.mxu0
      %v7263 = vmax.f32 %v7185, 0.0
      %v7264 = vmax.f32 %v7190, 0.0
      %v7265 = vmax.f32 %v7195, 0.0
      %v7266 = vmax.f32 %v7200, 0.0
      %v7267 = vmax.f32 %v7205, 0.0
      %v7268 = vmax.f32 %v7210, 0.0
      %v7269 = vmax.f32 %v7215, 0.0
      %v7270 = vmax.f32 %v7220, 0.0
      %v7271 = vmax.f32 %v7225, 0.0
      %v7272 = vmax.f32 %v7230, 0.0
      %v7273 = vmax.f32 %v7235, 0.0
      %v7274 = vmax.f32 %v7240, 0.0
      %v7275 = vmax.f32 %v7245, 0.0
      %v7276 = vmax.f32 %v7250, 0.0
      %v7277 = vmax.f32 %v7255, 0.0
      %v7278 = vmax.f32 %v7260, 0.0
      %v7280 = vsel %vm4490, %v7263, 0
      %v7283 = vsel %vm4490, %v7264, 0
      %v7286 = vsel %vm4490, %v7265, 0
      %v7289 = vsel %vm4490, %v7266, 0
      %v7292 = vsel %vm4490, %v7267, 0
      %v7295 = vsel %vm4490, %v7268, 0
      %v7298 = vsel %vm4490, %v7269, 0
      %v7301 = vsel %vm4490, %v7270, 0
      %v7304 = vsel %vm4490, %v7271, 0
      %v7307 = vsel %vm4490, %v7272, 0
      %v7310 = vsel %vm4490, %v7273, 0
      %v7313 = vsel %vm4490, %v7274, 0
      %v7316 = vsel %vm4490, %v7275, 0
      %v7319 = vsel %vm4490, %v7276, 0
      %v7322 = vsel %vm4490, %v7277, 0
      %v7325 = vsel %vm4490, %v7278, 0
      %7327 = vmatprep.subr.mxu0 0.0
      %7328 = vmatpush1.msra.mxu0 0.0
      %7329 = vmatprep.subr.mxu0 0.0
      %7330 = vmatpush1.msra.mxu0 0.0
      %7331 = vmatprep.subr.mxu0 0.0
      %7332 = vmatpush1.msra.mxu0 0.0
      %7333 = vmatprep.subr.mxu0 0.0
      %7334 = vmatpush1.msra.mxu0 0.0
      %7335 = vmatprep.subr.mxu0 0.0
      %7336 = vmatpush1.msra.mxu0 0.0
      %7337 = vmatprep.subr.mxu0 0.0
      %7338 = vmatpush1.msra.mxu0 0.0
      %7339 = vmatprep.subr.mxu0 0.0
      %7340 = vmatpush1.msra.mxu0 0.0
      %7341 = vmatprep.subr.mxu0 0.0
      %7342 = vmatpush1.msra.mxu0 0.0
      %7343 = vmatprep.subr.mxu0 0.0
      %7344 = vmatpush1.msra.mxu0 0.0
      %7345 = vmatprep.subr.mxu0 0.0
      %7346 = vmatpush1.msra.mxu0 0.0
      %7347 = vmatprep.subr.mxu0 0.0
      %7348 = vmatpush1.msra.mxu0 0.0
      %7349 = vmatprep.subr.mxu0 0.0
      %7350 = vmatpush1.msra.mxu0 0.0
      %7351 = vmatprep.subr.mxu0 0.0
      %7352 = vmatpush1.msra.mxu0 %v4504
      %7353 = vmatprep.subr.mxu0 0.0
      %7354 = vmatpush1.msra.mxu0 0.03448276
      %7355 = vmatprep.subr.mxu0 0.0
      %7356 = vmatpush1.msra.mxu0 0.03448276
      %7357 = vmatprep.subr.mxu0 0.0
      %7358 = vmatpush1.msra.mxu0 0.03448276
      %7359 = vmatprep.subr.mxu0 0.0
      %7360 = vmatpush2.msra.mxu0 0.0
      %7361 = vmatprep.subr.mxu0 0.0
      %7362 = vmatpush2.msra.mxu0 0.0
      %7363 = vmatprep.subr.mxu0 0.0
      %7364 = vmatpush2.msra.mxu0 0.0
      %7365 = vmatprep.subr.mxu0 0.0
      %7366 = vmatpush2.msra.mxu0 0.0
      %7367 = vmatprep.subr.mxu0 0.0
      %7368 = vmatpush2.msra.mxu0 0.0
      %7369 = vmatprep.subr.mxu0 0.0
      %7370 = vmatpush2.msra.mxu0 0.0
      %7371 = vmatprep.subr.mxu0 0.0
      %7372 = vmatpush2.msra.mxu0 0.0
      %7373 = vmatprep.subr.mxu0 0.0
      %7374 = vmatpush2.msra.mxu0 0.0
      %7375 = vmatprep.subr.mxu0 0.0
      %7376 = vmatpush2.msra.mxu0 0.0
      %7377 = vmatprep.subr.mxu0 0.0
      %7378 = vmatpush2.msra.mxu0 0.0
      %7379 = vmatprep.subr.mxu0 0.0
      %7380 = vmatpush2.msra.mxu0 0.0
      %7381 = vmatprep.subr.mxu0 0.0
      %7382 = vmatpush2.msra.mxu0 0.0
      %7383 = vmatprep.subr.mxu0 0.0
      %7384 = vmatpush2.msra.mxu0 0.0
      %7385 = vmatprep.subr.mxu0 0.0
      %7386 = vmatpush2.msra.mxu0 0.0
      %7387 = vmatprep.subr.mxu0 0.0
      %7388 = vmatpush2.msra.mxu0 0.0
      %7389 = vmatprep.subr.mxu0 0.0
      %7390 = vmatpush2.msra.mxu0 0.0
      %7391 = vmatprep.mubr.f32.mxu0 0.0
      %7392 = vmatmul.mubr.f32.gmra.mxu0 %v7280
      %v7393 = vpop.f32.mrf.mxu0
      %v7394 = vadd.f32 0.0, %v7393
      %v7395 = vpop.f32.mrf.mxu0
      %7396 = vmatprep.mubr.f32.mxu0 0.0
      %7397 = vmatmul.mubr.f32.gmra.mxu0 %v7283
      %v7398 = vpop.f32.mrf.mxu0
      %v7399 = vadd.f32 0.0, %v7398
      %v7400 = vpop.f32.mrf.mxu0
      %7401 = vmatprep.mubr.f32.mxu0 0.0
      %7402 = vmatmul.mubr.f32.gmra.mxu0 %v7286
      %v7403 = vpop.f32.mrf.mxu0
      %v7404 = vadd.f32 0.0, %v7403
      %v7405 = vpop.f32.mrf.mxu0
      %7406 = vmatprep.mubr.f32.mxu0 0.0
      %7407 = vmatmul.mubr.f32.gmra.mxu0 %v7289
      %v7408 = vpop.f32.mrf.mxu0
      %v7409 = vadd.f32 0.0, %v7408
      %v7410 = vpop.f32.mrf.mxu0
      %7411 = vmatprep.mubr.f32.mxu0 0.0
      %7412 = vmatmul.mubr.f32.gmra.mxu0 %v7292
      %v7413 = vpop.f32.mrf.mxu0
      %v7414 = vadd.f32 0.0, %v7413
      %v7415 = vpop.f32.mrf.mxu0
      %7416 = vmatprep.mubr.f32.mxu0 0.0
      %7417 = vmatmul.mubr.f32.gmra.mxu0 %v7295
      %v7418 = vpop.f32.mrf.mxu0
      %v7419 = vadd.f32 0.0, %v7418
      %v7420 = vpop.f32.mrf.mxu0
      %7421 = vmatprep.mubr.f32.mxu0 0.0
      %7422 = vmatmul.mubr.f32.gmra.mxu0 %v7298
      %v7423 = vpop.f32.mrf.mxu0
      %v7424 = vadd.f32 0.0, %v7423
      %v7425 = vpop.f32.mrf.mxu0
      %7426 = vmatprep.mubr.f32.mxu0 0.0
      %7427 = vmatmul.mubr.f32.gmra.mxu0 %v7301
      %v7428 = vpop.f32.mrf.mxu0
      %v7429 = vadd.f32 0.0, %v7428
      %v7430 = vpop.f32.mrf.mxu0
      %7431 = vmatprep.mubr.f32.mxu0 0.0
      %7432 = vmatmul.mubr.f32.gmra.mxu0 %v7304
      %v7433 = vpop.f32.mrf.mxu0
      %v7434 = vadd.f32 0.0, %v7433
      %v7435 = vpop.f32.mrf.mxu0
      %7436 = vmatprep.mubr.f32.mxu0 0.0
      %7437 = vmatmul.mubr.f32.gmra.mxu0 %v7307
      %v7438 = vpop.f32.mrf.mxu0
      %v7439 = vadd.f32 0.0, %v7438
      %v7440 = vpop.f32.mrf.mxu0
      %7441 = vmatprep.mubr.f32.mxu0 0.0
      %7442 = vmatmul.mubr.f32.gmra.mxu0 %v7310
      %v7443 = vpop.f32.mrf.mxu0
      %v7444 = vadd.f32 0.0, %v7443
      %v7445 = vpop.f32.mrf.mxu0
      %7446 = vmatprep.mubr.f32.mxu0 0.0
      %7447 = vmatmul.mubr.f32.gmra.mxu0 %v7313
      %v7448 = vpop.f32.mrf.mxu0
      %v7449 = vadd.f32 0.0, %v7448
      %v7450 = vpop.f32.mrf.mxu0
      %7451 = vmatprep.mubr.f32.mxu0 0.0
      %7452 = vmatmul.mubr.f32.gmra.mxu0 %v7316
      %v7453 = vpop.f32.mrf.mxu0
      %v7454 = vadd.f32 0.0, %v7453
      %v7455 = vpop.f32.mrf.mxu0
      %7456 = vmatprep.mubr.f32.mxu0 0.0
      %7457 = vmatmul.mubr.f32.gmra.mxu0 %v7319
      %v7458 = vpop.f32.mrf.mxu0
      %v7459 = vadd.f32 0.0, %v7458
      %v7460 = vpop.f32.mrf.mxu0
      %7461 = vmatprep.mubr.f32.mxu0 0.0
      %7462 = vmatmul.mubr.f32.gmra.mxu0 %v7322
      %v7463 = vpop.f32.mrf.mxu0
      %v7464 = vadd.f32 0.0, %v7463
      %v7465 = vpop.f32.mrf.mxu0
      %7466 = vmatprep.mubr.f32.mxu0 0.0
      %7467 = vmatmul.mubr.f32.gmra.mxu0 %v7325
      %v7468 = vpop.f32.mrf.mxu0
      %v7469 = vadd.f32 0.0, %v7468
      %v7470 = vpop.f32.mrf.mxu0
      %7471 = vdwg.mxu0
      %v7472 = vld [vmem:[%s4 + $0xb88] sm:$0xff]
      %v7473 = vld [vmem:[%s4 + $0xba0] sm:$0xff]
      %v7474 = vld [vmem:[%s4 + $0xbb8] sm:$0xff]
      %v7475 = vld [vmem:[%s4 + $0xbd0] sm:$0xff]
      %v7476 = vld [vmem:[%s4 + $0xbe8] sm:$0xff]
      %v7477 = vld [vmem:[%s4 + $0xc00] sm:$0xff]
      %v7478 = vld [vmem:[%s4 + $0xc18] sm:$0xff]
      %v7479 = vld [vmem:[%s4 + $0xc30] sm:$0xff]
      %v7480 = vld [vmem:[%s5 + $0x4e0] sm:$0xff]
      %v7481 = vld [vmem:[%s5 + $0x4e8] sm:$0xff]
      %v7482 = vld [vmem:[%s5 + $0x4f0] sm:$0xff]
      %v7483 = vld [vmem:[%s5 + $0x4f8] sm:$0xff]
      %v7484 = vld [vmem:[%s5 + $0x500] sm:$0xff]
      %v7485 = vld [vmem:[%s5 + $0x508] sm:$0xff]
      %v7486 = vld [vmem:[%s5 + $0x510] sm:$0xff]
      %v7487 = vld [vmem:[%s5 + $0x518] sm:$0xff]
      %7488 = vmatprep.subr.mxu0 0.0
      %7489 = vmatpush1.msra.mxu0 %v7469
      %7490 = vmatprep.subr.mxu0 0.0
      %7491 = vmatpush1.msra.mxu0 %v7464
      %7492 = vmatprep.subr.mxu0 0.0
      %7493 = vmatpush1.msra.mxu0 %v7459
      %7494 = vmatprep.subr.mxu0 0.0
      %7495 = vmatpush1.msra.mxu0 %v7454
      %7496 = vmatprep.subr.mxu0 0.0
      %7497 = vmatpush1.msra.mxu0 %v7449
      %7498 = vmatprep.subr.mxu0 0.0
      %7499 = vmatpush1.msra.mxu0 %v7444
      %7500 = vmatprep.subr.mxu0 0.0
      %7501 = vmatpush1.msra.mxu0 %v7439
      %7502 = vmatprep.subr.mxu0 0.0
      %7503 = vmatpush1.msra.mxu0 %v7434
      %7504 = vmatprep.subr.mxu0 0.0
      %7505 = vmatpush1.msra.mxu0 %v7429
      %7506 = vmatprep.subr.mxu0 0.0
      %7507 = vmatpush1.msra.mxu0 %v7424
      %7508 = vmatprep.subr.mxu0 0.0
      %7509 = vmatpush1.msra.mxu0 %v7419
      %7510 = vmatprep.subr.mxu0 0.0
      %7511 = vmatpush1.msra.mxu0 %v7414
      %7512 = vmatprep.subr.mxu0 0.0
      %7513 = vmatpush1.msra.mxu0 %v7409
      %7514 = vmatprep.subr.mxu0 0.0
      %7515 = vmatpush1.msra.mxu0 %v7404
      %7516 = vmatprep.subr.mxu0 0.0
      %7517 = vmatpush1.msra.mxu0 %v7399
      %7518 = vmatprep.subr.mxu0 0.0
      %7519 = vmatpush1.msra.mxu0 %v7394
      %7520 = vmatprep.subr.mxu0 0.0
      %7521 = vmatpush2.msra.mxu0 0.0
      %7522 = vmatprep.subr.mxu0 0.0
      %7523 = vmatpush2.msra.mxu0 0.0
      %7524 = vmatprep.subr.mxu0 0.0
      %7525 = vmatpush2.msra.mxu0 0.0
      %7526 = vmatprep.subr.mxu0 0.0
      %7527 = vmatpush2.msra.mxu0 0.0
      %7528 = vmatprep.subr.mxu0 0.0
      %7529 = vmatpush2.msra.mxu0 0.0
      %7530 = vmatprep.subr.mxu0 0.0
      %7531 = vmatpush2.msra.mxu0 0.0
      %7532 = vmatprep.subr.mxu0 0.0
      %7533 = vmatpush2.msra.mxu0 0.0
      %7534 = vmatprep.subr.mxu0 0.0
      %7535 = vmatpush2.msra.mxu0 0.0
      %7536 = vmatprep.subr.mxu0 0.0
      %7537 = vmatpush2.msra.mxu0 0.0
      %7538 = vmatprep.subr.mxu0 0.0
      %7539 = vmatpush2.msra.mxu0 0.0
      %7540 = vmatprep.subr.mxu0 0.0
      %7541 = vmatpush2.msra.mxu0 0.0
      %7542 = vmatprep.subr.mxu0 0.0
      %7543 = vmatpush2.msra.mxu0 0.0
      %7544 = vmatprep.subr.mxu0 0.0
      %7545 = vmatpush2.msra.mxu0 0.0
      %7546 = vmatprep.subr.mxu0 0.0
      %7547 = vmatpush2.msra.mxu0 0.0
      %7548 = vmatprep.subr.mxu0 0.0
      %7549 = vmatpush2.msra.mxu0 0.0
      %7550 = vmatprep.subr.mxu0 0.0
      %7551 = vmatpush2.msra.mxu0 0.0
      %7552 = vmatprep.mubr.f32.mxu0 0.0
      %7553 = vmatmul.mubr.f32.gmra.mxu0 %v7472
      %v7554 = vpop.f32.mrf.mxu0
      %v7555 = vadd.f32 %v7480, %v7554
      %v7556 = vpop.f32.mrf.mxu0
      %7557 = vmatprep.mubr.f32.mxu0 0.0
      %7558 = vmatmul.mubr.f32.gmra.mxu0 %v7473
      %v7559 = vpop.f32.mrf.mxu0
      %v7560 = vadd.f32 %v7481, %v7559
      %v7561 = vpop.f32.mrf.mxu0
      %7562 = vmatprep.mubr.f32.mxu0 0.0
      %7563 = vmatmul.mubr.f32.gmra.mxu0 %v7474
      %v7564 = vpop.f32.mrf.mxu0
      %v7565 = vadd.f32 %v7482, %v7564
      %v7566 = vpop.f32.mrf.mxu0
      %7567 = vmatprep.mubr.f32.mxu0 0.0
      %7568 = vmatmul.mubr.f32.gmra.mxu0 %v7475
      %v7569 = vpop.f32.mrf.mxu0
      %v7570 = vadd.f32 %v7483, %v7569
      %v7571 = vpop.f32.mrf.mxu0
      %7572 = vmatprep.mubr.f32.mxu0 0.0
      %7573 = vmatmul.mubr.f32.gmra.mxu0 %v7476
      %v7574 = vpop.f32.mrf.mxu0
      %v7575 = vadd.f32 %v7484, %v7574
      %v7576 = vpop.f32.mrf.mxu0
      %7577 = vmatprep.mubr.f32.mxu0 0.0
      %7578 = vmatmul.mubr.f32.gmra.mxu0 %v7477
      %v7579 = vpop.f32.mrf.mxu0
      %v7580 = vadd.f32 %v7485, %v7579
      %v7581 = vpop.f32.mrf.mxu0
      %7582 = vmatprep.mubr.f32.mxu0 0.0
      %7583 = vmatmul.mubr.f32.gmra.mxu0 %v7478
      %v7584 = vpop.f32.mrf.mxu0
      %v7585 = vadd.f32 %v7486, %v7584
      %v7586 = vpop.f32.mrf.mxu0
      %7587 = vmatprep.mubr.f32.mxu0 0.0
      %7588 = vmatmul.mubr.f32.gmra.mxu0 %v7479
      %v7589 = vpop.f32.mrf.mxu0
      %v7590 = vadd.f32 %v7487, %v7589
      %v7591 = vpop.f32.mrf.mxu0
      %7592 = vdwg.mxu0
      %v7593 = vmax.f32 %v7555, 0.0
      %v7594 = vmax.f32 %v7560, 0.0
      %v7595 = vmax.f32 %v7565, 0.0
      %v7596 = vmax.f32 %v7570, 0.0
      %v7597 = vmax.f32 %v7575, 0.0
      %v7598 = vmax.f32 %v7580, 0.0
      %v7599 = vmax.f32 %v7585, 0.0
      %v7600 = vmax.f32 %v7590, 0.0
      %v7601 = vld [vmem:[%s4 + $0xc48] sm:$0xff]
      %v7602 = vld [vmem:[%s4 + $0xc60] sm:$0xff]
      %v7603 = vld [vmem:[%s4 + $0xc78] sm:$0xff]
      %v7604 = vld [vmem:[%s4 + $0xc90] sm:$0xff]
      %v7605 = vld [vmem:[%s4 + $0xca8] sm:$0xff]
      %v7606 = vld [vmem:[%s4 + $0xcc0] sm:$0xff]
      %v7607 = vld [vmem:[%s4 + $0xcd8] sm:$0xff]
      %v7608 = vld [vmem:[%s4 + $0xcf0] sm:$0xff]
      %v7609 = vld [vmem:[%s4 + $0xd08] sm:$0xff]
      %v7610 = vld [vmem:[%s4 + $0xd20] sm:$0xff]
      %v7611 = vld [vmem:[%s4 + $0xd38] sm:$0xff]
      %v7612 = vld [vmem:[%s4 + $0xd50] sm:$0xff]
      %v7613 = vld [vmem:[%s4 + $0xd68] sm:$0xff]
      %v7614 = vld [vmem:[%s4 + $0xd80] sm:$0xff]
      %v7615 = vld [vmem:[%s4 + $0xd98] sm:$0xff]
      %v7616 = vld [vmem:[%s4 + $0xdb0] sm:$0xff]
      %v7617 = vld [vmem:[%s5 + $0x520] sm:$0xff]
      %v7618 = vld [vmem:[%s5 + $0x528] sm:$0xff]
      %v7619 = vld [vmem:[%s5 + $0x530] sm:$0xff]
      %v7620 = vld [vmem:[%s5 + $0x538] sm:$0xff]
      %v7621 = vld [vmem:[%s5 + $0x540] sm:$0xff]
      %v7622 = vld [vmem:[%s5 + $0x548] sm:$0xff]
      %v7623 = vld [vmem:[%s5 + $0x550] sm:$0xff]
      %v7624 = vld [vmem:[%s5 + $0x558] sm:$0xff]
      %v7625 = vld [vmem:[%s5 + $0x560] sm:$0xff]
      %v7626 = vld [vmem:[%s5 + $0x568] sm:$0xff]
      %v7627 = vld [vmem:[%s5 + $0x570] sm:$0xff]
      %v7628 = vld [vmem:[%s5 + $0x578] sm:$0xff]
      %v7629 = vld [vmem:[%s5 + $0x580] sm:$0xff]
      %v7630 = vld [vmem:[%s5 + $0x588] sm:$0xff]
      %v7631 = vld [vmem:[%s5 + $0x590] sm:$0xff]
      %v7632 = vld [vmem:[%s5 + $0x598] sm:$0xff]
      %v7634 = vsel %vm1507, %v7601, 0
      %v7637 = vsel %vm1507, %v7602, 0
      %v7640 = vsel %vm1507, %v7603, 0
      %v7643 = vsel %vm1507, %v7604, 0
      %v7646 = vsel %vm1507, %v7605, 0
      %v7649 = vsel %vm1507, %v7606, 0
      %v7652 = vsel %vm1507, %v7607, 0
      %v7655 = vsel %vm1507, %v7608, 0
      %v7658 = vsel %vm1507, %v7609, 0
      %v7661 = vsel %vm1507, %v7610, 0
      %v7664 = vsel %vm1507, %v7611, 0
      %v7667 = vsel %vm1507, %v7612, 0
      %v7670 = vsel %vm1507, %v7613, 0
      %v7673 = vsel %vm1507, %v7614, 0
      %v7676 = vsel %vm1507, %v7615, 0
      %v7679 = vsel %vm1507, %v7616, 0
      %7681 = vmatprep.subr.mxu0 0.0
      %7682 = vmatpush1.msra.mxu0 0.0
      %7683 = vmatprep.subr.mxu0 0.0
      %7684 = vmatpush1.msra.mxu0 0.0
      %7685 = vmatprep.subr.mxu0 0.0
      %7686 = vmatpush1.msra.mxu0 0.0
      %7687 = vmatprep.subr.mxu0 0.0
      %7688 = vmatpush1.msra.mxu0 0.0
      %7689 = vmatprep.subr.mxu0 0.0
      %7690 = vmatpush1.msra.mxu0 0.0
      %7691 = vmatprep.subr.mxu0 0.0
      %7692 = vmatpush1.msra.mxu0 0.0
      %7693 = vmatprep.subr.mxu0 0.0
      %7694 = vmatpush1.msra.mxu0 0.0
      %7695 = vmatprep.subr.mxu0 0.0
      %7696 = vmatpush1.msra.mxu0 0.0
      %7697 = vmatprep.subr.mxu0 0.0
      %7698 = vmatpush1.msra.mxu0 %v7600
      %7699 = vmatprep.subr.mxu0 0.0
      %7700 = vmatpush1.msra.mxu0 %v7599
      %7701 = vmatprep.subr.mxu0 0.0
      %7702 = vmatpush1.msra.mxu0 %v7598
      %7703 = vmatprep.subr.mxu0 0.0
      %7704 = vmatpush1.msra.mxu0 %v7597
      %7705 = vmatprep.subr.mxu0 0.0
      %7706 = vmatpush1.msra.mxu0 %v7596
      %7707 = vmatprep.subr.mxu0 0.0
      %7708 = vmatpush1.msra.mxu0 %v7595
      %7709 = vmatprep.subr.mxu0 0.0
      %7710 = vmatpush1.msra.mxu0 %v7594
      %7711 = vmatprep.subr.mxu0 0.0
      %7712 = vmatpush1.msra.mxu0 %v7593
      %7713 = vmatprep.subr.mxu0 0.0
      %7714 = vmatpush2.msra.mxu0 0.0
      %7715 = vmatprep.subr.mxu0 0.0
      %7716 = vmatpush2.msra.mxu0 0.0
      %7717 = vmatprep.subr.mxu0 0.0
      %7718 = vmatpush2.msra.mxu0 0.0
      %7719 = vmatprep.subr.mxu0 0.0
      %7720 = vmatpush2.msra.mxu0 0.0
      %7721 = vmatprep.subr.mxu0 0.0
      %7722 = vmatpush2.msra.mxu0 0.0
      %7723 = vmatprep.subr.mxu0 0.0
      %7724 = vmatpush2.msra.mxu0 0.0
      %7725 = vmatprep.subr.mxu0 0.0
      %7726 = vmatpush2.msra.mxu0 0.0
      %7727 = vmatprep.subr.mxu0 0.0
      %7728 = vmatpush2.msra.mxu0 0.0
      %7729 = vmatprep.subr.mxu0 0.0
      %7730 = vmatpush2.msra.mxu0 0.0
      %7731 = vmatprep.subr.mxu0 0.0
      %7732 = vmatpush2.msra.mxu0 0.0
      %7733 = vmatprep.subr.mxu0 0.0
      %7734 = vmatpush2.msra.mxu0 0.0
      %7735 = vmatprep.subr.mxu0 0.0
      %7736 = vmatpush2.msra.mxu0 0.0
      %7737 = vmatprep.subr.mxu0 0.0
      %7738 = vmatpush2.msra.mxu0 0.0
      %7739 = vmatprep.subr.mxu0 0.0
      %7740 = vmatpush2.msra.mxu0 0.0
      %7741 = vmatprep.subr.mxu0 0.0
      %7742 = vmatpush2.msra.mxu0 0.0
      %7743 = vmatprep.subr.mxu0 0.0
      %7744 = vmatpush2.msra.mxu0 0.0
      %7745 = vmatprep.mubr.f32.mxu0 0.0
      %7746 = vmatmul.mubr.f32.gmra.mxu0 %v7634
      %v7747 = vpop.f32.mrf.mxu0
      %v7748 = vadd.f32 %v7617, %v7747
      %v7749 = vpop.f32.mrf.mxu0
      %7750 = vmatprep.mubr.f32.mxu0 0.0
      %7751 = vmatmul.mubr.f32.gmra.mxu0 %v7637
      %v7752 = vpop.f32.mrf.mxu0
      %v7753 = vadd.f32 %v7618, %v7752
      %v7754 = vpop.f32.mrf.mxu0
      %7755 = vmatprep.mubr.f32.mxu0 0.0
      %7756 = vmatmul.mubr.f32.gmra.mxu0 %v7640
      %v7757 = vpop.f32.mrf.mxu0
      %v7758 = vadd.f32 %v7619, %v7757
      %v7759 = vpop.f32.mrf.mxu0
      %7760 = vmatprep.mubr.f32.mxu0 0.0
      %7761 = vmatmul.mubr.f32.gmra.mxu0 %v7643
      %v7762 = vpop.f32.mrf.mxu0
      %v7763 = vadd.f32 %v7620, %v7762
      %v7764 = vpop.f32.mrf.mxu0
      %7765 = vmatprep.mubr.f32.mxu0 0.0
      %7766 = vmatmul.mubr.f32.gmra.mxu0 %v7646
      %v7767 = vpop.f32.mrf.mxu0
      %v7768 = vadd.f32 %v7621, %v7767
      %v7769 = vpop.f32.mrf.mxu0
      %7770 = vmatprep.mubr.f32.mxu0 0.0
      %7771 = vmatmul.mubr.f32.gmra.mxu0 %v7649
      %v7772 = vpop.f32.mrf.mxu0
      %v7773 = vadd.f32 %v7622, %v7772
      %v7774 = vpop.f32.mrf.mxu0
      %7775 = vmatprep.mubr.f32.mxu0 0.0
      %7776 = vmatmul.mubr.f32.gmra.mxu0 %v7652
      %v7777 = vpop.f32.mrf.mxu0
      %v7778 = vadd.f32 %v7623, %v7777
      %v7779 = vpop.f32.mrf.mxu0
      %7780 = vmatprep.mubr.f32.mxu0 0.0
      %7781 = vmatmul.mubr.f32.gmra.mxu0 %v7655
      %v7782 = vpop.f32.mrf.mxu0
      %v7783 = vadd.f32 %v7624, %v7782
      %v7784 = vpop.f32.mrf.mxu0
      %7785 = vmatprep.mubr.f32.mxu0 0.0
      %7786 = vmatmul.mubr.f32.gmra.mxu0 %v7658
      %v7787 = vpop.f32.mrf.mxu0
      %v7788 = vadd.f32 %v7625, %v7787
      %v7789 = vpop.f32.mrf.mxu0
      %7790 = vmatprep.mubr.f32.mxu0 0.0
      %7791 = vmatmul.mubr.f32.gmra.mxu0 %v7661
      %v7792 = vpop.f32.mrf.mxu0
      %v7793 = vadd.f32 %v7626, %v7792
      %v7794 = vpop.f32.mrf.mxu0
      %7795 = vmatprep.mubr.f32.mxu0 0.0
      %7796 = vmatmul.mubr.f32.gmra.mxu0 %v7664
      %v7797 = vpop.f32.mrf.mxu0
      %v7798 = vadd.f32 %v7627, %v7797
      %v7799 = vpop.f32.mrf.mxu0
      %7800 = vmatprep.mubr.f32.mxu0 0.0
      %7801 = vmatmul.mubr.f32.gmra.mxu0 %v7667
      %v7802 = vpop.f32.mrf.mxu0
      %v7803 = vadd.f32 %v7628, %v7802
      %v7804 = vpop.f32.mrf.mxu0
      %7805 = vmatprep.mubr.f32.mxu0 0.0
      %7806 = vmatmul.mubr.f32.gmra.mxu0 %v7670
      %v7807 = vpop.f32.mrf.mxu0
      %v7808 = vadd.f32 %v7629, %v7807
      %v7809 = vpop.f32.mrf.mxu0
      %7810 = vmatprep.mubr.f32.mxu0 0.0
      %7811 = vmatmul.mubr.f32.gmra.mxu0 %v7673
      %v7812 = vpop.f32.mrf.mxu0
      %v7813 = vadd.f32 %v7630, %v7812
      %v7814 = vpop.f32.mrf.mxu0
      %7815 = vmatprep.mubr.f32.mxu0 0.0
      %7816 = vmatmul.mubr.f32.gmra.mxu0 %v7676
      %v7817 = vpop.f32.mrf.mxu0
      %v7818 = vadd.f32 %v7631, %v7817
      %v7819 = vpop.f32.mrf.mxu0
      %7820 = vmatprep.mubr.f32.mxu0 0.0
      %7821 = vmatmul.mubr.f32.gmra.mxu0 %v7679
      %v7822 = vpop.f32.mrf.mxu0
      %v7823 = vadd.f32 %v7632, %v7822
      %v7824 = vpop.f32.mrf.mxu0
      %7825 = vdwg.mxu0
      %v7826 = vxor.u32 %v7748, 2147483648
      %v7827 = vxor.u32 %v7753, 2147483648
      %v7828 = vxor.u32 %v7758, 2147483648
      %v7829 = vxor.u32 %v7763, 2147483648
      %v7830 = vxor.u32 %v7768, 2147483648
      %v7831 = vxor.u32 %v7773, 2147483648
      %v7832 = vxor.u32 %v7778, 2147483648
      %v7833 = vxor.u32 %v7783, 2147483648
      %v7834 = vxor.u32 %v7788, 2147483648
      %v7835 = vxor.u32 %v7793, 2147483648
      %v7836 = vxor.u32 %v7798, 2147483648
      %v7837 = vxor.u32 %v7803, 2147483648
      %v7838 = vxor.u32 %v7808, 2147483648
      %v7839 = vxor.u32 %v7813, 2147483648
      %v7840 = vxor.u32 %v7818, 2147483648
      %v7841 = vxor.u32 %v7823, 2147483648
      %v7842 = vmul.f32 %v7826, 1.442695
      %v7843 = vpow.pop %v7842
      %v7844 = vmul.f32 %v7827, 1.442695
      %v7845 = vpow.pop %v7844
      %v7846 = vmul.f32 %v7828, 1.442695
      %v7847 = vpow.pop %v7846
      %v7848 = vmul.f32 %v7829, 1.442695
      %v7849 = vpow.pop %v7848
      %v7850 = vmul.f32 %v7830, 1.442695
      %v7851 = vpow.pop %v7850
      %v7852 = vmul.f32 %v7831, 1.442695
      %v7853 = vpow.pop %v7852
      %v7854 = vmul.f32 %v7832, 1.442695
      %v7855 = vpow.pop %v7854
      %v7856 = vmul.f32 %v7833, 1.442695
      %v7857 = vpow.pop %v7856
      %v7858 = vmul.f32 %v7834, 1.442695
      %v7859 = vpow.pop %v7858
      %v7860 = vmul.f32 %v7835, 1.442695
      %v7861 = vpow.pop %v7860
      %v7862 = vmul.f32 %v7836, 1.442695
      %v7863 = vpow.pop %v7862
      %v7864 = vmul.f32 %v7837, 1.442695
      %v7865 = vpow.pop %v7864
      %v7866 = vmul.f32 %v7838, 1.442695
      %v7867 = vpow.pop %v7866
      %v7868 = vmul.f32 %v7839, 1.442695
      %v7869 = vpow.pop %v7868
      %v7870 = vmul.f32 %v7840, 1.442695
      %v7871 = vpow.pop %v7870
      %v7872 = vmul.f32 %v7841, 1.442695
      %v7873 = vpow.pop %v7872
      %v7874 = vadd.f32 %v7843, 1.0
      %v7875 = vadd.f32 %v7845, 1.0
      %v7876 = vadd.f32 %v7847, 1.0
      %v7877 = vadd.f32 %v7849, 1.0
      %v7878 = vadd.f32 %v7851, 1.0
      %v7879 = vadd.f32 %v7853, 1.0
      %v7880 = vadd.f32 %v7855, 1.0
      %v7881 = vadd.f32 %v7857, 1.0
      %v7882 = vadd.f32 %v7859, 1.0
      %v7883 = vadd.f32 %v7861, 1.0
      %v7884 = vadd.f32 %v7863, 1.0
      %v7885 = vadd.f32 %v7865, 1.0
      %v7886 = vadd.f32 %v7867, 1.0
      %v7887 = vadd.f32 %v7869, 1.0
      %v7888 = vadd.f32 %v7871, 1.0
      %v7889 = vadd.f32 %v7873, 1.0
      %v7890 = vrcp.pop %v7874
      %v7891 = vmul.f32 1.0, %v7890
      %v7892 = vrcp.pop %v7875
      %v7893 = vmul.f32 1.0, %v7892
      %v7894 = vrcp.pop %v7876
      %v7895 = vmul.f32 1.0, %v7894
      %v7896 = vrcp.pop %v7877
      %v7897 = vmul.f32 1.0, %v7896
      %v7898 = vrcp.pop %v7878
      %v7899 = vmul.f32 1.0, %v7898
      %v7900 = vrcp.pop %v7879
      %v7901 = vmul.f32 1.0, %v7900
      %v7902 = vrcp.pop %v7880
      %v7903 = vmul.f32 1.0, %v7902
      %v7904 = vrcp.pop %v7881
      %v7905 = vmul.f32 1.0, %v7904
      %v7906 = vrcp.pop %v7882
      %v7907 = vmul.f32 1.0, %v7906
      %v7908 = vrcp.pop %v7883
      %v7909 = vmul.f32 1.0, %v7908
      %v7910 = vrcp.pop %v7884
      %v7911 = vmul.f32 1.0, %v7910
      %v7912 = vrcp.pop %v7885
      %v7913 = vmul.f32 1.0, %v7912
      %v7914 = vrcp.pop %v7886
      %v7915 = vmul.f32 1.0, %v7914
      %v7916 = vrcp.pop %v7887
      %v7917 = vmul.f32 1.0, %v7916
      %v7918 = vrcp.pop %v7888
      %v7919 = vmul.f32 1.0, %v7918
      %v7920 = vrcp.pop %v7889
      %v7921 = vmul.f32 1.0, %v7920
      %v7922 = vadd.f32 %v7891, 1.0
      %v7923 = vadd.f32 %v7893, 1.0
      %v7924 = vadd.f32 %v7895, 1.0
      %v7925 = vadd.f32 %v7897, 1.0
      %v7926 = vadd.f32 %v7899, 1.0
      %v7927 = vadd.f32 %v7901, 1.0
      %v7928 = vadd.f32 %v7903, 1.0
      %v7929 = vadd.f32 %v7905, 1.0
      %v7930 = vadd.f32 %v7907, 1.0
      %v7931 = vadd.f32 %v7909, 1.0
      %v7932 = vadd.f32 %v7911, 1.0
      %v7933 = vadd.f32 %v7913, 1.0
      %v7934 = vadd.f32 %v7915, 1.0
      %v7935 = vadd.f32 %v7917, 1.0
      %v7936 = vadd.f32 %v7919, 1.0
      %v7937 = vadd.f32 %v7921, 1.0
      %7939 = vset.pattern.permute.xlu0 0
      %7940 = vperm.xlu0 %7939, %v7922
      %v7941 = vpop.permute.xlu0 %7940
      %7944 = vset.pattern.permute.xlu0 0
      %7945 = vperm.xlu0 %7944, %v7923
      %v7946 = vpop.permute.xlu0 %7945
      %7949 = vset.pattern.permute.xlu0 0
      %7950 = vperm.xlu0 %7949, %v7924
      %v7951 = vpop.permute.xlu0 %7950
      %7954 = vset.pattern.permute.xlu0 0
      %7955 = vperm.xlu0 %7954, %v7925
      %v7956 = vpop.permute.xlu0 %7955
      %7959 = vset.pattern.permute.xlu0 0
      %7960 = vperm.xlu0 %7959, %v7926
      %v7961 = vpop.permute.xlu0 %7960
      %7964 = vset.pattern.permute.xlu0 0
      %7965 = vperm.xlu0 %7964, %v7927
      %v7966 = vpop.permute.xlu0 %7965
      %7969 = vset.pattern.permute.xlu0 0
      %7970 = vperm.xlu0 %7969, %v7928
      %v7971 = vpop.permute.xlu0 %7970
      %7974 = vset.pattern.permute.xlu0 0
      %7975 = vperm.xlu0 %7974, %v7929
      %v7976 = vpop.permute.xlu0 %7975
      %7979 = vset.pattern.permute.xlu0 0
      %7980 = vperm.xlu0 %7979, %v7930
      %v7981 = vpop.permute.xlu0 %7980
      %7984 = vset.pattern.permute.xlu0 0
      %7985 = vperm.xlu0 %7984, %v7931
      %v7986 = vpop.permute.xlu0 %7985
      %7989 = vset.pattern.permute.xlu0 0
      %7990 = vperm.xlu0 %7989, %v7932
      %v7991 = vpop.permute.xlu0 %7990
      %7994 = vset.pattern.permute.xlu0 0
      %7995 = vperm.xlu0 %7994, %v7933
      %v7996 = vpop.permute.xlu0 %7995
      %7999 = vset.pattern.permute.xlu0 0
      %8000 = vperm.xlu0 %7999, %v7934
      %v8001 = vpop.permute.xlu0 %8000
      %8004 = vset.pattern.permute.xlu0 0
      %8005 = vperm.xlu0 %8004, %v7935
      %v8006 = vpop.permute.xlu0 %8005
      %8009 = vset.pattern.permute.xlu0 0
      %8010 = vperm.xlu0 %8009, %v7936
      %v8011 = vpop.permute.xlu0 %8010
      %8014 = vset.pattern.permute.xlu0 0
      %8015 = vperm.xlu0 %8014, %v7937
      %v8016 = vpop.permute.xlu0 %8015
      %v8018 = vmul.f32 %v6567, %v7941
      %v8019 = vmul.f32 %v6572, %v7946
      %v8020 = vmul.f32 %v6577, %v7951
      %v8021 = vmul.f32 %v6582, %v7956
      %v8022 = vmul.f32 %v6587, %v7961
      %v8023 = vmul.f32 %v6592, %v7966
      %v8024 = vmul.f32 %v6597, %v7971
      %v8025 = vmul.f32 %v6602, %v7976
      %v8026 = vmul.f32 %v6614, %v7981
      %v8027 = vmul.f32 %v6616, %v7986
      %v8028 = vmul.f32 %v6618, %v7991
      %v8029 = vmul.f32 %v6620, %v7996
      %v8030 = vmul.f32 %v6622, %v8001
      %v8031 = vmul.f32 %v6624, %v8006
      %v8032 = vmul.f32 %v6626, %v8011
      %v8033 = vmul.f32 %v6628, %v8016
      %8050 = vrot.lane.b32.xlu0 %v8018, 127
      %v8051 = vpop.permute.xlu0 %8050
      %8052 = vrot.lane.b32.xlu0 %v8019, 127
      %v8053 = vpop.permute.xlu0 %8052
      %8054 = vrot.lane.b32.xlu0 %v8020, 127
      %v8055 = vpop.permute.xlu0 %8054
      %8056 = vrot.lane.b32.xlu0 %v8021, 127
      %v8057 = vpop.permute.xlu0 %8056
      %8058 = vrot.lane.b32.xlu0 %v8022, 127
      %v8059 = vpop.permute.xlu0 %8058
      %8060 = vrot.lane.b32.xlu0 %v8023, 127
      %v8061 = vpop.permute.xlu0 %8060
      %8062 = vrot.lane.b32.xlu0 %v8024, 127
      %v8063 = vpop.permute.xlu0 %8062
      %8064 = vrot.lane.b32.xlu0 %v8025, 127
      %v8065 = vpop.permute.xlu0 %8064
      %8066 = vrot.lane.b32.xlu0 %v8026, 127
      %v8067 = vpop.permute.xlu0 %8066
      %8068 = vrot.lane.b32.xlu0 %v8027, 127
      %v8069 = vpop.permute.xlu0 %8068
      %8070 = vrot.lane.b32.xlu0 %v8028, 127
      %v8071 = vpop.permute.xlu0 %8070
      %8072 = vrot.lane.b32.xlu0 %v8029, 127
      %v8073 = vpop.permute.xlu0 %8072
      %8074 = vrot.lane.b32.xlu0 %v8030, 127
      %v8075 = vpop.permute.xlu0 %8074
      %8076 = vrot.lane.b32.xlu0 %v8031, 127
      %v8077 = vpop.permute.xlu0 %8076
      %8078 = vrot.lane.b32.xlu0 %v8032, 127
      %v8079 = vpop.permute.xlu0 %8078
      %8080 = vrot.lane.b32.xlu0 %v8033, 127
      %v8081 = vpop.permute.xlu0 %8080
      %8098 = vrot.lane.b32.xlu0 %v8018, 126
      %v8099 = vpop.permute.xlu0 %8098
      %8100 = vrot.lane.b32.xlu0 %v8019, 126
      %v8101 = vpop.permute.xlu0 %8100
      %8102 = vrot.lane.b32.xlu0 %v8020, 126
      %v8103 = vpop.permute.xlu0 %8102
      %8104 = vrot.lane.b32.xlu0 %v8021, 126
      %v8105 = vpop.permute.xlu0 %8104
      %8106 = vrot.lane.b32.xlu0 %v8022, 126
      %v8107 = vpop.permute.xlu0 %8106
      %8108 = vrot.lane.b32.xlu0 %v8023, 126
      %v8109 = vpop.permute.xlu0 %8108
      %8110 = vrot.lane.b32.xlu0 %v8024, 126
      %v8111 = vpop.permute.xlu0 %8110
      %8112 = vrot.lane.b32.xlu0 %v8025, 126
      %v8113 = vpop.permute.xlu0 %8112
      %8114 = vrot.lane.b32.xlu0 %v8026, 126
      %v8115 = vpop.permute.xlu0 %8114
      %8116 = vrot.lane.b32.xlu0 %v8027, 126
      %v8117 = vpop.permute.xlu0 %8116
      %8118 = vrot.lane.b32.xlu0 %v8028, 126
      %v8119 = vpop.permute.xlu0 %8118
      %8120 = vrot.lane.b32.xlu0 %v8029, 126
      %v8121 = vpop.permute.xlu0 %8120
      %8122 = vrot.lane.b32.xlu0 %v8030, 126
      %v8123 = vpop.permute.xlu0 %8122
      %8124 = vrot.lane.b32.xlu0 %v8031, 126
      %v8125 = vpop.permute.xlu0 %8124
      %8126 = vrot.lane.b32.xlu0 %v8032, 126
      %v8127 = vpop.permute.xlu0 %8126
      %8128 = vrot.lane.b32.xlu0 %v8033, 126
      %v8129 = vpop.permute.xlu0 %8128
      %v8146 = vld [vmem:[%s4 + $0x4f8] sm:$0xff]
      %v8147 = vld [vmem:[%s4 + $0x500] sm:$0xff]
      %v8148 = vld [vmem:[%s4 + $0x508] sm:$0xff]
      %v8149 = vld [vmem:[%s4 + $0x510] sm:$0xff]
      %v8150 = vld [vmem:[%s4 + $0x518] sm:$0xff]
      %v8151 = vld [vmem:[%s4 + $0x520] sm:$0xff]
      %v8152 = vld [vmem:[%s4 + $0x528] sm:$0xff]
      %v8153 = vld [vmem:[%s4 + $0x530] sm:$0xff]
      %v8154 = vld [vmem:[%s4 + $0x538] sm:$0xff]
      %v8155 = vld [vmem:[%s4 + $0x540] sm:$0xff]
      %v8156 = vld [vmem:[%s4 + $0x548] sm:$0xff]
      %v8157 = vld [vmem:[%s4 + $0x550] sm:$0xff]
      %v8158 = vld [vmem:[%s4 + $0x558] sm:$0xff]
      %v8159 = vld [vmem:[%s4 + $0x560] sm:$0xff]
      %v8160 = vld [vmem:[%s4 + $0x568] sm:$0xff]
      %v8161 = vld [vmem:[%s4 + $0x570] sm:$0xff]
      %v8162 = vld [vmem:[%s4 + $0x578] sm:$0xff]
      %v8163 = vld [vmem:[%s4 + $0x580] sm:$0xff]
      %v8164 = vld [vmem:[%s4 + $0x588] sm:$0xff]
      %v8165 = vld [vmem:[%s4 + $0x590] sm:$0xff]
      %v8166 = vld [vmem:[%s4 + $0x598] sm:$0xff]
      %v8167 = vld [vmem:[%s4 + $0x5a0] sm:$0xff]
      %v8168 = vld [vmem:[%s4 + $0x5a8] sm:$0xff]
      %v8169 = vld [vmem:[%s4 + $0x5b0] sm:$0xff]
      %v8170 = vld [vmem:[%s4 + $0x5b8] sm:$0xff]
      %v8171 = vld [vmem:[%s4 + $0x5c0] sm:$0xff]
      %v8172 = vld [vmem:[%s4 + $0x5c8] sm:$0xff]
      %v8173 = vld [vmem:[%s4 + $0x5d0] sm:$0xff]
      %v8174 = vld [vmem:[%s4 + $0x5d8] sm:$0xff]
      %v8175 = vld [vmem:[%s4 + $0x5e0] sm:$0xff]
      %v8176 = vld [vmem:[%s4 + $0x5e8] sm:$0xff]
      %v8177 = vld [vmem:[%s4 + $0x5f0] sm:$0xff]
      %v8178 = vld [vmem:[%s4 + $0x5f8] sm:$0xff]
      %v8179 = vld [vmem:[%s4 + $0x600] sm:$0xff]
      %v8180 = vld [vmem:[%s4 + $0x608] sm:$0xff]
      %v8181 = vld [vmem:[%s4 + $0x610] sm:$0xff]
      %v8182 = vld [vmem:[%s4 + $0x618] sm:$0xff]
      %v8183 = vld [vmem:[%s4 + $0x620] sm:$0xff]
      %v8184 = vld [vmem:[%s4 + $0x628] sm:$0xff]
      %v8185 = vld [vmem:[%s4 + $0x630] sm:$0xff]
      %v8186 = vld [vmem:[%s4 + $0x638] sm:$0xff]
      %v8187 = vld [vmem:[%s4 + $0x640] sm:$0xff]
      %v8188 = vld [vmem:[%s4 + $0x648] sm:$0xff]
      %v8189 = vld [vmem:[%s4 + $0x650] sm:$0xff]
      %v8190 = vld [vmem:[%s4 + $0x658] sm:$0xff]
      %v8191 = vld [vmem:[%s4 + $0x660] sm:$0xff]
      %v8192 = vld [vmem:[%s4 + $0x668] sm:$0xff]
      %v8193 = vld [vmem:[%s4 + $0x670] sm:$0xff]
      %v8194 = vld [vmem:[%s5 + $0x1b0] sm:$0xff]
      %v8195 = vld [vmem:[%s5 + $0x1b8] sm:$0xff]
      %v8196 = vld [vmem:[%s5 + $0x1c0] sm:$0xff]
      %v8197 = vld [vmem:[%s5 + $0x1c8] sm:$0xff]
      %v8198 = vld [vmem:[%s5 + $0x1d0] sm:$0xff]
      %v8199 = vld [vmem:[%s5 + $0x1d8] sm:$0xff]
      %v8200 = vld [vmem:[%s5 + $0x1e0] sm:$0xff]
      %v8201 = vld [vmem:[%s5 + $0x1e8] sm:$0xff]
      %v8202 = vld [vmem:[%s5 + $0x1f0] sm:$0xff]
      %v8203 = vld [vmem:[%s5 + $0x1f8] sm:$0xff]
      %v8204 = vld [vmem:[%s5 + $0x200] sm:$0xff]
      %v8205 = vld [vmem:[%s5 + $0x208] sm:$0xff]
      %v8206 = vld [vmem:[%s5 + $0x210] sm:$0xff]
      %v8207 = vld [vmem:[%s5 + $0x218] sm:$0xff]
      %v8208 = vld [vmem:[%s5 + $0x220] sm:$0xff]
      %v8209 = vld [vmem:[%s5 + $0x228] sm:$0xff]
      %8211 = vset.pattern.permute.xlu0 0
      %8212 = vperm.xlu0 %8211, %v8194
      %v8213 = vpop.permute.xlu0 %8212
      %8216 = vset.pattern.permute.xlu0 0
      %8217 = vperm.xlu0 %8216, %v8195
      %v8218 = vpop.permute.xlu0 %8217
      %8221 = vset.pattern.permute.xlu0 0
      %8222 = vperm.xlu0 %8221, %v8196
      %v8223 = vpop.permute.xlu0 %8222
      %8226 = vset.pattern.permute.xlu0 0
      %8227 = vperm.xlu0 %8226, %v8197
      %v8228 = vpop.permute.xlu0 %8227
      %8231 = vset.pattern.permute.xlu0 0
      %8232 = vperm.xlu0 %8231, %v8198
      %v8233 = vpop.permute.xlu0 %8232
      %8236 = vset.pattern.permute.xlu0 0
      %8237 = vperm.xlu0 %8236, %v8199
      %v8238 = vpop.permute.xlu0 %8237
      %8241 = vset.pattern.permute.xlu0 0
      %8242 = vperm.xlu0 %8241, %v8200
      %v8243 = vpop.permute.xlu0 %8242
      %8246 = vset.pattern.permute.xlu0 0
      %8247 = vperm.xlu0 %8246, %v8201
      %v8248 = vpop.permute.xlu0 %8247
      %8251 = vset.pattern.permute.xlu0 0
      %8252 = vperm.xlu0 %8251, %v8202
      %v8253 = vpop.permute.xlu0 %8252
      %8256 = vset.pattern.permute.xlu0 0
      %8257 = vperm.xlu0 %8256, %v8203
      %v8258 = vpop.permute.xlu0 %8257
      %8261 = vset.pattern.permute.xlu0 0
      %8262 = vperm.xlu0 %8261, %v8204
      %v8263 = vpop.permute.xlu0 %8262
      %8266 = vset.pattern.permute.xlu0 0
      %8267 = vperm.xlu0 %8266, %v8205
      %v8268 = vpop.permute.xlu0 %8267
      %8271 = vset.pattern.permute.xlu0 0
      %8272 = vperm.xlu0 %8271, %v8206
      %v8273 = vpop.permute.xlu0 %8272
      %8276 = vset.pattern.permute.xlu0 0
      %8277 = vperm.xlu0 %8276, %v8207
      %v8278 = vpop.permute.xlu0 %8277
      %8281 = vset.pattern.permute.xlu0 0
      %8282 = vperm.xlu0 %8281, %v8208
      %v8283 = vpop.permute.xlu0 %8282
      %8286 = vset.pattern.permute.xlu0 0
      %8287 = vperm.xlu0 %8286, %v8209
      %v8288 = vpop.permute.xlu0 %8287
      %8290 = vmatprep.subr.mxu0 0.0
      %8291 = vmatpush1.msra.mxu0 %v8033
      %8292 = vmatprep.subr.mxu0 0.0
      %8293 = vmatpush1.msra.mxu0 %v8032
      %8294 = vmatprep.subr.mxu0 0.0
      %8295 = vmatpush1.msra.mxu0 %v8031
      %8296 = vmatprep.subr.mxu0 0.0
      %8297 = vmatpush1.msra.mxu0 %v8030
      %8298 = vmatprep.subr.mxu0 0.0
      %8299 = vmatpush1.msra.mxu0 %v8029
      %8300 = vmatprep.subr.mxu0 0.0
      %8301 = vmatpush1.msra.mxu0 %v8028
      %8302 = vmatprep.subr.mxu0 0.0
      %8303 = vmatpush1.msra.mxu0 %v8027
      %8304 = vmatprep.subr.mxu0 0.0
      %8305 = vmatpush1.msra.mxu0 %v8026
      %8306 = vmatprep.subr.mxu0 0.0
      %8307 = vmatpush1.msra.mxu0 %v8025
      %8308 = vmatprep.subr.mxu0 0.0
      %8309 = vmatpush1.msra.mxu0 %v8024
      %8310 = vmatprep.subr.mxu0 0.0
      %8311 = vmatpush1.msra.mxu0 %v8023
      %8312 = vmatprep.subr.mxu0 0.0
      %8313 = vmatpush1.msra.mxu0 %v8022
      %8314 = vmatprep.subr.mxu0 0.0
      %8315 = vmatpush1.msra.mxu0 %v8021
      %8316 = vmatprep.subr.mxu0 0.0
      %8317 = vmatpush1.msra.mxu0 %v8020
      %8318 = vmatprep.subr.mxu0 0.0
      %8319 = vmatpush1.msra.mxu0 %v8019
      %8320 = vmatprep.subr.mxu0 0.0
      %8321 = vmatpush1.msra.mxu0 %v8018
      %8322 = vmatprep.subr.mxu0 0.0
      %8323 = vmatpush2.msra.mxu0 %v8081
      %8324 = vmatprep.subr.mxu0 0.0
      %8325 = vmatpush2.msra.mxu0 %v8079
      %8326 = vmatprep.subr.mxu0 0.0
      %8327 = vmatpush2.msra.mxu0 %v8077
      %8328 = vmatprep.subr.mxu0 0.0
      %8329 = vmatpush2.msra.mxu0 %v8075
      %8330 = vmatprep.subr.mxu0 0.0
      %8331 = vmatpush2.msra.mxu0 %v8073
      %8332 = vmatprep.subr.mxu0 0.0
      %8333 = vmatpush2.msra.mxu0 %v8071
      %8334 = vmatprep.subr.mxu0 0.0
      %8335 = vmatpush2.msra.mxu0 %v8069
      %8336 = vmatprep.subr.mxu0 0.0
      %8337 = vmatpush2.msra.mxu0 %v8067
      %8338 = vmatprep.subr.mxu0 0.0
      %8339 = vmatpush2.msra.mxu0 %v8065
      %8340 = vmatprep.subr.mxu0 0.0
      %8341 = vmatpush2.msra.mxu0 %v8063
      %8342 = vmatprep.subr.mxu0 0.0
      %8343 = vmatpush2.msra.mxu0 %v8061
      %8344 = vmatprep.subr.mxu0 0.0
      %8345 = vmatpush2.msra.mxu0 %v8059
      %8346 = vmatprep.subr.mxu0 0.0
      %8347 = vmatpush2.msra.mxu0 %v8057
      %8348 = vmatprep.subr.mxu0 0.0
      %8349 = vmatpush2.msra.mxu0 %v8055
      %8350 = vmatprep.subr.mxu0 0.0
      %8351 = vmatpush2.msra.mxu0 %v8053
      %8352 = vmatprep.subr.mxu0 0.0
      %8353 = vmatpush2.msra.mxu0 %v8051
      %8354 = vmatprep.mubr.f32.mxu0 %v8147
      %8355 = vmatmul.mubr.f32.gmra.mxu0 %v8146
      %v8356 = vpop.f32.mrf.mxu0
      %v8357 = vadd.f32 %v8213, %v8356
      %v8358 = vpop.f32.mrf.mxu0
      %8359 = vmatprep.mubr.f32.mxu0 %v8150
      %8360 = vmatmul.mubr.f32.gmra.mxu0 %v8149
      %v8361 = vpop.f32.mrf.mxu0
      %v8362 = vadd.f32 %v8218, %v8361
      %v8363 = vpop.f32.mrf.mxu0
      %8364 = vmatprep.mubr.f32.mxu0 %v8153
      %8365 = vmatmul.mubr.f32.gmra.mxu0 %v8152
      %v8366 = vpop.f32.mrf.mxu0
      %v8367 = vadd.f32 %v8223, %v8366
      %v8368 = vpop.f32.mrf.mxu0
      %8369 = vmatprep.mubr.f32.mxu0 %v8156
      %8370 = vmatmul.mubr.f32.gmra.mxu0 %v8155
      %v8371 = vpop.f32.mrf.mxu0
      %v8372 = vadd.f32 %v8228, %v8371
      %v8373 = vpop.f32.mrf.mxu0
      %8374 = vmatprep.mubr.f32.mxu0 %v8159
      %8375 = vmatmul.mubr.f32.gmra.mxu0 %v8158
      %v8376 = vpop.f32.mrf.mxu0
      %v8377 = vadd.f32 %v8233, %v8376
      %v8378 = vpop.f32.mrf.mxu0
      %8379 = vmatprep.mubr.f32.mxu0 %v8162
      %8380 = vmatmul.mubr.f32.gmra.mxu0 %v8161
      %v8381 = vpop.f32.mrf.mxu0
      %v8382 = vadd.f32 %v8238, %v8381
      %v8383 = vpop.f32.mrf.mxu0
      %8384 = vmatprep.mubr.f32.mxu0 %v8165
      %8385 = vmatmul.mubr.f32.gmra.mxu0 %v8164
      %v8386 = vpop.f32.mrf.mxu0
      %v8387 = vadd.f32 %v8243, %v8386
      %v8388 = vpop.f32.mrf.mxu0
      %8389 = vmatprep.mubr.f32.mxu0 %v8168
      %8390 = vmatmul.mubr.f32.gmra.mxu0 %v8167
      %v8391 = vpop.f32.mrf.mxu0
      %v8392 = vadd.f32 %v8248, %v8391
      %v8393 = vpop.f32.mrf.mxu0
      %8394 = vmatprep.mubr.f32.mxu0 %v8171
      %8395 = vmatmul.mubr.f32.gmra.mxu0 %v8170
      %v8396 = vpop.f32.mrf.mxu0
      %v8397 = vadd.f32 %v8253, %v8396
      %v8398 = vpop.f32.mrf.mxu0
      %8399 = vmatprep.mubr.f32.mxu0 %v8174
      %8400 = vmatmul.mubr.f32.gmra.mxu0 %v8173
      %v8401 = vpop.f32.mrf.mxu0
      %v8402 = vadd.f32 %v8258, %v8401
      %v8403 = vpop.f32.mrf.mxu0
      %8404 = vmatprep.mubr.f32.mxu0 %v8177
      %8405 = vmatmul.mubr.f32.gmra.mxu0 %v8176
      %v8406 = vpop.f32.mrf.mxu0
      %v8407 = vadd.f32 %v8263, %v8406
      %v8408 = vpop.f32.mrf.mxu0
      %8409 = vmatprep.mubr.f32.mxu0 %v8180
      %8410 = vmatmul.mubr.f32.gmra.mxu0 %v8179
      %v8411 = vpop.f32.mrf.mxu0
      %v8412 = vadd.f32 %v8268, %v8411
      %v8413 = vpop.f32.mrf.mxu0
      %8414 = vmatprep.mubr.f32.mxu0 %v8183
      %8415 = vmatmul.mubr.f32.gmra.mxu0 %v8182
      %v8416 = vpop.f32.mrf.mxu0
      %v8417 = vadd.f32 %v8273, %v8416
      %v8418 = vpop.f32.mrf.mxu0
      %8419 = vmatprep.mubr.f32.mxu0 %v8186
      %8420 = vmatmul.mubr.f32.gmra.mxu0 %v8185
      %v8421 = vpop.f32.mrf.mxu0
      %v8422 = vadd.f32 %v8278, %v8421
      %v8423 = vpop.f32.mrf.mxu0
      %8424 = vmatprep.mubr.f32.mxu0 %v8189
      %8425 = vmatmul.mubr.f32.gmra.mxu0 %v8188
      %v8426 = vpop.f32.mrf.mxu0
      %v8427 = vadd.f32 %v8283, %v8426
      %v8428 = vpop.f32.mrf.mxu0
      %8429 = vmatprep.mubr.f32.mxu0 %v8192
      %8430 = vmatmul.mubr.f32.gmra.mxu0 %v8191
      %v8431 = vpop.f32.mrf.mxu0
      %v8432 = vadd.f32 %v8288, %v8431
      %v8433 = vpop.f32.mrf.mxu0
      %8434 = vdwg.mxu0
      %8435 = vmatprep.subr.mxu0 0.0
      %8436 = vmatpush1.msra.mxu0 %v8129
      %8437 = vmatprep.subr.mxu0 0.0
      %8438 = vmatpush1.msra.mxu0 %v8127
      %8439 = vmatprep.subr.mxu0 0.0
      %8440 = vmatpush1.msra.mxu0 %v8125
      %8441 = vmatprep.subr.mxu0 0.0
      %8442 = vmatpush1.msra.mxu0 %v8123
      %8443 = vmatprep.subr.mxu0 0.0
      %8444 = vmatpush1.msra.mxu0 %v8121
      %8445 = vmatprep.subr.mxu0 0.0
      %8446 = vmatpush1.msra.mxu0 %v8119
      %8447 = vmatprep.subr.mxu0 0.0
      %8448 = vmatpush1.msra.mxu0 %v8117
      %8449 = vmatprep.subr.mxu0 0.0
      %8450 = vmatpush1.msra.mxu0 %v8115
      %8451 = vmatprep.subr.mxu0 0.0
      %8452 = vmatpush1.msra.mxu0 %v8113
      %8453 = vmatprep.subr.mxu0 0.0
      %8454 = vmatpush1.msra.mxu0 %v8111
      %8455 = vmatprep.subr.mxu0 0.0
      %8456 = vmatpush1.msra.mxu0 %v8109
      %8457 = vmatprep.subr.mxu0 0.0
      %8458 = vmatpush1.msra.mxu0 %v8107
      %8459 = vmatprep.subr.mxu0 0.0
      %8460 = vmatpush1.msra.mxu0 %v8105
      %8461 = vmatprep.subr.mxu0 0.0
      %8462 = vmatpush1.msra.mxu0 %v8103
      %8463 = vmatprep.subr.mxu0 0.0
      %8464 = vmatpush1.msra.mxu0 %v8101
      %8465 = vmatprep.subr.mxu0 0.0
      %8466 = vmatpush1.msra.mxu0 %v8099
      %8467 = vmatprep.subr.mxu0 0.0
      %8468 = vmatpush2.msra.mxu0 0.0
      %8469 = vmatprep.subr.mxu0 0.0
      %8470 = vmatpush2.msra.mxu0 0.0
      %8471 = vmatprep.subr.mxu0 0.0
      %8472 = vmatpush2.msra.mxu0 0.0
      %8473 = vmatprep.subr.mxu0 0.0
      %8474 = vmatpush2.msra.mxu0 0.0
      %8475 = vmatprep.subr.mxu0 0.0
      %8476 = vmatpush2.msra.mxu0 0.0
      %8477 = vmatprep.subr.mxu0 0.0
      %8478 = vmatpush2.msra.mxu0 0.0
      %8479 = vmatprep.subr.mxu0 0.0
      %8480 = vmatpush2.msra.mxu0 0.0
      %8481 = vmatprep.subr.mxu0 0.0
      %8482 = vmatpush2.msra.mxu0 0.0
      %8483 = vmatprep.subr.mxu0 0.0
      %8484 = vmatpush2.msra.mxu0 0.0
      %8485 = vmatprep.subr.mxu0 0.0
      %8486 = vmatpush2.msra.mxu0 0.0
      %8487 = vmatprep.subr.mxu0 0.0
      %8488 = vmatpush2.msra.mxu0 0.0
      %8489 = vmatprep.subr.mxu0 0.0
      %8490 = vmatpush2.msra.mxu0 0.0
      %8491 = vmatprep.subr.mxu0 0.0
      %8492 = vmatpush2.msra.mxu0 0.0
      %8493 = vmatprep.subr.mxu0 0.0
      %8494 = vmatpush2.msra.mxu0 0.0
      %8495 = vmatprep.subr.mxu0 0.0
      %8496 = vmatpush2.msra.mxu0 0.0
      %8497 = vmatprep.subr.mxu0 0.0
      %8498 = vmatpush2.msra.mxu0 0.0
      %8499 = vmatprep.mubr.f32.mxu0 0.0
      %8500 = vmatmul.mubr.f32.gmra.mxu0 %v8148
      %v8501 = vpop.f32.mrf.mxu0
      %v8502 = vadd.f32 %v8357, %v8501
      %v8503 = vpop.f32.mrf.mxu0
      %8504 = vmatprep.mubr.f32.mxu0 0.0
      %8505 = vmatmul.mubr.f32.gmra.mxu0 %v8151
      %v8506 = vpop.f32.mrf.mxu0
      %v8507 = vadd.f32 %v8362, %v8506
      %v8508 = vpop.f32.mrf.mxu0
      %8509 = vmatprep.mubr.f32.mxu0 0.0
      %8510 = vmatmul.mubr.f32.gmra.mxu0 %v8154
      %v8511 = vpop.f32.mrf.mxu0
      %v8512 = vadd.f32 %v8367, %v8511
      %v8513 = vpop.f32.mrf.mxu0
      %8514 = vmatprep.mubr.f32.mxu0 0.0
      %8515 = vmatmul.mubr.f32.gmra.mxu0 %v8157
      %v8516 = vpop.f32.mrf.mxu0
      %v8517 = vadd.f32 %v8372, %v8516
      %v8518 = vpop.f32.mrf.mxu0
      %8519 = vmatprep.mubr.f32.mxu0 0.0
      %8520 = vmatmul.mubr.f32.gmra.mxu0 %v8160
      %v8521 = vpop.f32.mrf.mxu0
      %v8522 = vadd.f32 %v8377, %v8521
      %v8523 = vpop.f32.mrf.mxu0
      %8524 = vmatprep.mubr.f32.mxu0 0.0
      %8525 = vmatmul.mubr.f32.gmra.mxu0 %v8163
      %v8526 = vpop.f32.mrf.mxu0
      %v8527 = vadd.f32 %v8382, %v8526
      %v8528 = vpop.f32.mrf.mxu0
      %8529 = vmatprep.mubr.f32.mxu0 0.0
      %8530 = vmatmul.mubr.f32.gmra.mxu0 %v8166
      %v8531 = vpop.f32.mrf.mxu0
      %v8532 = vadd.f32 %v8387, %v8531
      %v8533 = vpop.f32.mrf.mxu0
      %8534 = vmatprep.mubr.f32.mxu0 0.0
      %8535 = vmatmul.mubr.f32.gmra.mxu0 %v8169
      %v8536 = vpop.f32.mrf.mxu0
      %v8537 = vadd.f32 %v8392, %v8536
      %v8538 = vpop.f32.mrf.mxu0
      %8539 = vmatprep.mubr.f32.mxu0 0.0
      %8540 = vmatmul.mubr.f32.gmra.mxu0 %v8172
      %v8541 = vpop.f32.mrf.mxu0
      %v8542 = vadd.f32 %v8397, %v8541
      %v8543 = vpop.f32.mrf.mxu0
      %8544 = vmatprep.mubr.f32.mxu0 0.0
      %8545 = vmatmul.mubr.f32.gmra.mxu0 %v8175
      %v8546 = vpop.f32.mrf.mxu0
      %v8547 = vadd.f32 %v8402, %v8546
      %v8548 = vpop.f32.mrf.mxu0
      %8549 = vmatprep.mubr.f32.mxu0 0.0
      %8550 = vmatmul.mubr.f32.gmra.mxu0 %v8178
      %v8551 = vpop.f32.mrf.mxu0
      %v8552 = vadd.f32 %v8407, %v8551
      %v8553 = vpop.f32.mrf.mxu0
      %8554 = vmatprep.mubr.f32.mxu0 0.0
      %8555 = vmatmul.mubr.f32.gmra.mxu0 %v8181
      %v8556 = vpop.f32.mrf.mxu0
      %v8557 = vadd.f32 %v8412, %v8556
      %v8558 = vpop.f32.mrf.mxu0
      %8559 = vmatprep.mubr.f32.mxu0 0.0
      %8560 = vmatmul.mubr.f32.gmra.mxu0 %v8184
      %v8561 = vpop.f32.mrf.mxu0
      %v8562 = vadd.f32 %v8417, %v8561
      %v8563 = vpop.f32.mrf.mxu0
      %8564 = vmatprep.mubr.f32.mxu0 0.0
      %8565 = vmatmul.mubr.f32.gmra.mxu0 %v8187
      %v8566 = vpop.f32.mrf.mxu0
      %v8567 = vadd.f32 %v8422, %v8566
      %v8568 = vpop.f32.mrf.mxu0
      %8569 = vmatprep.mubr.f32.mxu0 0.0
      %8570 = vmatmul.mubr.f32.gmra.mxu0 %v8190
      %v8571 = vpop.f32.mrf.mxu0
      %v8572 = vadd.f32 %v8427, %v8571
      %v8573 = vpop.f32.mrf.mxu0
      %8574 = vmatprep.mubr.f32.mxu0 0.0
      %8575 = vmatmul.mubr.f32.gmra.mxu0 %v8193
      %v8576 = vpop.f32.mrf.mxu0
      %v8577 = vadd.f32 %v8432, %v8576
      %v8578 = vpop.f32.mrf.mxu0
      %8579 = vdwg.mxu0
      %v8580 = vld [vmem:[%s5 + $0x230] sm:$0xff]
      %v8581 = vld [vmem:[%s5 + $0x238] sm:$0xff]
      %v8582 = vld [vmem:[%s5 + $0x240] sm:$0xff]
      %v8583 = vld [vmem:[%s5 + $0x248] sm:$0xff]
      %v8584 = vld [vmem:[%s5 + $0x250] sm:$0xff]
      %v8585 = vld [vmem:[%s5 + $0x258] sm:$0xff]
      %v8586 = vld [vmem:[%s5 + $0x260] sm:$0xff]
      %v8587 = vld [vmem:[%s5 + $0x268] sm:$0xff]
      %v8588 = vld [vmem:[%s5 + $0x270] sm:$0xff]
      %v8589 = vld [vmem:[%s5 + $0x278] sm:$0xff]
      %v8590 = vld [vmem:[%s5 + $0x280] sm:$0xff]
      %v8591 = vld [vmem:[%s5 + $0x288] sm:$0xff]
      %v8592 = vld [vmem:[%s5 + $0x290] sm:$0xff]
      %v8593 = vld [vmem:[%s5 + $0x298] sm:$0xff]
      %v8594 = vld [vmem:[%s5 + $0x2a0] sm:$0xff]
      %v8595 = vld [vmem:[%s5 + $0x2a8] sm:$0xff]
      %v8596 = vld [vmem:[%s5 + $0x2b0] sm:$0xff]
      %v8597 = vld [vmem:[%s5 + $0x2b8] sm:$0xff]
      %v8598 = vld [vmem:[%s5 + $0x2c0] sm:$0xff]
      %v8599 = vld [vmem:[%s5 + $0x2c8] sm:$0xff]
      %v8600 = vld [vmem:[%s5 + $0x2d0] sm:$0xff]
      %v8601 = vld [vmem:[%s5 + $0x2d8] sm:$0xff]
      %v8602 = vld [vmem:[%s5 + $0x2e0] sm:$0xff]
      %v8603 = vld [vmem:[%s5 + $0x2e8] sm:$0xff]
      %v8604 = vld [vmem:[%s5 + $0x2f0] sm:$0xff]
      %v8605 = vld [vmem:[%s5 + $0x2f8] sm:$0xff]
      %v8606 = vld [vmem:[%s5 + $0x300] sm:$0xff]
      %v8607 = vld [vmem:[%s5 + $0x308] sm:$0xff]
      %v8608 = vld [vmem:[%s5 + $0x310] sm:$0xff]
      %v8609 = vld [vmem:[%s5 + $0x318] sm:$0xff]
      %v8610 = vld [vmem:[%s5 + $0x320] sm:$0xff]
      %v8611 = vld [vmem:[%s5 + $0x328] sm:$0xff]
      %vm8612 = vcmask 220160
      %v8614 = vsel %vm8612, %v8502, 0
      %v8617 = vsel %vm8612, %v8507, 0
      %v8620 = vsel %vm8612, %v8512, 0
      %v8623 = vsel %vm8612, %v8517, 0
      %v8626 = vsel %vm8612, %v8522, 0
      %v8629 = vsel %vm8612, %v8527, 0
      %v8632 = vsel %vm8612, %v8532, 0
      %v8635 = vsel %vm8612, %v8537, 0
      %v8638 = vsel %vm8612, %v8542, 0
      %v8641 = vsel %vm8612, %v8547, 0
      %v8644 = vsel %vm8612, %v8552, 0
      %v8647 = vsel %vm8612, %v8557, 0
      %v8650 = vsel %vm8612, %v8562, 0
      %v8653 = vsel %vm8612, %v8567, 0
      %v8656 = vsel %vm8612, %v8572, 0
      %v8659 = vsel %vm8612, %v8577, 0
      %vm8661 = vcmask 1042432
      %v8663 = vsel %vm8661, 0.037037037, 0
      %8665 = vmatprep.subr.mxu0 0.0
      %8666 = vmatpush1.msra.mxu0 0.0
      %8667 = vmatprep.subr.mxu0 0.0
      %8668 = vmatpush1.msra.mxu0 0.0
      %8669 = vmatprep.subr.mxu0 0.0
      %8670 = vmatpush1.msra.mxu0 0.0
      %8671 = vmatprep.subr.mxu0 0.0
      %8672 = vmatpush1.msra.mxu0 0.0
      %8673 = vmatprep.subr.mxu0 0.0
      %8674 = vmatpush1.msra.mxu0 0.0
      %8675 = vmatprep.subr.mxu0 0.0
      %8676 = vmatpush1.msra.mxu0 0.0
      %8677 = vmatprep.subr.mxu0 0.0
      %8678 = vmatpush1.msra.mxu0 0.0
      %8679 = vmatprep.subr.mxu0 0.0
      %8680 = vmatpush1.msra.mxu0 0.0
      %8681 = vmatprep.subr.mxu0 0.0
      %8682 = vmatpush1.msra.mxu0 0.0
      %8683 = vmatprep.subr.mxu0 0.0
      %8684 = vmatpush1.msra.mxu0 0.0
      %8685 = vmatprep.subr.mxu0 0.0
      %8686 = vmatpush1.msra.mxu0 0.0
      %8687 = vmatprep.subr.mxu0 0.0
      %8688 = vmatpush1.msra.mxu0 0.0
      %8689 = vmatprep.subr.mxu0 0.0
      %8690 = vmatpush1.msra.mxu0 %v8663
      %8691 = vmatprep.subr.mxu0 0.0
      %8692 = vmatpush1.msra.mxu0 0.037037037
      %8693 = vmatprep.subr.mxu0 0.0
      %8694 = vmatpush1.msra.mxu0 0.037037037
      %8695 = vmatprep.subr.mxu0 0.0
      %8696 = vmatpush1.msra.mxu0 0.037037037
      %8697 = vmatprep.subr.mxu0 0.0
      %8698 = vmatpush2.msra.mxu0 0.0
      %8699 = vmatprep.subr.mxu0 0.0
      %8700 = vmatpush2.msra.mxu0 0.0
      %8701 = vmatprep.subr.mxu0 0.0
      %8702 = vmatpush2.msra.mxu0 0.0
      %8703 = vmatprep.subr.mxu0 0.0
      %8704 = vmatpush2.msra.mxu0 0.0
      %8705 = vmatprep.subr.mxu0 0.0
      %8706 = vmatpush2.msra.mxu0 0.0
      %8707 = vmatprep.subr.mxu0 0.0
      %8708 = vmatpush2.msra.mxu0 0.0
      %8709 = vmatprep.subr.mxu0 0.0
      %8710 = vmatpush2.msra.mxu0 0.0
      %8711 = vmatprep.subr.mxu0 0.0
      %8712 = vmatpush2.msra.mxu0 0.0
      %8713 = vmatprep.subr.mxu0 0.0
      %8714 = vmatpush2.msra.mxu0 0.0
      %8715 = vmatprep.subr.mxu0 0.0
      %8716 = vmatpush2.msra.mxu0 0.0
      %8717 = vmatprep.subr.mxu0 0.0
      %8718 = vmatpush2.msra.mxu0 0.0
      %8719 = vmatprep.subr.mxu0 0.0
      %8720 = vmatpush2.msra.mxu0 0.0
      %8721 = vmatprep.subr.mxu0 0.0
      %8722 = vmatpush2.msra.mxu0 0.0
      %8723 = vmatprep.subr.mxu0 0.0
      %8724 = vmatpush2.msra.mxu0 0.0
      %8725 = vmatprep.subr.mxu0 0.0
      %8726 = vmatpush2.msra.mxu0 0.0
      %8727 = vmatprep.subr.mxu0 0.0
      %8728 = vmatpush2.msra.mxu0 0.0
      %8729 = vmatprep.mubr.f32.mxu0 0.0
      %8730 = vmatmul.mubr.f32.gmra.mxu0 %v8614
      %v8731 = vpop.f32.mrf.mxu0
      %v8732 = vadd.f32 0.0, %v8731
      %v8733 = vpop.f32.mrf.mxu0
      %8734 = vmatprep.mubr.f32.mxu0 0.0
      %8735 = vmatmul.mubr.f32.gmra.mxu0 %v8617
      %v8736 = vpop.f32.mrf.mxu0
      %v8737 = vadd.f32 0.0, %v8736
      %v8738 = vpop.f32.mrf.mxu0
      %8739 = vmatprep.mubr.f32.mxu0 0.0
      %8740 = vmatmul.mubr.f32.gmra.mxu0 %v8620
      %v8741 = vpop.f32.mrf.mxu0
      %v8742 = vadd.f32 0.0, %v8741
      %v8743 = vpop.f32.mrf.mxu0
      %8744 = vmatprep.mubr.f32.mxu0 0.0
      %8745 = vmatmul.mubr.f32.gmra.mxu0 %v8623
      %v8746 = vpop.f32.mrf.mxu0
      %v8747 = vadd.f32 0.0, %v8746
      %v8748 = vpop.f32.mrf.mxu0
      %8749 = vmatprep.mubr.f32.mxu0 0.0
      %8750 = vmatmul.mubr.f32.gmra.mxu0 %v8626
      %v8751 = vpop.f32.mrf.mxu0
      %v8752 = vadd.f32 0.0, %v8751
      %v8753 = vpop.f32.mrf.mxu0
      %8754 = vmatprep.mubr.f32.mxu0 0.0
      %8755 = vmatmul.mubr.f32.gmra.mxu0 %v8629
      %v8756 = vpop.f32.mrf.mxu0
      %v8757 = vadd.f32 0.0, %v8756
      %v8758 = vpop.f32.mrf.mxu0
      %8759 = vmatprep.mubr.f32.mxu0 0.0
      %8760 = vmatmul.mubr.f32.gmra.mxu0 %v8632
      %v8761 = vpop.f32.mrf.mxu0
      %v8762 = vadd.f32 0.0, %v8761
      %v8763 = vpop.f32.mrf.mxu0
      %8764 = vmatprep.mubr.f32.mxu0 0.0
      %8765 = vmatmul.mubr.f32.gmra.mxu0 %v8635
      %v8766 = vpop.f32.mrf.mxu0
      %v8767 = vadd.f32 0.0, %v8766
      %v8768 = vpop.f32.mrf.mxu0
      %8769 = vmatprep.mubr.f32.mxu0 0.0
      %8770 = vmatmul.mubr.f32.gmra.mxu0 %v8638
      %v8771 = vpop.f32.mrf.mxu0
      %v8772 = vadd.f32 0.0, %v8771
      %v8773 = vpop.f32.mrf.mxu0
      %8774 = vmatprep.mubr.f32.mxu0 0.0
      %8775 = vmatmul.mubr.f32.gmra.mxu0 %v8641
      %v8776 = vpop.f32.mrf.mxu0
      %v8777 = vadd.f32 0.0, %v8776
      %v8778 = vpop.f32.mrf.mxu0
      %8779 = vmatprep.mubr.f32.mxu0 0.0
      %8780 = vmatmul.mubr.f32.gmra.mxu0 %v8644
      %v8781 = vpop.f32.mrf.mxu0
      %v8782 = vadd.f32 0.0, %v8781
      %v8783 = vpop.f32.mrf.mxu0
      %8784 = vmatprep.mubr.f32.mxu0 0.0
      %8785 = vmatmul.mubr.f32.gmra.mxu0 %v8647
      %v8786 = vpop.f32.mrf.mxu0
      %v8787 = vadd.f32 0.0, %v8786
      %v8788 = vpop.f32.mrf.mxu0
      %8789 = vmatprep.mubr.f32.mxu0 0.0
      %8790 = vmatmul.mubr.f32.gmra.mxu0 %v8650
      %v8791 = vpop.f32.mrf.mxu0
      %v8792 = vadd.f32 0.0, %v8791
      %v8793 = vpop.f32.mrf.mxu0
      %8794 = vmatprep.mubr.f32.mxu0 0.0
      %8795 = vmatmul.mubr.f32.gmra.mxu0 %v8653
      %v8796 = vpop.f32.mrf.mxu0
      %v8797 = vadd.f32 0.0, %v8796
      %v8798 = vpop.f32.mrf.mxu0
      %8799 = vmatprep.mubr.f32.mxu0 0.0
      %8800 = vmatmul.mubr.f32.gmra.mxu0 %v8656
      %v8801 = vpop.f32.mrf.mxu0
      %v8802 = vadd.f32 0.0, %v8801
      %v8803 = vpop.f32.mrf.mxu0
      %8804 = vmatprep.mubr.f32.mxu0 0.0
      %8805 = vmatmul.mubr.f32.gmra.mxu0 %v8659
      %v8806 = vpop.f32.mrf.mxu0
      %v8807 = vadd.f32 0.0, %v8806
      %v8808 = vpop.f32.mrf.mxu0
      %8809 = vdwg.mxu0
      %v8810 = vmul.f32 %v8502, %v8502
      %v8811 = vmul.f32 %v8507, %v8507
      %v8812 = vmul.f32 %v8512, %v8512
      %v8813 = vmul.f32 %v8517, %v8517
      %v8814 = vmul.f32 %v8522, %v8522
      %v8815 = vmul.f32 %v8527, %v8527
      %v8816 = vmul.f32 %v8532, %v8532
      %v8817 = vmul.f32 %v8537, %v8537
      %v8818 = vmul.f32 %v8542, %v8542
      %v8819 = vmul.f32 %v8547, %v8547
      %v8820 = vmul.f32 %v8552, %v8552
      %v8821 = vmul.f32 %v8557, %v8557
      %v8822 = vmul.f32 %v8562, %v8562
      %v8823 = vmul.f32 %v8567, %v8567
      %v8824 = vmul.f32 %v8572, %v8572
      %v8825 = vmul.f32 %v8577, %v8577
      %v8827 = vsel %vm8612, %v8810, 0
      %v8830 = vsel %vm8612, %v8811, 0
      %v8833 = vsel %vm8612, %v8812, 0
      %v8836 = vsel %vm8612, %v8813, 0
      %v8839 = vsel %vm8612, %v8814, 0
      %v8842 = vsel %vm8612, %v8815, 0
      %v8845 = vsel %vm8612, %v8816, 0
      %v8848 = vsel %vm8612, %v8817, 0
      %v8851 = vsel %vm8612, %v8818, 0
      %v8854 = vsel %vm8612, %v8819, 0
      %v8857 = vsel %vm8612, %v8820, 0
      %v8860 = vsel %vm8612, %v8821, 0
      %v8863 = vsel %vm8612, %v8822, 0
      %v8866 = vsel %vm8612, %v8823, 0
      %v8869 = vsel %vm8612, %v8824, 0
      %v8872 = vsel %vm8612, %v8825, 0
      %8874 = vmatprep.subr.mxu0 0.0
      %8875 = vmatpush1.msra.mxu0 0.0
      %8876 = vmatprep.subr.mxu0 0.0
      %8877 = vmatpush1.msra.mxu0 0.0
      %8878 = vmatprep.subr.mxu0 0.0
      %8879 = vmatpush1.msra.mxu0 0.0
      %8880 = vmatprep.subr.mxu0 0.0
      %8881 = vmatpush1.msra.mxu0 0.0
      %8882 = vmatprep.subr.mxu0 0.0
      %8883 = vmatpush1.msra.mxu0 0.0
      %8884 = vmatprep.subr.mxu0 0.0
      %8885 = vmatpush1.msra.mxu0 0.0
      %8886 = vmatprep.subr.mxu0 0.0
      %8887 = vmatpush1.msra.mxu0 0.0
      %8888 = vmatprep.subr.mxu0 0.0
      %8889 = vmatpush1.msra.mxu0 0.0
      %8890 = vmatprep.subr.mxu0 0.0
      %8891 = vmatpush1.msra.mxu0 0.0
      %8892 = vmatprep.subr.mxu0 0.0
      %8893 = vmatpush1.msra.mxu0 0.0
      %8894 = vmatprep.subr.mxu0 0.0
      %8895 = vmatpush1.msra.mxu0 0.0
      %8896 = vmatprep.subr.mxu0 0.0
      %8897 = vmatpush1.msra.mxu0 0.0
      %8898 = vmatprep.subr.mxu0 0.0
      %8899 = vmatpush1.msra.mxu0 %v8663
      %8900 = vmatprep.subr.mxu0 0.0
      %8901 = vmatpush1.msra.mxu0 0.037037037
      %8902 = vmatprep.subr.mxu0 0.0
      %8903 = vmatpush1.msra.mxu0 0.037037037
      %8904 = vmatprep.subr.mxu0 0.0
      %8905 = vmatpush1.msra.mxu0 0.037037037
      %8906 = vmatprep.subr.mxu0 0.0
      %8907 = vmatpush2.msra.mxu0 0.0
      %8908 = vmatprep.subr.mxu0 0.0
      %8909 = vmatpush2.msra.mxu0 0.0
      %8910 = vmatprep.subr.mxu0 0.0
      %8911 = vmatpush2.msra.mxu0 0.0
      %8912 = vmatprep.subr.mxu0 0.0
      %8913 = vmatpush2.msra.mxu0 0.0
      %8914 = vmatprep.subr.mxu0 0.0
      %8915 = vmatpush2.msra.mxu0 0.0
      %8916 = vmatprep.subr.mxu0 0.0
      %8917 = vmatpush2.msra.mxu0 0.0
      %8918 = vmatprep.subr.mxu0 0.0
      %8919 = vmatpush2.msra.mxu0 0.0
      %8920 = vmatprep.subr.mxu0 0.0
      %8921 = vmatpush2.msra.mxu0 0.0
      %8922 = vmatprep.subr.mxu0 0.0
      %8923 = vmatpush2.msra.mxu0 0.0
      %8924 = vmatprep.subr.mxu0 0.0
      %8925 = vmatpush2.msra.mxu0 0.0
      %8926 = vmatprep.subr.mxu0 0.0
      %8927 = vmatpush2.msra.mxu0 0.0
      %8928 = vmatprep.subr.mxu0 0.0
      %8929 = vmatpush2.msra.mxu0 0.0
      %8930 = vmatprep.subr.mxu0 0.0
      %8931 = vmatpush2.msra.mxu0 0.0
      %8932 = vmatprep.subr.mxu0 0.0
      %8933 = vmatpush2.msra.mxu0 0.0
      %8934 = vmatprep.subr.mxu0 0.0
      %8935 = vmatpush2.msra.mxu0 0.0
      %8936 = vmatprep.subr.mxu0 0.0
      %8937 = vmatpush2.msra.mxu0 0.0
      %8938 = vmatprep.mubr.f32.mxu0 0.0
      %8939 = vmatmul.mubr.f32.gmra.mxu0 %v8827
      %v8940 = vpop.f32.mrf.mxu0
      %v8941 = vadd.f32 0.0, %v8940
      %v8942 = vpop.f32.mrf.mxu0
      %8943 = vmatprep.mubr.f32.mxu0 0.0
      %8944 = vmatmul.mubr.f32.gmra.mxu0 %v8830
      %v8945 = vpop.f32.mrf.mxu0
      %v8946 = vadd.f32 0.0, %v8945
      %v8947 = vpop.f32.mrf.mxu0
      %8948 = vmatprep.mubr.f32.mxu0 0.0
      %8949 = vmatmul.mubr.f32.gmra.mxu0 %v8833
      %v8950 = vpop.f32.mrf.mxu0
      %v8951 = vadd.f32 0.0, %v8950
      %v8952 = vpop.f32.mrf.mxu0
      %8953 = vmatprep.mubr.f32.mxu0 0.0
      %8954 = vmatmul.mubr.f32.gmra.mxu0 %v8836
      %v8955 = vpop.f32.mrf.mxu0
      %v8956 = vadd.f32 0.0, %v8955
      %v8957 = vpop.f32.mrf.mxu0
      %8958 = vmatprep.mubr.f32.mxu0 0.0
      %8959 = vmatmul.mubr.f32.gmra.mxu0 %v8839
      %v8960 = vpop.f32.mrf.mxu0
      %v8961 = vadd.f32 0.0, %v8960
      %v8962 = vpop.f32.mrf.mxu0
      %8963 = vmatprep.mubr.f32.mxu0 0.0
      %8964 = vmatmul.mubr.f32.gmra.mxu0 %v8842
      %v8965 = vpop.f32.mrf.mxu0
      %v8966 = vadd.f32 0.0, %v8965
      %v8967 = vpop.f32.mrf.mxu0
      %8968 = vmatprep.mubr.f32.mxu0 0.0
      %8969 = vmatmul.mubr.f32.gmra.mxu0 %v8845
      %v8970 = vpop.f32.mrf.mxu0
      %v8971 = vadd.f32 0.0, %v8970
      %v8972 = vpop.f32.mrf.mxu0
      %8973 = vmatprep.mubr.f32.mxu0 0.0
      %8974 = vmatmul.mubr.f32.gmra.mxu0 %v8848
      %v8975 = vpop.f32.mrf.mxu0
      %v8976 = vadd.f32 0.0, %v8975
      %v8977 = vpop.f32.mrf.mxu0
      %8978 = vmatprep.mubr.f32.mxu0 0.0
      %8979 = vmatmul.mubr.f32.gmra.mxu0 %v8851
      %v8980 = vpop.f32.mrf.mxu0
      %v8981 = vadd.f32 0.0, %v8980
      %v8982 = vpop.f32.mrf.mxu0
      %8983 = vmatprep.mubr.f32.mxu0 0.0
      %8984 = vmatmul.mubr.f32.gmra.mxu0 %v8854
      %v8985 = vpop.f32.mrf.mxu0
      %v8986 = vadd.f32 0.0, %v8985
      %v8987 = vpop.f32.mrf.mxu0
      %8988 = vmatprep.mubr.f32.mxu0 0.0
      %8989 = vmatmul.mubr.f32.gmra.mxu0 %v8857
      %v8990 = vpop.f32.mrf.mxu0
      %v8991 = vadd.f32 0.0, %v8990
      %v8992 = vpop.f32.mrf.mxu0
      %8993 = vmatprep.mubr.f32.mxu0 0.0
      %8994 = vmatmul.mubr.f32.gmra.mxu0 %v8860
      %v8995 = vpop.f32.mrf.mxu0
      %v8996 = vadd.f32 0.0, %v8995
      %v8997 = vpop.f32.mrf.mxu0
      %8998 = vmatprep.mubr.f32.mxu0 0.0
      %8999 = vmatmul.mubr.f32.gmra.mxu0 %v8863
      %v9000 = vpop.f32.mrf.mxu0
      %v9001 = vadd.f32 0.0, %v9000
      %v9002 = vpop.f32.mrf.mxu0
      %9003 = vmatprep.mubr.f32.mxu0 0.0
      %9004 = vmatmul.mubr.f32.gmra.mxu0 %v8866
      %v9005 = vpop.f32.mrf.mxu0
      %v9006 = vadd.f32 0.0, %v9005
      %v9007 = vpop.f32.mrf.mxu0
      %9008 = vmatprep.mubr.f32.mxu0 0.0
      %9009 = vmatmul.mubr.f32.gmra.mxu0 %v8869
      %v9010 = vpop.f32.mrf.mxu0
      %v9011 = vadd.f32 0.0, %v9010
      %v9012 = vpop.f32.mrf.mxu0
      %9013 = vmatprep.mubr.f32.mxu0 0.0
      %9014 = vmatmul.mubr.f32.gmra.mxu0 %v8872
      %v9015 = vpop.f32.mrf.mxu0
      %v9016 = vadd.f32 0.0, %v9015
      %v9017 = vpop.f32.mrf.mxu0
      %9018 = vdwg.mxu0
      %v9019 = vsel %vm2191, %v8732, 0.0
      %v9020 = vsel %vm2191, %v8737, 0.0
      %v9021 = vadd.f32 %v9019, %v9020
      %v9022 = vsel %vm2191, %v8742, 0.0
      %v9023 = vadd.f32 %v9021, %v9022
      %v9024 = vsel %vm2191, %v8747, 0.0
      %v9025 = vadd.f32 %v9023, %v9024
      %v9026 = vsel %vm2191, %v8752, 0.0
      %v9027 = vadd.f32 %v9025, %v9026
      %v9028 = vsel %vm2191, %v8757, 0.0
      %v9029 = vadd.f32 %v9027, %v9028
      %v9030 = vsel %vm2191, %v8762, 0.0
      %v9031 = vadd.f32 %v9029, %v9030
      %v9032 = vsel %vm2191, %v8767, 0.0
      %v9033 = vadd.f32 %v9031, %v9032
      %v9034 = vrot.slane %v9033, 4
      %v9035 = vadd.f32 %v9033, %v9034
      %v9036 = vrot.slane %v9035, 2
      %v9037 = vadd.f32 %v9035, %v9036
      %v9038 = vrot.slane %v9037, 1
      %v9039 = vadd.f32 %v9037, %v9038
      %v9040 = vrcp.pop 64.0
      %v9041 = vmul.f32 %v9039, %v9040
      %v9042 = vsel %vm2191, %v8941, 0.0
      %v9043 = vsel %vm2191, %v8946, 0.0
      %v9044 = vadd.f32 %v9042, %v9043
      %v9045 = vsel %vm2191, %v8951, 0.0
      %v9046 = vadd.f32 %v9044, %v9045
      %v9047 = vsel %vm2191, %v8956, 0.0
      %v9048 = vadd.f32 %v9046, %v9047
      %v9049 = vsel %vm2191, %v8961, 0.0
      %v9050 = vadd.f32 %v9048, %v9049
      %v9051 = vsel %vm2191, %v8966, 0.0
      %v9052 = vadd.f32 %v9050, %v9051
      %v9053 = vsel %vm2191, %v8971, 0.0
      %v9054 = vadd.f32 %v9052, %v9053
      %v9055 = vsel %vm2191, %v8976, 0.0
      %v9056 = vadd.f32 %v9054, %v9055
      %v9057 = vrot.slane %v9056, 4
      %v9058 = vadd.f32 %v9056, %v9057
      %v9059 = vrot.slane %v9058, 2
      %v9060 = vadd.f32 %v9058, %v9059
      %v9061 = vrot.slane %v9060, 1
      %v9062 = vadd.f32 %v9060, %v9061
      %v9063 = vmul.f32 %v9062, %v9040
      %v9064 = vmul.f32 %v9041, %v9041
      %v9065 = vsub.f32 %v9063, %v9064
      %v9066 = vadd.f32 %v9065, 1e-05
      %v9067 = vrsqrt.pop %v9066
      %9069 = vset.pattern.permute.xlu0 0
      %9070 = vperm.xlu0 %9069, %v9041
      %v9071 = vpop.permute.xlu0 %9070
      %v9073 = vsub.f32 %v8502, %v9071
      %v9074 = vsub.f32 %v8507, %v9071
      %v9075 = vsub.f32 %v8512, %v9071
      %v9076 = vsub.f32 %v8517, %v9071
      %v9077 = vsub.f32 %v8522, %v9071
      %v9078 = vsub.f32 %v8527, %v9071
      %v9079 = vsub.f32 %v8532, %v9071
      %v9080 = vsub.f32 %v8537, %v9071
      %9082 = vset.pattern.permute.xlu0 0
      %9083 = vperm.xlu0 %9082, %v9067
      %v9084 = vpop.permute.xlu0 %9083
      %v9086 = vmul.f32 %v9073, %v9084
      %v9087 = vmul.f32 %v9074, %v9084
      %v9088 = vmul.f32 %v9075, %v9084
      %v9089 = vmul.f32 %v9076, %v9084
      %v9090 = vmul.f32 %v9077, %v9084
      %v9091 = vmul.f32 %v9078, %v9084
      %v9092 = vmul.f32 %v9079, %v9084
      %v9093 = vmul.f32 %v9080, %v9084
      %9095 = vset.pattern.permute.xlu0 0
      %9096 = vperm.xlu0 %9095, %v8580
      %v9097 = vpop.permute.xlu0 %9096
      %9100 = vset.pattern.permute.xlu0 0
      %9101 = vperm.xlu0 %9100, %v8581
      %v9102 = vpop.permute.xlu0 %9101
      %9105 = vset.pattern.permute.xlu0 0
      %9106 = vperm.xlu0 %9105, %v8582
      %v9107 = vpop.permute.xlu0 %9106
      %9110 = vset.pattern.permute.xlu0 0
      %9111 = vperm.xlu0 %9110, %v8583
      %v9112 = vpop.permute.xlu0 %9111
      %9115 = vset.pattern.permute.xlu0 0
      %9116 = vperm.xlu0 %9115, %v8584
      %v9117 = vpop.permute.xlu0 %9116
      %9120 = vset.pattern.permute.xlu0 0
      %9121 = vperm.xlu0 %9120, %v8585
      %v9122 = vpop.permute.xlu0 %9121
      %9125 = vset.pattern.permute.xlu0 0
      %9126 = vperm.xlu0 %9125, %v8586
      %v9127 = vpop.permute.xlu0 %9126
      %9130 = vset.pattern.permute.xlu0 0
      %9131 = vperm.xlu0 %9130, %v8587
      %v9132 = vpop.permute.xlu0 %9131
      %v9134 = vmul.f32 %v9086, %v9097
      %v9135 = vmul.f32 %v9087, %v9102
      %v9136 = vmul.f32 %v9088, %v9107
      %v9137 = vmul.f32 %v9089, %v9112
      %v9138 = vmul.f32 %v9090, %v9117
      %v9139 = vmul.f32 %v9091, %v9122
      %v9140 = vmul.f32 %v9092, %v9127
      %v9141 = vmul.f32 %v9093, %v9132
      %9143 = vset.pattern.permute.xlu0 0
      %9144 = vperm.xlu0 %9143, %v8596
      %v9145 = vpop.permute.xlu0 %9144
      %9148 = vset.pattern.permute.xlu0 0
      %9149 = vperm.xlu0 %9148, %v8597
      %v9150 = vpop.permute.xlu0 %9149
      %9153 = vset.pattern.permute.xlu0 0
      %9154 = vperm.xlu0 %9153, %v8598
      %v9155 = vpop.permute.xlu0 %9154
      %9158 = vset.pattern.permute.xlu0 0
      %9159 = vperm.xlu0 %9158, %v8599
      %v9160 = vpop.permute.xlu0 %9159
      %9163 = vset.pattern.permute.xlu0 0
      %9164 = vperm.xlu0 %9163, %v8600
      %v9165 = vpop.permute.xlu0 %9164
      %9168 = vset.pattern.permute.xlu0 0
      %9169 = vperm.xlu0 %9168, %v8601
      %v9170 = vpop.permute.xlu0 %9169
      %9173 = vset.pattern.permute.xlu0 0
      %9174 = vperm.xlu0 %9173, %v8602
      %v9175 = vpop.permute.xlu0 %9174
      %9178 = vset.pattern.permute.xlu0 0
      %9179 = vperm.xlu0 %9178, %v8603
      %v9180 = vpop.permute.xlu0 %9179
      %v9182 = vadd.f32 %v9134, %v9145
      %v9183 = vadd.f32 %v9135, %v9150
      %v9184 = vadd.f32 %v9136, %v9155
      %v9185 = vadd.f32 %v9137, %v9160
      %v9186 = vadd.f32 %v9138, %v9165
      %v9187 = vadd.f32 %v9139, %v9170
      %v9188 = vadd.f32 %v9140, %v9175
      %v9189 = vadd.f32 %v9141, %v9180
      %v9190 = vsel %vm2191, %v8772, 0.0
      %v9191 = vsel %vm2191, %v8777, 0.0
      %v9192 = vadd.f32 %v9190, %v9191
      %v9193 = vsel %vm2191, %v8782, 0.0
      %v9194 = vadd.f32 %v9192, %v9193
      %v9195 = vsel %vm2191, %v8787, 0.0
      %v9196 = vadd.f32 %v9194, %v9195
      %v9197 = vsel %vm2191, %v8792, 0.0
      %v9198 = vadd.f32 %v9196, %v9197
      %v9199 = vsel %vm2191, %v8797, 0.0
      %v9200 = vadd.f32 %v9198, %v9199
      %v9201 = vsel %vm2191, %v8802, 0.0
      %v9202 = vadd.f32 %v9200, %v9201
      %v9203 = vsel %vm2191, %v8807, 0.0
      %v9204 = vadd.f32 %v9202, %v9203
      %v9205 = vrot.slane %v9204, 4
      %v9206 = vadd.f32 %v9204, %v9205
      %v9207 = vrot.slane %v9206, 2
      %v9208 = vadd.f32 %v9206, %v9207
      %v9209 = vrot.slane %v9208, 1
      %v9210 = vadd.f32 %v9208, %v9209
      %v9211 = vmul.f32 %v9210, %v9040
      %v9212 = vsel %vm2191, %v8981, 0.0
      %v9213 = vsel %vm2191, %v8986, 0.0
      %v9214 = vadd.f32 %v9212, %v9213
      %v9215 = vsel %vm2191, %v8991, 0.0
      %v9216 = vadd.f32 %v9214, %v9215
      %v9217 = vsel %vm2191, %v8996, 0.0
      %v9218 = vadd.f32 %v9216, %v9217
      %v9219 = vsel %vm2191, %v9001, 0.0
      %v9220 = vadd.f32 %v9218, %v9219
      %v9221 = vsel %vm2191, %v9006, 0.0
      %v9222 = vadd.f32 %v9220, %v9221
      %v9223 = vsel %vm2191, %v9011, 0.0
      %v9224 = vadd.f32 %v9222, %v9223
      %v9225 = vsel %vm2191, %v9016, 0.0
      %v9226 = vadd.f32 %v9224, %v9225
      %v9227 = vrot.slane %v9226, 4
      %v9228 = vadd.f32 %v9226, %v9227
      %v9229 = vrot.slane %v9228, 2
      %v9230 = vadd.f32 %v9228, %v9229
      %v9231 = vrot.slane %v9230, 1
      %v9232 = vadd.f32 %v9230, %v9231
      %v9233 = vmul.f32 %v9232, %v9040
      %v9234 = vmul.f32 %v9211, %v9211
      %v9235 = vsub.f32 %v9233, %v9234
      %v9236 = vadd.f32 %v9235, 1e-05
      %v9237 = vrsqrt.pop %v9236
      %9239 = vset.pattern.permute.xlu0 0
      %9240 = vperm.xlu0 %9239, %v9211
      %v9241 = vpop.permute.xlu0 %9240
      %v9243 = vsub.f32 %v8542, %v9241
      %v9244 = vsub.f32 %v8547, %v9241
      %v9245 = vsub.f32 %v8552, %v9241
      %v9246 = vsub.f32 %v8557, %v9241
      %v9247 = vsub.f32 %v8562, %v9241
      %v9248 = vsub.f32 %v8567, %v9241
      %v9249 = vsub.f32 %v8572, %v9241
      %v9250 = vsub.f32 %v8577, %v9241
      %9252 = vset.pattern.permute.xlu0 0
      %9253 = vperm.xlu0 %9252, %v9237
      %v9254 = vpop.permute.xlu0 %9253
      %v9256 = vmul.f32 %v9243, %v9254
      %v9257 = vmul.f32 %v9244, %v9254
      %v9258 = vmul.f32 %v9245, %v9254
      %v9259 = vmul.f32 %v9246, %v9254
      %v9260 = vmul.f32 %v9247, %v9254
      %v9261 = vmul.f32 %v9248, %v9254
      %v9262 = vmul.f32 %v9249, %v9254
      %v9263 = vmul.f32 %v9250, %v9254
      %9265 = vset.pattern.permute.xlu0 0
      %9266 = vperm.xlu0 %9265, %v8588
      %v9267 = vpop.permute.xlu0 %9266
      %9270 = vset.pattern.permute.xlu0 0
      %9271 = vperm.xlu0 %9270, %v8589
      %v9272 = vpop.permute.xlu0 %9271
      %9275 = vset.pattern.permute.xlu0 0
      %9276 = vperm.xlu0 %9275, %v8590
      %v9277 = vpop.permute.xlu0 %9276
      %9280 = vset.pattern.permute.xlu0 0
      %9281 = vperm.xlu0 %9280, %v8591
      %v9282 = vpop.permute.xlu0 %9281
      %9285 = vset.pattern.permute.xlu0 0
      %9286 = vperm.xlu0 %9285, %v8592
      %v9287 = vpop.permute.xlu0 %9286
      %9290 = vset.pattern.permute.xlu0 0
      %9291 = vperm.xlu0 %9290, %v8593
      %v9292 = vpop.permute.xlu0 %9291
      %9295 = vset.pattern.permute.xlu0 0
      %9296 = vperm.xlu0 %9295, %v8594
      %v9297 = vpop.permute.xlu0 %9296
      %9300 = vset.pattern.permute.xlu0 0
      %9301 = vperm.xlu0 %9300, %v8595
      %v9302 = vpop.permute.xlu0 %9301
      %v9304 = vmul.f32 %v9256, %v9267
      %v9305 = vmul.f32 %v9257, %v9272
      %v9306 = vmul.f32 %v9258, %v9277
      %v9307 = vmul.f32 %v9259, %v9282
      %v9308 = vmul.f32 %v9260, %v9287
      %v9309 = vmul.f32 %v9261, %v9292
      %v9310 = vmul.f32 %v9262, %v9297
      %v9311 = vmul.f32 %v9263, %v9302
      %9313 = vset.pattern.permute.xlu0 0
      %9314 = vperm.xlu0 %9313, %v8604
      %v9315 = vpop.permute.xlu0 %9314
      %9318 = vset.pattern.permute.xlu0 0
      %9319 = vperm.xlu0 %9318, %v8605
      %v9320 = vpop.permute.xlu0 %9319
      %9323 = vset.pattern.permute.xlu0 0
      %9324 = vperm.xlu0 %9323, %v8606
      %v9325 = vpop.permute.xlu0 %9324
      %9328 = vset.pattern.permute.xlu0 0
      %9329 = vperm.xlu0 %9328, %v8607
      %v9330 = vpop.permute.xlu0 %9329
      %9333 = vset.pattern.permute.xlu0 0
      %9334 = vperm.xlu0 %9333, %v8608
      %v9335 = vpop.permute.xlu0 %9334
      %9338 = vset.pattern.permute.xlu0 0
      %9339 = vperm.xlu0 %9338, %v8609
      %v9340 = vpop.permute.xlu0 %9339
      %9343 = vset.pattern.permute.xlu0 0
      %9344 = vperm.xlu0 %9343, %v8610
      %v9345 = vpop.permute.xlu0 %9344
      %9348 = vset.pattern.permute.xlu0 0
      %9349 = vperm.xlu0 %9348, %v8611
      %v9350 = vpop.permute.xlu0 %9349
      %v9352 = vadd.f32 %v9304, %v9315
      %v9353 = vadd.f32 %v9305, %v9320
      %v9354 = vadd.f32 %v9306, %v9325
      %v9355 = vadd.f32 %v9307, %v9330
      %v9356 = vadd.f32 %v9308, %v9335
      %v9357 = vadd.f32 %v9309, %v9340
      %v9358 = vadd.f32 %v9310, %v9345
      %v9359 = vadd.f32 %v9311, %v9350
      %v9360 = vmax.f32 %v9182, 0.0
      %v9361 = vmax.f32 %v9183, 0.0
      %v9362 = vmax.f32 %v9184, 0.0
      %v9363 = vmax.f32 %v9185, 0.0
      %v9364 = vmax.f32 %v9186, 0.0
      %v9365 = vmax.f32 %v9187, 0.0
      %v9366 = vmax.f32 %v9188, 0.0
      %v9367 = vmax.f32 %v9189, 0.0
      %v9368 = vmax.f32 %v9352, 0.0
      %v9369 = vmax.f32 %v9353, 0.0
      %v9370 = vmax.f32 %v9354, 0.0
      %v9371 = vmax.f32 %v9355, 0.0
      %v9372 = vmax.f32 %v9356, 0.0
      %v9373 = vmax.f32 %v9357, 0.0
      %v9374 = vmax.f32 %v9358, 0.0
      %v9375 = vmax.f32 %v9359, 0.0
      %v9377 = vsel %vm8612, %v9360, 0
      %v9380 = vsel %vm8612, %v9361, 0
      %v9383 = vsel %vm8612, %v9362, 0
      %v9386 = vsel %vm8612, %v9363, 0
      %v9389 = vsel %vm8612, %v9364, 0
      %v9392 = vsel %vm8612, %v9365, 0
      %v9395 = vsel %vm8612, %v9366, 0
      %v9398 = vsel %vm8612, %v9367, 0
      %v9401 = vsel %vm8612, %v9368, 0
      %v9404 = vsel %vm8612, %v9369, 0
      %v9407 = vsel %vm8612, %v9370, 0
      %v9410 = vsel %vm8612, %v9371, 0
      %v9413 = vsel %vm8612, %v9372, 0
      %v9416 = vsel %vm8612, %v9373, 0
      %v9419 = vsel %vm8612, %v9374, 0
      %v9422 = vsel %vm8612, %v9375, 0
      %9424 = vmatprep.subr.mxu0 0.0
      %9425 = vmatpush1.msra.mxu0 0.0
      %9426 = vmatprep.subr.mxu0 0.0
      %9427 = vmatpush1.msra.mxu0 0.0
      %9428 = vmatprep.subr.mxu0 0.0
      %9429 = vmatpush1.msra.mxu0 0.0
      %9430 = vmatprep.subr.mxu0 0.0
      %9431 = vmatpush1.msra.mxu0 0.0
      %9432 = vmatprep.subr.mxu0 0.0
      %9433 = vmatpush1.msra.mxu0 0.0
      %9434 = vmatprep.subr.mxu0 0.0
      %9435 = vmatpush1.msra.mxu0 0.0
      %9436 = vmatprep.subr.mxu0 0.0
      %9437 = vmatpush1.msra.mxu0 0.0
      %9438 = vmatprep.subr.mxu0 0.0
      %9439 = vmatpush1.msra.mxu0 0.0
      %9440 = vmatprep.subr.mxu0 0.0
      %9441 = vmatpush1.msra.mxu0 0.0
      %9442 = vmatprep.subr.mxu0 0.0
      %9443 = vmatpush1.msra.mxu0 0.0
      %9444 = vmatprep.subr.mxu0 0.0
      %9445 = vmatpush1.msra.mxu0 0.0
      %9446 = vmatprep.subr.mxu0 0.0
      %9447 = vmatpush1.msra.mxu0 0.0
      %9448 = vmatprep.subr.mxu0 0.0
      %9449 = vmatpush1.msra.mxu0 %v8663
      %9450 = vmatprep.subr.mxu0 0.0
      %9451 = vmatpush1.msra.mxu0 0.037037037
      %9452 = vmatprep.subr.mxu0 0.0
      %9453 = vmatpush1.msra.mxu0 0.037037037
      %9454 = vmatprep.subr.mxu0 0.0
      %9455 = vmatpush1.msra.mxu0 0.037037037
      %9456 = vmatprep.subr.mxu0 0.0
      %9457 = vmatpush2.msra.mxu0 0.0
      %9458 = vmatprep.subr.mxu0 0.0
      %9459 = vmatpush2.msra.mxu0 0.0
      %9460 = vmatprep.subr.mxu0 0.0
      %9461 = vmatpush2.msra.mxu0 0.0
      %9462 = vmatprep.subr.mxu0 0.0
      %9463 = vmatpush2.msra.mxu0 0.0
      %9464 = vmatprep.subr.mxu0 0.0
      %9465 = vmatpush2.msra.mxu0 0.0
      %9466 = vmatprep.subr.mxu0 0.0
      %9467 = vmatpush2.msra.mxu0 0.0
      %9468 = vmatprep.subr.mxu0 0.0
      %9469 = vmatpush2.msra.mxu0 0.0
      %9470 = vmatprep.subr.mxu0 0.0
      %9471 = vmatpush2.msra.mxu0 0.0
      %9472 = vmatprep.subr.mxu0 0.0
      %9473 = vmatpush2.msra.mxu0 0.0
      %9474 = vmatprep.subr.mxu0 0.0
      %9475 = vmatpush2.msra.mxu0 0.0
      %9476 = vmatprep.subr.mxu0 0.0
      %9477 = vmatpush2.msra.mxu0 0.0
      %9478 = vmatprep.subr.mxu0 0.0
      %9479 = vmatpush2.msra.mxu0 0.0
      %9480 = vmatprep.subr.mxu0 0.0
      %9481 = vmatpush2.msra.mxu0 0.0
      %9482 = vmatprep.subr.mxu0 0.0
      %9483 = vmatpush2.msra.mxu0 0.0
      %9484 = vmatprep.subr.mxu0 0.0
      %9485 = vmatpush2.msra.mxu0 0.0
      %9486 = vmatprep.subr.mxu0 0.0
      %9487 = vmatpush2.msra.mxu0 0.0
      %9488 = vmatprep.mubr.f32.mxu0 0.0
      %9489 = vmatmul.mubr.f32.gmra.mxu0 %v9377
      %v9490 = vpop.f32.mrf.mxu0
      %v9491 = vadd.f32 0.0, %v9490
      %v9492 = vpop.f32.mrf.mxu0
      %9493 = vmatprep.mubr.f32.mxu0 0.0
      %9494 = vmatmul.mubr.f32.gmra.mxu0 %v9380
      %v9495 = vpop.f32.mrf.mxu0
      %v9496 = vadd.f32 0.0, %v9495
      %v9497 = vpop.f32.mrf.mxu0
      %9498 = vmatprep.mubr.f32.mxu0 0.0
      %9499 = vmatmul.mubr.f32.gmra.mxu0 %v9383
      %v9500 = vpop.f32.mrf.mxu0
      %v9501 = vadd.f32 0.0, %v9500
      %v9502 = vpop.f32.mrf.mxu0
      %9503 = vmatprep.mubr.f32.mxu0 0.0
      %9504 = vmatmul.mubr.f32.gmra.mxu0 %v9386
      %v9505 = vpop.f32.mrf.mxu0
      %v9506 = vadd.f32 0.0, %v9505
      %v9507 = vpop.f32.mrf.mxu0
      %9508 = vmatprep.mubr.f32.mxu0 0.0
      %9509 = vmatmul.mubr.f32.gmra.mxu0 %v9389
      %v9510 = vpop.f32.mrf.mxu0
      %v9511 = vadd.f32 0.0, %v9510
      %v9512 = vpop.f32.mrf.mxu0
      %9513 = vmatprep.mubr.f32.mxu0 0.0
      %9514 = vmatmul.mubr.f32.gmra.mxu0 %v9392
      %v9515 = vpop.f32.mrf.mxu0
      %v9516 = vadd.f32 0.0, %v9515
      %v9517 = vpop.f32.mrf.mxu0
      %9518 = vmatprep.mubr.f32.mxu0 0.0
      %9519 = vmatmul.mubr.f32.gmra.mxu0 %v9395
      %v9520 = vpop.f32.mrf.mxu0
      %v9521 = vadd.f32 0.0, %v9520
      %v9522 = vpop.f32.mrf.mxu0
      %9523 = vmatprep.mubr.f32.mxu0 0.0
      %9524 = vmatmul.mubr.f32.gmra.mxu0 %v9398
      %v9525 = vpop.f32.mrf.mxu0
      %v9526 = vadd.f32 0.0, %v9525
      %v9527 = vpop.f32.mrf.mxu0
      %9528 = vmatprep.mubr.f32.mxu0 0.0
      %9529 = vmatmul.mubr.f32.gmra.mxu0 %v9401
      %v9530 = vpop.f32.mrf.mxu0
      %v9531 = vadd.f32 0.0, %v9530
      %v9532 = vpop.f32.mrf.mxu0
      %9533 = vmatprep.mubr.f32.mxu0 0.0
      %9534 = vmatmul.mubr.f32.gmra.mxu0 %v9404
      %v9535 = vpop.f32.mrf.mxu0
      %v9536 = vadd.f32 0.0, %v9535
      %v9537 = vpop.f32.mrf.mxu0
      %9538 = vmatprep.mubr.f32.mxu0 0.0
      %9539 = vmatmul.mubr.f32.gmra.mxu0 %v9407
      %v9540 = vpop.f32.mrf.mxu0
      %v9541 = vadd.f32 0.0, %v9540
      %v9542 = vpop.f32.mrf.mxu0
      %9543 = vmatprep.mubr.f32.mxu0 0.0
      %9544 = vmatmul.mubr.f32.gmra.mxu0 %v9410
      %v9545 = vpop.f32.mrf.mxu0
      %v9546 = vadd.f32 0.0, %v9545
      %v9547 = vpop.f32.mrf.mxu0
      %9548 = vmatprep.mubr.f32.mxu0 0.0
      %9549 = vmatmul.mubr.f32.gmra.mxu0 %v9413
      %v9550 = vpop.f32.mrf.mxu0
      %v9551 = vadd.f32 0.0, %v9550
      %v9552 = vpop.f32.mrf.mxu0
      %9553 = vmatprep.mubr.f32.mxu0 0.0
      %9554 = vmatmul.mubr.f32.gmra.mxu0 %v9416
      %v9555 = vpop.f32.mrf.mxu0
      %v9556 = vadd.f32 0.0, %v9555
      %v9557 = vpop.f32.mrf.mxu0
      %9558 = vmatprep.mubr.f32.mxu0 0.0
      %9559 = vmatmul.mubr.f32.gmra.mxu0 %v9419
      %v9560 = vpop.f32.mrf.mxu0
      %v9561 = vadd.f32 0.0, %v9560
      %v9562 = vpop.f32.mrf.mxu0
      %9563 = vmatprep.mubr.f32.mxu0 0.0
      %9564 = vmatmul.mubr.f32.gmra.mxu0 %v9422
      %v9565 = vpop.f32.mrf.mxu0
      %v9566 = vadd.f32 0.0, %v9565
      %v9567 = vpop.f32.mrf.mxu0
      %9568 = vdwg.mxu0
      %v9569 = vld [vmem:[%s4 + $0xdc8] sm:$0x3f]
      %v9570 = vld [vmem:[%s5 + $0x5a0] sm:$0x3f]
      %9571 = vmatprep.subr.mxu0 0.0
      %9572 = vmatpush1.msra.mxu0 %v9566
      %9573 = vmatprep.subr.mxu0 0.0
      %9574 = vmatpush1.msra.mxu0 %v9561
      %9575 = vmatprep.subr.mxu0 0.0
      %9576 = vmatpush1.msra.mxu0 %v9556
      %9577 = vmatprep.subr.mxu0 0.0
      %9578 = vmatpush1.msra.mxu0 %v9551
      %9579 = vmatprep.subr.mxu0 0.0
      %9580 = vmatpush1.msra.mxu0 %v9546
      %9581 = vmatprep.subr.mxu0 0.0
      %9582 = vmatpush1.msra.mxu0 %v9541
      %9583 = vmatprep.subr.mxu0 0.0
      %9584 = vmatpush1.msra.mxu0 %v9536
      %9585 = vmatprep.subr.mxu0 0.0
      %9586 = vmatpush1.msra.mxu0 %v9531
      %9587 = vmatprep.subr.mxu0 0.0
      %9588 = vmatpush1.msra.mxu0 %v9526
      %9589 = vmatprep.subr.mxu0 0.0
      %9590 = vmatpush1.msra.mxu0 %v9521
      %9591 = vmatprep.subr.mxu0 0.0
      %9592 = vmatpush1.msra.mxu0 %v9516
      %9593 = vmatprep.subr.mxu0 0.0
      %9594 = vmatpush1.msra.mxu0 %v9511
      %9595 = vmatprep.subr.mxu0 0.0
      %9596 = vmatpush1.msra.mxu0 %v9506
      %9597 = vmatprep.subr.mxu0 0.0
      %9598 = vmatpush1.msra.mxu0 %v9501
      %9599 = vmatprep.subr.mxu0 0.0
      %9600 = vmatpush1.msra.mxu0 %v9496
      %9601 = vmatprep.subr.mxu0 0.0
      %9602 = vmatpush1.msra.mxu0 %v9491
      %9603 = vmatprep.subr.mxu0 0.0
      %9604 = vmatpush2.msra.mxu0 0.0
      %9605 = vmatprep.subr.mxu0 0.0
      %9606 = vmatpush2.msra.mxu0 0.0
      %9607 = vmatprep.subr.mxu0 0.0
      %9608 = vmatpush2.msra.mxu0 0.0
      %9609 = vmatprep.subr.mxu0 0.0
      %9610 = vmatpush2.msra.mxu0 0.0
      %9611 = vmatprep.subr.mxu0 0.0
      %9612 = vmatpush2.msra.mxu0 0.0
      %9613 = vmatprep.subr.mxu0 0.0
      %9614 = vmatpush2.msra.mxu0 0.0
      %9615 = vmatprep.subr.mxu0 0.0
      %9616 = vmatpush2.msra.mxu0 0.0
      %9617 = vmatprep.subr.mxu0 0.0
      %9618 = vmatpush2.msra.mxu0 0.0
      %9619 = vmatprep.subr.mxu0 0.0
      %9620 = vmatpush2.msra.mxu0 0.0
      %9621 = vmatprep.subr.mxu0 0.0
      %9622 = vmatpush2.msra.mxu0 0.0
      %9623 = vmatprep.subr.mxu0 0.0
      %9624 = vmatpush2.msra.mxu0 0.0
      %9625 = vmatprep.subr.mxu0 0.0
      %9626 = vmatpush2.msra.mxu0 0.0
      %9627 = vmatprep.subr.mxu0 0.0
      %9628 = vmatpush2.msra.mxu0 0.0
      %9629 = vmatprep.subr.mxu0 0.0
      %9630 = vmatpush2.msra.mxu0 0.0
      %9631 = vmatprep.subr.mxu0 0.0
      %9632 = vmatpush2.msra.mxu0 0.0
      %9633 = vmatprep.subr.mxu0 0.0
      %9634 = vmatpush2.msra.mxu0 0.0
      %9635 = vmatprep.mubr.f32.mxu0 0.0
      %9636 = vmatmul.mubr.f32.gmra.mxu0 %v9569
      %v9637 = vpop.f32.mrf.mxu0
      %v9638 = vadd.f32 %v9570, %v9637
      %v9639 = vpop.f32.mrf.mxu0
      %9640 = vdwg.mxu0
      %vm9641 = vcmask 5120
      %9642 = vst.msk [vmem:[%s246] sm:$0x3f] %vm9641, %v9638
      %p9643 = scmp.lt.s32.totalorder %s17, 1
      %s9644 = scalar_select %p9643, %s17, 1
      %s9645 = smul.addr %s9644, 8
      %s9646 = scalar_lea.vmem %s6, %s9645
      // Predicated region
      $region45: #{mwa_cnn_forward.1} parent=43 // pred_check
        %p9647 = pneg %p166
      $region46: #{mwa_cnn_forward.1} parent=43 // pred_check_branch
        %9649 = sbr.rel (%p9647) target = $region48
      $region47: #{mwa_cnn_forward.1} parent=43 // pred_region
        _
      $region48: #{mwa_cnn_forward.1} parent=43 // pred_fallthru
        _
    $region44: #{mwa_cnn_forward.1} parent=5 // pred_fallthru
      _
    %p9650 = scmp.le.s32.totalorder 2, %s12
    // Predicated region
    $region49: #{mwa_cnn_forward.1} parent=5 // pred_check
      %p9651 = pneg %p9650
    $region50: #{mwa_cnn_forward.1} parent=5 // pred_check_branch
      %9653 = sbr.rel (%p9651) target = $region52
    $region51: #{mwa_cnn_forward.1} parent=5 // pred_region
      %s9654 = ssub.s32 %s12, 2
      // Predicated region
      $region53: #{mwa_cnn_forward.1} parent=51 // pred_check
        %p9655 = pneg %p172
      $region54: #{mwa_cnn_forward.1} parent=51 // pred_check_branch
        %9657 = sbr.rel (%p9655) target = $region56
      $region55: #{mwa_cnn_forward.1} parent=51 // pred_region
        %p9658 = scmp.lt.s32.totalorder %s18, 1
        %s9659 = scalar_select %p9658, %s18, 1
        %s9660 = smul.addr %s9659, 8
        %s9661 = scalar_lea.vmem %s6, %s9660
      $region56: #{mwa_cnn_forward.1} parent=51 // pred_fallthru
        _
    $region52: #{mwa_cnn_forward.1} parent=5 // pred_fallthru
      _
  $region6: #{mwa_cnn_forward.1} parent=0 // loop_footer
    %s16 = sadd.s32 1, %s12
  $region7: #{mwa_cnn_forward.1} parent=0 // loop_footer_branch
    %11 = sbr.rel target = $region3
  $region8: #{mwa_cnn_forward.1} parent=0 // loop_exit
    _

</llo_original>
